<compile_context>
chip_gen: v7x
topology: tpu7x:2x2x1
jax: 0.10.0
libtpu: 0.0.40
codegen_flags: <defaults>
</compile_context>

<pallas_src>
import functools

import jax
import jax.numpy as jnp
from jax.experimental import pallas as pl
from jax.experimental.pallas import tpu as pltpu

LANES = 128                     # lane width; hidden conv channels are padded to this
VMEM_LIMIT = 32 * 1024 * 1024   # scoped-VMEM budget, safe on v5e / v6e / v7x


def s_cv2d(size, kernel_size=4, stride=2, padding=0):
    return (size + 2 * padding - kernel_size) // stride + 1


def _round_up(x, m):
    return ((x + m - 1) // m) * m


def _plan(height, width):
    """Static spatial bookkeeping for the fused conv kernel."""
    oh1, ow1 = s_cv2d(height), s_cv2d(width)
    oh2, ow2 = s_cv2d(oh1), s_cv2d(ow1)
    oh3, ow3 = s_cv2d(oh2), s_cv2d(ow2)
    assert oh3 >= 1 and ow3 >= 1, "spatial input too small for three k=4,s=2 convs"
    # conv3 is computed at every offset (stride-1 grid) so its reads of the
    # conv2 activation are contiguous; host keeps the even rows/cols only.
    hf3 = 2 * oh3 - 1
    wf3 = _round_up(2 * ow3 - 1, 8)
    # conv2 padded output width: conv3's contiguous column window must fit.
    wp2 = _round_up(max(ow2, wf3 + 3), 8)
    # conv1 output is stored split by (row, column) parity; per-parity extents.
    ohh1 = max((oh1 + 1) // 2, oh2 + 1)
    wph1 = _round_up(max((ow1 + 1) // 2, wp2 + 1), 8)
    return {"oh1": oh1, "ow1": ow1, "ohh1": ohh1, "wph1": wph1,
            "oh2": oh2, "ow2": ow2, "wp2": wp2,
            "oh3": oh3, "ow3": ow3, "hf3": hf3, "wf3": wf3}


# ----------------------------------------------------------------------------
# Pallas kernel: whole conv stack (3 x Conv+foldedBN+ReLU) for one batch element
# ----------------------------------------------------------------------------
def _fused_cnn_kernel(x1_ref, w1_ref, b1_ref, w2_ref, b2_ref, w3_ref, b3_ref,
                      o_ref, a1_ref, a2_ref, *, plan):
    ohh1, wph1 = plan["ohh1"], plan["wph1"]
    oh2, wp2 = plan["oh2"], plan["wp2"]
    hf3, wf3 = plan["hf3"], plan["wf3"]

    # ---- conv1: single dense MXU matmul over the host-built bf16 im2col.
    h1 = jnp.dot(x1_ref[0], w1_ref[...], preferred_element_type=jnp.float32)
    h1 = jnp.maximum(h1 + b1_ref[...], 0.0)
    # rows were host-ordered (row-parity, row//2, col-parity, col//2), so this
    # store puts conv1's output directly in the layout conv2 reads contiguously
    a1_ref[...] = h1.reshape(2, ohh1, 2, wph1, LANES)

    # ---- conv2: 16 shifted (M,128)x(128,128) matmuls, f32 accumulation.
    acc2 = jnp.zeros((oh2 * wp2, LANES), jnp.float32)
    for di in range(4):
        for dj in range(4):
            patch = a1_ref[di % 2, pl.ds(di // 2, oh2),
                           dj % 2, pl.ds(dj // 2, wp2), :]
            patch = patch.reshape(oh2 * wp2, LANES).astype(jnp.bfloat16)
            acc2 = acc2 + jnp.dot(patch, w2_ref[di * 4 + dj],
                                  preferred_element_type=jnp.float32)
    h2 = jnp.maximum(acc2 + b2_ref[...], 0.0)
    a2_ref[...] = h2.reshape(oh2, wp2, LANES)

    # ---- conv3 at every (stride-1) offset: all reads are contiguous slices.
    acc3 = jnp.zeros((hf3 * wf3, LANES), jnp.float32)
    for di in range(4):
        for dj in range(4):
            patch = a2_ref[pl.ds(di, hf3), pl.ds(dj, wf3), :]
            patch = patch.reshape(hf3 * wf3, LANES).astype(jnp.bfloat16)
            acc3 = acc3 + jnp.dot(patch, w3_ref[di * 4 + dj],
                                  preferred_element_type=jnp.float32)
    h3 = jnp.maximum(acc3 + b3_ref[...], 0.0)
    o_ref[...] = h3.reshape(1, hf3 * wf3, LANES).astype(jnp.bfloat16)


def fused_cnn(x1, w1, b1, w2, b2, w3, b3, *, plan):
    n = x1.shape[0]
    m1 = 4 * plan["ohh1"] * plan["wph1"]
    assert x1.shape[1] == m1
    k1 = x1.shape[2]
    m3 = plan["hf3"] * plan["wf3"]
    kernel = functools.partial(_fused_cnn_kernel, plan=plan)
    return pl.pallas_call(
        kernel,
        out_shape=jax.ShapeDtypeStruct((n, m3, LANES), jnp.bfloat16),
        grid=(n,),
        in_specs=[
            pl.BlockSpec((1, m1, k1), lambda i: (i, 0, 0)),
            pl.BlockSpec((k1, LANES), lambda i: (0, 0)),
            pl.BlockSpec((1, LANES), lambda i: (0, 0)),
            pl.BlockSpec((16, LANES, LANES), lambda i: (0, 0, 0)),
            pl.BlockSpec((1, LANES), lambda i: (0, 0)),
            pl.BlockSpec((16, LANES, LANES), lambda i: (0, 0, 0)),
            pl.BlockSpec((1, LANES), lambda i: (0, 0)),
        ],
        out_specs=pl.BlockSpec((1, m3, LANES), lambda i: (i, 0, 0)),
        scratch_shapes=[
            pltpu.VMEM((2, plan["ohh1"], 2, plan["wph1"], LANES), jnp.float32),
            pltpu.VMEM((plan["oh2"], plan["wp2"], LANES), jnp.float32),
        ],
        compiler_params=pltpu.CompilerParams(
            dimension_semantics=("parallel",),
            vmem_limit_bytes=VMEM_LIMIT),
    )(x1, w1, b1, w2, b2, w3, b3)


# ----------------------------------------------------------------------------
# Pallas kernel: fused  Linear + ReLU + Linear  (fc head), row-tiled over batch
# ----------------------------------------------------------------------------
def _mlp_kernel(x_ref, w1_ref, b1_ref, w2_ref, b2_ref, o_ref):
    h = jnp.dot(x_ref[...], w1_ref[...], preferred_element_type=jnp.float32)
    h = jnp.maximum(h + b1_ref[...], 0.0)
    y = jnp.dot(h.astype(jnp.bfloat16), w2_ref[...],
                preferred_element_type=jnp.float32)
    o_ref[...] = y + b2_ref[...]


def mlp(x, w1, b1, w2, b2, *, tm):
    m, f = x.shape
    nh = w1.shape[1]
    no = w2.shape[1]
    return pl.pallas_call(
        _mlp_kernel,
        out_shape=jax.ShapeDtypeStruct((m, no), jnp.float32),
        grid=(m // tm,),
        in_specs=[
            pl.BlockSpec((tm, f), lambda i: (i, 0)),
            pl.BlockSpec((f, nh), lambda i: (0, 0)),
            pl.BlockSpec((1, nh), lambda i: (0, 0)),
            pl.BlockSpec((nh, no), lambda i: (0, 0)),
            pl.BlockSpec((1, no), lambda i: (0, 0)),
        ],
        out_specs=pl.BlockSpec((tm, no), lambda i: (i, 0)),
        compiler_params=pltpu.CompilerParams(
            dimension_semantics=("parallel",),
            vmem_limit_bytes=VMEM_LIMIT),
    )(x, w1, b1, w2, b2)


# ----------------------------------------------------------------------------
# Parameter init (torch-like layout) and one-time packing for the kernels
# ----------------------------------------------------------------------------
def init_params(key, output_c, input_c, height, width, hidden_size):
    h = s_cv2d(s_cv2d(s_cv2d(height)))
    w = s_cv2d(s_cv2d(s_cv2d(width)))
    keys = jax.random.split(key, 5)

    def conv_block(k, cout, cin):
        return {
            "w": jax.random.normal(k, (cout, cin, 4, 4), jnp.float32) * 0.05,
            "b": jnp.zeros((cout,), jnp.float32),
            "gamma": jnp.ones((cout,), jnp.float32),
            "beta": jnp.zeros((cout,), jnp.float32),
            "mean": jnp.zeros((cout,), jnp.float32),
            "var": jnp.ones((cout,), jnp.float32),
        }

    return {
        "c1": conv_block(keys[0], hidden_size, input_c),
        "c2": conv_block(keys[1], hidden_size, hidden_size),
        "c3": conv_block(keys[2], hidden_size, hidden_size),
        "fc1_w": jax.random.normal(keys[3], (256, hidden_size * h * w), jnp.float32) * 0.05,
        "fc1_b": jnp.zeros((256,), jnp.float32),
        "fc2_w": jax.random.normal(keys[4], (output_c, 256), jnp.float32) * 0.05,
        "fc2_b": jnp.zeros((output_c,), jnp.float32),
    }


def pack_params(params, *, input_c, height, width, hidden_size, output_c, eps=1e-5):
    """Fold BN (eval) into conv weights, reorder/pad, cast weights to bf16."""
    assert hidden_size <= LANES and output_c <= LANES
    plan = _plan(height, width)

    def fold(p):
        scale = p["gamma"] / jnp.sqrt(p["var"] + eps)
        w = p["w"] * scale[:, None, None, None]          # (Cout, Cin, 4, 4)
        b = (p["b"] - p["mean"]) * scale + p["beta"]     # (Cout,)
        return w, b

    def pad_bias(b):
        return jnp.pad(b, (0, LANES - b.shape[0])).reshape(1, LANES).astype(jnp.float32)

    # conv1: (Cout,Cin,4,4) -> (4,4,Cin,Cout) -> (16*Cin, 128)   [im2col order]
    w1, b1 = fold(params["c1"])
    w1 = jnp.transpose(w1, (2, 3, 1, 0)).reshape(16 * input_c, hidden_size)
    w1 = jnp.pad(w1, ((0, 0), (0, LANES - hidden_size))).astype(jnp.bfloat16)

    def pack_mid(p):
        w, b = fold(p)
        w = jnp.transpose(w, (2, 3, 1, 0))               # (4,4,Cin,Cout)
        w = jnp.pad(w, ((0, 0), (0, 0),
                        (0, LANES - w.shape[2]), (0, LANES - w.shape[3])))
        return w.reshape(16, LANES, LANES).astype(jnp.bfloat16), pad_bias(b)

    w2, b2 = pack_mid(params["c2"])
    w3, b3 = pack_mid(params["c3"])

    oh3, ow3 = plan["oh3"], plan["ow3"]
    # torch flattens (C,H,W); kernel features are compact (H,W,C): permute fc1.
    fc1 = params["fc1_w"].reshape(256, hidden_size, oh3, ow3)
    fc1 = jnp.transpose(fc1, (0, 2, 3, 1)).reshape(256, oh3 * ow3 * hidden_size)
    fc1 = fc1.T.astype(jnp.bfloat16)                     # (F, 256), F compact
    fc2 = jnp.pad(params["fc2_w"].T,
                  ((0, 0), (0, LANES - output_c))).astype(jnp.bfloat16)
    return {
        "w1": w1, "b1": pad_bias(b1),
        "w2": w2, "b2": b2,
        "w3": w3, "b3": b3,
        "fc1_w": fc1,
        "fc1_b": params["fc1_b"].reshape(1, 256).astype(jnp.float32),
        "fc2_w": fc2,
        "fc2_b": jnp.pad(params["fc2_b"], (0, LANES - output_c)
                         ).reshape(1, LANES).astype(jnp.float32),
    }


# ----------------------------------------------------------------------------
# Forward pass
# ----------------------------------------------------------------------------
def cnn_forward(packed, obs, *, input_c, height, width, hidden_size, output_c):
    plan = _plan(height, width)
    oh1, ow1 = plan["oh1"], plan["ow1"]
    ohh1, wph1 = plan["ohh1"], plan["wph1"]
    oh3, ow3, hf3, wf3 = plan["oh3"], plan["ow3"], plan["hf3"], plan["wf3"]

    # obs_.view(-1, input_c, height, width) ; NHWC once, no channel padding.
    x = obs.reshape(-1, input_c, height, width).astype(jnp.float32)
    n = x.shape[0]
    x = jnp.transpose(x, (0, 2, 3, 1))                               # (N,H,W,Cin)

    # Layer-1 im2col in bf16 (K = 16*Cin), rows ordered (row-parity, row//2,
    # col-parity, col//2) so the kernel stores conv1's output already in the
    # parity-split layout conv2 reads with contiguous slices.
    pats = [x[:, di:di + 2 * oh1:2, dj:dj + 2 * ow1:2, :]
            for di in range(4) for dj in range(4)]
    xi = jnp.stack(pats, axis=3).reshape(n, oh1, ow1, 16 * input_c)
    blocks = []
    for pi in range(2):
        for pj in range(2):
            blk = xi[:, pi::2, pj::2, :]
            blk = jnp.pad(blk, ((0, 0), (0, ohh1 - blk.shape[1]),
                                (0, wph1 - blk.shape[2]), (0, 0)))
            blocks.append(blk)
    x1 = jnp.stack([jnp.stack(blocks[0:2], axis=2),
                    jnp.stack(blocks[2:4], axis=2)], axis=1)         # (N,2,ohh1,2,wph1,K)
    x1 = x1.reshape(n, 4 * ohh1 * wph1, 16 * input_c).astype(jnp.bfloat16)

    conv_out = fused_cnn(x1, packed["w1"], packed["b1"], packed["w2"], packed["b2"],
                         packed["w3"], packed["b3"], plan=plan)

    # Keep the real stride-2 rows/cols and the real channels; flatten (H,W,C).
    feat = conv_out.reshape(n, hf3, wf3, LANES)[:, 0:2 * oh3:2, 0:2 * ow3:2,
                                                :hidden_size]
    feat = feat.reshape(n, oh3 * ow3 * hidden_size)

    tm = min(128, _round_up(n, 8))
    mpad = _round_up(n, tm)
    if mpad != n:
        feat = jnp.pad(feat, ((0, mpad - n), (0, 0)))
    y = mlp(feat, packed["fc1_w"], packed["fc1_b"],
            packed["fc2_w"], packed["fc2_b"], tm=tm)
    return y[:n, :output_c]                                          # .view(-1, output_c)


# ----------------------------------------------------------------------------
# Pure-JAX (XLA) reference with matching bf16-operand / f32-accum numerics
# ----------------------------------------------------------------------------
def cnn_reference(params, obs, *, input_c, height, width, output_c, eps=1e-5):
    x = obs.reshape(-1, input_c, height, width).astype(jnp.float32)
    for name in ("c1", "c2", "c3"):
        p = params[name]
        scale = p["gamma"] / jnp.sqrt(p["var"] + eps)
        w = (p["w"] * scale[:, None, None, None]).astype(jnp.bfloat16)
        b = (p["b"] - p["mean"]) * scale + p["beta"]
        y = jax.lax.conv_general_dilated(
            x.astype(jnp.bfloat16), w, window_strides=(2, 2), padding="VALID",
            dimension_numbers=("NCHW", "OIHW", "NCHW"),
            preferred_element_type=jnp.float32)
        x = jnp.maximum(y + b[None, :, None, None], 0.0)
    xf = x.reshape(x.shape[0], -1)
    h = jnp.maximum(
        jnp.dot(xf.astype(jnp.bfloat16), params["fc1_w"].T.astype(jnp.bfloat16),
                preferred_element_type=jnp.float32) + params["fc1_b"], 0.0)
    y = jnp.dot(h.astype(jnp.bfloat16), params["fc2_w"].T.astype(jnp.bfloat16),
                preferred_element_type=jnp.float32) + params["fc2_b"]
    return y.reshape(-1, output_c)


# ----------------------------------------------------------------------------
if __name__ == "__main__":
    # Small shapes consistent with the module: batch=2, input_c=4 (= L*C),
    # spatial 32x32 (smallest sane size surviving three k=4/s=2 convs),
    # hidden=32, output_c=8.
    OUTPUT_C, INPUT_C, HEIGHT, WIDTH, HIDDEN = 8, 4, 32, 32, 32

    key = jax.random.PRNGKey(0)
    pkey, xkey = jax.random.split(key)
    params = init_params(pkey, OUTPUT_C, INPUT_C, HEIGHT, WIDTH, HIDDEN)
    packed = pack_params(params, input_c=INPUT_C, height=HEIGHT, width=WIDTH,
                         hidden_size=HIDDEN, output_c=OUTPUT_C)
    obs = jax.random.normal(xkey, (2, INPUT_C, HEIGHT, WIDTH), jnp.float32)

    fwd = jax.jit(functools.partial(cnn_forward, input_c=INPUT_C, height=HEIGHT,
                                    width=WIDTH, hidden_size=HIDDEN,
                                    output_c=OUTPUT_C))
    out = jax.block_until_ready(fwd(packed, obs))
    assert out.shape == (2, OUTPUT_C), out.shape

    ref = jax.block_until_ready(
        cnn_reference(params, obs, input_c=INPUT_C, height=HEIGHT,
                      width=WIDTH, output_c=OUTPUT_C))
    err = float(jnp.max(jnp.abs(out - ref)))
    assert err < 5e-2, f"max abs err vs XLA reference too large: {err}"
    print("KERNEL_OK")
</pallas_src>

<mosaic_0001>
module attributes {stable_mosaic.version = 11 : i64} {
  func.func @_fused_cnn_kernel(%arg0: i32, %arg1: memref<1x768x64xbf16, #tpu.memory_space<vmem>>, %arg2: memref<64x128xbf16, #tpu.memory_space<vmem>>, %arg3: memref<1x128xf32, #tpu.memory_space<vmem>>, %arg4: memref<16x128x128xbf16, #tpu.memory_space<vmem>>, %arg5: memref<1x128xf32, #tpu.memory_space<vmem>>, %arg6: memref<16x128x128xbf16, #tpu.memory_space<vmem>>, %arg7: memref<1x128xf32, #tpu.memory_space<vmem>>, %arg8: memref<1x24x128xbf16, #tpu.memory_space<vmem>>, %arg9: memref<2x8x2x24x128xf32, #tpu.memory_space<vmem>>, %arg10: memref<6x16x128xf32, #tpu.memory_space<vmem>>) attributes {dimension_semantics = [#tpu.dimension_semantics<parallel>], iteration_bounds = array<i64: 2>, scalar_prefetch = 0 : i64, scratch_operands = 2 : i64, tpu.core_type = #tpu.core_type<tc>, window_params = [{transform_indices = @transform_0, window_bounds = array<i64: 1, 768, 64>}, {pipeline_mode = #tpu.pipeline_mode<synchronous>, transform_indices = @transform_1, window_bounds = array<i64: 64, 128>}, {pipeline_mode = #tpu.pipeline_mode<synchronous>, transform_indices = @transform_2, window_bounds = array<i64: 1, 128>}, {pipeline_mode = #tpu.pipeline_mode<synchronous>, transform_indices = @transform_3, window_bounds = array<i64: 16, 128, 128>}, {pipeline_mode = #tpu.pipeline_mode<synchronous>, transform_indices = @transform_4, window_bounds = array<i64: 1, 128>}, {pipeline_mode = #tpu.pipeline_mode<synchronous>, transform_indices = @transform_5, window_bounds = array<i64: 16, 128, 128>}, {pipeline_mode = #tpu.pipeline_mode<synchronous>, transform_indices = @transform_6, window_bounds = array<i64: 1, 128>}, {transform_indices = @transform_7, window_bounds = array<i64: 1, 24, 128>}]} {
    %c0 = arith.constant 0 : index
    %c0_0 = arith.constant 0 : index
    %c0_1 = arith.constant 0 : index
    %0 = vector.load %arg1[%c0, %c0_0, %c0_1] : memref<1x768x64xbf16, #tpu.memory_space<vmem>>, vector<1x768x64xbf16>
    %1 = vector.shape_cast %0 : vector<1x768x64xbf16> to vector<768x64xbf16>
    %c0_2 = arith.constant 0 : index
    %c0_3 = arith.constant 0 : index
    %2 = vector.load %arg2[%c0_2, %c0_3] : memref<64x128xbf16, #tpu.memory_space<vmem>>, vector<64x128xbf16>
    %cst = arith.constant dense<0.000000e+00> : vector<768x128xf32>
    %3 = tpu.matmul %1, %2, %cst {dimension_numbers = #tpu.dot_dimension_numbers<[1], [0], [0], [1], [0, 0, 1, 1], [], []>} : vector<768x64xbf16>, vector<64x128xbf16>, vector<768x128xf32> -> vector<768x128xf32>
    %c0_4 = arith.constant 0 : index
    %c0_5 = arith.constant 0 : index
    %4 = vector.load %arg3[%c0_4, %c0_5] : memref<1x128xf32, #tpu.memory_space<vmem>>, vector<1x128xf32>
    %5 = vector.broadcast %4 : vector<1x128xf32> to vector<768x128xf32>
    %6 = arith.addf %3, %5 : vector<768x128xf32>
    %cst_6 = arith.constant 0.000000e+00 : f32
    %7 = vector.broadcast %cst_6 : f32 to vector<768x128xf32>
    %8 = arith.maximumf %6, %7 : vector<768x128xf32>
    %9 = vector.shape_cast %8 : vector<768x128xf32> to vector<2x8x2x24x128xf32>
    %c0_7 = arith.constant 0 : index
    %c0_8 = arith.constant 0 : index
    %c0_9 = arith.constant 0 : index
    %c0_10 = arith.constant 0 : index
    %c0_11 = arith.constant 0 : index
    %10 = vector.load %arg9[%c0_7, %c0_8, %c0_9, %c0_10, %c0_11] : memref<2x8x2x24x128xf32, #tpu.memory_space<vmem>>, vector<2x8x2x24x128xf32>
    tpu.vector_store %arg9[%c0_7, %c0_8, %c0_9, %c0_10, %c0_11], %9 {strides = array<i32>} : memref<2x8x2x24x128xf32, #tpu.memory_space<vmem>>, vector<2x8x2x24x128xf32>,
    %cst_12 = arith.constant 0.000000e+00 : f32
    %11 = vector.broadcast %cst_12 : f32 to vector<96x128xf32>
    %c0_13 = arith.constant 0 : index
    %c0_14 = arith.constant 0 : index
    %c0_15 = arith.constant 0 : index
    %c0_16 = arith.constant 0 : index
    %c0_17 = arith.constant 0 : index
    %12 = vector.load %arg9[%c0_13, %c0_14, %c0_15, %c0_16, %c0_17] : memref<2x8x2x24x128xf32, #tpu.memory_space<vmem>>, vector<1x6x1x16x128xf32>
    %13 = vector.shape_cast %12 : vector<1x6x1x16x128xf32> to vector<6x16x128xf32>
    %14 = vector.shape_cast %13 : vector<6x16x128xf32> to vector<96x128xf32>
    %15 = arith.truncf %14 : vector<96x128xf32> to vector<96x128xbf16>
    %c0_18 = arith.constant 0 : index
    %c0_19 = arith.constant 0 : index
    %c0_20 = arith.constant 0 : index
    %16 = vector.load %arg4[%c0_18, %c0_19, %c0_20] : memref<16x128x128xbf16, #tpu.memory_space<vmem>>, vector<1x128x128xbf16>
    %17 = vector.shape_cast %16 : vector<1x128x128xbf16> to vector<128x128xbf16>
    %cst_21 = arith.constant dense<0.000000e+00> : vector<96x128xf32>
    %18 = tpu.matmul %15, %17, %cst_21 {dimension_numbers = #tpu.dot_dimension_numbers<[1], [0], [0], [1], [0, 0, 1, 1], [], []>} : vector<96x128xbf16>, vector<128x128xbf16>, vector<96x128xf32> -> vector<96x128xf32>
    %19 = arith.addf %11, %18 : vector<96x128xf32>
    %c0_22 = arith.constant 0 : index
    %c0_23 = arith.constant 0 : index
    %c1 = arith.constant 1 : index
    %c0_24 = arith.constant 0 : index
    %c0_25 = arith.constant 0 : index
    %20 = vector.load %arg9[%c0_22, %c0_23, %c1, %c0_24, %c0_25] : memref<2x8x2x24x128xf32, #tpu.memory_space<vmem>>, vector<1x6x1x16x128xf32>
    %21 = vector.shape_cast %20 : vector<1x6x1x16x128xf32> to vector<6x16x128xf32>
    %22 = vector.shape_cast %21 : vector<6x16x128xf32> to vector<96x128xf32>
    %23 = arith.truncf %22 : vector<96x128xf32> to vector<96x128xbf16>
    %c1_26 = arith.constant 1 : index
    %c0_27 = arith.constant 0 : index
    %c0_28 = arith.constant 0 : index
    %24 = vector.load %arg4[%c1_26, %c0_27, %c0_28] : memref<16x128x128xbf16, #tpu.memory_space<vmem>>, vector<1x128x128xbf16>
    %25 = vector.shape_cast %24 : vector<1x128x128xbf16> to vector<128x128xbf16>
    %cst_29 = arith.constant dense<0.000000e+00> : vector<96x128xf32>
    %26 = tpu.matmul %23, %25, %cst_29 {dimension_numbers = #tpu.dot_dimension_numbers<[1], [0], [0], [1], [0, 0, 1, 1], [], []>} : vector<96x128xbf16>, vector<128x128xbf16>, vector<96x128xf32> -> vector<96x128xf32>
    %27 = arith.addf %19, %26 : vector<96x128xf32>
    %c0_30 = arith.constant 0 : index
    %c0_31 = arith.constant 0 : index
    %c0_32 = arith.constant 0 : index
    %c1_33 = arith.constant 1 : index
    %c0_34 = arith.constant 0 : index
    %28 = vector.load %arg9[%c0_30, %c0_31, %c0_32, %c1_33, %c0_34] : memref<2x8x2x24x128xf32, #tpu.memory_space<vmem>>, vector<1x6x1x16x128xf32>
    %29 = vector.shape_cast %28 : vector<1x6x1x16x128xf32> to vector<6x16x128xf32>
    %30 = vector.shape_cast %29 : vector<6x16x128xf32> to vector<96x128xf32>
    %31 = arith.truncf %30 : vector<96x128xf32> to vector<96x128xbf16>
    %c2 = arith.constant 2 : index
    %c0_35 = arith.constant 0 : index
    %c0_36 = arith.constant 0 : index
    %32 = vector.load %arg4[%c2, %c0_35, %c0_36] : memref<16x128x128xbf16, #tpu.memory_space<vmem>>, vector<1x128x128xbf16>
    %33 = vector.shape_cast %32 : vector<1x128x128xbf16> to vector<128x128xbf16>
    %cst_37 = arith.constant dense<0.000000e+00> : vector<96x128xf32>
    %34 = tpu.matmul %31, %33, %cst_37 {dimension_numbers = #tpu.dot_dimension_numbers<[1], [0], [0], [1], [0, 0, 1, 1], [], []>} : vector<96x128xbf16>, vector<128x128xbf16>, vector<96x128xf32> -> vector<96x128xf32>
    %35 = arith.addf %27, %34 : vector<96x128xf32>
    %c0_38 = arith.constant 0 : index
    %c0_39 = arith.constant 0 : index
    %c1_40 = arith.constant 1 : index
    %c1_41 = arith.constant 1 : index
    %c0_42 = arith.constant 0 : index
    %36 = vector.load %arg9[%c0_38, %c0_39, %c1_40, %c1_41, %c0_42] : memref<2x8x2x24x128xf32, #tpu.memory_space<vmem>>, vector<1x6x1x16x128xf32>
    %37 = vector.shape_cast %36 : vector<1x6x1x16x128xf32> to vector<6x16x128xf32>
    %38 = vector.shape_cast %37 : vector<6x16x128xf32> to vector<96x128xf32>
    %39 = arith.truncf %38 : vector<96x128xf32> to vector<96x128xbf16>
    %c3 = arith.constant 3 : index
    %c0_43 = arith.constant 0 : index
    %c0_44 = arith.constant 0 : index
    %40 = vector.load %arg4[%c3, %c0_43, %c0_44] : memref<16x128x128xbf16, #tpu.memory_space<vmem>>, vector<1x128x128xbf16>
    %41 = vector.shape_cast %40 : vector<1x128x128xbf16> to vector<128x128xbf16>
    %cst_45 = arith.constant dense<0.000000e+00> : vector<96x128xf32>
    %42 = tpu.matmul %39, %41, %cst_45 {dimension_numbers = #tpu.dot_dimension_numbers<[1], [0], [0], [1], [0, 0, 1, 1], [], []>} : vector<96x128xbf16>, vector<128x128xbf16>, vector<96x128xf32> -> vector<96x128xf32>
    %43 = arith.addf %35, %42 : vector<96x128xf32>
    %c1_46 = arith.constant 1 : index
    %c0_47 = arith.constant 0 : index
    %c0_48 = arith.constant 0 : index
    %c0_49 = arith.constant 0 : index
    %c0_50 = arith.constant 0 : index
    %44 = vector.load %arg9[%c1_46, %c0_47, %c0_48, %c0_49, %c0_50] : memref<2x8x2x24x128xf32, #tpu.memory_space<vmem>>, vector<1x6x1x16x128xf32>
    %45 = vector.shape_cast %44 : vector<1x6x1x16x128xf32> to vector<6x16x128xf32>
    %46 = vector.shape_cast %45 : vector<6x16x128xf32> to vector<96x128xf32>
    %47 = arith.truncf %46 : vector<96x128xf32> to vector<96x128xbf16>
    %c4 = arith.constant 4 : index
    %c0_51 = arith.constant 0 : index
    %c0_52 = arith.constant 0 : index
    %48 = vector.load %arg4[%c4, %c0_51, %c0_52] : memref<16x128x128xbf16, #tpu.memory_space<vmem>>, vector<1x128x128xbf16>
    %49 = vector.shape_cast %48 : vector<1x128x128xbf16> to vector<128x128xbf16>
    %cst_53 = arith.constant dense<0.000000e+00> : vector<96x128xf32>
    %50 = tpu.matmul %47, %49, %cst_53 {dimension_numbers = #tpu.dot_dimension_numbers<[1], [0], [0], [1], [0, 0, 1, 1], [], []>} : vector<96x128xbf16>, vector<128x128xbf16>, vector<96x128xf32> -> vector<96x128xf32>
    %51 = arith.addf %43, %50 : vector<96x128xf32>
    %c1_54 = arith.constant 1 : index
    %c0_55 = arith.constant 0 : index
    %c1_56 = arith.constant 1 : index
    %c0_57 = arith.constant 0 : index
    %c0_58 = arith.constant 0 : index
    %52 = vector.load %arg9[%c1_54, %c0_55, %c1_56, %c0_57, %c0_58] : memref<2x8x2x24x128xf32, #tpu.memory_space<vmem>>, vector<1x6x1x16x128xf32>
    %53 = vector.shape_cast %52 : vector<1x6x1x16x128xf32> to vector<6x16x128xf32>
    %54 = vector.shape_cast %53 : vector<6x16x128xf32> to vector<96x128xf32>
    %55 = arith.truncf %54 : vector<96x128xf32> to vector<96x128xbf16>
    %c5 = arith.constant 5 : index
    %c0_59 = arith.constant 0 : index
    %c0_60 = arith.constant 0 : index
    %56 = vector.load %arg4[%c5, %c0_59, %c0_60] : memref<16x128x128xbf16, #tpu.memory_space<vmem>>, vector<1x128x128xbf16>
    %57 = vector.shape_cast %56 : vector<1x128x128xbf16> to vector<128x128xbf16>
    %cst_61 = arith.constant dense<0.000000e+00> : vector<96x128xf32>
    %58 = tpu.matmul %55, %57, %cst_61 {dimension_numbers = #tpu.dot_dimension_numbers<[1], [0], [0], [1], [0, 0, 1, 1], [], []>} : vector<96x128xbf16>, vector<128x128xbf16>, vector<96x128xf32> -> vector<96x128xf32>
    %59 = arith.addf %51, %58 : vector<96x128xf32>
    %c1_62 = arith.constant 1 : index
    %c0_63 = arith.constant 0 : index
    %c0_64 = arith.constant 0 : index
    %c1_65 = arith.constant 1 : index
    %c0_66 = arith.constant 0 : index
    %60 = vector.load %arg9[%c1_62, %c0_63, %c0_64, %c1_65, %c0_66] : memref<2x8x2x24x128xf32, #tpu.memory_space<vmem>>, vector<1x6x1x16x128xf32>
    %61 = vector.shape_cast %60 : vector<1x6x1x16x128xf32> to vector<6x16x128xf32>
    %62 = vector.shape_cast %61 : vector<6x16x128xf32> to vector<96x128xf32>
    %63 = arith.truncf %62 : vector<96x128xf32> to vector<96x128xbf16>
    %c6 = arith.constant 6 : index
    %c0_67 = arith.constant 0 : index
    %c0_68 = arith.constant 0 : index
    %64 = vector.load %arg4[%c6, %c0_67, %c0_68] : memref<16x128x128xbf16, #tpu.memory_space<vmem>>, vector<1x128x128xbf16>
    %65 = vector.shape_cast %64 : vector<1x128x128xbf16> to vector<128x128xbf16>
    %cst_69 = arith.constant dense<0.000000e+00> : vector<96x128xf32>
    %66 = tpu.matmul %63, %65, %cst_69 {dimension_numbers = #tpu.dot_dimension_numbers<[1], [0], [0], [1], [0, 0, 1, 1], [], []>} : vector<96x128xbf16>, vector<128x128xbf16>, vector<96x128xf32> -> vector<96x128xf32>
    %67 = arith.addf %59, %66 : vector<96x128xf32>
    %c1_70 = arith.constant 1 : index
    %c0_71 = arith.constant 0 : index
    %c1_72 = arith.constant 1 : index
    %c1_73 = arith.constant 1 : index
    %c0_74 = arith.constant 0 : index
    %68 = vector.load %arg9[%c1_70, %c0_71, %c1_72, %c1_73, %c0_74] : memref<2x8x2x24x128xf32, #tpu.memory_space<vmem>>, vector<1x6x1x16x128xf32>
    %69 = vector.shape_cast %68 : vector<1x6x1x16x128xf32> to vector<6x16x128xf32>
    %70 = vector.shape_cast %69 : vector<6x16x128xf32> to vector<96x128xf32>
    %71 = arith.truncf %70 : vector<96x128xf32> to vector<96x128xbf16>
    %c7 = arith.constant 7 : index
    %c0_75 = arith.constant 0 : index
    %c0_76 = arith.constant 0 : index
    %72 = vector.load %arg4[%c7, %c0_75, %c0_76] : memref<16x128x128xbf16, #tpu.memory_space<vmem>>, vector<1x128x128xbf16>
    %73 = vector.shape_cast %72 : vector<1x128x128xbf16> to vector<128x128xbf16>
    %cst_77 = arith.constant dense<0.000000e+00> : vector<96x128xf32>
    %74 = tpu.matmul %71, %73, %cst_77 {dimension_numbers = #tpu.dot_dimension_numbers<[1], [0], [0], [1], [0, 0, 1, 1], [], []>} : vector<96x128xbf16>, vector<128x128xbf16>, vector<96x128xf32> -> vector<96x128xf32>
    %75 = arith.addf %67, %74 : vector<96x128xf32>
    %c0_78 = arith.constant 0 : index
    %c1_79 = arith.constant 1 : index
    %c0_80 = arith.constant 0 : index
    %c0_81 = arith.constant 0 : index
    %c0_82 = arith.constant 0 : index
    %76 = vector.load %arg9[%c0_78, %c1_79, %c0_80, %c0_81, %c0_82] : memref<2x8x2x24x128xf32, #tpu.memory_space<vmem>>, vector<1x6x1x16x128xf32>
    %77 = vector.shape_cast %76 : vector<1x6x1x16x128xf32> to vector<6x16x128xf32>
    %78 = vector.shape_cast %77 : vector<6x16x128xf32> to vector<96x128xf32>
    %79 = arith.truncf %78 : vector<96x128xf32> to vector<96x128xbf16>
    %c8 = arith.constant 8 : index
    %c0_83 = arith.constant 0 : index
    %c0_84 = arith.constant 0 : index
    %80 = vector.load %arg4[%c8, %c0_83, %c0_84] : memref<16x128x128xbf16, #tpu.memory_space<vmem>>, vector<1x128x128xbf16>
    %81 = vector.shape_cast %80 : vector<1x128x128xbf16> to vector<128x128xbf16>
    %cst_85 = arith.constant dense<0.000000e+00> : vector<96x128xf32>
    %82 = tpu.matmul %79, %81, %cst_85 {dimension_numbers = #tpu.dot_dimension_numbers<[1], [0], [0], [1], [0, 0, 1, 1], [], []>} : vector<96x128xbf16>, vector<128x128xbf16>, vector<96x128xf32> -> vector<96x128xf32>
    %83 = arith.addf %75, %82 : vector<96x128xf32>
    %c0_86 = arith.constant 0 : index
    %c1_87 = arith.constant 1 : index
    %c1_88 = arith.constant 1 : index
    %c0_89 = arith.constant 0 : index
    %c0_90 = arith.constant 0 : index
    %84 = vector.load %arg9[%c0_86, %c1_87, %c1_88, %c0_89, %c0_90] : memref<2x8x2x24x128xf32, #tpu.memory_space<vmem>>, vector<1x6x1x16x128xf32>
    %85 = vector.shape_cast %84 : vector<1x6x1x16x128xf32> to vector<6x16x128xf32>
    %86 = vector.shape_cast %85 : vector<6x16x128xf32> to vector<96x128xf32>
    %87 = arith.truncf %86 : vector<96x128xf32> to vector<96x128xbf16>
    %c9 = arith.constant 9 : index
    %c0_91 = arith.constant 0 : index
    %c0_92 = arith.constant 0 : index
    %88 = vector.load %arg4[%c9, %c0_91, %c0_92] : memref<16x128x128xbf16, #tpu.memory_space<vmem>>, vector<1x128x128xbf16>
    %89 = vector.shape_cast %88 : vector<1x128x128xbf16> to vector<128x128xbf16>
    %cst_93 = arith.constant dense<0.000000e+00> : vector<96x128xf32>
    %90 = tpu.matmul %87, %89, %cst_93 {dimension_numbers = #tpu.dot_dimension_numbers<[1], [0], [0], [1], [0, 0, 1, 1], [], []>} : vector<96x128xbf16>, vector<128x128xbf16>, vector<96x128xf32> -> vector<96x128xf32>
    %91 = arith.addf %83, %90 : vector<96x128xf32>
    %c0_94 = arith.constant 0 : index
    %c1_95 = arith.constant 1 : index
    %c0_96 = arith.constant 0 : index
    %c1_97 = arith.constant 1 : index
    %c0_98 = arith.constant 0 : index
    %92 = vector.load %arg9[%c0_94, %c1_95, %c0_96, %c1_97, %c0_98] : memref<2x8x2x24x128xf32, #tpu.memory_space<vmem>>, vector<1x6x1x16x128xf32>
    %93 = vector.shape_cast %92 : vector<1x6x1x16x128xf32> to vector<6x16x128xf32>
    %94 = vector.shape_cast %93 : vector<6x16x128xf32> to vector<96x128xf32>
    %95 = arith.truncf %94 : vector<96x128xf32> to vector<96x128xbf16>
    %c10 = arith.constant 10 : index
    %c0_99 = arith.constant 0 : index
    %c0_100 = arith.constant 0 : index
    %96 = vector.load %arg4[%c10, %c0_99, %c0_100] : memref<16x128x128xbf16, #tpu.memory_space<vmem>>, vector<1x128x128xbf16>
    %97 = vector.shape_cast %96 : vector<1x128x128xbf16> to vector<128x128xbf16>
    %cst_101 = arith.constant dense<0.000000e+00> : vector<96x128xf32>
    %98 = tpu.matmul %95, %97, %cst_101 {dimension_numbers = #tpu.dot_dimension_numbers<[1], [0], [0], [1], [0, 0, 1, 1], [], []>} : vector<96x128xbf16>, vector<128x128xbf16>, vector<96x128xf32> -> vector<96x128xf32>
    %99 = arith.addf %91, %98 : vector<96x128xf32>
    %c0_102 = arith.constant 0 : index
    %c1_103 = arith.constant 1 : index
    %c1_104 = arith.constant 1 : index
    %c1_105 = arith.constant 1 : index
    %c0_106 = arith.constant 0 : index
    %100 = vector.load %arg9[%c0_102, %c1_103, %c1_104, %c1_105, %c0_106] : memref<2x8x2x24x128xf32, #tpu.memory_space<vmem>>, vector<1x6x1x16x128xf32>
    %101 = vector.shape_cast %100 : vector<1x6x1x16x128xf32> to vector<6x16x128xf32>
    %102 = vector.shape_cast %101 : vector<6x16x128xf32> to vector<96x128xf32>
    %103 = arith.truncf %102 : vector<96x128xf32> to vector<96x128xbf16>
    %c11 = arith.constant 11 : index
    %c0_107 = arith.constant 0 : index
    %c0_108 = arith.constant 0 : index
    %104 = vector.load %arg4[%c11, %c0_107, %c0_108] : memref<16x128x128xbf16, #tpu.memory_space<vmem>>, vector<1x128x128xbf16>
    %105 = vector.shape_cast %104 : vector<1x128x128xbf16> to vector<128x128xbf16>
    %cst_109 = arith.constant dense<0.000000e+00> : vector<96x128xf32>
    %106 = tpu.matmul %103, %105, %cst_109 {dimension_numbers = #tpu.dot_dimension_numbers<[1], [0], [0], [1], [0, 0, 1, 1], [], []>} : vector<96x128xbf16>, vector<128x128xbf16>, vector<96x128xf32> -> vector<96x128xf32>
    %107 = arith.addf %99, %106 : vector<96x128xf32>
    %c1_110 = arith.constant 1 : index
    %c1_111 = arith.constant 1 : index
    %c0_112 = arith.constant 0 : index
    %c0_113 = arith.constant 0 : index
    %c0_114 = arith.constant 0 : index
    %108 = vector.load %arg9[%c1_110, %c1_111, %c0_112, %c0_113, %c0_114] : memref<2x8x2x24x128xf32, #tpu.memory_space<vmem>>, vector<1x6x1x16x128xf32>
    %109 = vector.shape_cast %108 : vector<1x6x1x16x128xf32> to vector<6x16x128xf32>
    %110 = vector.shape_cast %109 : vector<6x16x128xf32> to vector<96x128xf32>
    %111 = arith.truncf %110 : vector<96x128xf32> to vector<96x128xbf16>
    %c12 = arith.constant 12 : index
    %c0_115 = arith.constant 0 : index
    %c0_116 = arith.constant 0 : index
    %112 = vector.load %arg4[%c12, %c0_115, %c0_116] : memref<16x128x128xbf16, #tpu.memory_space<vmem>>, vector<1x128x128xbf16>
    %113 = vector.shape_cast %112 : vector<1x128x128xbf16> to vector<128x128xbf16>
    %cst_117 = arith.constant dense<0.000000e+00> : vector<96x128xf32>
    %114 = tpu.matmul %111, %113, %cst_117 {dimension_numbers = #tpu.dot_dimension_numbers<[1], [0], [0], [1], [0, 0, 1, 1], [], []>} : vector<96x128xbf16>, vector<128x128xbf16>, vector<96x128xf32> -> vector<96x128xf32>
    %115 = arith.addf %107, %114 : vector<96x128xf32>
    %c1_118 = arith.constant 1 : index
    %c1_119 = arith.constant 1 : index
    %c1_120 = arith.constant 1 : index
    %c0_121 = arith.constant 0 : index
    %c0_122 = arith.constant 0 : index
    %116 = vector.load %arg9[%c1_118, %c1_119, %c1_120, %c0_121, %c0_122] : memref<2x8x2x24x128xf32, #tpu.memory_space<vmem>>, vector<1x6x1x16x128xf32>
    %117 = vector.shape_cast %116 : vector<1x6x1x16x128xf32> to vector<6x16x128xf32>
    %118 = vector.shape_cast %117 : vector<6x16x128xf32> to vector<96x128xf32>
    %119 = arith.truncf %118 : vector<96x128xf32> to vector<96x128xbf16>
    %c13 = arith.constant 13 : index
    %c0_123 = arith.constant 0 : index
    %c0_124 = arith.constant 0 : index
    %120 = vector.load %arg4[%c13, %c0_123, %c0_124] : memref<16x128x128xbf16, #tpu.memory_space<vmem>>, vector<1x128x128xbf16>
    %121 = vector.shape_cast %120 : vector<1x128x128xbf16> to vector<128x128xbf16>
    %cst_125 = arith.constant dense<0.000000e+00> : vector<96x128xf32>
    %122 = tpu.matmul %119, %121, %cst_125 {dimension_numbers = #tpu.dot_dimension_numbers<[1], [0], [0], [1], [0, 0, 1, 1], [], []>} : vector<96x128xbf16>, vector<128x128xbf16>, vector<96x128xf32> -> vector<96x128xf32>
    %123 = arith.addf %115, %122 : vector<96x128xf32>
    %c1_126 = arith.constant 1 : index
    %c1_127 = arith.constant 1 : index
    %c0_128 = arith.constant 0 : index
    %c1_129 = arith.constant 1 : index
    %c0_130 = arith.constant 0 : index
    %124 = vector.load %arg9[%c1_126, %c1_127, %c0_128, %c1_129, %c0_130] : memref<2x8x2x24x128xf32, #tpu.memory_space<vmem>>, vector<1x6x1x16x128xf32>
    %125 = vector.shape_cast %124 : vector<1x6x1x16x128xf32> to vector<6x16x128xf32>
    %126 = vector.shape_cast %125 : vector<6x16x128xf32> to vector<96x128xf32>
    %127 = arith.truncf %126 : vector<96x128xf32> to vector<96x128xbf16>
    %c14 = arith.constant 14 : index
    %c0_131 = arith.constant 0 : index
    %c0_132 = arith.constant 0 : index
    %128 = vector.load %arg4[%c14, %c0_131, %c0_132] : memref<16x128x128xbf16, #tpu.memory_space<vmem>>, vector<1x128x128xbf16>
    %129 = vector.shape_cast %128 : vector<1x128x128xbf16> to vector<128x128xbf16>
    %cst_133 = arith.constant dense<0.000000e+00> : vector<96x128xf32>
    %130 = tpu.matmul %127, %129, %cst_133 {dimension_numbers = #tpu.dot_dimension_numbers<[1], [0], [0], [1], [0, 0, 1, 1], [], []>} : vector<96x128xbf16>, vector<128x128xbf16>, vector<96x128xf32> -> vector<96x128xf32>
    %131 = arith.addf %123, %130 : vector<96x128xf32>
    %c1_134 = arith.constant 1 : index
    %c1_135 = arith.constant 1 : index
    %c1_136 = arith.constant 1 : index
    %c1_137 = arith.constant 1 : index
    %c0_138 = arith.constant 0 : index
    %132 = vector.load %arg9[%c1_134, %c1_135, %c1_136, %c1_137, %c0_138] : memref<2x8x2x24x128xf32, #tpu.memory_space<vmem>>, vector<1x6x1x16x128xf32>
    %133 = vector.shape_cast %132 : vector<1x6x1x16x128xf32> to vector<6x16x128xf32>
    %134 = vector.shape_cast %133 : vector<6x16x128xf32> to vector<96x128xf32>
    %135 = arith.truncf %134 : vector<96x128xf32> to vector<96x128xbf16>
    %c15 = arith.constant 15 : index
    %c0_139 = arith.constant 0 : index
    %c0_140 = arith.constant 0 : index
    %136 = vector.load %arg4[%c15, %c0_139, %c0_140] : memref<16x128x128xbf16, #tpu.memory_space<vmem>>, vector<1x128x128xbf16>
    %137 = vector.shape_cast %136 : vector<1x128x128xbf16> to vector<128x128xbf16>
    %cst_141 = arith.constant dense<0.000000e+00> : vector<96x128xf32>
    %138 = tpu.matmul %135, %137, %cst_141 {dimension_numbers = #tpu.dot_dimension_numbers<[1], [0], [0], [1], [0, 0, 1, 1], [], []>} : vector<96x128xbf16>, vector<128x128xbf16>, vector<96x128xf32> -> vector<96x128xf32>
    %139 = arith.addf %131, %138 : vector<96x128xf32>
    %c0_142 = arith.constant 0 : index
    %c0_143 = arith.constant 0 : index
    %140 = vector.load %arg5[%c0_142, %c0_143] : memref<1x128xf32, #tpu.memory_space<vmem>>, vector<1x128xf32>
    %141 = vector.broadcast %140 : vector<1x128xf32> to vector<96x128xf32>
    %142 = arith.addf %139, %141 : vector<96x128xf32>
    %cst_144 = arith.constant 0.000000e+00 : f32
    %143 = vector.broadcast %cst_144 : f32 to vector<96x128xf32>
    %144 = arith.maximumf %142, %143 : vector<96x128xf32>
    %145 = vector.shape_cast %144 : vector<96x128xf32> to vector<6x16x128xf32>
    %c0_145 = arith.constant 0 : index
    %c0_146 = arith.constant 0 : index
    %c0_147 = arith.constant 0 : index
    %146 = vector.load %arg10[%c0_145, %c0_146, %c0_147] : memref<6x16x128xf32, #tpu.memory_space<vmem>>, vector<6x16x128xf32>
    tpu.vector_store %arg10[%c0_145, %c0_146, %c0_147], %145 {strides = array<i32>} : memref<6x16x128xf32, #tpu.memory_space<vmem>>, vector<6x16x128xf32>,
    %cst_148 = arith.constant 0.000000e+00 : f32
    %147 = vector.broadcast %cst_148 : f32 to vector<24x128xf32>
    %c0_149 = arith.constant 0 : index
    %c0_150 = arith.constant 0 : index
    %c0_151 = arith.constant 0 : index
    %148 = vector.load %arg10[%c0_149, %c0_150, %c0_151] : memref<6x16x128xf32, #tpu.memory_space<vmem>>, vector<3x8x128xf32>
    %149 = vector.shape_cast %148 : vector<3x8x128xf32> to vector<24x128xf32>
    %150 = arith.truncf %149 : vector<24x128xf32> to vector<24x128xbf16>
    %c0_152 = arith.constant 0 : index
    %c0_153 = arith.constant 0 : index
    %c0_154 = arith.constant 0 : index
    %151 = vector.load %arg6[%c0_152, %c0_153, %c0_154] : memref<16x128x128xbf16, #tpu.memory_space<vmem>>, vector<1x128x128xbf16>
    %152 = vector.shape_cast %151 : vector<1x128x128xbf16> to vector<128x128xbf16>
    %cst_155 = arith.constant dense<0.000000e+00> : vector<24x128xf32>
    %153 = tpu.matmul %150, %152, %cst_155 {dimension_numbers = #tpu.dot_dimension_numbers<[1], [0], [0], [1], [0, 0, 1, 1], [], []>} : vector<24x128xbf16>, vector<128x128xbf16>, vector<24x128xf32> -> vector<24x128xf32>
    %154 = arith.addf %147, %153 : vector<24x128xf32>
    %c0_156 = arith.constant 0 : index
    %c1_157 = arith.constant 1 : index
    %c0_158 = arith.constant 0 : index
    %155 = vector.load %arg10[%c0_156, %c1_157, %c0_158] : memref<6x16x128xf32, #tpu.memory_space<vmem>>, vector<3x8x128xf32>
    %156 = vector.shape_cast %155 : vector<3x8x128xf32> to vector<24x128xf32>
    %157 = arith.truncf %156 : vector<24x128xf32> to vector<24x128xbf16>
    %c1_159 = arith.constant 1 : index
    %c0_160 = arith.constant 0 : index
    %c0_161 = arith.constant 0 : index
    %158 = vector.load %arg6[%c1_159, %c0_160, %c0_161] : memref<16x128x128xbf16, #tpu.memory_space<vmem>>, vector<1x128x128xbf16>
    %159 = vector.shape_cast %158 : vector<1x128x128xbf16> to vector<128x128xbf16>
    %cst_162 = arith.constant dense<0.000000e+00> : vector<24x128xf32>
    %160 = tpu.matmul %157, %159, %cst_162 {dimension_numbers = #tpu.dot_dimension_numbers<[1], [0], [0], [1], [0, 0, 1, 1], [], []>} : vector<24x128xbf16>, vector<128x128xbf16>, vector<24x128xf32> -> vector<24x128xf32>
    %161 = arith.addf %154, %160 : vector<24x128xf32>
    %c0_163 = arith.constant 0 : index
    %c2_164 = arith.constant 2 : index
    %c0_165 = arith.constant 0 : index
    %162 = vector.load %arg10[%c0_163, %c2_164, %c0_165] : memref<6x16x128xf32, #tpu.memory_space<vmem>>, vector<3x8x128xf32>
    %163 = vector.shape_cast %162 : vector<3x8x128xf32> to vector<24x128xf32>
    %164 = arith.truncf %163 : vector<24x128xf32> to vector<24x128xbf16>
    %c2_166 = arith.constant 2 : index
    %c0_167 = arith.constant 0 : index
    %c0_168 = arith.constant 0 : index
    %165 = vector.load %arg6[%c2_166, %c0_167, %c0_168] : memref<16x128x128xbf16, #tpu.memory_space<vmem>>, vector<1x128x128xbf16>
    %166 = vector.shape_cast %165 : vector<1x128x128xbf16> to vector<128x128xbf16>
    %cst_169 = arith.constant dense<0.000000e+00> : vector<24x128xf32>
    %167 = tpu.matmul %164, %166, %cst_169 {dimension_numbers = #tpu.dot_dimension_numbers<[1], [0], [0], [1], [0, 0, 1, 1], [], []>} : vector<24x128xbf16>, vector<128x128xbf16>, vector<24x128xf32> -> vector<24x128xf32>
    %168 = arith.addf %161, %167 : vector<24x128xf32>
    %c0_170 = arith.constant 0 : index
    %c3_171 = arith.constant 3 : index
    %c0_172 = arith.constant 0 : index
    %169 = vector.load %arg10[%c0_170, %c3_171, %c0_172] : memref<6x16x128xf32, #tpu.memory_space<vmem>>, vector<3x8x128xf32>
    %170 = vector.shape_cast %169 : vector<3x8x128xf32> to vector<24x128xf32>
    %171 = arith.truncf %170 : vector<24x128xf32> to vector<24x128xbf16>
    %c3_173 = arith.constant 3 : index
    %c0_174 = arith.constant 0 : index
    %c0_175 = arith.constant 0 : index
    %172 = vector.load %arg6[%c3_173, %c0_174, %c0_175] : memref<16x128x128xbf16, #tpu.memory_space<vmem>>, vector<1x128x128xbf16>
    %173 = vector.shape_cast %172 : vector<1x128x128xbf16> to vector<128x128xbf16>
    %cst_176 = arith.constant dense<0.000000e+00> : vector<24x128xf32>
    %174 = tpu.matmul %171, %173, %cst_176 {dimension_numbers = #tpu.dot_dimension_numbers<[1], [0], [0], [1], [0, 0, 1, 1], [], []>} : vector<24x128xbf16>, vector<128x128xbf16>, vector<24x128xf32> -> vector<24x128xf32>
    %175 = arith.addf %168, %174 : vector<24x128xf32>
    %c1_177 = arith.constant 1 : index
    %c0_178 = arith.constant 0 : index
    %c0_179 = arith.constant 0 : index
    %176 = vector.load %arg10[%c1_177, %c0_178, %c0_179] : memref<6x16x128xf32, #tpu.memory_space<vmem>>, vector<3x8x128xf32>
    %177 = vector.shape_cast %176 : vector<3x8x128xf32> to vector<24x128xf32>
    %178 = arith.truncf %177 : vector<24x128xf32> to vector<24x128xbf16>
    %c4_180 = arith.constant 4 : index
    %c0_181 = arith.constant 0 : index
    %c0_182 = arith.constant 0 : index
    %179 = vector.load %arg6[%c4_180, %c0_181, %c0_182] : memref<16x128x128xbf16, #tpu.memory_space<vmem>>, vector<1x128x128xbf16>
    %180 = vector.shape_cast %179 : vector<1x128x128xbf16> to vector<128x128xbf16>
    %cst_183 = arith.constant dense<0.000000e+00> : vector<24x128xf32>
    %181 = tpu.matmul %178, %180, %cst_183 {dimension_numbers = #tpu.dot_dimension_numbers<[1], [0], [0], [1], [0, 0, 1, 1], [], []>} : vector<24x128xbf16>, vector<128x128xbf16>, vector<24x128xf32> -> vector<24x128xf32>
    %182 = arith.addf %175, %181 : vector<24x128xf32>
    %c1_184 = arith.constant 1 : index
    %c1_185 = arith.constant 1 : index
    %c0_186 = arith.constant 0 : index
    %183 = vector.load %arg10[%c1_184, %c1_185, %c0_186] : memref<6x16x128xf32, #tpu.memory_space<vmem>>, vector<3x8x128xf32>
    %184 = vector.shape_cast %183 : vector<3x8x128xf32> to vector<24x128xf32>
    %185 = arith.truncf %184 : vector<24x128xf32> to vector<24x128xbf16>
    %c5_187 = arith.constant 5 : index
    %c0_188 = arith.constant 0 : index
    %c0_189 = arith.constant 0 : index
    %186 = vector.load %arg6[%c5_187, %c0_188, %c0_189] : memref<16x128x128xbf16, #tpu.memory_space<vmem>>, vector<1x128x128xbf16>
    %187 = vector.shape_cast %186 : vector<1x128x128xbf16> to vector<128x128xbf16>
    %cst_190 = arith.constant dense<0.000000e+00> : vector<24x128xf32>
    %188 = tpu.matmul %185, %187, %cst_190 {dimension_numbers = #tpu.dot_dimension_numbers<[1], [0], [0], [1], [0, 0, 1, 1], [], []>} : vector<24x128xbf16>, vector<128x128xbf16>, vector<24x128xf32> -> vector<24x128xf32>
    %189 = arith.addf %182, %188 : vector<24x128xf32>
    %c1_191 = arith.constant 1 : index
    %c2_192 = arith.constant 2 : index
    %c0_193 = arith.constant 0 : index
    %190 = vector.load %arg10[%c1_191, %c2_192, %c0_193] : memref<6x16x128xf32, #tpu.memory_space<vmem>>, vector<3x8x128xf32>
    %191 = vector.shape_cast %190 : vector<3x8x128xf32> to vector<24x128xf32>
    %192 = arith.truncf %191 : vector<24x128xf32> to vector<24x128xbf16>
    %c6_194 = arith.constant 6 : index
    %c0_195 = arith.constant 0 : index
    %c0_196 = arith.constant 0 : index
    %193 = vector.load %arg6[%c6_194, %c0_195, %c0_196] : memref<16x128x128xbf16, #tpu.memory_space<vmem>>, vector<1x128x128xbf16>
    %194 = vector.shape_cast %193 : vector<1x128x128xbf16> to vector<128x128xbf16>
    %cst_197 = arith.constant dense<0.000000e+00> : vector<24x128xf32>
    %195 = tpu.matmul %192, %194, %cst_197 {dimension_numbers = #tpu.dot_dimension_numbers<[1], [0], [0], [1], [0, 0, 1, 1], [], []>} : vector<24x128xbf16>, vector<128x128xbf16>, vector<24x128xf32> -> vector<24x128xf32>
    %196 = arith.addf %189, %195 : vector<24x128xf32>
    %c1_198 = arith.constant 1 : index
    %c3_199 = arith.constant 3 : index
    %c0_200 = arith.constant 0 : index
    %197 = vector.load %arg10[%c1_198, %c3_199, %c0_200] : memref<6x16x128xf32, #tpu.memory_space<vmem>>, vector<3x8x128xf32>
    %198 = vector.shape_cast %197 : vector<3x8x128xf32> to vector<24x128xf32>
    %199 = arith.truncf %198 : vector<24x128xf32> to vector<24x128xbf16>
    %c7_201 = arith.constant 7 : index
    %c0_202 = arith.constant 0 : index
    %c0_203 = arith.constant 0 : index
    %200 = vector.load %arg6[%c7_201, %c0_202, %c0_203] : memref<16x128x128xbf16, #tpu.memory_space<vmem>>, vector<1x128x128xbf16>
    %201 = vector.shape_cast %200 : vector<1x128x128xbf16> to vector<128x128xbf16>
    %cst_204 = arith.constant dense<0.000000e+00> : vector<24x128xf32>
    %202 = tpu.matmul %199, %201, %cst_204 {dimension_numbers = #tpu.dot_dimension_numbers<[1], [0], [0], [1], [0, 0, 1, 1], [], []>} : vector<24x128xbf16>, vector<128x128xbf16>, vector<24x128xf32> -> vector<24x128xf32>
    %203 = arith.addf %196, %202 : vector<24x128xf32>
    %c2_205 = arith.constant 2 : index
    %c0_206 = arith.constant 0 : index
    %c0_207 = arith.constant 0 : index
    %204 = vector.load %arg10[%c2_205, %c0_206, %c0_207] : memref<6x16x128xf32, #tpu.memory_space<vmem>>, vector<3x8x128xf32>
    %205 = vector.shape_cast %204 : vector<3x8x128xf32> to vector<24x128xf32>
    %206 = arith.truncf %205 : vector<24x128xf32> to vector<24x128xbf16>
    %c8_208 = arith.constant 8 : index
    %c0_209 = arith.constant 0 : index
    %c0_210 = arith.constant 0 : index
    %207 = vector.load %arg6[%c8_208, %c0_209, %c0_210] : memref<16x128x128xbf16, #tpu.memory_space<vmem>>, vector<1x128x128xbf16>
    %208 = vector.shape_cast %207 : vector<1x128x128xbf16> to vector<128x128xbf16>
    %cst_211 = arith.constant dense<0.000000e+00> : vector<24x128xf32>
    %209 = tpu.matmul %206, %208, %cst_211 {dimension_numbers = #tpu.dot_dimension_numbers<[1], [0], [0], [1], [0, 0, 1, 1], [], []>} : vector<24x128xbf16>, vector<128x128xbf16>, vector<24x128xf32> -> vector<24x128xf32>
    %210 = arith.addf %203, %209 : vector<24x128xf32>
    %c2_212 = arith.constant 2 : index
    %c1_213 = arith.constant 1 : index
    %c0_214 = arith.constant 0 : index
    %211 = vector.load %arg10[%c2_212, %c1_213, %c0_214] : memref<6x16x128xf32, #tpu.memory_space<vmem>>, vector<3x8x128xf32>
    %212 = vector.shape_cast %211 : vector<3x8x128xf32> to vector<24x128xf32>
    %213 = arith.truncf %212 : vector<24x128xf32> to vector<24x128xbf16>
    %c9_215 = arith.constant 9 : index
    %c0_216 = arith.constant 0 : index
    %c0_217 = arith.constant 0 : index
    %214 = vector.load %arg6[%c9_215, %c0_216, %c0_217] : memref<16x128x128xbf16, #tpu.memory_space<vmem>>, vector<1x128x128xbf16>
    %215 = vector.shape_cast %214 : vector<1x128x128xbf16> to vector<128x128xbf16>
    %cst_218 = arith.constant dense<0.000000e+00> : vector<24x128xf32>
    %216 = tpu.matmul %213, %215, %cst_218 {dimension_numbers = #tpu.dot_dimension_numbers<[1], [0], [0], [1], [0, 0, 1, 1], [], []>} : vector<24x128xbf16>, vector<128x128xbf16>, vector<24x128xf32> -> vector<24x128xf32>
    %217 = arith.addf %210, %216 : vector<24x128xf32>
    %c2_219 = arith.constant 2 : index
    %c2_220 = arith.constant 2 : index
    %c0_221 = arith.constant 0 : index
    %218 = vector.load %arg10[%c2_219, %c2_220, %c0_221] : memref<6x16x128xf32, #tpu.memory_space<vmem>>, vector<3x8x128xf32>
    %219 = vector.shape_cast %218 : vector<3x8x128xf32> to vector<24x128xf32>
    %220 = arith.truncf %219 : vector<24x128xf32> to vector<24x128xbf16>
    %c10_222 = arith.constant 10 : index
    %c0_223 = arith.constant 0 : index
    %c0_224 = arith.constant 0 : index
    %221 = vector.load %arg6[%c10_222, %c0_223, %c0_224] : memref<16x128x128xbf16, #tpu.memory_space<vmem>>, vector<1x128x128xbf16>
    %222 = vector.shape_cast %221 : vector<1x128x128xbf16> to vector<128x128xbf16>
    %cst_225 = arith.constant dense<0.000000e+00> : vector<24x128xf32>
    %223 = tpu.matmul %220, %222, %cst_225 {dimension_numbers = #tpu.dot_dimension_numbers<[1], [0], [0], [1], [0, 0, 1, 1], [], []>} : vector<24x128xbf16>, vector<128x128xbf16>, vector<24x128xf32> -> vector<24x128xf32>
    %224 = arith.addf %217, %223 : vector<24x128xf32>
    %c2_226 = arith.constant 2 : index
    %c3_227 = arith.constant 3 : index
    %c0_228 = arith.constant 0 : index
    %225 = vector.load %arg10[%c2_226, %c3_227, %c0_228] : memref<6x16x128xf32, #tpu.memory_space<vmem>>, vector<3x8x128xf32>
    %226 = vector.shape_cast %225 : vector<3x8x128xf32> to vector<24x128xf32>
    %227 = arith.truncf %226 : vector<24x128xf32> to vector<24x128xbf16>
    %c11_229 = arith.constant 11 : index
    %c0_230 = arith.constant 0 : index
    %c0_231 = arith.constant 0 : index
    %228 = vector.load %arg6[%c11_229, %c0_230, %c0_231] : memref<16x128x128xbf16, #tpu.memory_space<vmem>>, vector<1x128x128xbf16>
    %229 = vector.shape_cast %228 : vector<1x128x128xbf16> to vector<128x128xbf16>
    %cst_232 = arith.constant dense<0.000000e+00> : vector<24x128xf32>
    %230 = tpu.matmul %227, %229, %cst_232 {dimension_numbers = #tpu.dot_dimension_numbers<[1], [0], [0], [1], [0, 0, 1, 1], [], []>} : vector<24x128xbf16>, vector<128x128xbf16>, vector<24x128xf32> -> vector<24x128xf32>
    %231 = arith.addf %224, %230 : vector<24x128xf32>
    %c3_233 = arith.constant 3 : index
    %c0_234 = arith.constant 0 : index
    %c0_235 = arith.constant 0 : index
    %232 = vector.load %arg10[%c3_233, %c0_234, %c0_235] : memref<6x16x128xf32, #tpu.memory_space<vmem>>, vector<3x8x128xf32>
    %233 = vector.shape_cast %232 : vector<3x8x128xf32> to vector<24x128xf32>
    %234 = arith.truncf %233 : vector<24x128xf32> to vector<24x128xbf16>
    %c12_236 = arith.constant 12 : index
    %c0_237 = arith.constant 0 : index
    %c0_238 = arith.constant 0 : index
    %235 = vector.load %arg6[%c12_236, %c0_237, %c0_238] : memref<16x128x128xbf16, #tpu.memory_space<vmem>>, vector<1x128x128xbf16>
    %236 = vector.shape_cast %235 : vector<1x128x128xbf16> to vector<128x128xbf16>
    %cst_239 = arith.constant dense<0.000000e+00> : vector<24x128xf32>
    %237 = tpu.matmul %234, %236, %cst_239 {dimension_numbers = #tpu.dot_dimension_numbers<[1], [0], [0], [1], [0, 0, 1, 1], [], []>} : vector<24x128xbf16>, vector<128x128xbf16>, vector<24x128xf32> -> vector<24x128xf32>
    %238 = arith.addf %231, %237 : vector<24x128xf32>
    %c3_240 = arith.constant 3 : index
    %c1_241 = arith.constant 1 : index
    %c0_242 = arith.constant 0 : index
    %239 = vector.load %arg10[%c3_240, %c1_241, %c0_242] : memref<6x16x128xf32, #tpu.memory_space<vmem>>, vector<3x8x128xf32>
    %240 = vector.shape_cast %239 : vector<3x8x128xf32> to vector<24x128xf32>
    %241 = arith.truncf %240 : vector<24x128xf32> to vector<24x128xbf16>
    %c13_243 = arith.constant 13 : index
    %c0_244 = arith.constant 0 : index
    %c0_245 = arith.constant 0 : index
    %242 = vector.load %arg6[%c13_243, %c0_244, %c0_245] : memref<16x128x128xbf16, #tpu.memory_space<vmem>>, vector<1x128x128xbf16>
    %243 = vector.shape_cast %242 : vector<1x128x128xbf16> to vector<128x128xbf16>
    %cst_246 = arith.constant dense<0.000000e+00> : vector<24x128xf32>
    %244 = tpu.matmul %241, %243, %cst_246 {dimension_numbers = #tpu.dot_dimension_numbers<[1], [0], [0], [1], [0, 0, 1, 1], [], []>} : vector<24x128xbf16>, vector<128x128xbf16>, vector<24x128xf32> -> vector<24x128xf32>
    %245 = arith.addf %238, %244 : vector<24x128xf32>
    %c3_247 = arith.constant 3 : index
    %c2_248 = arith.constant 2 : index
    %c0_249 = arith.constant 0 : index
    %246 = vector.load %arg10[%c3_247, %c2_248, %c0_249] : memref<6x16x128xf32, #tpu.memory_space<vmem>>, vector<3x8x128xf32>
    %247 = vector.shape_cast %246 : vector<3x8x128xf32> to vector<24x128xf32>
    %248 = arith.truncf %247 : vector<24x128xf32> to vector<24x128xbf16>
    %c14_250 = arith.constant 14 : index
    %c0_251 = arith.constant 0 : index
    %c0_252 = arith.constant 0 : index
    %249 = vector.load %arg6[%c14_250, %c0_251, %c0_252] : memref<16x128x128xbf16, #tpu.memory_space<vmem>>, vector<1x128x128xbf16>
    %250 = vector.shape_cast %249 : vector<1x128x128xbf16> to vector<128x128xbf16>
    %cst_253 = arith.constant dense<0.000000e+00> : vector<24x128xf32>
    %251 = tpu.matmul %248, %250, %cst_253 {dimension_numbers = #tpu.dot_dimension_numbers<[1], [0], [0], [1], [0, 0, 1, 1], [], []>} : vector<24x128xbf16>, vector<128x128xbf16>, vector<24x128xf32> -> vector<24x128xf32>
    %252 = arith.addf %245, %251 : vector<24x128xf32>
    %c3_254 = arith.constant 3 : index
    %c3_255 = arith.constant 3 : index
    %c0_256 = arith.constant 0 : index
    %253 = vector.load %arg10[%c3_254, %c3_255, %c0_256] : memref<6x16x128xf32, #tpu.memory_space<vmem>>, vector<3x8x128xf32>
    %254 = vector.shape_cast %253 : vector<3x8x128xf32> to vector<24x128xf32>
    %255 = arith.truncf %254 : vector<24x128xf32> to vector<24x128xbf16>
    %c15_257 = arith.constant 15 : index
    %c0_258 = arith.constant 0 : index
    %c0_259 = arith.constant 0 : index
    %256 = vector.load %arg6[%c15_257, %c0_258, %c0_259] : memref<16x128x128xbf16, #tpu.memory_space<vmem>>, vector<1x128x128xbf16>
    %257 = vector.shape_cast %256 : vector<1x128x128xbf16> to vector<128x128xbf16>
    %cst_260 = arith.constant dense<0.000000e+00> : vector<24x128xf32>
    %258 = tpu.matmul %255, %257, %cst_260 {dimension_numbers = #tpu.dot_dimension_numbers<[1], [0], [0], [1], [0, 0, 1, 1], [], []>} : vector<24x128xbf16>, vector<128x128xbf16>, vector<24x128xf32> -> vector<24x128xf32>
    %259 = arith.addf %252, %258 : vector<24x128xf32>
    %c0_261 = arith.constant 0 : index
    %c0_262 = arith.constant 0 : index
    %260 = vector.load %arg7[%c0_261, %c0_262] : memref<1x128xf32, #tpu.memory_space<vmem>>, vector<1x128xf32>
    %261 = vector.broadcast %260 : vector<1x128xf32> to vector<24x128xf32>
    %262 = arith.addf %259, %261 : vector<24x128xf32>
    %cst_263 = arith.constant 0.000000e+00 : f32
    %263 = vector.broadcast %cst_263 : f32 to vector<24x128xf32>
    %264 = arith.maximumf %262, %263 : vector<24x128xf32>
    %265 = vector.shape_cast %264 : vector<24x128xf32> to vector<1x24x128xf32>
    %266 = arith.truncf %265 : vector<1x24x128xf32> to vector<1x24x128xbf16>
    %c0_264 = arith.constant 0 : index
    %c0_265 = arith.constant 0 : index
    %c0_266 = arith.constant 0 : index
    %267 = vector.load %arg8[%c0_264, %c0_265, %c0_266] : memref<1x24x128xbf16, #tpu.memory_space<vmem>>, vector<1x24x128xbf16>
    tpu.vector_store %arg8[%c0_264, %c0_265, %c0_266], %266 {strides = array<i32>} : memref<1x24x128xbf16, #tpu.memory_space<vmem>>, vector<1x24x128xbf16>,
    return
  }
  func.func @transform_0(%arg0: i32) -> (i32, i32, i32) {
    %c0_i32 = arith.constant 0 : i32
    %c0_i32_0 = arith.constant 0 : i32
    %c0_i32_1 = arith.constant 0 : i32
    return %arg0, %c0_i32, %c0_i32_0 : i32, i32, i32
  }
  func.func @transform_1(%arg0: i32) -> (i32, i32) {
    %c0_i32 = arith.constant 0 : i32
    %c0_i32_0 = arith.constant 0 : i32
    %c0_i32_1 = arith.constant 0 : i32
    return %c0_i32, %c0_i32_0 : i32, i32
  }
  func.func @transform_2(%arg0: i32) -> (i32, i32) {
    %c0_i32 = arith.constant 0 : i32
    %c0_i32_0 = arith.constant 0 : i32
    %c0_i32_1 = arith.constant 0 : i32
    return %c0_i32, %c0_i32_0 : i32, i32
  }
  func.func @transform_3(%arg0: i32) -> (i32, i32, i32) {
    %c0_i32 = arith.constant 0 : i32
    %c0_i32_0 = arith.constant 0 : i32
    %c0_i32_1 = arith.constant 0 : i32
    %c0_i32_2 = arith.constant 0 : i32
    return %c0_i32, %c0_i32_0, %c0_i32_1 : i32, i32, i32
  }
  func.func @transform_4(%arg0: i32) -> (i32, i32) {
    %c0_i32 = arith.constant 0 : i32
    %c0_i32_0 = arith.constant 0 : i32
    %c0_i32_1 = arith.constant 0 : i32
    return %c0_i32, %c0_i32_0 : i32, i32
  }
  func.func @transform_5(%arg0: i32) -> (i32, i32, i32) {
    %c0_i32 = arith.constant 0 : i32
    %c0_i32_0 = arith.constant 0 : i32
    %c0_i32_1 = arith.constant 0 : i32
    %c0_i32_2 = arith.constant 0 : i32
    return %c0_i32, %c0_i32_0, %c0_i32_1 : i32, i32, i32
  }
  func.func @transform_6(%arg0: i32) -> (i32, i32) {
    %c0_i32 = arith.constant 0 : i32
    %c0_i32_0 = arith.constant 0 : i32
    %c0_i32_1 = arith.constant 0 : i32
    return %c0_i32, %c0_i32_0 : i32, i32
  }
  func.func @transform_7(%arg0: i32) -> (i32, i32, i32) {
    %c0_i32 = arith.constant 0 : i32
    %c0_i32_0 = arith.constant 0 : i32
    %c0_i32_1 = arith.constant 0 : i32
    return %arg0, %c0_i32, %c0_i32_0 : i32, i32, i32
  }
}

module attributes {stable_mosaic.version = 11 : i64} {
  func.func @_mlp_kernel(%arg0: i32, %arg1: memref<8x128xbf16, #tpu.memory_space<vmem>>, %arg2: memref<128x256xbf16, #tpu.memory_space<vmem>>, %arg3: memref<1x256xf32, #tpu.memory_space<vmem>>, %arg4: memref<256x128xbf16, #tpu.memory_space<vmem>>, %arg5: memref<1x128xf32, #tpu.memory_space<vmem>>, %arg6: memref<8x128xf32, #tpu.memory_space<vmem>>) attributes {dimension_semantics = [#tpu.dimension_semantics<parallel>], iteration_bounds = array<i64: 1>, scalar_prefetch = 0 : i64, scratch_operands = 0 : i64, tpu.core_type = #tpu.core_type<tc>, window_params = [{transform_indices = @transform_0, window_bounds = array<i64: 8, 128>}, {pipeline_mode = #tpu.pipeline_mode<synchronous>, transform_indices = @transform_1, window_bounds = array<i64: 128, 256>}, {pipeline_mode = #tpu.pipeline_mode<synchronous>, transform_indices = @transform_2, window_bounds = array<i64: 1, 256>}, {pipeline_mode = #tpu.pipeline_mode<synchronous>, transform_indices = @transform_3, window_bounds = array<i64: 256, 128>}, {pipeline_mode = #tpu.pipeline_mode<synchronous>, transform_indices = @transform_4, window_bounds = array<i64: 1, 128>}, {transform_indices = @transform_5, window_bounds = array<i64: 8, 128>}]} {
    %c0 = arith.constant 0 : index
    %c0_0 = arith.constant 0 : index
    %0 = vector.load %arg1[%c0, %c0_0] : memref<8x128xbf16, #tpu.memory_space<vmem>>, vector<8x128xbf16>
    %c0_1 = arith.constant 0 : index
    %c0_2 = arith.constant 0 : index
    %1 = vector.load %arg2[%c0_1, %c0_2] : memref<128x256xbf16, #tpu.memory_space<vmem>>, vector<128x256xbf16>
    %cst = arith.constant dense<0.000000e+00> : vector<8x256xf32>
    %2 = tpu.matmul %0, %1, %cst {dimension_numbers = #tpu.dot_dimension_numbers<[1], [0], [0], [1], [0, 0, 1, 1], [], []>} : vector<8x128xbf16>, vector<128x256xbf16>, vector<8x256xf32> -> vector<8x256xf32>
    %c0_3 = arith.constant 0 : index
    %c0_4 = arith.constant 0 : index
    %3 = vector.load %arg3[%c0_3, %c0_4] : memref<1x256xf32, #tpu.memory_space<vmem>>, vector<1x256xf32>
    %4 = vector.broadcast %3 : vector<1x256xf32> to vector<8x256xf32>
    %5 = arith.addf %2, %4 : vector<8x256xf32>
    %cst_5 = arith.constant 0.000000e+00 : f32
    %6 = vector.broadcast %cst_5 : f32 to vector<8x256xf32>
    %7 = arith.maximumf %5, %6 : vector<8x256xf32>
    %8 = arith.truncf %7 : vector<8x256xf32> to vector<8x256xbf16>
    %c0_6 = arith.constant 0 : index
    %c0_7 = arith.constant 0 : index
    %9 = vector.load %arg4[%c0_6, %c0_7] : memref<256x128xbf16, #tpu.memory_space<vmem>>, vector<256x128xbf16>
    %cst_8 = arith.constant dense<0.000000e+00> : vector<8x128xf32>
    %10 = tpu.matmul %8, %9, %cst_8 {dimension_numbers = #tpu.dot_dimension_numbers<[1], [0], [0], [1], [0, 0, 1, 1], [], []>} : vector<8x256xbf16>, vector<256x128xbf16>, vector<8x128xf32> -> vector<8x128xf32>
    %c0_9 = arith.constant 0 : index
    %c0_10 = arith.constant 0 : index
    %11 = vector.load %arg5[%c0_9, %c0_10] : memref<1x128xf32, #tpu.memory_space<vmem>>, vector<1x128xf32>
    %12 = vector.broadcast %11 : vector<1x128xf32> to vector<8x128xf32>
    %13 = arith.addf %10, %12 : vector<8x128xf32>
    %c0_11 = arith.constant 0 : index
    %c0_12 = arith.constant 0 : index
    %14 = vector.load %arg6[%c0_11, %c0_12] : memref<8x128xf32, #tpu.memory_space<vmem>>, vector<8x128xf32>
    tpu.vector_store %arg6[%c0_11, %c0_12], %13 {strides = array<i32>} : memref<8x128xf32, #tpu.memory_space<vmem>>, vector<8x128xf32>,
    return
  }
  func.func @transform_0(%arg0: i32) -> (i32, i32) {
    %c0_i32 = arith.constant 0 : i32
    %c0_i32_0 = arith.constant 0 : i32
    return %arg0, %c0_i32 : i32, i32
  }
  func.func @transform_1(%arg0: i32) -> (i32, i32) {
    %c0_i32 = arith.constant 0 : i32
    %c0_i32_0 = arith.constant 0 : i32
    %c0_i32_1 = arith.constant 0 : i32
    return %c0_i32, %c0_i32_0 : i32, i32
  }
  func.func @transform_2(%arg0: i32) -> (i32, i32) {
    %c0_i32 = arith.constant 0 : i32
    %c0_i32_0 = arith.constant 0 : i32
    %c0_i32_1 = arith.constant 0 : i32
    return %c0_i32, %c0_i32_0 : i32, i32
  }
  func.func @transform_3(%arg0: i32) -> (i32, i32) {
    %c0_i32 = arith.constant 0 : i32
    %c0_i32_0 = arith.constant 0 : i32
    %c0_i32_1 = arith.constant 0 : i32
    return %c0_i32, %c0_i32_0 : i32, i32
  }
  func.func @transform_4(%arg0: i32) -> (i32, i32) {
    %c0_i32 = arith.constant 0 : i32
    %c0_i32_0 = arith.constant 0 : i32
    %c0_i32_1 = arith.constant 0 : i32
    return %c0_i32, %c0_i32_0 : i32, i32
  }
  func.func @transform_5(%arg0: i32) -> (i32, i32) {
    %c0_i32 = arith.constant 0 : i32
    %c0_i32_0 = arith.constant 0 : i32
    return %arg0, %c0_i32 : i32, i32
  }
}

</mosaic_0001>

<llo_original>
// kernel: cnn_forward.3
$region0: #{cnn_forward.3}
  #allocation0 [shape = 'u32[]', space=smem, size = 0x4, offset = 0x4, fixed_abs, tag = 'smem constant byte address 0x4 - core index']
  #allocation1 [shape = 'u32[144,128]{1,0:T(1,128)}', space=vmem, size = 0x12000, scoped, tag = 'internal scratch']
  %s0 = inlined_call_operand.vmem [shape: bf16[8,128], index: 0, kind: input, shape index: {}]
  %s1 = inlined_call_operand.vmem [shape: bf16[128,256], index: 1, kind: input, shape index: {}]
  %s2 = inlined_call_operand.vmem [shape: f32[1,256], index: 2, kind: input, shape index: {}]
  %s3 = inlined_call_operand.vmem [shape: bf16[256,128], index: 3, kind: input, shape index: {}]
  %s4 = inlined_call_operand.vmem [shape: f32[1,128], index: 4, kind: input, shape index: {}]
  %s5 = inlined_call_operand.vmem [shape: f32[8,128], index: 5, kind: output, shape index: {}]
  %s6 = sld [smem:[#allocation0]]
  $region30: #{cnn_forward.3} parent=0
    _
  %s8 = ssub.s32 1, %s6
  %s9 = scalar_select 0, %s8, %s6
  // Predicated region
  $region2: #{cnn_forward.3} parent=0 // pred_check
    _
  $region3: #{cnn_forward.3} parent=0 // pred_check_branch
    %11 = sbr.rel (0) target = $region5
  $region4: #{cnn_forward.3} parent=0 // pred_region
    _
  $region5: #{cnn_forward.3} parent=0 // pred_fallthru
    _
  // Predicated region
  $region6: #{cnn_forward.3} parent=0 // pred_check
    _
  $region7: #{cnn_forward.3} parent=0 // pred_check_branch
    %13 = sbr.rel (0) target = $region9
  $region8: #{cnn_forward.3} parent=0 // pred_region
    _
  $region9: #{cnn_forward.3} parent=0 // pred_fallthru
    _
  // Predicated region
  $region10: #{cnn_forward.3} parent=0 // pred_check
    _
  $region11: #{cnn_forward.3} parent=0 // pred_check_branch
    %15 = sbr.rel (0) target = $region13
  $region12: #{cnn_forward.3} parent=0 // pred_region
    _
  $region13: #{cnn_forward.3} parent=0 // pred_fallthru
    _
  // Predicated region
  $region14: #{cnn_forward.3} parent=0 // pred_check
    _
  $region15: #{cnn_forward.3} parent=0 // pred_check_branch
    %17 = sbr.rel (0) target = $region17
  $region16: #{cnn_forward.3} parent=0 // pred_region
    _
  $region17: #{cnn_forward.3} parent=0 // pred_fallthru
    _
  // Predicated region
  $region18: #{cnn_forward.3} parent=0 // pred_check
    _
  $region19: #{cnn_forward.3} parent=0 // pred_check_branch
    %19 = sbr.rel (0) target = $region21
  $region20: #{cnn_forward.3} parent=0 // pred_region
    _
  $region21: #{cnn_forward.3} parent=0 // pred_fallthru
    _
  %v21 = vld [vmem:[%s0] sm:$0xf]
  %v22 = vld [vmem:[%s1] sm:$0xff]
  %v23 = vld [vmem:[%s1 + $0x8] sm:$0xff]
  %v24 = vld [vmem:[%s1 + $0x10] sm:$0xff]
  %v25 = vld [vmem:[%s1 + $0x18] sm:$0xff]
  %v26 = vld [vmem:[%s1 + $0x20] sm:$0xff]
  %v27 = vld [vmem:[%s1 + $0x28] sm:$0xff]
  %v28 = vld [vmem:[%s1 + $0x30] sm:$0xff]
  %v29 = vld [vmem:[%s1 + $0x38] sm:$0xff]
  %v30 = vld [vmem:[%s1 + $0x40] sm:$0xff]
  %v31 = vld [vmem:[%s1 + $0x48] sm:$0xff]
  %v32 = vld [vmem:[%s1 + $0x50] sm:$0xff]
  %v33 = vld [vmem:[%s1 + $0x58] sm:$0xff]
  %v34 = vld [vmem:[%s1 + $0x60] sm:$0xff]
  %v35 = vld [vmem:[%s1 + $0x68] sm:$0xff]
  %v36 = vld [vmem:[%s1 + $0x70] sm:$0xff]
  %v37 = vld [vmem:[%s1 + $0x78] sm:$0xff]
  %v38 = vld [vmem:[%s2] sm:$0x3]
  %v40 = vlaneseq
  %v41 = vshrl.u32 %v40, 7
  %v42 = vsub.s32 0, %v41
  %v43 = vrot.slane %v38, %v42
  %v44 = vlaneseq
  %v45 = vshrl.u32 %v44, 7
  %v46 = vsub.s32 1, %v45
  %v47 = vrot.slane %v38, %v46
  %v66 = vunpack.c.l.b16 %v22
  %v67 = vunpack.c.h.b16 %v22
  %v68 = vunpack.c.l.b16 %v23
  %v69 = vunpack.c.h.b16 %v23
  %v70 = vunpack.c.l.b16 %v24
  %v71 = vunpack.c.h.b16 %v24
  %v72 = vunpack.c.l.b16 %v25
  %v73 = vunpack.c.h.b16 %v25
  %v74 = vunpack.c.l.b16 %v26
  %v75 = vunpack.c.h.b16 %v26
  %v76 = vunpack.c.l.b16 %v27
  %v77 = vunpack.c.h.b16 %v27
  %v78 = vunpack.c.l.b16 %v28
  %v79 = vunpack.c.h.b16 %v28
  %v80 = vunpack.c.l.b16 %v29
  %v81 = vunpack.c.h.b16 %v29
  %v82 = vunpack.c.l.b16 %v30
  %v83 = vunpack.c.h.b16 %v30
  %v84 = vunpack.c.l.b16 %v31
  %v85 = vunpack.c.h.b16 %v31
  %v86 = vunpack.c.l.b16 %v32
  %v87 = vunpack.c.h.b16 %v32
  %v88 = vunpack.c.l.b16 %v33
  %v89 = vunpack.c.h.b16 %v33
  %v90 = vunpack.c.l.b16 %v34
  %v91 = vunpack.c.h.b16 %v34
  %v92 = vunpack.c.l.b16 %v35
  %v93 = vunpack.c.h.b16 %v35
  %v94 = vunpack.c.l.b16 %v36
  %v95 = vunpack.c.h.b16 %v36
  %v96 = vunpack.c.l.b16 %v37
  %v97 = vunpack.c.h.b16 %v37
  %v98 = vpack.c.b16 %v68, %v66
  %v99 = vpack.c.b16 %v69, %v67
  %v100 = vpack.c.b16 %v72, %v70
  %v101 = vpack.c.b16 %v73, %v71
  %v102 = vpack.c.b16 %v76, %v74
  %v103 = vpack.c.b16 %v77, %v75
  %v104 = vpack.c.b16 %v80, %v78
  %v105 = vpack.c.b16 %v81, %v79
  %v106 = vpack.c.b16 %v84, %v82
  %v107 = vpack.c.b16 %v85, %v83
  %v108 = vpack.c.b16 %v88, %v86
  %v109 = vpack.c.b16 %v89, %v87
  %v110 = vpack.c.b16 %v92, %v90
  %v111 = vpack.c.b16 %v93, %v91
  %v112 = vpack.c.b16 %v96, %v94
  %v113 = vpack.c.b16 %v97, %v95
  %130 = vmatprep.subr.bf16.mxu0 %v99
  %131 = vmatpush1.bf16.msra.mxu0 %v98
  %132 = vmatprep.subr.bf16.mxu0 %v101
  %133 = vmatpush1.bf16.msra.mxu0 %v100
  %134 = vmatprep.subr.bf16.mxu0 %v103
  %135 = vmatpush1.bf16.msra.mxu0 %v102
  %136 = vmatprep.subr.bf16.mxu0 %v105
  %137 = vmatpush1.bf16.msra.mxu0 %v104
  %138 = vmatprep.subr.bf16.mxu0 %v107
  %139 = vmatpush1.bf16.msra.mxu0 %v106
  %140 = vmatprep.subr.bf16.mxu0 %v109
  %141 = vmatpush1.bf16.msra.mxu0 %v108
  %142 = vmatprep.subr.bf16.mxu0 %v111
  %143 = vmatpush1.bf16.msra.mxu0 %v110
  %144 = vmatprep.subr.bf16.mxu0 %v113
  %145 = vmatpush1.bf16.msra.mxu0 %v112
  %146 = vmatprep.subr.bf16.mxu0 0
  %147 = vmatpush1.bf16.msra.mxu0 0
  %148 = vmatprep.subr.bf16.mxu0 0
  %149 = vmatpush1.bf16.msra.mxu0 0
  %150 = vmatprep.subr.bf16.mxu0 0
  %151 = vmatpush1.bf16.msra.mxu0 0
  %152 = vmatprep.subr.bf16.mxu0 0
  %153 = vmatpush1.bf16.msra.mxu0 0
  %154 = vmatprep.subr.bf16.mxu0 0
  %155 = vmatpush1.bf16.msra.mxu0 0
  %156 = vmatprep.subr.bf16.mxu0 0
  %157 = vmatpush1.bf16.msra.mxu0 0
  %158 = vmatprep.subr.bf16.mxu0 0
  %159 = vmatpush1.bf16.msra.mxu0 0
  %160 = vmatprep.subr.bf16.mxu0 0
  %161 = vmatpush1.bf16.msra.mxu0 0
  %162 = vmatprep.mubr.bf16.mxu0 0
  %163 = vmatmul.mubr.bf16.gmra.mrb[0].mxu0 %v21
  %v164 = vpop.f32.mrb[0].mxu0
  %v165 = vadd.f32 %v43, %v164
  %v166 = vpop.f32.mrb[0].mxu0
  %v167 = vadd.f32 %v47, %v166
  %v168 = vpop.f32.mrb[0].mxu0
  %v169 = vpop.f32.mrb[0].mxu0
  %170 = vdwg.mxu0
  %v171 = vmax.f32 %v165, 0.0
  %v172 = vmax.f32 %v167, 0.0
  %v173 = vpack.c.bf16 %v171, %v171
  %v174 = vpack.c.bf16 %v172, %v172
  %v175 = vld [vmem:[%s3] sm:$0xf]
  %v176 = vld [vmem:[%s3 + $0x4] sm:$0xf]
  %v177 = vld [vmem:[%s3 + $0x8] sm:$0xf]
  %v178 = vld [vmem:[%s3 + $0xc] sm:$0xf]
  %v179 = vld [vmem:[%s3 + $0x10] sm:$0xf]
  %v180 = vld [vmem:[%s3 + $0x14] sm:$0xf]
  %v181 = vld [vmem:[%s3 + $0x18] sm:$0xf]
  %v182 = vld [vmem:[%s3 + $0x1c] sm:$0xf]
  %v183 = vld [vmem:[%s3 + $0x20] sm:$0xf]
  %v184 = vld [vmem:[%s3 + $0x24] sm:$0xf]
  %v185 = vld [vmem:[%s3 + $0x28] sm:$0xf]
  %v186 = vld [vmem:[%s3 + $0x2c] sm:$0xf]
  %v187 = vld [vmem:[%s3 + $0x30] sm:$0xf]
  %v188 = vld [vmem:[%s3 + $0x34] sm:$0xf]
  %v189 = vld [vmem:[%s3 + $0x38] sm:$0xf]
  %v190 = vld [vmem:[%s3 + $0x3c] sm:$0xf]
  %v191 = vld [vmem:[%s3 + $0x40] sm:$0xf]
  %v192 = vld [vmem:[%s3 + $0x44] sm:$0xf]
  %v193 = vld [vmem:[%s3 + $0x48] sm:$0xf]
  %v194 = vld [vmem:[%s3 + $0x4c] sm:$0xf]
  %v195 = vld [vmem:[%s3 + $0x50] sm:$0xf]
  %v196 = vld [vmem:[%s3 + $0x54] sm:$0xf]
  %v197 = vld [vmem:[%s3 + $0x58] sm:$0xf]
  %v198 = vld [vmem:[%s3 + $0x5c] sm:$0xf]
  %v199 = vld [vmem:[%s3 + $0x60] sm:$0xf]
  %v200 = vld [vmem:[%s3 + $0x64] sm:$0xf]
  %v201 = vld [vmem:[%s3 + $0x68] sm:$0xf]
  %v202 = vld [vmem:[%s3 + $0x6c] sm:$0xf]
  %v203 = vld [vmem:[%s3 + $0x70] sm:$0xf]
  %v204 = vld [vmem:[%s3 + $0x74] sm:$0xf]
  %v205 = vld [vmem:[%s3 + $0x78] sm:$0xf]
  %v206 = vld [vmem:[%s3 + $0x7c] sm:$0xf]
  %v207 = vld [vmem:[%s4] sm:$0x1]
  %v209 = vlaneseq
  %v210 = vshrl.u32 %v209, 7
  %v211 = vsub.s32 0, %v210
  %v212 = vrot.slane %v207, %v211
  %v246 = vunpack.c.l.b16 %v175
  %v247 = vunpack.c.l.b16 %v176
  %v248 = vunpack.c.l.b16 %v177
  %v249 = vunpack.c.l.b16 %v178
  %v250 = vunpack.c.l.b16 %v179
  %v251 = vunpack.c.l.b16 %v180
  %v252 = vunpack.c.l.b16 %v181
  %v253 = vunpack.c.l.b16 %v182
  %v254 = vunpack.c.l.b16 %v183
  %v255 = vunpack.c.l.b16 %v184
  %v256 = vunpack.c.l.b16 %v185
  %v257 = vunpack.c.l.b16 %v186
  %v258 = vunpack.c.l.b16 %v187
  %v259 = vunpack.c.l.b16 %v188
  %v260 = vunpack.c.l.b16 %v189
  %v261 = vunpack.c.l.b16 %v190
  %v262 = vunpack.c.l.b16 %v191
  %v263 = vunpack.c.l.b16 %v192
  %v264 = vunpack.c.l.b16 %v193
  %v265 = vunpack.c.l.b16 %v194
  %v266 = vunpack.c.l.b16 %v195
  %v267 = vunpack.c.l.b16 %v196
  %v268 = vunpack.c.l.b16 %v197
  %v269 = vunpack.c.l.b16 %v198
  %v270 = vunpack.c.l.b16 %v199
  %v271 = vunpack.c.l.b16 %v200
  %v272 = vunpack.c.l.b16 %v201
  %v273 = vunpack.c.l.b16 %v202
  %v274 = vunpack.c.l.b16 %v203
  %v275 = vunpack.c.l.b16 %v204
  %v276 = vunpack.c.l.b16 %v205
  %v277 = vunpack.c.l.b16 %v206
  %v278 = vpack.c.b16 %v247, %v246
  %v279 = vpack.c.b16 %v249, %v248
  %v280 = vpack.c.b16 %v251, %v250
  %v281 = vpack.c.b16 %v253, %v252
  %v282 = vpack.c.b16 %v255, %v254
  %v283 = vpack.c.b16 %v257, %v256
  %v284 = vpack.c.b16 %v259, %v258
  %v285 = vpack.c.b16 %v261, %v260
  %v286 = vpack.c.b16 %v263, %v262
  %v287 = vpack.c.b16 %v265, %v264
  %v288 = vpack.c.b16 %v267, %v266
  %v289 = vpack.c.b16 %v269, %v268
  %v290 = vpack.c.b16 %v271, %v270
  %v291 = vpack.c.b16 %v273, %v272
  %v292 = vpack.c.b16 %v275, %v274
  %v293 = vpack.c.b16 %v277, %v276
  %310 = vmatprep.subr.bf16.mxu0 0
  %311 = vmatpush1.bf16.msra.mxu0 %v278
  %312 = vmatprep.subr.bf16.mxu0 0
  %313 = vmatpush1.bf16.msra.mxu0 %v279
  %314 = vmatprep.subr.bf16.mxu0 0
  %315 = vmatpush1.bf16.msra.mxu0 %v280
  %316 = vmatprep.subr.bf16.mxu0 0
  %317 = vmatpush1.bf16.msra.mxu0 %v281
  %318 = vmatprep.subr.bf16.mxu0 0
  %319 = vmatpush1.bf16.msra.mxu0 %v282
  %320 = vmatprep.subr.bf16.mxu0 0
  %321 = vmatpush1.bf16.msra.mxu0 %v283
  %322 = vmatprep.subr.bf16.mxu0 0
  %323 = vmatpush1.bf16.msra.mxu0 %v284
  %324 = vmatprep.subr.bf16.mxu0 0
  %325 = vmatpush1.bf16.msra.mxu0 %v285
  %326 = vmatprep.subr.bf16.mxu0 0
  %327 = vmatpush1.bf16.msra.mxu0 %v286
  %328 = vmatprep.subr.bf16.mxu0 0
  %329 = vmatpush1.bf16.msra.mxu0 %v287
  %330 = vmatprep.subr.bf16.mxu0 0
  %331 = vmatpush1.bf16.msra.mxu0 %v288
  %332 = vmatprep.subr.bf16.mxu0 0
  %333 = vmatpush1.bf16.msra.mxu0 %v289
  %334 = vmatprep.subr.bf16.mxu0 0
  %335 = vmatpush1.bf16.msra.mxu0 %v290
  %336 = vmatprep.subr.bf16.mxu0 0
  %337 = vmatpush1.bf16.msra.mxu0 %v291
  %338 = vmatprep.subr.bf16.mxu0 0
  %339 = vmatpush1.bf16.msra.mxu0 %v292
  %340 = vmatprep.subr.bf16.mxu0 0
  %341 = vmatpush1.bf16.msra.mxu0 %v293
  %342 = vmatprep.mubr.bf16.mxu0 %v174
  %343 = vmatmul.mubr.bf16.gmra.mrb[0].mxu0 %v173
  %v344 = vpop.f32.mrb[0].mxu0
  %v345 = vadd.f32 %v212, %v344
  %v346 = vpop.f32.mrb[0].mxu0
  %v347 = vpop.f32.mrb[0].mxu0
  %v348 = vpop.f32.mrb[0].mxu0
  %349 = vdwg.mxu0
  %350 = vst [vmem:[%s5] sm:$0xff] %v345
  // Predicated region
  $region22: #{cnn_forward.3} parent=0 // pred_check
    _
  $region23: #{cnn_forward.3} parent=0 // pred_check_branch
    %352 = sbr.rel (0) target = $region25
  $region24: #{cnn_forward.3} parent=0 // pred_region
    _
  $region25: #{cnn_forward.3} parent=0 // pred_fallthru
    _
  // Predicated region
  $region26: #{cnn_forward.3} parent=0 // pred_check
    _
  $region27: #{cnn_forward.3} parent=0 // pred_check_branch
    %354 = sbr.rel (0) target = $region29
  $region28: #{cnn_forward.3} parent=0 // pred_region
    _
  $region29: #{cnn_forward.3} parent=0 // pred_fallthru
    _

// kernel: cnn_forward.2
$region0: #{cnn_forward.2}
  #allocation0 [shape = 'u32[]', space=smem, size = 0x4, offset = 0x4, fixed_abs, tag = 'smem constant byte address 0x4 - core index']
  #allocation1 [shape = 'u32[144,128]{1,0:T(1,128)}', space=vmem, size = 0x12000, scoped, tag = 'internal scratch']
  #allocation2 [shape = 'f32[2,8,2,24,128]{4,3,2,1,0:T(8,128)}', space=vmem, size = 0x60000, scoped, tag = 'scratch operand']
  #allocation3 [shape = 'f32[6,16,128]{2,1,0:T(8,128)}', space=vmem, size = 0xc000, scoped, tag = 'scratch operand']
  %s0 = inlined_call_operand.vmem [shape: bf16[2,768,64], index: 0, kind: input, shape index: {}]
  %s1 = inlined_call_operand.vmem [shape: bf16[64,128], index: 1, kind: input, shape index: {}]
  %s2 = inlined_call_operand.vmem [shape: f32[1,128], index: 2, kind: input, shape index: {}]
  %s3 = inlined_call_operand.vmem [shape: bf16[16,128,128], index: 3, kind: input, shape index: {}]
  %s4 = inlined_call_operand.vmem [shape: f32[1,128], index: 4, kind: input, shape index: {}]
  %s5 = inlined_call_operand.vmem [shape: bf16[16,128,128], index: 5, kind: input, shape index: {}]
  %s6 = inlined_call_operand.vmem [shape: f32[1,128], index: 6, kind: input, shape index: {}]
  %s7 = inlined_call_operand.vmem [shape: bf16[2,24,128], index: 7, kind: output, shape index: {}]
  %s8 = sld [smem:[#allocation0]]
  $region61: #{cnn_forward.2} parent=0
    _
  %s10 = ssub.s32 1, %s8
  %s11 = scalar_select 0, %s10, %s8
  loop: start=0, step=1, limit=4
  $region2: #{cnn_forward.2} parent=0 // loop_pre_header
    _
  $region3: #{cnn_forward.2} parent=0 // loop_header
    %s13 = sphi 0, %s17
    %p14 = scmp.ge.s32.totalorder %s13, 4
    %s23 = sphi 0, %s25
    %s26 = sphi 0, %s23
    %s27 = sphi 0, %s26
    %s43 = sphi 0, %s27
    %s47 = sphi 0, %s47
    %s49 = sphi 0, %s47
    %s50 = sphi 0, %s49
    %s64 = sphi 0, %s50
    %s68 = sphi 0, %s68
    %s70 = sphi 0, %s68
    %s71 = sphi 0, %s70
    %s85 = sphi 0, %s71
    %s89 = sphi 0, %s89
    %s91 = sphi 0, %s89
    %s92 = sphi 0, %s91
    %s106 = sphi 0, %s92
    %s110 = sphi 0, %s110
    %s112 = sphi 0, %s110
    %s113 = sphi 0, %s112
    %s127 = sphi 0, %s113
    %s131 = sphi 0, %s131
    %s133 = sphi 0, %s131
    %s134 = sphi 0, %s133
    %s148 = sphi 0, %s134
    %s152 = sphi 0, %s152
    %s154 = sphi 0, %s152
    %s155 = sphi 0, %s154
    %s169 = sphi 0, %s155
    %s175 = sphi 0, %s177
    %s178 = sphi 0, %s175
    %s179 = sphi 0, %s178
    %s195 = sphi 0, %s179
  $region4: #{cnn_forward.2} parent=0 // loop_header_branch
    %16 = sbr.rel (%p14) target = $region8
  $region5: #{cnn_forward.2} parent=0 // loop_body
    %s18 = ssub.s32 %s13, 1
    %s19 = ssub.s32 %s13, 2
    %s20 = sadd.s32 %s13, 1
    %s21 = ssub.s32 %s13, %s20
    %p22 = scmp.eq.s32.totalorder %s21, 0
    %s24 = sadd.s32 %s23, 1
    %s25 = scalar_select %p22, %s23, %s24
    %p28 = pneg %p22
    %p29 = scmp.eq.s32.totalorder %s13, 1
    %p30 = por %p28, %p29
    %p31 = scmp.ne.s32.totalorder %s23, %s26
    %p32 = scmp.eq.s32.totalorder %s13, 0
    %p33 = por %p31, %p32
    %p34 = scmp.ne.s32.totalorder %s23, %s26
    %p35 = scmp.eq.s32.totalorder %s18, 1
    %p36 = por %p34, %p35
    %p37 = scmp.ne.s32.totalorder %s26, %s27
    %p38 = scmp.eq.s32.totalorder %s18, 0
    %p39 = por %p37, %p38
    %p40 = scmp.ne.s32.totalorder %s26, %s27
    %p41 = scmp.eq.s32.totalorder %s19, 1
    %p42 = por %p40, %p41
    %p44 = scmp.ne.s32.totalorder %s27, %s43
    %p45 = scmp.eq.s32.totalorder %s19, 0
    %p46 = por %p44, %p45
    %s48 = sadd.s32 %s47, 1
    %p51 = scmp.eq.s32.totalorder %s13, 1
    %p52 = scmp.ne.s32.totalorder %s47, %s49
    %p53 = scmp.eq.s32.totalorder %s13, 0
    %p54 = por %p52, %p53
    %p55 = scmp.ne.s32.totalorder %s47, %s49
    %p56 = scmp.eq.s32.totalorder %s18, 1
    %p57 = por %p55, %p56
    %p58 = scmp.ne.s32.totalorder %s49, %s50
    %p59 = scmp.eq.s32.totalorder %s18, 0
    %p60 = por %p58, %p59
    %p61 = scmp.ne.s32.totalorder %s49, %s50
    %p62 = scmp.eq.s32.totalorder %s19, 1
    %p63 = por %p61, %p62
    %p65 = scmp.ne.s32.totalorder %s50, %s64
    %p66 = scmp.eq.s32.totalorder %s19, 0
    %p67 = por %p65, %p66
    %s69 = sadd.s32 %s68, 1
    %p72 = scmp.eq.s32.totalorder %s13, 1
    %p73 = scmp.ne.s32.totalorder %s68, %s70
    %p74 = scmp.eq.s32.totalorder %s13, 0
    %p75 = por %p73, %p74
    %p76 = scmp.ne.s32.totalorder %s68, %s70
    %p77 = scmp.eq.s32.totalorder %s18, 1
    %p78 = por %p76, %p77
    %p79 = scmp.ne.s32.totalorder %s70, %s71
    %p80 = scmp.eq.s32.totalorder %s18, 0
    %p81 = por %p79, %p80
    %p82 = scmp.ne.s32.totalorder %s70, %s71
    %p83 = scmp.eq.s32.totalorder %s19, 1
    %p84 = por %p82, %p83
    %p86 = scmp.ne.s32.totalorder %s71, %s85
    %p87 = scmp.eq.s32.totalorder %s19, 0
    %p88 = por %p86, %p87
    %s90 = sadd.s32 %s89, 1
    %p93 = scmp.eq.s32.totalorder %s13, 1
    %p94 = scmp.ne.s32.totalorder %s89, %s91
    %p95 = scmp.eq.s32.totalorder %s13, 0
    %p96 = por %p94, %p95
    %p97 = scmp.ne.s32.totalorder %s89, %s91
    %p98 = scmp.eq.s32.totalorder %s18, 1
    %p99 = por %p97, %p98
    %p100 = scmp.ne.s32.totalorder %s91, %s92
    %p101 = scmp.eq.s32.totalorder %s18, 0
    %p102 = por %p100, %p101
    %p103 = scmp.ne.s32.totalorder %s91, %s92
    %p104 = scmp.eq.s32.totalorder %s19, 1
    %p105 = por %p103, %p104
    %p107 = scmp.ne.s32.totalorder %s92, %s106
    %p108 = scmp.eq.s32.totalorder %s19, 0
    %p109 = por %p107, %p108
    %s111 = sadd.s32 %s110, 1
    %p114 = scmp.eq.s32.totalorder %s13, 1
    %p115 = scmp.ne.s32.totalorder %s110, %s112
    %p116 = scmp.eq.s32.totalorder %s13, 0
    %p117 = por %p115, %p116
    %p118 = scmp.ne.s32.totalorder %s110, %s112
    %p119 = scmp.eq.s32.totalorder %s18, 1
    %p120 = por %p118, %p119
    %p121 = scmp.ne.s32.totalorder %s112, %s113
    %p122 = scmp.eq.s32.totalorder %s18, 0
    %p123 = por %p121, %p122
    %p124 = scmp.ne.s32.totalorder %s112, %s113
    %p125 = scmp.eq.s32.totalorder %s19, 1
    %p126 = por %p124, %p125
    %p128 = scmp.ne.s32.totalorder %s113, %s127
    %p129 = scmp.eq.s32.totalorder %s19, 0
    %p130 = por %p128, %p129
    %s132 = sadd.s32 %s131, 1
    %p135 = scmp.eq.s32.totalorder %s13, 1
    %p136 = scmp.ne.s32.totalorder %s131, %s133
    %p137 = scmp.eq.s32.totalorder %s13, 0
    %p138 = por %p136, %p137
    %p139 = scmp.ne.s32.totalorder %s131, %s133
    %p140 = scmp.eq.s32.totalorder %s18, 1
    %p141 = por %p139, %p140
    %p142 = scmp.ne.s32.totalorder %s133, %s134
    %p143 = scmp.eq.s32.totalorder %s18, 0
    %p144 = por %p142, %p143
    %p145 = scmp.ne.s32.totalorder %s133, %s134
    %p146 = scmp.eq.s32.totalorder %s19, 1
    %p147 = por %p145, %p146
    %p149 = scmp.ne.s32.totalorder %s134, %s148
    %p150 = scmp.eq.s32.totalorder %s19, 0
    %p151 = por %p149, %p150
    %s153 = sadd.s32 %s152, 1
    %p156 = scmp.eq.s32.totalorder %s13, 1
    %p157 = scmp.ne.s32.totalorder %s152, %s154
    %p158 = scmp.eq.s32.totalorder %s13, 0
    %p159 = por %p157, %p158
    %p160 = scmp.ne.s32.totalorder %s152, %s154
    %p161 = scmp.eq.s32.totalorder %s18, 1
    %p162 = por %p160, %p161
    %p163 = scmp.ne.s32.totalorder %s154, %s155
    %p164 = scmp.eq.s32.totalorder %s18, 0
    %p165 = por %p163, %p164
    %p166 = scmp.ne.s32.totalorder %s154, %s155
    %p167 = scmp.eq.s32.totalorder %s19, 1
    %p168 = por %p166, %p167
    %p170 = scmp.ne.s32.totalorder %s155, %s169
    %p171 = scmp.eq.s32.totalorder %s19, 0
    %p172 = por %p170, %p171
    %s173 = ssub.s32 %s13, %s20
    %p174 = scmp.eq.s32.totalorder %s173, 0
    %s176 = sadd.s32 %s175, 1
    %s177 = scalar_select %p174, %s175, %s176
    %p180 = pneg %p174
    %p181 = scmp.eq.s32.totalorder %s13, 1
    %p182 = por %p180, %p181
    %p183 = scmp.ne.s32.totalorder %s175, %s178
    %p184 = scmp.eq.s32.totalorder %s13, 0
    %p185 = por %p183, %p184
    %p186 = scmp.ne.s32.totalorder %s175, %s178
    %p187 = scmp.eq.s32.totalorder %s18, 1
    %p188 = por %p186, %p187
    %p189 = scmp.ne.s32.totalorder %s178, %s179
    %p190 = scmp.eq.s32.totalorder %s18, 0
    %p191 = por %p189, %p190
    %p192 = scmp.ne.s32.totalorder %s178, %s179
    %p193 = scmp.eq.s32.totalorder %s19, 1
    %p194 = por %p192, %p193
    %p196 = scmp.ne.s32.totalorder %s179, %s195
    %p197 = scmp.eq.s32.totalorder %s19, 0
    %p198 = por %p196, %p197
    %p199 = scmp.le.s32.totalorder 1, %s13
    %p200 = scmp.lt.s32.totalorder %s13, 3
    %p201 = pnand %p199, %p200
    %p202 = pneg %p201
    // Predicated region
    $region9: #{cnn_forward.2} parent=5 // pred_check
      _
    $region10: #{cnn_forward.2} parent=5 // pred_check_branch
      %204 = sbr.rel (%p201) target = $region12
    $region11: #{cnn_forward.2} parent=5 // pred_region
      %s205 = ssub.s32 %s13, 1
      // Predicated region
      $region13: #{cnn_forward.2} parent=11 // pred_check
        %p206 = pneg %p60
      $region14: #{cnn_forward.2} parent=11 // pred_check_branch
        %208 = sbr.rel (%p206) target = $region16
      $region15: #{cnn_forward.2} parent=11 // pred_region
        _
      $region16: #{cnn_forward.2} parent=11 // pred_fallthru
        _
      // Predicated region
      $region17: #{cnn_forward.2} parent=11 // pred_check
        %p209 = pneg %p81
      $region18: #{cnn_forward.2} parent=11 // pred_check_branch
        %211 = sbr.rel (%p209) target = $region20
      $region19: #{cnn_forward.2} parent=11 // pred_region
        _
      $region20: #{cnn_forward.2} parent=11 // pred_fallthru
        _
      // Predicated region
      $region21: #{cnn_forward.2} parent=11 // pred_check
        %p212 = pneg %p102
      $region22: #{cnn_forward.2} parent=11 // pred_check_branch
        %214 = sbr.rel (%p212) target = $region24
      $region23: #{cnn_forward.2} parent=11 // pred_region
        _
      $region24: #{cnn_forward.2} parent=11 // pred_fallthru
        _
      // Predicated region
      $region25: #{cnn_forward.2} parent=11 // pred_check
        %p215 = pneg %p123
      $region26: #{cnn_forward.2} parent=11 // pred_check_branch
        %217 = sbr.rel (%p215) target = $region28
      $region27: #{cnn_forward.2} parent=11 // pred_region
        _
      $region28: #{cnn_forward.2} parent=11 // pred_fallthru
        _
      // Predicated region
      $region29: #{cnn_forward.2} parent=11 // pred_check
        %p218 = pneg %p144
      $region30: #{cnn_forward.2} parent=11 // pred_check_branch
        %220 = sbr.rel (%p218) target = $region32
      $region31: #{cnn_forward.2} parent=11 // pred_region
        _
      $region32: #{cnn_forward.2} parent=11 // pred_fallthru
        _
      // Predicated region
      $region33: #{cnn_forward.2} parent=11 // pred_check
        %p221 = pneg %p165
      $region34: #{cnn_forward.2} parent=11 // pred_check_branch
        %223 = sbr.rel (%p221) target = $region36
      $region35: #{cnn_forward.2} parent=11 // pred_region
        _
      $region36: #{cnn_forward.2} parent=11 // pred_fallthru
        _
    $region12: #{cnn_forward.2} parent=5 // pred_fallthru
      _
    %p224 = scmp.lt.s32.totalorder %s13, 2
    // Predicated region
    $region37: #{cnn_forward.2} parent=5 // pred_check
      %p225 = pneg %p224
    $region38: #{cnn_forward.2} parent=5 // pred_check_branch
      %227 = sbr.rel (%p225) target = $region40
    $region39: #{cnn_forward.2} parent=5 // pred_region
      // Predicated region
      $region41: #{cnn_forward.2} parent=39 // pred_check
        %p228 = pneg %p33
      $region42: #{cnn_forward.2} parent=39 // pred_check_branch
        %230 = sbr.rel (%p228) target = $region44
      $region43: #{cnn_forward.2} parent=39 // pred_region
        %p231 = scmp.lt.s32.totalorder %s13, 1
        %s232 = scalar_select %p231, %s13, 1
        %s233 = smul.addr %s232, 96
        %s234 = smul.addr %s233, 4
        %s235 = scalar_lea.vmem %s0, %s234
      $region44: #{cnn_forward.2} parent=39 // pred_fallthru
        _
    $region40: #{cnn_forward.2} parent=5 // pred_fallthru
      _
    %p236 = scmp.le.s32.totalorder 1, %s13
    %p237 = scmp.lt.s32.totalorder %s13, 3
    %p238 = pnand %p236, %p237
    %p239 = pneg %p238
    // Predicated region
    $region45: #{cnn_forward.2} parent=5 // pred_check
      _
    $region46: #{cnn_forward.2} parent=5 // pred_check_branch
      %241 = sbr.rel (%p238) target = $region48
    $region47: #{cnn_forward.2} parent=5 // pred_region
      %s242 = ssub.s32 %s13, 1
      %p243 = scmp.lt.s32.totalorder %s18, 1
      %s244 = scalar_select %p243, %s18, 1
      %s245 = smul.addr %s244, 96
      %s246 = smul.addr %s245, 4
      %s247 = scalar_lea.vmem %s0, %s246
      %p248 = pneg %p39
      %p249 = pneg %p36
      %p250 = pneg %p60
      %p251 = pneg %p57
      %p252 = pneg %p81
      %p253 = pneg %p78
      %p254 = pneg %p102
      %p255 = pneg %p99
      %p256 = pneg %p123
      %p257 = pneg %p120
      %p258 = pneg %p144
      %p259 = pneg %p141
      %p260 = pneg %p165
      %p261 = pneg %p162
      %p262 = pneg %p191
      %p263 = pneg %p188
      %p264 = scmp.lt.s32.totalorder %s18, 1
      %s265 = scalar_select %p264, %s18, 1
      %s266 = smul.addr %s265, 3
      %s267 = smul.addr %s266, 4
      %s268 = scalar_lea.vmem %s7, %s267
      %p269 = scmp.lt.s32.totalorder %s18, 1
      %s270 = scalar_select %p269, %s18, 1
      %s271 = smul.addr %s270, 96
      %s272 = smul.addr %s271, 4
      %s273 = scalar_lea.vmem %s0, %s272
      %p274 = scmp.lt.s32.totalorder %s18, 1
      %s275 = scalar_select %p274, %s18, 1
      %s276 = smul.addr %s275, 3
      %s277 = smul.addr %s276, 4
      %s278 = scalar_lea.vmem %s7, %s277
      %v280 = vld [vmem:[%s273] sm:$0xf]
      %v281 = vld [vmem:[%s273 + $0x4] sm:$0xf]
      %v282 = vld [vmem:[%s273 + $0x8] sm:$0xf]
      %v283 = vld [vmem:[%s273 + $0xc] sm:$0xf]
      %v284 = vld [vmem:[%s273 + $0x10] sm:$0xf]
      %v285 = vld [vmem:[%s273 + $0x14] sm:$0xf]
      %v286 = vld [vmem:[%s273 + $0x18] sm:$0xf]
      %v287 = vld [vmem:[%s273 + $0x1c] sm:$0xf]
      %v288 = vld [vmem:[%s273 + $0x20] sm:$0xf]
      %v289 = vld [vmem:[%s273 + $0x24] sm:$0xf]
      %v290 = vld [vmem:[%s273 + $0x28] sm:$0xf]
      %v291 = vld [vmem:[%s273 + $0x2c] sm:$0xf]
      %v292 = vld [vmem:[%s273 + $0x30] sm:$0xf]
      %v293 = vld [vmem:[%s273 + $0x34] sm:$0xf]
      %v294 = vld [vmem:[%s273 + $0x38] sm:$0xf]
      %v295 = vld [vmem:[%s273 + $0x3c] sm:$0xf]
      %v296 = vld [vmem:[%s273 + $0x40] sm:$0xf]
      %v297 = vld [vmem:[%s273 + $0x44] sm:$0xf]
      %v298 = vld [vmem:[%s273 + $0x48] sm:$0xf]
      %v299 = vld [vmem:[%s273 + $0x4c] sm:$0xf]
      %v300 = vld [vmem:[%s273 + $0x50] sm:$0xf]
      %v301 = vld [vmem:[%s273 + $0x54] sm:$0xf]
      %v302 = vld [vmem:[%s273 + $0x58] sm:$0xf]
      %v303 = vld [vmem:[%s273 + $0x5c] sm:$0xf]
      %v304 = vld [vmem:[%s273 + $0x60] sm:$0xf]
      %v305 = vld [vmem:[%s273 + $0x64] sm:$0xf]
      %v306 = vld [vmem:[%s273 + $0x68] sm:$0xf]
      %v307 = vld [vmem:[%s273 + $0x6c] sm:$0xf]
      %v308 = vld [vmem:[%s273 + $0x70] sm:$0xf]
      %v309 = vld [vmem:[%s273 + $0x74] sm:$0xf]
      %v310 = vld [vmem:[%s273 + $0x78] sm:$0xf]
      %v311 = vld [vmem:[%s273 + $0x7c] sm:$0xf]
      %v312 = vld [vmem:[%s273 + $0x80] sm:$0xf]
      %v313 = vld [vmem:[%s273 + $0x84] sm:$0xf]
      %v314 = vld [vmem:[%s273 + $0x88] sm:$0xf]
      %v315 = vld [vmem:[%s273 + $0x8c] sm:$0xf]
      %v316 = vld [vmem:[%s273 + $0x90] sm:$0xf]
      %v317 = vld [vmem:[%s273 + $0x94] sm:$0xf]
      %v318 = vld [vmem:[%s273 + $0x98] sm:$0xf]
      %v319 = vld [vmem:[%s273 + $0x9c] sm:$0xf]
      %v320 = vld [vmem:[%s273 + $0xa0] sm:$0xf]
      %v321 = vld [vmem:[%s273 + $0xa4] sm:$0xf]
      %v322 = vld [vmem:[%s273 + $0xa8] sm:$0xf]
      %v323 = vld [vmem:[%s273 + $0xac] sm:$0xf]
      %v324 = vld [vmem:[%s273 + $0xb0] sm:$0xf]
      %v325 = vld [vmem:[%s273 + $0xb4] sm:$0xf]
      %v326 = vld [vmem:[%s273 + $0xb8] sm:$0xf]
      %v327 = vld [vmem:[%s273 + $0xbc] sm:$0xf]
      %v328 = vld [vmem:[%s273 + $0xc0] sm:$0xf]
      %v329 = vld [vmem:[%s273 + $0xc4] sm:$0xf]
      %v330 = vld [vmem:[%s273 + $0xc8] sm:$0xf]
      %v331 = vld [vmem:[%s273 + $0xcc] sm:$0xf]
      %v332 = vld [vmem:[%s273 + $0xd0] sm:$0xf]
      %v333 = vld [vmem:[%s273 + $0xd4] sm:$0xf]
      %v334 = vld [vmem:[%s273 + $0xd8] sm:$0xf]
      %v335 = vld [vmem:[%s273 + $0xdc] sm:$0xf]
      %v336 = vld [vmem:[%s273 + $0xe0] sm:$0xf]
      %v337 = vld [vmem:[%s273 + $0xe4] sm:$0xf]
      %v338 = vld [vmem:[%s273 + $0xe8] sm:$0xf]
      %v339 = vld [vmem:[%s273 + $0xec] sm:$0xf]
      %v340 = vld [vmem:[%s273 + $0xf0] sm:$0xf]
      %v341 = vld [vmem:[%s273 + $0xf4] sm:$0xf]
      %v342 = vld [vmem:[%s273 + $0xf8] sm:$0xf]
      %v343 = vld [vmem:[%s273 + $0xfc] sm:$0xf]
      %v344 = vld [vmem:[%s273 + $0x100] sm:$0xf]
      %v345 = vld [vmem:[%s273 + $0x104] sm:$0xf]
      %v346 = vld [vmem:[%s273 + $0x108] sm:$0xf]
      %v347 = vld [vmem:[%s273 + $0x10c] sm:$0xf]
      %v348 = vld [vmem:[%s273 + $0x110] sm:$0xf]
      %v349 = vld [vmem:[%s273 + $0x114] sm:$0xf]
      %v350 = vld [vmem:[%s273 + $0x118] sm:$0xf]
      %v351 = vld [vmem:[%s273 + $0x11c] sm:$0xf]
      %v352 = vld [vmem:[%s273 + $0x120] sm:$0xf]
      %v353 = vld [vmem:[%s273 + $0x124] sm:$0xf]
      %v354 = vld [vmem:[%s273 + $0x128] sm:$0xf]
      %v355 = vld [vmem:[%s273 + $0x12c] sm:$0xf]
      %v356 = vld [vmem:[%s273 + $0x130] sm:$0xf]
      %v357 = vld [vmem:[%s273 + $0x134] sm:$0xf]
      %v358 = vld [vmem:[%s273 + $0x138] sm:$0xf]
      %v359 = vld [vmem:[%s273 + $0x13c] sm:$0xf]
      %v360 = vld [vmem:[%s273 + $0x140] sm:$0xf]
      %v361 = vld [vmem:[%s273 + $0x144] sm:$0xf]
      %v362 = vld [vmem:[%s273 + $0x148] sm:$0xf]
      %v363 = vld [vmem:[%s273 + $0x14c] sm:$0xf]
      %v364 = vld [vmem:[%s273 + $0x150] sm:$0xf]
      %v365 = vld [vmem:[%s273 + $0x154] sm:$0xf]
      %v366 = vld [vmem:[%s273 + $0x158] sm:$0xf]
      %v367 = vld [vmem:[%s273 + $0x15c] sm:$0xf]
      %v368 = vld [vmem:[%s273 + $0x160] sm:$0xf]
      %v369 = vld [vmem:[%s273 + $0x164] sm:$0xf]
      %v370 = vld [vmem:[%s273 + $0x168] sm:$0xf]
      %v371 = vld [vmem:[%s273 + $0x16c] sm:$0xf]
      %v372 = vld [vmem:[%s273 + $0x170] sm:$0xf]
      %v373 = vld [vmem:[%s273 + $0x174] sm:$0xf]
      %v374 = vld [vmem:[%s273 + $0x178] sm:$0xf]
      %v375 = vld [vmem:[%s273 + $0x17c] sm:$0xf]
      %v376 = vld [vmem:[%s1] sm:$0xf]
      %v377 = vld [vmem:[%s1 + $0x4] sm:$0xf]
      %v378 = vld [vmem:[%s1 + $0x8] sm:$0xf]
      %v379 = vld [vmem:[%s1 + $0xc] sm:$0xf]
      %v380 = vld [vmem:[%s1 + $0x10] sm:$0xf]
      %v381 = vld [vmem:[%s1 + $0x14] sm:$0xf]
      %v382 = vld [vmem:[%s1 + $0x18] sm:$0xf]
      %v383 = vld [vmem:[%s1 + $0x1c] sm:$0xf]
      %v384 = vld [vmem:[%s2] sm:$0x1]
      %v386 = vlaneseq
      %v387 = vshrl.u32 %v386, 7
      %v388 = vsub.s32 0, %v387
      %v389 = vrot.slane %v384, %v388
      %v487 = vunpack.c.l.b16 %v280
      %v488 = vunpack.c.l.b16 %v281
      %v489 = vunpack.c.l.b16 %v282
      %v490 = vunpack.c.l.b16 %v283
      %v491 = vunpack.c.l.b16 %v284
      %v492 = vunpack.c.l.b16 %v285
      %v493 = vunpack.c.l.b16 %v286
      %v494 = vunpack.c.l.b16 %v287
      %v495 = vunpack.c.l.b16 %v288
      %v496 = vunpack.c.l.b16 %v289
      %v497 = vunpack.c.l.b16 %v290
      %v498 = vunpack.c.l.b16 %v291
      %v499 = vunpack.c.l.b16 %v292
      %v500 = vunpack.c.l.b16 %v293
      %v501 = vunpack.c.l.b16 %v294
      %v502 = vunpack.c.l.b16 %v295
      %v503 = vunpack.c.l.b16 %v296
      %v504 = vunpack.c.l.b16 %v297
      %v505 = vunpack.c.l.b16 %v298
      %v506 = vunpack.c.l.b16 %v299
      %v507 = vunpack.c.l.b16 %v300
      %v508 = vunpack.c.l.b16 %v301
      %v509 = vunpack.c.l.b16 %v302
      %v510 = vunpack.c.l.b16 %v303
      %v511 = vunpack.c.l.b16 %v304
      %v512 = vunpack.c.l.b16 %v305
      %v513 = vunpack.c.l.b16 %v306
      %v514 = vunpack.c.l.b16 %v307
      %v515 = vunpack.c.l.b16 %v308
      %v516 = vunpack.c.l.b16 %v309
      %v517 = vunpack.c.l.b16 %v310
      %v518 = vunpack.c.l.b16 %v311
      %v519 = vunpack.c.l.b16 %v312
      %v520 = vunpack.c.l.b16 %v313
      %v521 = vunpack.c.l.b16 %v314
      %v522 = vunpack.c.l.b16 %v315
      %v523 = vunpack.c.l.b16 %v316
      %v524 = vunpack.c.l.b16 %v317
      %v525 = vunpack.c.l.b16 %v318
      %v526 = vunpack.c.l.b16 %v319
      %v527 = vunpack.c.l.b16 %v320
      %v528 = vunpack.c.l.b16 %v321
      %v529 = vunpack.c.l.b16 %v322
      %v530 = vunpack.c.l.b16 %v323
      %v531 = vunpack.c.l.b16 %v324
      %v532 = vunpack.c.l.b16 %v325
      %v533 = vunpack.c.l.b16 %v326
      %v534 = vunpack.c.l.b16 %v327
      %v535 = vunpack.c.l.b16 %v328
      %v536 = vunpack.c.l.b16 %v329
      %v537 = vunpack.c.l.b16 %v330
      %v538 = vunpack.c.l.b16 %v331
      %v539 = vunpack.c.l.b16 %v332
      %v540 = vunpack.c.l.b16 %v333
      %v541 = vunpack.c.l.b16 %v334
      %v542 = vunpack.c.l.b16 %v335
      %v543 = vunpack.c.l.b16 %v336
      %v544 = vunpack.c.l.b16 %v337
      %v545 = vunpack.c.l.b16 %v338
      %v546 = vunpack.c.l.b16 %v339
      %v547 = vunpack.c.l.b16 %v340
      %v548 = vunpack.c.l.b16 %v341
      %v549 = vunpack.c.l.b16 %v342
      %v550 = vunpack.c.l.b16 %v343
      %v551 = vunpack.c.l.b16 %v344
      %v552 = vunpack.c.l.b16 %v345
      %v553 = vunpack.c.l.b16 %v346
      %v554 = vunpack.c.l.b16 %v347
      %v555 = vunpack.c.l.b16 %v348
      %v556 = vunpack.c.l.b16 %v349
      %v557 = vunpack.c.l.b16 %v350
      %v558 = vunpack.c.l.b16 %v351
      %v559 = vunpack.c.l.b16 %v352
      %v560 = vunpack.c.l.b16 %v353
      %v561 = vunpack.c.l.b16 %v354
      %v562 = vunpack.c.l.b16 %v355
      %v563 = vunpack.c.l.b16 %v356
      %v564 = vunpack.c.l.b16 %v357
      %v565 = vunpack.c.l.b16 %v358
      %v566 = vunpack.c.l.b16 %v359
      %v567 = vunpack.c.l.b16 %v360
      %v568 = vunpack.c.l.b16 %v361
      %v569 = vunpack.c.l.b16 %v362
      %v570 = vunpack.c.l.b16 %v363
      %v571 = vunpack.c.l.b16 %v364
      %v572 = vunpack.c.l.b16 %v365
      %v573 = vunpack.c.l.b16 %v366
      %v574 = vunpack.c.l.b16 %v367
      %v575 = vunpack.c.l.b16 %v368
      %v576 = vunpack.c.l.b16 %v369
      %v577 = vunpack.c.l.b16 %v370
      %v578 = vunpack.c.l.b16 %v371
      %v579 = vunpack.c.l.b16 %v372
      %v580 = vunpack.c.l.b16 %v373
      %v581 = vunpack.c.l.b16 %v374
      %v582 = vunpack.c.l.b16 %v375
      %v583 = vpack.c.b16 %v488, %v487
      %v584 = vpack.c.b16 %v490, %v489
      %v585 = vpack.c.b16 %v492, %v491
      %v586 = vpack.c.b16 %v494, %v493
      %v587 = vpack.c.b16 %v496, %v495
      %v588 = vpack.c.b16 %v498, %v497
      %v589 = vpack.c.b16 %v500, %v499
      %v590 = vpack.c.b16 %v502, %v501
      %v591 = vpack.c.b16 %v504, %v503
      %v592 = vpack.c.b16 %v506, %v505
      %v593 = vpack.c.b16 %v508, %v507
      %v594 = vpack.c.b16 %v510, %v509
      %v595 = vpack.c.b16 %v512, %v511
      %v596 = vpack.c.b16 %v514, %v513
      %v597 = vpack.c.b16 %v516, %v515
      %v598 = vpack.c.b16 %v518, %v517
      %v599 = vpack.c.b16 %v520, %v519
      %v600 = vpack.c.b16 %v522, %v521
      %v601 = vpack.c.b16 %v524, %v523
      %v602 = vpack.c.b16 %v526, %v525
      %v603 = vpack.c.b16 %v528, %v527
      %v604 = vpack.c.b16 %v530, %v529
      %v605 = vpack.c.b16 %v532, %v531
      %v606 = vpack.c.b16 %v534, %v533
      %v607 = vpack.c.b16 %v536, %v535
      %v608 = vpack.c.b16 %v538, %v537
      %v609 = vpack.c.b16 %v540, %v539
      %v610 = vpack.c.b16 %v542, %v541
      %v611 = vpack.c.b16 %v544, %v543
      %v612 = vpack.c.b16 %v546, %v545
      %v613 = vpack.c.b16 %v548, %v547
      %v614 = vpack.c.b16 %v550, %v549
      %v615 = vpack.c.b16 %v552, %v551
      %v616 = vpack.c.b16 %v554, %v553
      %v617 = vpack.c.b16 %v556, %v555
      %v618 = vpack.c.b16 %v558, %v557
      %v619 = vpack.c.b16 %v560, %v559
      %v620 = vpack.c.b16 %v562, %v561
      %v621 = vpack.c.b16 %v564, %v563
      %v622 = vpack.c.b16 %v566, %v565
      %v623 = vpack.c.b16 %v568, %v567
      %v624 = vpack.c.b16 %v570, %v569
      %v625 = vpack.c.b16 %v572, %v571
      %v626 = vpack.c.b16 %v574, %v573
      %v627 = vpack.c.b16 %v576, %v575
      %v628 = vpack.c.b16 %v578, %v577
      %v629 = vpack.c.b16 %v580, %v579
      %v630 = vpack.c.b16 %v582, %v581
      %v639 = vunpack.c.l.b16 %v376
      %v640 = vunpack.c.l.b16 %v377
      %v641 = vunpack.c.l.b16 %v378
      %v642 = vunpack.c.l.b16 %v379
      %v643 = vunpack.c.l.b16 %v380
      %v644 = vunpack.c.l.b16 %v381
      %v645 = vunpack.c.l.b16 %v382
      %v646 = vunpack.c.l.b16 %v383
      %v647 = vpack.c.b16 %v640, %v639
      %v648 = vpack.c.b16 %v642, %v641
      %v649 = vpack.c.b16 %v644, %v643
      %v650 = vpack.c.b16 %v646, %v645
      %vm655 = vcmask 523264
      %v657 = vsel %vm655, %v583, 0
      %v660 = vsel %vm655, %v584, 0
      %v663 = vsel %vm655, %v585, 0
      %v666 = vsel %vm655, %v586, 0
      %v669 = vsel %vm655, %v587, 0
      %v672 = vsel %vm655, %v588, 0
      %v675 = vsel %vm655, %v589, 0
      %v678 = vsel %vm655, %v590, 0
      %v681 = vsel %vm655, %v591, 0
      %v684 = vsel %vm655, %v592, 0
      %v687 = vsel %vm655, %v593, 0
      %v690 = vsel %vm655, %v594, 0
      %v693 = vsel %vm655, %v595, 0
      %v696 = vsel %vm655, %v596, 0
      %v699 = vsel %vm655, %v597, 0
      %v702 = vsel %vm655, %v598, 0
      %v705 = vsel %vm655, %v599, 0
      %v708 = vsel %vm655, %v600, 0
      %v711 = vsel %vm655, %v601, 0
      %v714 = vsel %vm655, %v602, 0
      %v717 = vsel %vm655, %v603, 0
      %v720 = vsel %vm655, %v604, 0
      %v723 = vsel %vm655, %v605, 0
      %v726 = vsel %vm655, %v606, 0
      %v729 = vsel %vm655, %v607, 0
      %v732 = vsel %vm655, %v608, 0
      %v735 = vsel %vm655, %v609, 0
      %v738 = vsel %vm655, %v610, 0
      %v741 = vsel %vm655, %v611, 0
      %v744 = vsel %vm655, %v612, 0
      %v747 = vsel %vm655, %v613, 0
      %v750 = vsel %vm655, %v614, 0
      %v753 = vsel %vm655, %v615, 0
      %v756 = vsel %vm655, %v616, 0
      %v759 = vsel %vm655, %v617, 0
      %v762 = vsel %vm655, %v618, 0
      %v765 = vsel %vm655, %v619, 0
      %v768 = vsel %vm655, %v620, 0
      %v771 = vsel %vm655, %v621, 0
      %v774 = vsel %vm655, %v622, 0
      %v777 = vsel %vm655, %v623, 0
      %v780 = vsel %vm655, %v624, 0
      %v783 = vsel %vm655, %v625, 0
      %v786 = vsel %vm655, %v626, 0
      %v789 = vsel %vm655, %v627, 0
      %v792 = vsel %vm655, %v628, 0
      %v795 = vsel %vm655, %v629, 0
      %v798 = vsel %vm655, %v630, 0
      %800 = vmatprep.subr.bf16.mxu0 0
      %801 = vmatpush1.bf16.msra.mxu0 %v647
      %802 = vmatprep.subr.bf16.mxu0 0
      %803 = vmatpush1.bf16.msra.mxu0 %v648
      %804 = vmatprep.subr.bf16.mxu0 0
      %805 = vmatpush1.bf16.msra.mxu0 %v649
      %806 = vmatprep.subr.bf16.mxu0 0
      %807 = vmatpush1.bf16.msra.mxu0 %v650
      %808 = vmatprep.subr.bf16.mxu0 0
      %809 = vmatpush1.bf16.msra.mxu0 0
      %810 = vmatprep.subr.bf16.mxu0 0
      %811 = vmatpush1.bf16.msra.mxu0 0
      %812 = vmatprep.subr.bf16.mxu0 0
      %813 = vmatpush1.bf16.msra.mxu0 0
      %814 = vmatprep.subr.bf16.mxu0 0
      %815 = vmatpush1.bf16.msra.mxu0 0
      %816 = vmatprep.subr.bf16.mxu0 0
      %817 = vmatpush1.bf16.msra.mxu0 0
      %818 = vmatprep.subr.bf16.mxu0 0
      %819 = vmatpush1.bf16.msra.mxu0 0
      %820 = vmatprep.subr.bf16.mxu0 0
      %821 = vmatpush1.bf16.msra.mxu0 0
      %822 = vmatprep.subr.bf16.mxu0 0
      %823 = vmatpush1.bf16.msra.mxu0 0
      %824 = vmatprep.subr.bf16.mxu0 0
      %825 = vmatpush1.bf16.msra.mxu0 0
      %826 = vmatprep.subr.bf16.mxu0 0
      %827 = vmatpush1.bf16.msra.mxu0 0
      %828 = vmatprep.subr.bf16.mxu0 0
      %829 = vmatpush1.bf16.msra.mxu0 0
      %830 = vmatprep.subr.bf16.mxu0 0
      %831 = vmatpush1.bf16.msra.mxu0 0
      %832 = vmatprep.mubr.bf16.mxu0 0
      %833 = vmatmul.mubr.bf16.gmra.mrb[0].mxu0 %v657
      %v834 = vpop.f32.mrb[0].mxu0
      %v835 = vadd.f32 %v389, %v834
      %v836 = vpop.f32.mrb[0].mxu0
      %v837 = vpop.f32.mrb[0].mxu0
      %v838 = vadd.f32 %v389, %v837
      %v839 = vpop.f32.mrb[0].mxu0
      %840 = vmatprep.mubr.bf16.mxu0 0
      %841 = vmatmul.mubr.bf16.gmra.mrb[0].mxu0 %v660
      %v842 = vpop.f32.mrb[0].mxu0
      %v843 = vadd.f32 %v389, %v842
      %v844 = vpop.f32.mrb[0].mxu0
      %v845 = vpop.f32.mrb[0].mxu0
      %v846 = vadd.f32 %v389, %v845
      %v847 = vpop.f32.mrb[0].mxu0
      %848 = vmatprep.mubr.bf16.mxu0 0
      %849 = vmatmul.mubr.bf16.gmra.mrb[0].mxu0 %v663
      %v850 = vpop.f32.mrb[0].mxu0
      %v851 = vadd.f32 %v389, %v850
      %v852 = vpop.f32.mrb[0].mxu0
      %v853 = vpop.f32.mrb[0].mxu0
      %v854 = vadd.f32 %v389, %v853
      %v855 = vpop.f32.mrb[0].mxu0
      %856 = vmatprep.mubr.bf16.mxu0 0
      %857 = vmatmul.mubr.bf16.gmra.mrb[0].mxu0 %v666
      %v858 = vpop.f32.mrb[0].mxu0
      %v859 = vadd.f32 %v389, %v858
      %v860 = vpop.f32.mrb[0].mxu0
      %v861 = vpop.f32.mrb[0].mxu0
      %v862 = vadd.f32 %v389, %v861
      %v863 = vpop.f32.mrb[0].mxu0
      %864 = vmatprep.mubr.bf16.mxu0 0
      %865 = vmatmul.mubr.bf16.gmra.mrb[0].mxu0 %v669
      %v866 = vpop.f32.mrb[0].mxu0
      %v867 = vadd.f32 %v389, %v866
      %v868 = vpop.f32.mrb[0].mxu0
      %v869 = vpop.f32.mrb[0].mxu0
      %v870 = vadd.f32 %v389, %v869
      %v871 = vpop.f32.mrb[0].mxu0
      %872 = vmatprep.mubr.bf16.mxu0 0
      %873 = vmatmul.mubr.bf16.gmra.mrb[0].mxu0 %v672
      %v874 = vpop.f32.mrb[0].mxu0
      %v875 = vadd.f32 %v389, %v874
      %v876 = vpop.f32.mrb[0].mxu0
      %v877 = vpop.f32.mrb[0].mxu0
      %v878 = vadd.f32 %v389, %v877
      %v879 = vpop.f32.mrb[0].mxu0
      %880 = vmatprep.mubr.bf16.mxu0 0
      %881 = vmatmul.mubr.bf16.gmra.mrb[0].mxu0 %v675
      %v882 = vpop.f32.mrb[0].mxu0
      %v883 = vadd.f32 %v389, %v882
      %v884 = vpop.f32.mrb[0].mxu0
      %v885 = vpop.f32.mrb[0].mxu0
      %v886 = vadd.f32 %v389, %v885
      %v887 = vpop.f32.mrb[0].mxu0
      %888 = vmatprep.mubr.bf16.mxu0 0
      %889 = vmatmul.mubr.bf16.gmra.mrb[0].mxu0 %v678
      %v890 = vpop.f32.mrb[0].mxu0
      %v891 = vadd.f32 %v389, %v890
      %v892 = vpop.f32.mrb[0].mxu0
      %v893 = vpop.f32.mrb[0].mxu0
      %v894 = vadd.f32 %v389, %v893
      %v895 = vpop.f32.mrb[0].mxu0
      %896 = vmatprep.mubr.bf16.mxu0 0
      %897 = vmatmul.mubr.bf16.gmra.mrb[0].mxu0 %v681
      %v898 = vpop.f32.mrb[0].mxu0
      %v899 = vadd.f32 %v389, %v898
      %v900 = vpop.f32.mrb[0].mxu0
      %v901 = vpop.f32.mrb[0].mxu0
      %v902 = vadd.f32 %v389, %v901
      %v903 = vpop.f32.mrb[0].mxu0
      %904 = vmatprep.mubr.bf16.mxu0 0
      %905 = vmatmul.mubr.bf16.gmra.mrb[0].mxu0 %v684
      %v906 = vpop.f32.mrb[0].mxu0
      %v907 = vadd.f32 %v389, %v906
      %v908 = vpop.f32.mrb[0].mxu0
      %v909 = vpop.f32.mrb[0].mxu0
      %v910 = vadd.f32 %v389, %v909
      %v911 = vpop.f32.mrb[0].mxu0
      %912 = vmatprep.mubr.bf16.mxu0 0
      %913 = vmatmul.mubr.bf16.gmra.mrb[0].mxu0 %v687
      %v914 = vpop.f32.mrb[0].mxu0
      %v915 = vadd.f32 %v389, %v914
      %v916 = vpop.f32.mrb[0].mxu0
      %v917 = vpop.f32.mrb[0].mxu0
      %v918 = vadd.f32 %v389, %v917
      %v919 = vpop.f32.mrb[0].mxu0
      %920 = vmatprep.mubr.bf16.mxu0 0
      %921 = vmatmul.mubr.bf16.gmra.mrb[0].mxu0 %v690
      %v922 = vpop.f32.mrb[0].mxu0
      %v923 = vadd.f32 %v389, %v922
      %v924 = vpop.f32.mrb[0].mxu0
      %v925 = vpop.f32.mrb[0].mxu0
      %v926 = vadd.f32 %v389, %v925
      %v927 = vpop.f32.mrb[0].mxu0
      %928 = vmatprep.mubr.bf16.mxu0 0
      %929 = vmatmul.mubr.bf16.gmra.mrb[0].mxu0 %v693
      %v930 = vpop.f32.mrb[0].mxu0
      %v931 = vadd.f32 %v389, %v930
      %v932 = vpop.f32.mrb[0].mxu0
      %v933 = vpop.f32.mrb[0].mxu0
      %v934 = vadd.f32 %v389, %v933
      %v935 = vpop.f32.mrb[0].mxu0
      %936 = vmatprep.mubr.bf16.mxu0 0
      %937 = vmatmul.mubr.bf16.gmra.mrb[0].mxu0 %v696
      %v938 = vpop.f32.mrb[0].mxu0
      %v939 = vadd.f32 %v389, %v938
      %v940 = vpop.f32.mrb[0].mxu0
      %v941 = vpop.f32.mrb[0].mxu0
      %v942 = vadd.f32 %v389, %v941
      %v943 = vpop.f32.mrb[0].mxu0
      %944 = vmatprep.mubr.bf16.mxu0 0
      %945 = vmatmul.mubr.bf16.gmra.mrb[0].mxu0 %v699
      %v946 = vpop.f32.mrb[0].mxu0
      %v947 = vadd.f32 %v389, %v946
      %v948 = vpop.f32.mrb[0].mxu0
      %v949 = vpop.f32.mrb[0].mxu0
      %v950 = vadd.f32 %v389, %v949
      %v951 = vpop.f32.mrb[0].mxu0
      %952 = vmatprep.mubr.bf16.mxu0 0
      %953 = vmatmul.mubr.bf16.gmra.mrb[0].mxu0 %v702
      %v954 = vpop.f32.mrb[0].mxu0
      %v955 = vadd.f32 %v389, %v954
      %v956 = vpop.f32.mrb[0].mxu0
      %v957 = vpop.f32.mrb[0].mxu0
      %v958 = vadd.f32 %v389, %v957
      %v959 = vpop.f32.mrb[0].mxu0
      %960 = vmatprep.mubr.bf16.mxu0 0
      %961 = vmatmul.mubr.bf16.gmra.mrb[0].mxu0 %v705
      %v962 = vpop.f32.mrb[0].mxu0
      %v963 = vadd.f32 %v389, %v962
      %v964 = vpop.f32.mrb[0].mxu0
      %v965 = vpop.f32.mrb[0].mxu0
      %v966 = vadd.f32 %v389, %v965
      %v967 = vpop.f32.mrb[0].mxu0
      %968 = vmatprep.mubr.bf16.mxu0 0
      %969 = vmatmul.mubr.bf16.gmra.mrb[0].mxu0 %v708
      %v970 = vpop.f32.mrb[0].mxu0
      %v971 = vadd.f32 %v389, %v970
      %v972 = vpop.f32.mrb[0].mxu0
      %v973 = vpop.f32.mrb[0].mxu0
      %v974 = vadd.f32 %v389, %v973
      %v975 = vpop.f32.mrb[0].mxu0
      %976 = vmatprep.mubr.bf16.mxu0 0
      %977 = vmatmul.mubr.bf16.gmra.mrb[0].mxu0 %v711
      %v978 = vpop.f32.mrb[0].mxu0
      %v979 = vadd.f32 %v389, %v978
      %v980 = vpop.f32.mrb[0].mxu0
      %v981 = vpop.f32.mrb[0].mxu0
      %v982 = vadd.f32 %v389, %v981
      %v983 = vpop.f32.mrb[0].mxu0
      %984 = vmatprep.mubr.bf16.mxu0 0
      %985 = vmatmul.mubr.bf16.gmra.mrb[0].mxu0 %v714
      %v986 = vpop.f32.mrb[0].mxu0
      %v987 = vadd.f32 %v389, %v986
      %v988 = vpop.f32.mrb[0].mxu0
      %v989 = vpop.f32.mrb[0].mxu0
      %v990 = vadd.f32 %v389, %v989
      %v991 = vpop.f32.mrb[0].mxu0
      %992 = vmatprep.mubr.bf16.mxu0 0
      %993 = vmatmul.mubr.bf16.gmra.mrb[0].mxu0 %v717
      %v994 = vpop.f32.mrb[0].mxu0
      %v995 = vadd.f32 %v389, %v994
      %v996 = vpop.f32.mrb[0].mxu0
      %v997 = vpop.f32.mrb[0].mxu0
      %v998 = vadd.f32 %v389, %v997
      %v999 = vpop.f32.mrb[0].mxu0
      %1000 = vmatprep.mubr.bf16.mxu0 0
      %1001 = vmatmul.mubr.bf16.gmra.mrb[0].mxu0 %v720
      %v1002 = vpop.f32.mrb[0].mxu0
      %v1003 = vadd.f32 %v389, %v1002
      %v1004 = vpop.f32.mrb[0].mxu0
      %v1005 = vpop.f32.mrb[0].mxu0
      %v1006 = vadd.f32 %v389, %v1005
      %v1007 = vpop.f32.mrb[0].mxu0
      %1008 = vmatprep.mubr.bf16.mxu0 0
      %1009 = vmatmul.mubr.bf16.gmra.mrb[0].mxu0 %v723
      %v1010 = vpop.f32.mrb[0].mxu0
      %v1011 = vadd.f32 %v389, %v1010
      %v1012 = vpop.f32.mrb[0].mxu0
      %v1013 = vpop.f32.mrb[0].mxu0
      %v1014 = vadd.f32 %v389, %v1013
      %v1015 = vpop.f32.mrb[0].mxu0
      %1016 = vmatprep.mubr.bf16.mxu0 0
      %1017 = vmatmul.mubr.bf16.gmra.mrb[0].mxu0 %v726
      %v1018 = vpop.f32.mrb[0].mxu0
      %v1019 = vadd.f32 %v389, %v1018
      %v1020 = vpop.f32.mrb[0].mxu0
      %v1021 = vpop.f32.mrb[0].mxu0
      %v1022 = vadd.f32 %v389, %v1021
      %v1023 = vpop.f32.mrb[0].mxu0
      %1024 = vmatprep.mubr.bf16.mxu0 0
      %1025 = vmatmul.mubr.bf16.gmra.mrb[0].mxu0 %v729
      %v1026 = vpop.f32.mrb[0].mxu0
      %v1027 = vadd.f32 %v389, %v1026
      %v1028 = vpop.f32.mrb[0].mxu0
      %v1029 = vpop.f32.mrb[0].mxu0
      %v1030 = vadd.f32 %v389, %v1029
      %v1031 = vpop.f32.mrb[0].mxu0
      %1032 = vmatprep.mubr.bf16.mxu0 0
      %1033 = vmatmul.mubr.bf16.gmra.mrb[0].mxu0 %v732
      %v1034 = vpop.f32.mrb[0].mxu0
      %v1035 = vadd.f32 %v389, %v1034
      %v1036 = vpop.f32.mrb[0].mxu0
      %v1037 = vpop.f32.mrb[0].mxu0
      %v1038 = vadd.f32 %v389, %v1037
      %v1039 = vpop.f32.mrb[0].mxu0
      %1040 = vmatprep.mubr.bf16.mxu0 0
      %1041 = vmatmul.mubr.bf16.gmra.mrb[0].mxu0 %v735
      %v1042 = vpop.f32.mrb[0].mxu0
      %v1043 = vadd.f32 %v389, %v1042
      %v1044 = vpop.f32.mrb[0].mxu0
      %v1045 = vpop.f32.mrb[0].mxu0
      %v1046 = vadd.f32 %v389, %v1045
      %v1047 = vpop.f32.mrb[0].mxu0
      %1048 = vmatprep.mubr.bf16.mxu0 0
      %1049 = vmatmul.mubr.bf16.gmra.mrb[0].mxu0 %v738
      %v1050 = vpop.f32.mrb[0].mxu0
      %v1051 = vadd.f32 %v389, %v1050
      %v1052 = vpop.f32.mrb[0].mxu0
      %v1053 = vpop.f32.mrb[0].mxu0
      %v1054 = vadd.f32 %v389, %v1053
      %v1055 = vpop.f32.mrb[0].mxu0
      %1056 = vmatprep.mubr.bf16.mxu0 0
      %1057 = vmatmul.mubr.bf16.gmra.mrb[0].mxu0 %v741
      %v1058 = vpop.f32.mrb[0].mxu0
      %v1059 = vadd.f32 %v389, %v1058
      %v1060 = vpop.f32.mrb[0].mxu0
      %v1061 = vpop.f32.mrb[0].mxu0
      %v1062 = vadd.f32 %v389, %v1061
      %v1063 = vpop.f32.mrb[0].mxu0
      %1064 = vmatprep.mubr.bf16.mxu0 0
      %1065 = vmatmul.mubr.bf16.gmra.mrb[0].mxu0 %v744
      %v1066 = vpop.f32.mrb[0].mxu0
      %v1067 = vadd.f32 %v389, %v1066
      %v1068 = vpop.f32.mrb[0].mxu0
      %v1069 = vpop.f32.mrb[0].mxu0
      %v1070 = vadd.f32 %v389, %v1069
      %v1071 = vpop.f32.mrb[0].mxu0
      %1072 = vmatprep.mubr.bf16.mxu0 0
      %1073 = vmatmul.mubr.bf16.gmra.mrb[0].mxu0 %v747
      %v1074 = vpop.f32.mrb[0].mxu0
      %v1075 = vadd.f32 %v389, %v1074
      %v1076 = vpop.f32.mrb[0].mxu0
      %v1077 = vpop.f32.mrb[0].mxu0
      %v1078 = vadd.f32 %v389, %v1077
      %v1079 = vpop.f32.mrb[0].mxu0
      %1080 = vmatprep.mubr.bf16.mxu0 0
      %1081 = vmatmul.mubr.bf16.gmra.mrb[0].mxu0 %v750
      %v1082 = vpop.f32.mrb[0].mxu0
      %v1083 = vadd.f32 %v389, %v1082
      %v1084 = vpop.f32.mrb[0].mxu0
      %v1085 = vpop.f32.mrb[0].mxu0
      %v1086 = vadd.f32 %v389, %v1085
      %v1087 = vpop.f32.mrb[0].mxu0
      %1088 = vmatprep.mubr.bf16.mxu0 0
      %1089 = vmatmul.mubr.bf16.gmra.mrb[0].mxu0 %v753
      %v1090 = vpop.f32.mrb[0].mxu0
      %v1091 = vadd.f32 %v389, %v1090
      %v1092 = vpop.f32.mrb[0].mxu0
      %v1093 = vpop.f32.mrb[0].mxu0
      %v1094 = vadd.f32 %v389, %v1093
      %v1095 = vpop.f32.mrb[0].mxu0
      %1096 = vmatprep.mubr.bf16.mxu0 0
      %1097 = vmatmul.mubr.bf16.gmra.mrb[0].mxu0 %v756
      %v1098 = vpop.f32.mrb[0].mxu0
      %v1099 = vadd.f32 %v389, %v1098
      %v1100 = vpop.f32.mrb[0].mxu0
      %v1101 = vpop.f32.mrb[0].mxu0
      %v1102 = vadd.f32 %v389, %v1101
      %v1103 = vpop.f32.mrb[0].mxu0
      %1104 = vmatprep.mubr.bf16.mxu0 0
      %1105 = vmatmul.mubr.bf16.gmra.mrb[0].mxu0 %v759
      %v1106 = vpop.f32.mrb[0].mxu0
      %v1107 = vadd.f32 %v389, %v1106
      %v1108 = vpop.f32.mrb[0].mxu0
      %v1109 = vpop.f32.mrb[0].mxu0
      %v1110 = vadd.f32 %v389, %v1109
      %v1111 = vpop.f32.mrb[0].mxu0
      %1112 = vmatprep.mubr.bf16.mxu0 0
      %1113 = vmatmul.mubr.bf16.gmra.mrb[0].mxu0 %v762
      %v1114 = vpop.f32.mrb[0].mxu0
      %v1115 = vadd.f32 %v389, %v1114
      %v1116 = vpop.f32.mrb[0].mxu0
      %v1117 = vpop.f32.mrb[0].mxu0
      %v1118 = vadd.f32 %v389, %v1117
      %v1119 = vpop.f32.mrb[0].mxu0
      %1120 = vmatprep.mubr.bf16.mxu0 0
      %1121 = vmatmul.mubr.bf16.gmra.mrb[0].mxu0 %v765
      %v1122 = vpop.f32.mrb[0].mxu0
      %v1123 = vadd.f32 %v389, %v1122
      %v1124 = vpop.f32.mrb[0].mxu0
      %v1125 = vpop.f32.mrb[0].mxu0
      %v1126 = vadd.f32 %v389, %v1125
      %v1127 = vpop.f32.mrb[0].mxu0
      %1128 = vmatprep.mubr.bf16.mxu0 0
      %1129 = vmatmul.mubr.bf16.gmra.mrb[0].mxu0 %v768
      %v1130 = vpop.f32.mrb[0].mxu0
      %v1131 = vadd.f32 %v389, %v1130
      %v1132 = vpop.f32.mrb[0].mxu0
      %v1133 = vpop.f32.mrb[0].mxu0
      %v1134 = vadd.f32 %v389, %v1133
      %v1135 = vpop.f32.mrb[0].mxu0
      %1136 = vmatprep.mubr.bf16.mxu0 0
      %1137 = vmatmul.mubr.bf16.gmra.mrb[0].mxu0 %v771
      %v1138 = vpop.f32.mrb[0].mxu0
      %v1139 = vadd.f32 %v389, %v1138
      %v1140 = vpop.f32.mrb[0].mxu0
      %v1141 = vpop.f32.mrb[0].mxu0
      %v1142 = vadd.f32 %v389, %v1141
      %v1143 = vpop.f32.mrb[0].mxu0
      %1144 = vmatprep.mubr.bf16.mxu0 0
      %1145 = vmatmul.mubr.bf16.gmra.mrb[0].mxu0 %v774
      %v1146 = vpop.f32.mrb[0].mxu0
      %v1147 = vadd.f32 %v389, %v1146
      %v1148 = vpop.f32.mrb[0].mxu0
      %v1149 = vpop.f32.mrb[0].mxu0
      %v1150 = vadd.f32 %v389, %v1149
      %v1151 = vpop.f32.mrb[0].mxu0
      %1152 = vmatprep.mubr.bf16.mxu0 0
      %1153 = vmatmul.mubr.bf16.gmra.mrb[0].mxu0 %v777
      %v1154 = vpop.f32.mrb[0].mxu0
      %v1155 = vadd.f32 %v389, %v1154
      %v1156 = vpop.f32.mrb[0].mxu0
      %v1157 = vpop.f32.mrb[0].mxu0
      %v1158 = vadd.f32 %v389, %v1157
      %v1159 = vpop.f32.mrb[0].mxu0
      %1160 = vmatprep.mubr.bf16.mxu0 0
      %1161 = vmatmul.mubr.bf16.gmra.mrb[0].mxu0 %v780
      %v1162 = vpop.f32.mrb[0].mxu0
      %v1163 = vadd.f32 %v389, %v1162
      %v1164 = vpop.f32.mrb[0].mxu0
      %v1165 = vpop.f32.mrb[0].mxu0
      %v1166 = vadd.f32 %v389, %v1165
      %v1167 = vpop.f32.mrb[0].mxu0
      %1168 = vmatprep.mubr.bf16.mxu0 0
      %1169 = vmatmul.mubr.bf16.gmra.mrb[0].mxu0 %v783
      %v1170 = vpop.f32.mrb[0].mxu0
      %v1171 = vadd.f32 %v389, %v1170
      %v1172 = vpop.f32.mrb[0].mxu0
      %v1173 = vpop.f32.mrb[0].mxu0
      %v1174 = vadd.f32 %v389, %v1173
      %v1175 = vpop.f32.mrb[0].mxu0
      %1176 = vmatprep.mubr.bf16.mxu0 0
      %1177 = vmatmul.mubr.bf16.gmra.mrb[0].mxu0 %v786
      %v1178 = vpop.f32.mrb[0].mxu0
      %v1179 = vadd.f32 %v389, %v1178
      %v1180 = vpop.f32.mrb[0].mxu0
      %v1181 = vpop.f32.mrb[0].mxu0
      %v1182 = vadd.f32 %v389, %v1181
      %v1183 = vpop.f32.mrb[0].mxu0
      %1184 = vmatprep.mubr.bf16.mxu0 0
      %1185 = vmatmul.mubr.bf16.gmra.mrb[0].mxu0 %v789
      %v1186 = vpop.f32.mrb[0].mxu0
      %v1187 = vadd.f32 %v389, %v1186
      %v1188 = vpop.f32.mrb[0].mxu0
      %v1189 = vpop.f32.mrb[0].mxu0
      %v1190 = vadd.f32 %v389, %v1189
      %v1191 = vpop.f32.mrb[0].mxu0
      %1192 = vmatprep.mubr.bf16.mxu0 0
      %1193 = vmatmul.mubr.bf16.gmra.mrb[0].mxu0 %v792
      %v1194 = vpop.f32.mrb[0].mxu0
      %v1195 = vadd.f32 %v389, %v1194
      %v1196 = vpop.f32.mrb[0].mxu0
      %v1197 = vpop.f32.mrb[0].mxu0
      %v1198 = vadd.f32 %v389, %v1197
      %v1199 = vpop.f32.mrb[0].mxu0
      %1200 = vmatprep.mubr.bf16.mxu0 0
      %1201 = vmatmul.mubr.bf16.gmra.mrb[0].mxu0 %v795
      %v1202 = vpop.f32.mrb[0].mxu0
      %v1203 = vadd.f32 %v389, %v1202
      %v1204 = vpop.f32.mrb[0].mxu0
      %v1205 = vpop.f32.mrb[0].mxu0
      %v1206 = vadd.f32 %v389, %v1205
      %v1207 = vpop.f32.mrb[0].mxu0
      %1208 = vmatprep.mubr.bf16.mxu0 0
      %1209 = vmatmul.mubr.bf16.gmra.mrb[0].mxu0 %v798
      %v1210 = vpop.f32.mrb[0].mxu0
      %v1211 = vadd.f32 %v389, %v1210
      %v1212 = vpop.f32.mrb[0].mxu0
      %v1213 = vpop.f32.mrb[0].mxu0
      %v1214 = vadd.f32 %v389, %v1213
      %v1215 = vpop.f32.mrb[0].mxu0
      %1216 = vdwg.mxu0
      %v1217 = vmax.f32 %v835, 0.0
      %v1218 = vmax.f32 %v838, 0.0
      %v1219 = vmax.f32 %v843, 0.0
      %v1220 = vmax.f32 %v846, 0.0
      %v1221 = vmax.f32 %v851, 0.0
      %v1222 = vmax.f32 %v854, 0.0
      %v1223 = vmax.f32 %v859, 0.0
      %v1224 = vmax.f32 %v862, 0.0
      %v1225 = vmax.f32 %v867, 0.0
      %v1226 = vmax.f32 %v870, 0.0
      %v1227 = vmax.f32 %v875, 0.0
      %v1228 = vmax.f32 %v878, 0.0
      %v1229 = vmax.f32 %v883, 0.0
      %v1230 = vmax.f32 %v886, 0.0
      %v1231 = vmax.f32 %v891, 0.0
      %v1232 = vmax.f32 %v894, 0.0
      %v1233 = vmax.f32 %v899, 0.0
      %v1234 = vmax.f32 %v902, 0.0
      %v1235 = vmax.f32 %v907, 0.0
      %v1236 = vmax.f32 %v910, 0.0
      %v1237 = vmax.f32 %v915, 0.0
      %v1238 = vmax.f32 %v918, 0.0
      %v1239 = vmax.f32 %v923, 0.0
      %v1240 = vmax.f32 %v926, 0.0
      %v1241 = vmax.f32 %v931, 0.0
      %v1242 = vmax.f32 %v934, 0.0
      %v1243 = vmax.f32 %v939, 0.0
      %v1244 = vmax.f32 %v942, 0.0
      %v1245 = vmax.f32 %v947, 0.0
      %v1246 = vmax.f32 %v950, 0.0
      %v1247 = vmax.f32 %v955, 0.0
      %v1248 = vmax.f32 %v958, 0.0
      %v1249 = vmax.f32 %v963, 0.0
      %v1250 = vmax.f32 %v966, 0.0
      %v1251 = vmax.f32 %v971, 0.0
      %v1252 = vmax.f32 %v974, 0.0
      %v1253 = vmax.f32 %v979, 0.0
      %v1254 = vmax.f32 %v982, 0.0
      %v1255 = vmax.f32 %v987, 0.0
      %v1256 = vmax.f32 %v990, 0.0
      %v1257 = vmax.f32 %v995, 0.0
      %v1258 = vmax.f32 %v998, 0.0
      %v1259 = vmax.f32 %v1003, 0.0
      %v1260 = vmax.f32 %v1006, 0.0
      %v1261 = vmax.f32 %v1011, 0.0
      %v1262 = vmax.f32 %v1014, 0.0
      %v1263 = vmax.f32 %v1019, 0.0
      %v1264 = vmax.f32 %v1022, 0.0
      %v1265 = vmax.f32 %v1027, 0.0
      %v1266 = vmax.f32 %v1030, 0.0
      %v1267 = vmax.f32 %v1035, 0.0
      %v1268 = vmax.f32 %v1038, 0.0
      %v1269 = vmax.f32 %v1043, 0.0
      %v1270 = vmax.f32 %v1046, 0.0
      %v1271 = vmax.f32 %v1051, 0.0
      %v1272 = vmax.f32 %v1054, 0.0
      %v1273 = vmax.f32 %v1059, 0.0
      %v1274 = vmax.f32 %v1062, 0.0
      %v1275 = vmax.f32 %v1067, 0.0
      %v1276 = vmax.f32 %v1070, 0.0
      %v1277 = vmax.f32 %v1075, 0.0
      %v1278 = vmax.f32 %v1078, 0.0
      %v1279 = vmax.f32 %v1083, 0.0
      %v1280 = vmax.f32 %v1086, 0.0
      %v1281 = vmax.f32 %v1091, 0.0
      %v1282 = vmax.f32 %v1094, 0.0
      %v1283 = vmax.f32 %v1099, 0.0
      %v1284 = vmax.f32 %v1102, 0.0
      %v1285 = vmax.f32 %v1107, 0.0
      %v1286 = vmax.f32 %v1110, 0.0
      %v1287 = vmax.f32 %v1115, 0.0
      %v1288 = vmax.f32 %v1118, 0.0
      %v1289 = vmax.f32 %v1123, 0.0
      %v1290 = vmax.f32 %v1126, 0.0
      %v1291 = vmax.f32 %v1131, 0.0
      %v1292 = vmax.f32 %v1134, 0.0
      %v1293 = vmax.f32 %v1139, 0.0
      %v1294 = vmax.f32 %v1142, 0.0
      %v1295 = vmax.f32 %v1147, 0.0
      %v1296 = vmax.f32 %v1150, 0.0
      %v1297 = vmax.f32 %v1155, 0.0
      %v1298 = vmax.f32 %v1158, 0.0
      %v1299 = vmax.f32 %v1163, 0.0
      %v1300 = vmax.f32 %v1166, 0.0
      %v1301 = vmax.f32 %v1171, 0.0
      %v1302 = vmax.f32 %v1174, 0.0
      %v1303 = vmax.f32 %v1179, 0.0
      %v1304 = vmax.f32 %v1182, 0.0
      %v1305 = vmax.f32 %v1187, 0.0
      %v1306 = vmax.f32 %v1190, 0.0
      %v1307 = vmax.f32 %v1195, 0.0
      %v1308 = vmax.f32 %v1198, 0.0
      %v1309 = vmax.f32 %v1203, 0.0
      %v1310 = vmax.f32 %v1206, 0.0
      %v1311 = vmax.f32 %v1211, 0.0
      %v1312 = vmax.f32 %v1214, 0.0
      %1313 = vst [vmem:[#allocation2] sm:$0xff] %v1217
      %1314 = vst [vmem:[#allocation2 + $0x8] sm:$0xff] %v1218
      %1315 = vst [vmem:[#allocation2 + $0x10] sm:$0xff] %v1219
      %1316 = vst [vmem:[#allocation2 + $0x18] sm:$0xff] %v1220
      %1317 = vst [vmem:[#allocation2 + $0x20] sm:$0xff] %v1221
      %1318 = vst [vmem:[#allocation2 + $0x28] sm:$0xff] %v1222
      %1319 = vst [vmem:[#allocation2 + $0x30] sm:$0xff] %v1223
      %1320 = vst [vmem:[#allocation2 + $0x38] sm:$0xff] %v1224
      %1321 = vst [vmem:[#allocation2 + $0x40] sm:$0xff] %v1225
      %1322 = vst [vmem:[#allocation2 + $0x48] sm:$0xff] %v1226
      %1323 = vst [vmem:[#allocation2 + $0x50] sm:$0xff] %v1227
      %1324 = vst [vmem:[#allocation2 + $0x58] sm:$0xff] %v1228
      %1325 = vst [vmem:[#allocation2 + $0x60] sm:$0xff] %v1229
      %1326 = vst [vmem:[#allocation2 + $0x68] sm:$0xff] %v1230
      %1327 = vst [vmem:[#allocation2 + $0x70] sm:$0xff] %v1231
      %1328 = vst [vmem:[#allocation2 + $0x78] sm:$0xff] %v1232
      %1329 = vst [vmem:[#allocation2 + $0x80] sm:$0xff] %v1233
      %1330 = vst [vmem:[#allocation2 + $0x88] sm:$0xff] %v1234
      %1331 = vst [vmem:[#allocation2 + $0x90] sm:$0xff] %v1235
      %1332 = vst [vmem:[#allocation2 + $0x98] sm:$0xff] %v1236
      %1333 = vst [vmem:[#allocation2 + $0xa0] sm:$0xff] %v1237
      %1334 = vst [vmem:[#allocation2 + $0xa8] sm:$0xff] %v1238
      %1335 = vst [vmem:[#allocation2 + $0xb0] sm:$0xff] %v1239
      %1336 = vst [vmem:[#allocation2 + $0xb8] sm:$0xff] %v1240
      %1337 = vst [vmem:[#allocation2 + $0xc0] sm:$0xff] %v1241
      %1338 = vst [vmem:[#allocation2 + $0xc8] sm:$0xff] %v1242
      %1339 = vst [vmem:[#allocation2 + $0xd0] sm:$0xff] %v1243
      %1340 = vst [vmem:[#allocation2 + $0xd8] sm:$0xff] %v1244
      %1341 = vst [vmem:[#allocation2 + $0xe0] sm:$0xff] %v1245
      %1342 = vst [vmem:[#allocation2 + $0xe8] sm:$0xff] %v1246
      %1343 = vst [vmem:[#allocation2 + $0xf0] sm:$0xff] %v1247
      %1344 = vst [vmem:[#allocation2 + $0xf8] sm:$0xff] %v1248
      %1345 = vst [vmem:[#allocation2 + $0x100] sm:$0xff] %v1249
      %1346 = vst [vmem:[#allocation2 + $0x108] sm:$0xff] %v1250
      %1347 = vst [vmem:[#allocation2 + $0x110] sm:$0xff] %v1251
      %1348 = vst [vmem:[#allocation2 + $0x118] sm:$0xff] %v1252
      %1349 = vst [vmem:[#allocation2 + $0x120] sm:$0xff] %v1253
      %1350 = vst [vmem:[#allocation2 + $0x128] sm:$0xff] %v1254
      %1351 = vst [vmem:[#allocation2 + $0x130] sm:$0xff] %v1255
      %1352 = vst [vmem:[#allocation2 + $0x138] sm:$0xff] %v1256
      %1353 = vst [vmem:[#allocation2 + $0x140] sm:$0xff] %v1257
      %1354 = vst [vmem:[#allocation2 + $0x148] sm:$0xff] %v1258
      %1355 = vst [vmem:[#allocation2 + $0x150] sm:$0xff] %v1259
      %1356 = vst [vmem:[#allocation2 + $0x158] sm:$0xff] %v1260
      %1357 = vst [vmem:[#allocation2 + $0x160] sm:$0xff] %v1261
      %1358 = vst [vmem:[#allocation2 + $0x168] sm:$0xff] %v1262
      %1359 = vst [vmem:[#allocation2 + $0x170] sm:$0xff] %v1263
      %1360 = vst [vmem:[#allocation2 + $0x178] sm:$0xff] %v1264
      %1361 = vst [vmem:[#allocation2 + $0x180] sm:$0xff] %v1265
      %1362 = vst [vmem:[#allocation2 + $0x188] sm:$0xff] %v1266
      %1363 = vst [vmem:[#allocation2 + $0x190] sm:$0xff] %v1267
      %1364 = vst [vmem:[#allocation2 + $0x198] sm:$0xff] %v1268
      %1365 = vst [vmem:[#allocation2 + $0x1a0] sm:$0xff] %v1269
      %1366 = vst [vmem:[#allocation2 + $0x1a8] sm:$0xff] %v1270
      %1367 = vst [vmem:[#allocation2 + $0x1b0] sm:$0xff] %v1271
      %1368 = vst [vmem:[#allocation2 + $0x1b8] sm:$0xff] %v1272
      %1369 = vst [vmem:[#allocation2 + $0x1c0] sm:$0xff] %v1273
      %1370 = vst [vmem:[#allocation2 + $0x1c8] sm:$0xff] %v1274
      %1371 = vst [vmem:[#allocation2 + $0x1d0] sm:$0xff] %v1275
      %1372 = vst [vmem:[#allocation2 + $0x1d8] sm:$0xff] %v1276
      %1373 = vst [vmem:[#allocation2 + $0x1e0] sm:$0xff] %v1277
      %1374 = vst [vmem:[#allocation2 + $0x1e8] sm:$0xff] %v1278
      %1375 = vst [vmem:[#allocation2 + $0x1f0] sm:$0xff] %v1279
      %1376 = vst [vmem:[#allocation2 + $0x1f8] sm:$0xff] %v1280
      %1377 = vst [vmem:[#allocation2 + $0x200] sm:$0xff] %v1281
      %1378 = vst [vmem:[#allocation2 + $0x208] sm:$0xff] %v1282
      %1379 = vst [vmem:[#allocation2 + $0x210] sm:$0xff] %v1283
      %1380 = vst [vmem:[#allocation2 + $0x218] sm:$0xff] %v1284
      %1381 = vst [vmem:[#allocation2 + $0x220] sm:$0xff] %v1285
      %1382 = vst [vmem:[#allocation2 + $0x228] sm:$0xff] %v1286
      %1383 = vst [vmem:[#allocation2 + $0x230] sm:$0xff] %v1287
      %1384 = vst [vmem:[#allocation2 + $0x238] sm:$0xff] %v1288
      %1385 = vst [vmem:[#allocation2 + $0x240] sm:$0xff] %v1289
      %1386 = vst [vmem:[#allocation2 + $0x248] sm:$0xff] %v1290
      %1387 = vst [vmem:[#allocation2 + $0x250] sm:$0xff] %v1291
      %1388 = vst [vmem:[#allocation2 + $0x258] sm:$0xff] %v1292
      %1389 = vst [vmem:[#allocation2 + $0x260] sm:$0xff] %v1293
      %1390 = vst [vmem:[#allocation2 + $0x268] sm:$0xff] %v1294
      %1391 = vst [vmem:[#allocation2 + $0x270] sm:$0xff] %v1295
      %1392 = vst [vmem:[#allocation2 + $0x278] sm:$0xff] %v1296
      %1393 = vst [vmem:[#allocation2 + $0x280] sm:$0xff] %v1297
      %1394 = vst [vmem:[#allocation2 + $0x288] sm:$0xff] %v1298
      %1395 = vst [vmem:[#allocation2 + $0x290] sm:$0xff] %v1299
      %1396 = vst [vmem:[#allocation2 + $0x298] sm:$0xff] %v1300
      %1397 = vst [vmem:[#allocation2 + $0x2a0] sm:$0xff] %v1301
      %1398 = vst [vmem:[#allocation2 + $0x2a8] sm:$0xff] %v1302
      %1399 = vst [vmem:[#allocation2 + $0x2b0] sm:$0xff] %v1303
      %1400 = vst [vmem:[#allocation2 + $0x2b8] sm:$0xff] %v1304
      %1401 = vst [vmem:[#allocation2 + $0x2c0] sm:$0xff] %v1305
      %1402 = vst [vmem:[#allocation2 + $0x2c8] sm:$0xff] %v1306
      %1403 = vst [vmem:[#allocation2 + $0x2d0] sm:$0xff] %v1307
      %1404 = vst [vmem:[#allocation2 + $0x2d8] sm:$0xff] %v1308
      %1405 = vst [vmem:[#allocation2 + $0x2e0] sm:$0xff] %v1309
      %1406 = vst [vmem:[#allocation2 + $0x2e8] sm:$0xff] %v1310
      %1407 = vst [vmem:[#allocation2 + $0x2f0] sm:$0xff] %v1311
      %1408 = vst [vmem:[#allocation2 + $0x2f8] sm:$0xff] %v1312
      %v1409 = vld [vmem:[#allocation2] sm:$0xff]
      %v1410 = vld [vmem:[#allocation2 + $0x8] sm:$0xff]
      %v1411 = vld [vmem:[#allocation2 + $0x30] sm:$0xff]
      %v1412 = vld [vmem:[#allocation2 + $0x38] sm:$0xff]
      %v1413 = vld [vmem:[#allocation2 + $0x60] sm:$0xff]
      %v1414 = vld [vmem:[#allocation2 + $0x68] sm:$0xff]
      %v1415 = vld [vmem:[#allocation2 + $0x90] sm:$0xff]
      %v1416 = vld [vmem:[#allocation2 + $0x98] sm:$0xff]
      %v1417 = vld [vmem:[#allocation2 + $0xc0] sm:$0xff]
      %v1418 = vld [vmem:[#allocation2 + $0xc8] sm:$0xff]
      %v1419 = vld [vmem:[#allocation2 + $0xf0] sm:$0xff]
      %v1420 = vld [vmem:[#allocation2 + $0xf8] sm:$0xff]
      %v1421 = vpack.c.bf16 %v1410, %v1409
      %v1422 = vpack.c.bf16 %v1412, %v1411
      %v1423 = vpack.c.bf16 %v1414, %v1413
      %v1424 = vpack.c.bf16 %v1416, %v1415
      %v1425 = vpack.c.bf16 %v1418, %v1417
      %v1426 = vpack.c.bf16 %v1420, %v1419
      %v1427 = vld [vmem:[%s3] sm:$0xf]
      %v1428 = vld [vmem:[%s3 + $0x4] sm:$0xf]
      %v1429 = vld [vmem:[%s3 + $0x8] sm:$0xf]
      %v1430 = vld [vmem:[%s3 + $0xc] sm:$0xf]
      %v1431 = vld [vmem:[%s3 + $0x10] sm:$0xf]
      %v1432 = vld [vmem:[%s3 + $0x14] sm:$0xf]
      %v1433 = vld [vmem:[%s3 + $0x18] sm:$0xf]
      %v1434 = vld [vmem:[%s3 + $0x1c] sm:$0xf]
      %v1435 = vld [vmem:[%s3 + $0x20] sm:$0xf]
      %v1436 = vld [vmem:[%s3 + $0x24] sm:$0xf]
      %v1437 = vld [vmem:[%s3 + $0x28] sm:$0xf]
      %v1438 = vld [vmem:[%s3 + $0x2c] sm:$0xf]
      %v1439 = vld [vmem:[%s3 + $0x30] sm:$0xf]
      %v1440 = vld [vmem:[%s3 + $0x34] sm:$0xf]
      %v1441 = vld [vmem:[%s3 + $0x38] sm:$0xf]
      %v1442 = vld [vmem:[%s3 + $0x3c] sm:$0xf]
      %s1443 = scalar_lea.vmem [#allocation2], 24
      %v1444 = vld [vmem:[%s1443] sm:$0xff]
      %v1445 = vld [vmem:[%s1443 + $0x8] sm:$0xff]
      %v1446 = vld [vmem:[%s1443 + $0x30] sm:$0xff]
      %v1447 = vld [vmem:[%s1443 + $0x38] sm:$0xff]
      %v1448 = vld [vmem:[%s1443 + $0x60] sm:$0xff]
      %v1449 = vld [vmem:[%s1443 + $0x68] sm:$0xff]
      %v1450 = vld [vmem:[%s1443 + $0x90] sm:$0xff]
      %v1451 = vld [vmem:[%s1443 + $0x98] sm:$0xff]
      %v1452 = vld [vmem:[%s1443 + $0xc0] sm:$0xff]
      %v1453 = vld [vmem:[%s1443 + $0xc8] sm:$0xff]
      %v1454 = vld [vmem:[%s1443 + $0xf0] sm:$0xff]
      %v1455 = vld [vmem:[%s1443 + $0xf8] sm:$0xff]
      %v1456 = vpack.c.bf16 %v1445, %v1444
      %v1457 = vpack.c.bf16 %v1447, %v1446
      %v1458 = vpack.c.bf16 %v1449, %v1448
      %v1459 = vpack.c.bf16 %v1451, %v1450
      %v1460 = vpack.c.bf16 %v1453, %v1452
      %v1461 = vpack.c.bf16 %v1455, %v1454
      %s1462 = scalar_lea.vmem %s3, 64
      %v1463 = vld [vmem:[%s1462] sm:$0xf]
      %v1464 = vld [vmem:[%s1462 + $0x4] sm:$0xf]
      %v1465 = vld [vmem:[%s1462 + $0x8] sm:$0xf]
      %v1466 = vld [vmem:[%s1462 + $0xc] sm:$0xf]
      %v1467 = vld [vmem:[%s1462 + $0x10] sm:$0xf]
      %v1468 = vld [vmem:[%s1462 + $0x14] sm:$0xf]
      %v1469 = vld [vmem:[%s1462 + $0x18] sm:$0xf]
      %v1470 = vld [vmem:[%s1462 + $0x1c] sm:$0xf]
      %v1471 = vld [vmem:[%s1462 + $0x20] sm:$0xf]
      %v1472 = vld [vmem:[%s1462 + $0x24] sm:$0xf]
      %v1473 = vld [vmem:[%s1462 + $0x28] sm:$0xf]
      %v1474 = vld [vmem:[%s1462 + $0x2c] sm:$0xf]
      %v1475 = vld [vmem:[%s1462 + $0x30] sm:$0xf]
      %v1476 = vld [vmem:[%s1462 + $0x34] sm:$0xf]
      %v1477 = vld [vmem:[%s1462 + $0x38] sm:$0xf]
      %v1478 = vld [vmem:[%s1462 + $0x3c] sm:$0xf]
      %v1495 = vunpack.c.l.b16 %v1463
      %v1496 = vunpack.c.l.b16 %v1464
      %v1497 = vunpack.c.l.b16 %v1465
      %v1498 = vunpack.c.l.b16 %v1466
      %v1499 = vunpack.c.l.b16 %v1467
      %v1500 = vunpack.c.l.b16 %v1468
      %v1501 = vunpack.c.l.b16 %v1469
      %v1502 = vunpack.c.l.b16 %v1470
      %v1503 = vunpack.c.l.b16 %v1471
      %v1504 = vunpack.c.l.b16 %v1472
      %v1505 = vunpack.c.l.b16 %v1473
      %v1506 = vunpack.c.l.b16 %v1474
      %v1507 = vunpack.c.l.b16 %v1475
      %v1508 = vunpack.c.l.b16 %v1476
      %v1509 = vunpack.c.l.b16 %v1477
      %v1510 = vunpack.c.l.b16 %v1478
      %v1511 = vpack.c.b16 %v1496, %v1495
      %v1512 = vpack.c.b16 %v1498, %v1497
      %v1513 = vpack.c.b16 %v1500, %v1499
      %v1514 = vpack.c.b16 %v1502, %v1501
      %v1515 = vpack.c.b16 %v1504, %v1503
      %v1516 = vpack.c.b16 %v1506, %v1505
      %v1517 = vpack.c.b16 %v1508, %v1507
      %v1518 = vpack.c.b16 %v1510, %v1509
      %1527 = vmatprep.subr.bf16.mxu0 0
      %1528 = vmatpush1.bf16.msra.mxu0 %v1511
      %1529 = vmatprep.subr.bf16.mxu0 0
      %1530 = vmatpush1.bf16.msra.mxu0 %v1512
      %1531 = vmatprep.subr.bf16.mxu0 0
      %1532 = vmatpush1.bf16.msra.mxu0 %v1513
      %1533 = vmatprep.subr.bf16.mxu0 0
      %1534 = vmatpush1.bf16.msra.mxu0 %v1514
      %1535 = vmatprep.subr.bf16.mxu0 0
      %1536 = vmatpush1.bf16.msra.mxu0 %v1515
      %1537 = vmatprep.subr.bf16.mxu0 0
      %1538 = vmatpush1.bf16.msra.mxu0 %v1516
      %1539 = vmatprep.subr.bf16.mxu0 0
      %1540 = vmatpush1.bf16.msra.mxu0 %v1517
      %1541 = vmatprep.subr.bf16.mxu0 0
      %1542 = vmatpush1.bf16.msra.mxu0 %v1518
      %1543 = vmatprep.subr.bf16.mxu0 0
      %1544 = vmatpush1.bf16.msra.mxu0 0
      %1545 = vmatprep.subr.bf16.mxu0 0
      %1546 = vmatpush1.bf16.msra.mxu0 0
      %1547 = vmatprep.subr.bf16.mxu0 0
      %1548 = vmatpush1.bf16.msra.mxu0 0
      %1549 = vmatprep.subr.bf16.mxu0 0
      %1550 = vmatpush1.bf16.msra.mxu0 0
      %1551 = vmatprep.subr.bf16.mxu0 0
      %1552 = vmatpush1.bf16.msra.mxu0 0
      %1553 = vmatprep.subr.bf16.mxu0 0
      %1554 = vmatpush1.bf16.msra.mxu0 0
      %1555 = vmatprep.subr.bf16.mxu0 0
      %1556 = vmatpush1.bf16.msra.mxu0 0
      %1557 = vmatprep.subr.bf16.mxu0 0
      %1558 = vmatpush1.bf16.msra.mxu0 0
      %1559 = vmatprep.mubr.bf16.mxu0 0
      %1560 = vmatmul.mubr.bf16.gmra.mrb[0].mxu0 %v1456
      %v1561 = vpop.f32.mrb[0].mxu0
      %v1562 = vadd.f32 0.0, %v1561
      %v1563 = vpop.f32.mrb[0].mxu0
      %v1564 = vpop.f32.mrb[0].mxu0
      %v1565 = vadd.f32 0.0, %v1564
      %v1566 = vpop.f32.mrb[0].mxu0
      %1567 = vmatprep.mubr.bf16.mxu0 0
      %1568 = vmatmul.mubr.bf16.gmra.mrb[0].mxu0 %v1457
      %v1569 = vpop.f32.mrb[0].mxu0
      %v1570 = vadd.f32 0.0, %v1569
      %v1571 = vpop.f32.mrb[0].mxu0
      %v1572 = vpop.f32.mrb[0].mxu0
      %v1573 = vadd.f32 0.0, %v1572
      %v1574 = vpop.f32.mrb[0].mxu0
      %1575 = vmatprep.mubr.bf16.mxu0 0
      %1576 = vmatmul.mubr.bf16.gmra.mrb[0].mxu0 %v1458
      %v1577 = vpop.f32.mrb[0].mxu0
      %v1578 = vadd.f32 0.0, %v1577
      %v1579 = vpop.f32.mrb[0].mxu0
      %v1580 = vpop.f32.mrb[0].mxu0
      %v1581 = vadd.f32 0.0, %v1580
      %v1582 = vpop.f32.mrb[0].mxu0
      %1583 = vmatprep.mubr.bf16.mxu0 0
      %1584 = vmatmul.mubr.bf16.gmra.mrb[0].mxu0 %v1459
      %v1585 = vpop.f32.mrb[0].mxu0
      %v1586 = vadd.f32 0.0, %v1585
      %v1587 = vpop.f32.mrb[0].mxu0
      %v1588 = vpop.f32.mrb[0].mxu0
      %v1589 = vadd.f32 0.0, %v1588
      %v1590 = vpop.f32.mrb[0].mxu0
      %1591 = vmatprep.mubr.bf16.mxu0 0
      %1592 = vmatmul.mubr.bf16.gmra.mrb[0].mxu0 %v1460
      %v1593 = vpop.f32.mrb[0].mxu0
      %v1594 = vadd.f32 0.0, %v1593
      %v1595 = vpop.f32.mrb[0].mxu0
      %v1596 = vpop.f32.mrb[0].mxu0
      %v1597 = vadd.f32 0.0, %v1596
      %v1598 = vpop.f32.mrb[0].mxu0
      %1599 = vmatprep.mubr.bf16.mxu0 0
      %1600 = vmatmul.mubr.bf16.gmra.mrb[0].mxu0 %v1461
      %v1601 = vpop.f32.mrb[0].mxu0
      %v1602 = vadd.f32 0.0, %v1601
      %v1603 = vpop.f32.mrb[0].mxu0
      %v1604 = vpop.f32.mrb[0].mxu0
      %v1605 = vadd.f32 0.0, %v1604
      %v1606 = vpop.f32.mrb[0].mxu0
      %1607 = vdwg.mxu0
      %v1624 = vunpack.c.l.b16 %v1427
      %v1625 = vunpack.c.l.b16 %v1428
      %v1626 = vunpack.c.l.b16 %v1429
      %v1627 = vunpack.c.l.b16 %v1430
      %v1628 = vunpack.c.l.b16 %v1431
      %v1629 = vunpack.c.l.b16 %v1432
      %v1630 = vunpack.c.l.b16 %v1433
      %v1631 = vunpack.c.l.b16 %v1434
      %v1632 = vunpack.c.l.b16 %v1435
      %v1633 = vunpack.c.l.b16 %v1436
      %v1634 = vunpack.c.l.b16 %v1437
      %v1635 = vunpack.c.l.b16 %v1438
      %v1636 = vunpack.c.l.b16 %v1439
      %v1637 = vunpack.c.l.b16 %v1440
      %v1638 = vunpack.c.l.b16 %v1441
      %v1639 = vunpack.c.l.b16 %v1442
      %v1640 = vpack.c.b16 %v1625, %v1624
      %v1641 = vpack.c.b16 %v1627, %v1626
      %v1642 = vpack.c.b16 %v1629, %v1628
      %v1643 = vpack.c.b16 %v1631, %v1630
      %v1644 = vpack.c.b16 %v1633, %v1632
      %v1645 = vpack.c.b16 %v1635, %v1634
      %v1646 = vpack.c.b16 %v1637, %v1636
      %v1647 = vpack.c.b16 %v1639, %v1638
      %1656 = vmatprep.subr.bf16.mxu0 0
      %1657 = vmatpush1.bf16.msra.mxu0 %v1640
      %1658 = vmatprep.subr.bf16.mxu0 0
      %1659 = vmatpush1.bf16.msra.mxu0 %v1641
      %1660 = vmatprep.subr.bf16.mxu0 0
      %1661 = vmatpush1.bf16.msra.mxu0 %v1642
      %1662 = vmatprep.subr.bf16.mxu0 0
      %1663 = vmatpush1.bf16.msra.mxu0 %v1643
      %1664 = vmatprep.subr.bf16.mxu0 0
      %1665 = vmatpush1.bf16.msra.mxu0 %v1644
      %1666 = vmatprep.subr.bf16.mxu0 0
      %1667 = vmatpush1.bf16.msra.mxu0 %v1645
      %1668 = vmatprep.subr.bf16.mxu0 0
      %1669 = vmatpush1.bf16.msra.mxu0 %v1646
      %1670 = vmatprep.subr.bf16.mxu0 0
      %1671 = vmatpush1.bf16.msra.mxu0 %v1647
      %1672 = vmatprep.subr.bf16.mxu0 0
      %1673 = vmatpush1.bf16.msra.mxu0 0
      %1674 = vmatprep.subr.bf16.mxu0 0
      %1675 = vmatpush1.bf16.msra.mxu0 0
      %1676 = vmatprep.subr.bf16.mxu0 0
      %1677 = vmatpush1.bf16.msra.mxu0 0
      %1678 = vmatprep.subr.bf16.mxu0 0
      %1679 = vmatpush1.bf16.msra.mxu0 0
      %1680 = vmatprep.subr.bf16.mxu0 0
      %1681 = vmatpush1.bf16.msra.mxu0 0
      %1682 = vmatprep.subr.bf16.mxu0 0
      %1683 = vmatpush1.bf16.msra.mxu0 0
      %1684 = vmatprep.subr.bf16.mxu0 0
      %1685 = vmatpush1.bf16.msra.mxu0 0
      %1686 = vmatprep.subr.bf16.mxu0 0
      %1687 = vmatpush1.bf16.msra.mxu0 0
      %1688 = vmatprep.mubr.bf16.mxu0 0
      %1689 = vmatmul.mubr.bf16.gmra.mrb[0].mxu0 %v1421
      %v1690 = vpop.f32.mrb[0].mxu0
      %v1691 = vadd.f32 %v1562, %v1690
      %v1692 = vpop.f32.mrb[0].mxu0
      %v1693 = vpop.f32.mrb[0].mxu0
      %v1694 = vadd.f32 %v1565, %v1693
      %v1695 = vpop.f32.mrb[0].mxu0
      %1696 = vmatprep.mubr.bf16.mxu0 0
      %1697 = vmatmul.mubr.bf16.gmra.mrb[0].mxu0 %v1422
      %v1698 = vpop.f32.mrb[0].mxu0
      %v1699 = vadd.f32 %v1570, %v1698
      %v1700 = vpop.f32.mrb[0].mxu0
      %v1701 = vpop.f32.mrb[0].mxu0
      %v1702 = vadd.f32 %v1573, %v1701
      %v1703 = vpop.f32.mrb[0].mxu0
      %1704 = vmatprep.mubr.bf16.mxu0 0
      %1705 = vmatmul.mubr.bf16.gmra.mrb[0].mxu0 %v1423
      %v1706 = vpop.f32.mrb[0].mxu0
      %v1707 = vadd.f32 %v1578, %v1706
      %v1708 = vpop.f32.mrb[0].mxu0
      %v1709 = vpop.f32.mrb[0].mxu0
      %v1710 = vadd.f32 %v1581, %v1709
      %v1711 = vpop.f32.mrb[0].mxu0
      %1712 = vmatprep.mubr.bf16.mxu0 0
      %1713 = vmatmul.mubr.bf16.gmra.mrb[0].mxu0 %v1424
      %v1714 = vpop.f32.mrb[0].mxu0
      %v1715 = vadd.f32 %v1586, %v1714
      %v1716 = vpop.f32.mrb[0].mxu0
      %v1717 = vpop.f32.mrb[0].mxu0
      %v1718 = vadd.f32 %v1589, %v1717
      %v1719 = vpop.f32.mrb[0].mxu0
      %1720 = vmatprep.mubr.bf16.mxu0 0
      %1721 = vmatmul.mubr.bf16.gmra.mrb[0].mxu0 %v1425
      %v1722 = vpop.f32.mrb[0].mxu0
      %v1723 = vadd.f32 %v1594, %v1722
      %v1724 = vpop.f32.mrb[0].mxu0
      %v1725 = vpop.f32.mrb[0].mxu0
      %v1726 = vadd.f32 %v1597, %v1725
      %v1727 = vpop.f32.mrb[0].mxu0
      %1728 = vmatprep.mubr.bf16.mxu0 0
      %1729 = vmatmul.mubr.bf16.gmra.mrb[0].mxu0 %v1426
      %v1730 = vpop.f32.mrb[0].mxu0
      %v1731 = vadd.f32 %v1602, %v1730
      %v1732 = vpop.f32.mrb[0].mxu0
      %v1733 = vpop.f32.mrb[0].mxu0
      %v1734 = vadd.f32 %v1605, %v1733
      %v1735 = vpop.f32.mrb[0].mxu0
      %1736 = vdwg.mxu0
      %v1737 = vld [vmem:[#allocation2 + $0x1] sm:$0xff]
      %v1738 = vld [vmem:[#allocation2 + $0x9] sm:$0xff]
      %v1739 = vld [vmem:[#allocation2 + $0x31] sm:$0xff]
      %v1740 = vld [vmem:[#allocation2 + $0x39] sm:$0xff]
      %v1741 = vld [vmem:[#allocation2 + $0x61] sm:$0xff]
      %v1742 = vld [vmem:[#allocation2 + $0x69] sm:$0xff]
      %v1743 = vld [vmem:[#allocation2 + $0x91] sm:$0xff]
      %v1744 = vld [vmem:[#allocation2 + $0x99] sm:$0xff]
      %v1745 = vld [vmem:[#allocation2 + $0xc1] sm:$0xff]
      %v1746 = vld [vmem:[#allocation2 + $0xc9] sm:$0xff]
      %v1747 = vld [vmem:[#allocation2 + $0xf1] sm:$0xff]
      %v1748 = vld [vmem:[#allocation2 + $0xf9] sm:$0xff]
      %v1749 = vpack.c.bf16 %v1738, %v1737
      %v1750 = vpack.c.bf16 %v1740, %v1739
      %v1751 = vpack.c.bf16 %v1742, %v1741
      %v1752 = vpack.c.bf16 %v1744, %v1743
      %v1753 = vpack.c.bf16 %v1746, %v1745
      %v1754 = vpack.c.bf16 %v1748, %v1747
      %s1755 = scalar_lea.vmem %s3, 128
      %v1756 = vld [vmem:[%s1755] sm:$0xf]
      %v1757 = vld [vmem:[%s1755 + $0x4] sm:$0xf]
      %v1758 = vld [vmem:[%s1755 + $0x8] sm:$0xf]
      %v1759 = vld [vmem:[%s1755 + $0xc] sm:$0xf]
      %v1760 = vld [vmem:[%s1755 + $0x10] sm:$0xf]
      %v1761 = vld [vmem:[%s1755 + $0x14] sm:$0xf]
      %v1762 = vld [vmem:[%s1755 + $0x18] sm:$0xf]
      %v1763 = vld [vmem:[%s1755 + $0x1c] sm:$0xf]
      %v1764 = vld [vmem:[%s1755 + $0x20] sm:$0xf]
      %v1765 = vld [vmem:[%s1755 + $0x24] sm:$0xf]
      %v1766 = vld [vmem:[%s1755 + $0x28] sm:$0xf]
      %v1767 = vld [vmem:[%s1755 + $0x2c] sm:$0xf]
      %v1768 = vld [vmem:[%s1755 + $0x30] sm:$0xf]
      %v1769 = vld [vmem:[%s1755 + $0x34] sm:$0xf]
      %v1770 = vld [vmem:[%s1755 + $0x38] sm:$0xf]
      %v1771 = vld [vmem:[%s1755 + $0x3c] sm:$0xf]
      %v1788 = vunpack.c.l.b16 %v1756
      %v1789 = vunpack.c.l.b16 %v1757
      %v1790 = vunpack.c.l.b16 %v1758
      %v1791 = vunpack.c.l.b16 %v1759
      %v1792 = vunpack.c.l.b16 %v1760
      %v1793 = vunpack.c.l.b16 %v1761
      %v1794 = vunpack.c.l.b16 %v1762
      %v1795 = vunpack.c.l.b16 %v1763
      %v1796 = vunpack.c.l.b16 %v1764
      %v1797 = vunpack.c.l.b16 %v1765
      %v1798 = vunpack.c.l.b16 %v1766
      %v1799 = vunpack.c.l.b16 %v1767
      %v1800 = vunpack.c.l.b16 %v1768
      %v1801 = vunpack.c.l.b16 %v1769
      %v1802 = vunpack.c.l.b16 %v1770
      %v1803 = vunpack.c.l.b16 %v1771
      %v1804 = vpack.c.b16 %v1789, %v1788
      %v1805 = vpack.c.b16 %v1791, %v1790
      %v1806 = vpack.c.b16 %v1793, %v1792
      %v1807 = vpack.c.b16 %v1795, %v1794
      %v1808 = vpack.c.b16 %v1797, %v1796
      %v1809 = vpack.c.b16 %v1799, %v1798
      %v1810 = vpack.c.b16 %v1801, %v1800
      %v1811 = vpack.c.b16 %v1803, %v1802
      %1820 = vmatprep.subr.bf16.mxu0 0
      %1821 = vmatpush1.bf16.msra.mxu0 %v1804
      %1822 = vmatprep.subr.bf16.mxu0 0
      %1823 = vmatpush1.bf16.msra.mxu0 %v1805
      %1824 = vmatprep.subr.bf16.mxu0 0
      %1825 = vmatpush1.bf16.msra.mxu0 %v1806
      %1826 = vmatprep.subr.bf16.mxu0 0
      %1827 = vmatpush1.bf16.msra.mxu0 %v1807
      %1828 = vmatprep.subr.bf16.mxu0 0
      %1829 = vmatpush1.bf16.msra.mxu0 %v1808
      %1830 = vmatprep.subr.bf16.mxu0 0
      %1831 = vmatpush1.bf16.msra.mxu0 %v1809
      %1832 = vmatprep.subr.bf16.mxu0 0
      %1833 = vmatpush1.bf16.msra.mxu0 %v1810
      %1834 = vmatprep.subr.bf16.mxu0 0
      %1835 = vmatpush1.bf16.msra.mxu0 %v1811
      %1836 = vmatprep.subr.bf16.mxu0 0
      %1837 = vmatpush1.bf16.msra.mxu0 0
      %1838 = vmatprep.subr.bf16.mxu0 0
      %1839 = vmatpush1.bf16.msra.mxu0 0
      %1840 = vmatprep.subr.bf16.mxu0 0
      %1841 = vmatpush1.bf16.msra.mxu0 0
      %1842 = vmatprep.subr.bf16.mxu0 0
      %1843 = vmatpush1.bf16.msra.mxu0 0
      %1844 = vmatprep.subr.bf16.mxu0 0
      %1845 = vmatpush1.bf16.msra.mxu0 0
      %1846 = vmatprep.subr.bf16.mxu0 0
      %1847 = vmatpush1.bf16.msra.mxu0 0
      %1848 = vmatprep.subr.bf16.mxu0 0
      %1849 = vmatpush1.bf16.msra.mxu0 0
      %1850 = vmatprep.subr.bf16.mxu0 0
      %1851 = vmatpush1.bf16.msra.mxu0 0
      %1852 = vmatprep.mubr.bf16.mxu0 0
      %1853 = vmatmul.mubr.bf16.gmra.mrb[0].mxu0 %v1749
      %v1854 = vpop.f32.mrb[0].mxu0
      %v1855 = vadd.f32 0.0, %v1854
      %v1856 = vpop.f32.mrb[0].mxu0
      %v1857 = vpop.f32.mrb[0].mxu0
      %v1858 = vadd.f32 0.0, %v1857
      %v1859 = vpop.f32.mrb[0].mxu0
      %1860 = vmatprep.mubr.bf16.mxu0 0
      %1861 = vmatmul.mubr.bf16.gmra.mrb[0].mxu0 %v1750
      %v1862 = vpop.f32.mrb[0].mxu0
      %v1863 = vadd.f32 0.0, %v1862
      %v1864 = vpop.f32.mrb[0].mxu0
      %v1865 = vpop.f32.mrb[0].mxu0
      %v1866 = vadd.f32 0.0, %v1865
      %v1867 = vpop.f32.mrb[0].mxu0
      %1868 = vmatprep.mubr.bf16.mxu0 0
      %1869 = vmatmul.mubr.bf16.gmra.mrb[0].mxu0 %v1751
      %v1870 = vpop.f32.mrb[0].mxu0
      %v1871 = vadd.f32 0.0, %v1870
      %v1872 = vpop.f32.mrb[0].mxu0
      %v1873 = vpop.f32.mrb[0].mxu0
      %v1874 = vadd.f32 0.0, %v1873
      %v1875 = vpop.f32.mrb[0].mxu0
      %1876 = vmatprep.mubr.bf16.mxu0 0
      %1877 = vmatmul.mubr.bf16.gmra.mrb[0].mxu0 %v1752
      %v1878 = vpop.f32.mrb[0].mxu0
      %v1879 = vadd.f32 0.0, %v1878
      %v1880 = vpop.f32.mrb[0].mxu0
      %v1881 = vpop.f32.mrb[0].mxu0
      %v1882 = vadd.f32 0.0, %v1881
      %v1883 = vpop.f32.mrb[0].mxu0
      %1884 = vmatprep.mubr.bf16.mxu0 0
      %1885 = vmatmul.mubr.bf16.gmra.mrb[0].mxu0 %v1753
      %v1886 = vpop.f32.mrb[0].mxu0
      %v1887 = vadd.f32 0.0, %v1886
      %v1888 = vpop.f32.mrb[0].mxu0
      %v1889 = vpop.f32.mrb[0].mxu0
      %v1890 = vadd.f32 0.0, %v1889
      %v1891 = vpop.f32.mrb[0].mxu0
      %1892 = vmatprep.mubr.bf16.mxu0 0
      %1893 = vmatmul.mubr.bf16.gmra.mrb[0].mxu0 %v1754
      %v1894 = vpop.f32.mrb[0].mxu0
      %v1895 = vadd.f32 0.0, %v1894
      %v1896 = vpop.f32.mrb[0].mxu0
      %v1897 = vpop.f32.mrb[0].mxu0
      %v1898 = vadd.f32 0.0, %v1897
      %v1899 = vpop.f32.mrb[0].mxu0
      %1900 = vdwg.mxu0
      %v1901 = vadd.f32 %v1691, %v1855
      %v1902 = vadd.f32 %v1694, %v1858
      %v1903 = vadd.f32 %v1699, %v1863
      %v1904 = vadd.f32 %v1702, %v1866
      %v1905 = vadd.f32 %v1707, %v1871
      %v1906 = vadd.f32 %v1710, %v1874
      %v1907 = vadd.f32 %v1715, %v1879
      %v1908 = vadd.f32 %v1718, %v1882
      %v1909 = vadd.f32 %v1723, %v1887
      %v1910 = vadd.f32 %v1726, %v1890
      %v1911 = vadd.f32 %v1731, %v1895
      %v1912 = vadd.f32 %v1734, %v1898
      %v1913 = vld [vmem:[%s1443 + $0x1] sm:$0xff]
      %v1914 = vld [vmem:[%s1443 + $0x9] sm:$0xff]
      %v1915 = vld [vmem:[%s1443 + $0x31] sm:$0xff]
      %v1916 = vld [vmem:[%s1443 + $0x39] sm:$0xff]
      %v1917 = vld [vmem:[%s1443 + $0x61] sm:$0xff]
      %v1918 = vld [vmem:[%s1443 + $0x69] sm:$0xff]
      %v1919 = vld [vmem:[%s1443 + $0x91] sm:$0xff]
      %v1920 = vld [vmem:[%s1443 + $0x99] sm:$0xff]
      %v1921 = vld [vmem:[%s1443 + $0xc1] sm:$0xff]
      %v1922 = vld [vmem:[%s1443 + $0xc9] sm:$0xff]
      %v1923 = vld [vmem:[%s1443 + $0xf1] sm:$0xff]
      %v1924 = vld [vmem:[%s1443 + $0xf9] sm:$0xff]
      %v1925 = vpack.c.bf16 %v1914, %v1913
      %v1926 = vpack.c.bf16 %v1916, %v1915
      %v1927 = vpack.c.bf16 %v1918, %v1917
      %v1928 = vpack.c.bf16 %v1920, %v1919
      %v1929 = vpack.c.bf16 %v1922, %v1921
      %v1930 = vpack.c.bf16 %v1924, %v1923
      %s1931 = scalar_lea.vmem %s3, 192
      %v1932 = vld [vmem:[%s1931] sm:$0xf]
      %v1933 = vld [vmem:[%s1931 + $0x4] sm:$0xf]
      %v1934 = vld [vmem:[%s1931 + $0x8] sm:$0xf]
      %v1935 = vld [vmem:[%s1931 + $0xc] sm:$0xf]
      %v1936 = vld [vmem:[%s1931 + $0x10] sm:$0xf]
      %v1937 = vld [vmem:[%s1931 + $0x14] sm:$0xf]
      %v1938 = vld [vmem:[%s1931 + $0x18] sm:$0xf]
      %v1939 = vld [vmem:[%s1931 + $0x1c] sm:$0xf]
      %v1940 = vld [vmem:[%s1931 + $0x20] sm:$0xf]
      %v1941 = vld [vmem:[%s1931 + $0x24] sm:$0xf]
      %v1942 = vld [vmem:[%s1931 + $0x28] sm:$0xf]
      %v1943 = vld [vmem:[%s1931 + $0x2c] sm:$0xf]
      %v1944 = vld [vmem:[%s1931 + $0x30] sm:$0xf]
      %v1945 = vld [vmem:[%s1931 + $0x34] sm:$0xf]
      %v1946 = vld [vmem:[%s1931 + $0x38] sm:$0xf]
      %v1947 = vld [vmem:[%s1931 + $0x3c] sm:$0xf]
      %v1964 = vunpack.c.l.b16 %v1932
      %v1965 = vunpack.c.l.b16 %v1933
      %v1966 = vunpack.c.l.b16 %v1934
      %v1967 = vunpack.c.l.b16 %v1935
      %v1968 = vunpack.c.l.b16 %v1936
      %v1969 = vunpack.c.l.b16 %v1937
      %v1970 = vunpack.c.l.b16 %v1938
      %v1971 = vunpack.c.l.b16 %v1939
      %v1972 = vunpack.c.l.b16 %v1940
      %v1973 = vunpack.c.l.b16 %v1941
      %v1974 = vunpack.c.l.b16 %v1942
      %v1975 = vunpack.c.l.b16 %v1943
      %v1976 = vunpack.c.l.b16 %v1944
      %v1977 = vunpack.c.l.b16 %v1945
      %v1978 = vunpack.c.l.b16 %v1946
      %v1979 = vunpack.c.l.b16 %v1947
      %v1980 = vpack.c.b16 %v1965, %v1964
      %v1981 = vpack.c.b16 %v1967, %v1966
      %v1982 = vpack.c.b16 %v1969, %v1968
      %v1983 = vpack.c.b16 %v1971, %v1970
      %v1984 = vpack.c.b16 %v1973, %v1972
      %v1985 = vpack.c.b16 %v1975, %v1974
      %v1986 = vpack.c.b16 %v1977, %v1976
      %v1987 = vpack.c.b16 %v1979, %v1978
      %1996 = vmatprep.subr.bf16.mxu0 0
      %1997 = vmatpush1.bf16.msra.mxu0 %v1980
      %1998 = vmatprep.subr.bf16.mxu0 0
      %1999 = vmatpush1.bf16.msra.mxu0 %v1981
      %2000 = vmatprep.subr.bf16.mxu0 0
      %2001 = vmatpush1.bf16.msra.mxu0 %v1982
      %2002 = vmatprep.subr.bf16.mxu0 0
      %2003 = vmatpush1.bf16.msra.mxu0 %v1983
      %2004 = vmatprep.subr.bf16.mxu0 0
      %2005 = vmatpush1.bf16.msra.mxu0 %v1984
      %2006 = vmatprep.subr.bf16.mxu0 0
      %2007 = vmatpush1.bf16.msra.mxu0 %v1985
      %2008 = vmatprep.subr.bf16.mxu0 0
      %2009 = vmatpush1.bf16.msra.mxu0 %v1986
      %2010 = vmatprep.subr.bf16.mxu0 0
      %2011 = vmatpush1.bf16.msra.mxu0 %v1987
      %2012 = vmatprep.subr.bf16.mxu0 0
      %2013 = vmatpush1.bf16.msra.mxu0 0
      %2014 = vmatprep.subr.bf16.mxu0 0
      %2015 = vmatpush1.bf16.msra.mxu0 0
      %2016 = vmatprep.subr.bf16.mxu0 0
      %2017 = vmatpush1.bf16.msra.mxu0 0
      %2018 = vmatprep.subr.bf16.mxu0 0
      %2019 = vmatpush1.bf16.msra.mxu0 0
      %2020 = vmatprep.subr.bf16.mxu0 0
      %2021 = vmatpush1.bf16.msra.mxu0 0
      %2022 = vmatprep.subr.bf16.mxu0 0
      %2023 = vmatpush1.bf16.msra.mxu0 0
      %2024 = vmatprep.subr.bf16.mxu0 0
      %2025 = vmatpush1.bf16.msra.mxu0 0
      %2026 = vmatprep.subr.bf16.mxu0 0
      %2027 = vmatpush1.bf16.msra.mxu0 0
      %2028 = vmatprep.mubr.bf16.mxu0 0
      %2029 = vmatmul.mubr.bf16.gmra.mrb[0].mxu0 %v1925
      %v2030 = vpop.f32.mrb[0].mxu0
      %v2031 = vadd.f32 0.0, %v2030
      %v2032 = vpop.f32.mrb[0].mxu0
      %v2033 = vpop.f32.mrb[0].mxu0
      %v2034 = vadd.f32 0.0, %v2033
      %v2035 = vpop.f32.mrb[0].mxu0
      %2036 = vmatprep.mubr.bf16.mxu0 0
      %2037 = vmatmul.mubr.bf16.gmra.mrb[0].mxu0 %v1926
      %v2038 = vpop.f32.mrb[0].mxu0
      %v2039 = vadd.f32 0.0, %v2038
      %v2040 = vpop.f32.mrb[0].mxu0
      %v2041 = vpop.f32.mrb[0].mxu0
      %v2042 = vadd.f32 0.0, %v2041
      %v2043 = vpop.f32.mrb[0].mxu0
      %2044 = vmatprep.mubr.bf16.mxu0 0
      %2045 = vmatmul.mubr.bf16.gmra.mrb[0].mxu0 %v1927
      %v2046 = vpop.f32.mrb[0].mxu0
      %v2047 = vadd.f32 0.0, %v2046
      %v2048 = vpop.f32.mrb[0].mxu0
      %v2049 = vpop.f32.mrb[0].mxu0
      %v2050 = vadd.f32 0.0, %v2049
      %v2051 = vpop.f32.mrb[0].mxu0
      %2052 = vmatprep.mubr.bf16.mxu0 0
      %2053 = vmatmul.mubr.bf16.gmra.mrb[0].mxu0 %v1928
      %v2054 = vpop.f32.mrb[0].mxu0
      %v2055 = vadd.f32 0.0, %v2054
      %v2056 = vpop.f32.mrb[0].mxu0
      %v2057 = vpop.f32.mrb[0].mxu0
      %v2058 = vadd.f32 0.0, %v2057
      %v2059 = vpop.f32.mrb[0].mxu0
      %2060 = vmatprep.mubr.bf16.mxu0 0
      %2061 = vmatmul.mubr.bf16.gmra.mrb[0].mxu0 %v1929
      %v2062 = vpop.f32.mrb[0].mxu0
      %v2063 = vadd.f32 0.0, %v2062
      %v2064 = vpop.f32.mrb[0].mxu0
      %v2065 = vpop.f32.mrb[0].mxu0
      %v2066 = vadd.f32 0.0, %v2065
      %v2067 = vpop.f32.mrb[0].mxu0
      %2068 = vmatprep.mubr.bf16.mxu0 0
      %2069 = vmatmul.mubr.bf16.gmra.mrb[0].mxu0 %v1930
      %v2070 = vpop.f32.mrb[0].mxu0
      %v2071 = vadd.f32 0.0, %v2070
      %v2072 = vpop.f32.mrb[0].mxu0
      %v2073 = vpop.f32.mrb[0].mxu0
      %v2074 = vadd.f32 0.0, %v2073
      %v2075 = vpop.f32.mrb[0].mxu0
      %2076 = vdwg.mxu0
      %v2077 = vadd.f32 %v1901, %v2031
      %v2078 = vadd.f32 %v1902, %v2034
      %v2079 = vadd.f32 %v1903, %v2039
      %v2080 = vadd.f32 %v1904, %v2042
      %v2081 = vadd.f32 %v1905, %v2047
      %v2082 = vadd.f32 %v1906, %v2050
      %v2083 = vadd.f32 %v1907, %v2055
      %v2084 = vadd.f32 %v1908, %v2058
      %v2085 = vadd.f32 %v1909, %v2063
      %v2086 = vadd.f32 %v1910, %v2066
      %v2087 = vadd.f32 %v1911, %v2071
      %v2088 = vadd.f32 %v1912, %v2074
      %s2089 = scalar_lea.vmem [#allocation2], 384
      %v2090 = vld [vmem:[%s2089] sm:$0xff]
      %v2091 = vld [vmem:[%s2089 + $0x8] sm:$0xff]
      %v2092 = vld [vmem:[%s2089 + $0x30] sm:$0xff]
      %v2093 = vld [vmem:[%s2089 + $0x38] sm:$0xff]
      %v2094 = vld [vmem:[%s2089 + $0x60] sm:$0xff]
      %v2095 = vld [vmem:[%s2089 + $0x68] sm:$0xff]
      %v2096 = vld [vmem:[%s2089 + $0x90] sm:$0xff]
      %v2097 = vld [vmem:[%s2089 + $0x98] sm:$0xff]
      %v2098 = vld [vmem:[%s2089 + $0xc0] sm:$0xff]
      %v2099 = vld [vmem:[%s2089 + $0xc8] sm:$0xff]
      %v2100 = vld [vmem:[%s2089 + $0xf0] sm:$0xff]
      %v2101 = vld [vmem:[%s2089 + $0xf8] sm:$0xff]
      %v2102 = vpack.c.bf16 %v2091, %v2090
      %v2103 = vpack.c.bf16 %v2093, %v2092
      %v2104 = vpack.c.bf16 %v2095, %v2094
      %v2105 = vpack.c.bf16 %v2097, %v2096
      %v2106 = vpack.c.bf16 %v2099, %v2098
      %v2107 = vpack.c.bf16 %v2101, %v2100
      %s2108 = scalar_lea.vmem %s3, 256
      %v2109 = vld [vmem:[%s2108] sm:$0xf]
      %v2110 = vld [vmem:[%s2108 + $0x4] sm:$0xf]
      %v2111 = vld [vmem:[%s2108 + $0x8] sm:$0xf]
      %v2112 = vld [vmem:[%s2108 + $0xc] sm:$0xf]
      %v2113 = vld [vmem:[%s2108 + $0x10] sm:$0xf]
      %v2114 = vld [vmem:[%s2108 + $0x14] sm:$0xf]
      %v2115 = vld [vmem:[%s2108 + $0x18] sm:$0xf]
      %v2116 = vld [vmem:[%s2108 + $0x1c] sm:$0xf]
      %v2117 = vld [vmem:[%s2108 + $0x20] sm:$0xf]
      %v2118 = vld [vmem:[%s2108 + $0x24] sm:$0xf]
      %v2119 = vld [vmem:[%s2108 + $0x28] sm:$0xf]
      %v2120 = vld [vmem:[%s2108 + $0x2c] sm:$0xf]
      %v2121 = vld [vmem:[%s2108 + $0x30] sm:$0xf]
      %v2122 = vld [vmem:[%s2108 + $0x34] sm:$0xf]
      %v2123 = vld [vmem:[%s2108 + $0x38] sm:$0xf]
      %v2124 = vld [vmem:[%s2108 + $0x3c] sm:$0xf]
      %v2141 = vunpack.c.l.b16 %v2109
      %v2142 = vunpack.c.l.b16 %v2110
      %v2143 = vunpack.c.l.b16 %v2111
      %v2144 = vunpack.c.l.b16 %v2112
      %v2145 = vunpack.c.l.b16 %v2113
      %v2146 = vunpack.c.l.b16 %v2114
      %v2147 = vunpack.c.l.b16 %v2115
      %v2148 = vunpack.c.l.b16 %v2116
      %v2149 = vunpack.c.l.b16 %v2117
      %v2150 = vunpack.c.l.b16 %v2118
      %v2151 = vunpack.c.l.b16 %v2119
      %v2152 = vunpack.c.l.b16 %v2120
      %v2153 = vunpack.c.l.b16 %v2121
      %v2154 = vunpack.c.l.b16 %v2122
      %v2155 = vunpack.c.l.b16 %v2123
      %v2156 = vunpack.c.l.b16 %v2124
      %v2157 = vpack.c.b16 %v2142, %v2141
      %v2158 = vpack.c.b16 %v2144, %v2143
      %v2159 = vpack.c.b16 %v2146, %v2145
      %v2160 = vpack.c.b16 %v2148, %v2147
      %v2161 = vpack.c.b16 %v2150, %v2149
      %v2162 = vpack.c.b16 %v2152, %v2151
      %v2163 = vpack.c.b16 %v2154, %v2153
      %v2164 = vpack.c.b16 %v2156, %v2155
      %2173 = vmatprep.subr.bf16.mxu0 0
      %2174 = vmatpush1.bf16.msra.mxu0 %v2157
      %2175 = vmatprep.subr.bf16.mxu0 0
      %2176 = vmatpush1.bf16.msra.mxu0 %v2158
      %2177 = vmatprep.subr.bf16.mxu0 0
      %2178 = vmatpush1.bf16.msra.mxu0 %v2159
      %2179 = vmatprep.subr.bf16.mxu0 0
      %2180 = vmatpush1.bf16.msra.mxu0 %v2160
      %2181 = vmatprep.subr.bf16.mxu0 0
      %2182 = vmatpush1.bf16.msra.mxu0 %v2161
      %2183 = vmatprep.subr.bf16.mxu0 0
      %2184 = vmatpush1.bf16.msra.mxu0 %v2162
      %2185 = vmatprep.subr.bf16.mxu0 0
      %2186 = vmatpush1.bf16.msra.mxu0 %v2163
      %2187 = vmatprep.subr.bf16.mxu0 0
      %2188 = vmatpush1.bf16.msra.mxu0 %v2164
      %2189 = vmatprep.subr.bf16.mxu0 0
      %2190 = vmatpush1.bf16.msra.mxu0 0
      %2191 = vmatprep.subr.bf16.mxu0 0
      %2192 = vmatpush1.bf16.msra.mxu0 0
      %2193 = vmatprep.subr.bf16.mxu0 0
      %2194 = vmatpush1.bf16.msra.mxu0 0
      %2195 = vmatprep.subr.bf16.mxu0 0
      %2196 = vmatpush1.bf16.msra.mxu0 0
      %2197 = vmatprep.subr.bf16.mxu0 0
      %2198 = vmatpush1.bf16.msra.mxu0 0
      %2199 = vmatprep.subr.bf16.mxu0 0
      %2200 = vmatpush1.bf16.msra.mxu0 0
      %2201 = vmatprep.subr.bf16.mxu0 0
      %2202 = vmatpush1.bf16.msra.mxu0 0
      %2203 = vmatprep.subr.bf16.mxu0 0
      %2204 = vmatpush1.bf16.msra.mxu0 0
      %2205 = vmatprep.mubr.bf16.mxu0 0
      %2206 = vmatmul.mubr.bf16.gmra.mrb[0].mxu0 %v2102
      %v2207 = vpop.f32.mrb[0].mxu0
      %v2208 = vadd.f32 0.0, %v2207
      %v2209 = vpop.f32.mrb[0].mxu0
      %v2210 = vpop.f32.mrb[0].mxu0
      %v2211 = vadd.f32 0.0, %v2210
      %v2212 = vpop.f32.mrb[0].mxu0
      %2213 = vmatprep.mubr.bf16.mxu0 0
      %2214 = vmatmul.mubr.bf16.gmra.mrb[0].mxu0 %v2103
      %v2215 = vpop.f32.mrb[0].mxu0
      %v2216 = vadd.f32 0.0, %v2215
      %v2217 = vpop.f32.mrb[0].mxu0
      %v2218 = vpop.f32.mrb[0].mxu0
      %v2219 = vadd.f32 0.0, %v2218
      %v2220 = vpop.f32.mrb[0].mxu0
      %2221 = vmatprep.mubr.bf16.mxu0 0
      %2222 = vmatmul.mubr.bf16.gmra.mrb[0].mxu0 %v2104
      %v2223 = vpop.f32.mrb[0].mxu0
      %v2224 = vadd.f32 0.0, %v2223
      %v2225 = vpop.f32.mrb[0].mxu0
      %v2226 = vpop.f32.mrb[0].mxu0
      %v2227 = vadd.f32 0.0, %v2226
      %v2228 = vpop.f32.mrb[0].mxu0
      %2229 = vmatprep.mubr.bf16.mxu0 0
      %2230 = vmatmul.mubr.bf16.gmra.mrb[0].mxu0 %v2105
      %v2231 = vpop.f32.mrb[0].mxu0
      %v2232 = vadd.f32 0.0, %v2231
      %v2233 = vpop.f32.mrb[0].mxu0
      %v2234 = vpop.f32.mrb[0].mxu0
      %v2235 = vadd.f32 0.0, %v2234
      %v2236 = vpop.f32.mrb[0].mxu0
      %2237 = vmatprep.mubr.bf16.mxu0 0
      %2238 = vmatmul.mubr.bf16.gmra.mrb[0].mxu0 %v2106
      %v2239 = vpop.f32.mrb[0].mxu0
      %v2240 = vadd.f32 0.0, %v2239
      %v2241 = vpop.f32.mrb[0].mxu0
      %v2242 = vpop.f32.mrb[0].mxu0
      %v2243 = vadd.f32 0.0, %v2242
      %v2244 = vpop.f32.mrb[0].mxu0
      %2245 = vmatprep.mubr.bf16.mxu0 0
      %2246 = vmatmul.mubr.bf16.gmra.mrb[0].mxu0 %v2107
      %v2247 = vpop.f32.mrb[0].mxu0
      %v2248 = vadd.f32 0.0, %v2247
      %v2249 = vpop.f32.mrb[0].mxu0
      %v2250 = vpop.f32.mrb[0].mxu0
      %v2251 = vadd.f32 0.0, %v2250
      %v2252 = vpop.f32.mrb[0].mxu0
      %2253 = vdwg.mxu0
      %v2254 = vadd.f32 %v2077, %v2208
      %v2255 = vadd.f32 %v2078, %v2211
      %v2256 = vadd.f32 %v2079, %v2216
      %v2257 = vadd.f32 %v2080, %v2219
      %v2258 = vadd.f32 %v2081, %v2224
      %v2259 = vadd.f32 %v2082, %v2227
      %v2260 = vadd.f32 %v2083, %v2232
      %v2261 = vadd.f32 %v2084, %v2235
      %v2262 = vadd.f32 %v2085, %v2240
      %v2263 = vadd.f32 %v2086, %v2243
      %v2264 = vadd.f32 %v2087, %v2248
      %v2265 = vadd.f32 %v2088, %v2251
      %s2266 = scalar_lea.vmem [#allocation2], 408
      %v2267 = vld [vmem:[%s2266] sm:$0xff]
      %v2268 = vld [vmem:[%s2266 + $0x8] sm:$0xff]
      %v2269 = vld [vmem:[%s2266 + $0x30] sm:$0xff]
      %v2270 = vld [vmem:[%s2266 + $0x38] sm:$0xff]
      %v2271 = vld [vmem:[%s2266 + $0x60] sm:$0xff]
      %v2272 = vld [vmem:[%s2266 + $0x68] sm:$0xff]
      %v2273 = vld [vmem:[%s2266 + $0x90] sm:$0xff]
      %v2274 = vld [vmem:[%s2266 + $0x98] sm:$0xff]
      %v2275 = vld [vmem:[%s2266 + $0xc0] sm:$0xff]
      %v2276 = vld [vmem:[%s2266 + $0xc8] sm:$0xff]
      %v2277 = vld [vmem:[%s2266 + $0xf0] sm:$0xff]
      %v2278 = vld [vmem:[%s2266 + $0xf8] sm:$0xff]
      %v2279 = vpack.c.bf16 %v2268, %v2267
      %v2280 = vpack.c.bf16 %v2270, %v2269
      %v2281 = vpack.c.bf16 %v2272, %v2271
      %v2282 = vpack.c.bf16 %v2274, %v2273
      %v2283 = vpack.c.bf16 %v2276, %v2275
      %v2284 = vpack.c.bf16 %v2278, %v2277
      %s2285 = scalar_lea.vmem %s3, 320
      %v2286 = vld [vmem:[%s2285] sm:$0xf]
      %v2287 = vld [vmem:[%s2285 + $0x4] sm:$0xf]
      %v2288 = vld [vmem:[%s2285 + $0x8] sm:$0xf]
      %v2289 = vld [vmem:[%s2285 + $0xc] sm:$0xf]
      %v2290 = vld [vmem:[%s2285 + $0x10] sm:$0xf]
      %v2291 = vld [vmem:[%s2285 + $0x14] sm:$0xf]
      %v2292 = vld [vmem:[%s2285 + $0x18] sm:$0xf]
      %v2293 = vld [vmem:[%s2285 + $0x1c] sm:$0xf]
      %v2294 = vld [vmem:[%s2285 + $0x20] sm:$0xf]
      %v2295 = vld [vmem:[%s2285 + $0x24] sm:$0xf]
      %v2296 = vld [vmem:[%s2285 + $0x28] sm:$0xf]
      %v2297 = vld [vmem:[%s2285 + $0x2c] sm:$0xf]
      %v2298 = vld [vmem:[%s2285 + $0x30] sm:$0xf]
      %v2299 = vld [vmem:[%s2285 + $0x34] sm:$0xf]
      %v2300 = vld [vmem:[%s2285 + $0x38] sm:$0xf]
      %v2301 = vld [vmem:[%s2285 + $0x3c] sm:$0xf]
      %v2318 = vunpack.c.l.b16 %v2286
      %v2319 = vunpack.c.l.b16 %v2287
      %v2320 = vunpack.c.l.b16 %v2288
      %v2321 = vunpack.c.l.b16 %v2289
      %v2322 = vunpack.c.l.b16 %v2290
      %v2323 = vunpack.c.l.b16 %v2291
      %v2324 = vunpack.c.l.b16 %v2292
      %v2325 = vunpack.c.l.b16 %v2293
      %v2326 = vunpack.c.l.b16 %v2294
      %v2327 = vunpack.c.l.b16 %v2295
      %v2328 = vunpack.c.l.b16 %v2296
      %v2329 = vunpack.c.l.b16 %v2297
      %v2330 = vunpack.c.l.b16 %v2298
      %v2331 = vunpack.c.l.b16 %v2299
      %v2332 = vunpack.c.l.b16 %v2300
      %v2333 = vunpack.c.l.b16 %v2301
      %v2334 = vpack.c.b16 %v2319, %v2318
      %v2335 = vpack.c.b16 %v2321, %v2320
      %v2336 = vpack.c.b16 %v2323, %v2322
      %v2337 = vpack.c.b16 %v2325, %v2324
      %v2338 = vpack.c.b16 %v2327, %v2326
      %v2339 = vpack.c.b16 %v2329, %v2328
      %v2340 = vpack.c.b16 %v2331, %v2330
      %v2341 = vpack.c.b16 %v2333, %v2332
      %2350 = vmatprep.subr.bf16.mxu0 0
      %2351 = vmatpush1.bf16.msra.mxu0 %v2334
      %2352 = vmatprep.subr.bf16.mxu0 0
      %2353 = vmatpush1.bf16.msra.mxu0 %v2335
      %2354 = vmatprep.subr.bf16.mxu0 0
      %2355 = vmatpush1.bf16.msra.mxu0 %v2336
      %2356 = vmatprep.subr.bf16.mxu0 0
      %2357 = vmatpush1.bf16.msra.mxu0 %v2337
      %2358 = vmatprep.subr.bf16.mxu0 0
      %2359 = vmatpush1.bf16.msra.mxu0 %v2338
      %2360 = vmatprep.subr.bf16.mxu0 0
      %2361 = vmatpush1.bf16.msra.mxu0 %v2339
      %2362 = vmatprep.subr.bf16.mxu0 0
      %2363 = vmatpush1.bf16.msra.mxu0 %v2340
      %2364 = vmatprep.subr.bf16.mxu0 0
      %2365 = vmatpush1.bf16.msra.mxu0 %v2341
      %2366 = vmatprep.subr.bf16.mxu0 0
      %2367 = vmatpush1.bf16.msra.mxu0 0
      %2368 = vmatprep.subr.bf16.mxu0 0
      %2369 = vmatpush1.bf16.msra.mxu0 0
      %2370 = vmatprep.subr.bf16.mxu0 0
      %2371 = vmatpush1.bf16.msra.mxu0 0
      %2372 = vmatprep.subr.bf16.mxu0 0
      %2373 = vmatpush1.bf16.msra.mxu0 0
      %2374 = vmatprep.subr.bf16.mxu0 0
      %2375 = vmatpush1.bf16.msra.mxu0 0
      %2376 = vmatprep.subr.bf16.mxu0 0
      %2377 = vmatpush1.bf16.msra.mxu0 0
      %2378 = vmatprep.subr.bf16.mxu0 0
      %2379 = vmatpush1.bf16.msra.mxu0 0
      %2380 = vmatprep.subr.bf16.mxu0 0
      %2381 = vmatpush1.bf16.msra.mxu0 0
      %2382 = vmatprep.mubr.bf16.mxu0 0
      %2383 = vmatmul.mubr.bf16.gmra.mrb[0].mxu0 %v2279
      %v2384 = vpop.f32.mrb[0].mxu0
      %v2385 = vadd.f32 0.0, %v2384
      %v2386 = vpop.f32.mrb[0].mxu0
      %v2387 = vpop.f32.mrb[0].mxu0
      %v2388 = vadd.f32 0.0, %v2387
      %v2389 = vpop.f32.mrb[0].mxu0
      %2390 = vmatprep.mubr.bf16.mxu0 0
      %2391 = vmatmul.mubr.bf16.gmra.mrb[0].mxu0 %v2280
      %v2392 = vpop.f32.mrb[0].mxu0
      %v2393 = vadd.f32 0.0, %v2392
      %v2394 = vpop.f32.mrb[0].mxu0
      %v2395 = vpop.f32.mrb[0].mxu0
      %v2396 = vadd.f32 0.0, %v2395
      %v2397 = vpop.f32.mrb[0].mxu0
      %2398 = vmatprep.mubr.bf16.mxu0 0
      %2399 = vmatmul.mubr.bf16.gmra.mrb[0].mxu0 %v2281
      %v2400 = vpop.f32.mrb[0].mxu0
      %v2401 = vadd.f32 0.0, %v2400
      %v2402 = vpop.f32.mrb[0].mxu0
      %v2403 = vpop.f32.mrb[0].mxu0
      %v2404 = vadd.f32 0.0, %v2403
      %v2405 = vpop.f32.mrb[0].mxu0
      %2406 = vmatprep.mubr.bf16.mxu0 0
      %2407 = vmatmul.mubr.bf16.gmra.mrb[0].mxu0 %v2282
      %v2408 = vpop.f32.mrb[0].mxu0
      %v2409 = vadd.f32 0.0, %v2408
      %v2410 = vpop.f32.mrb[0].mxu0
      %v2411 = vpop.f32.mrb[0].mxu0
      %v2412 = vadd.f32 0.0, %v2411
      %v2413 = vpop.f32.mrb[0].mxu0
      %2414 = vmatprep.mubr.bf16.mxu0 0
      %2415 = vmatmul.mubr.bf16.gmra.mrb[0].mxu0 %v2283
      %v2416 = vpop.f32.mrb[0].mxu0
      %v2417 = vadd.f32 0.0, %v2416
      %v2418 = vpop.f32.mrb[0].mxu0
      %v2419 = vpop.f32.mrb[0].mxu0
      %v2420 = vadd.f32 0.0, %v2419
      %v2421 = vpop.f32.mrb[0].mxu0
      %2422 = vmatprep.mubr.bf16.mxu0 0
      %2423 = vmatmul.mubr.bf16.gmra.mrb[0].mxu0 %v2284
      %v2424 = vpop.f32.mrb[0].mxu0
      %v2425 = vadd.f32 0.0, %v2424
      %v2426 = vpop.f32.mrb[0].mxu0
      %v2427 = vpop.f32.mrb[0].mxu0
      %v2428 = vadd.f32 0.0, %v2427
      %v2429 = vpop.f32.mrb[0].mxu0
      %2430 = vdwg.mxu0
      %v2431 = vadd.f32 %v2254, %v2385
      %v2432 = vadd.f32 %v2255, %v2388
      %v2433 = vadd.f32 %v2256, %v2393
      %v2434 = vadd.f32 %v2257, %v2396
      %v2435 = vadd.f32 %v2258, %v2401
      %v2436 = vadd.f32 %v2259, %v2404
      %v2437 = vadd.f32 %v2260, %v2409
      %v2438 = vadd.f32 %v2261, %v2412
      %v2439 = vadd.f32 %v2262, %v2417
      %v2440 = vadd.f32 %v2263, %v2420
      %v2441 = vadd.f32 %v2264, %v2425
      %v2442 = vadd.f32 %v2265, %v2428
      %v2443 = vld [vmem:[%s2089 + $0x1] sm:$0xff]
      %v2444 = vld [vmem:[%s2089 + $0x9] sm:$0xff]
      %v2445 = vld [vmem:[%s2089 + $0x31] sm:$0xff]
      %v2446 = vld [vmem:[%s2089 + $0x39] sm:$0xff]
      %v2447 = vld [vmem:[%s2089 + $0x61] sm:$0xff]
      %v2448 = vld [vmem:[%s2089 + $0x69] sm:$0xff]
      %v2449 = vld [vmem:[%s2089 + $0x91] sm:$0xff]
      %v2450 = vld [vmem:[%s2089 + $0x99] sm:$0xff]
      %v2451 = vld [vmem:[%s2089 + $0xc1] sm:$0xff]
      %v2452 = vld [vmem:[%s2089 + $0xc9] sm:$0xff]
      %v2453 = vld [vmem:[%s2089 + $0xf1] sm:$0xff]
      %v2454 = vld [vmem:[%s2089 + $0xf9] sm:$0xff]
      %v2455 = vpack.c.bf16 %v2444, %v2443
      %v2456 = vpack.c.bf16 %v2446, %v2445
      %v2457 = vpack.c.bf16 %v2448, %v2447
      %v2458 = vpack.c.bf16 %v2450, %v2449
      %v2459 = vpack.c.bf16 %v2452, %v2451
      %v2460 = vpack.c.bf16 %v2454, %v2453
      %s2461 = scalar_lea.vmem %s3, 384
      %v2462 = vld [vmem:[%s2461] sm:$0xf]
      %v2463 = vld [vmem:[%s2461 + $0x4] sm:$0xf]
      %v2464 = vld [vmem:[%s2461 + $0x8] sm:$0xf]
      %v2465 = vld [vmem:[%s2461 + $0xc] sm:$0xf]
      %v2466 = vld [vmem:[%s2461 + $0x10] sm:$0xf]
      %v2467 = vld [vmem:[%s2461 + $0x14] sm:$0xf]
      %v2468 = vld [vmem:[%s2461 + $0x18] sm:$0xf]
      %v2469 = vld [vmem:[%s2461 + $0x1c] sm:$0xf]
      %v2470 = vld [vmem:[%s2461 + $0x20] sm:$0xf]
      %v2471 = vld [vmem:[%s2461 + $0x24] sm:$0xf]
      %v2472 = vld [vmem:[%s2461 + $0x28] sm:$0xf]
      %v2473 = vld [vmem:[%s2461 + $0x2c] sm:$0xf]
      %v2474 = vld [vmem:[%s2461 + $0x30] sm:$0xf]
      %v2475 = vld [vmem:[%s2461 + $0x34] sm:$0xf]
      %v2476 = vld [vmem:[%s2461 + $0x38] sm:$0xf]
      %v2477 = vld [vmem:[%s2461 + $0x3c] sm:$0xf]
      %v2494 = vunpack.c.l.b16 %v2462
      %v2495 = vunpack.c.l.b16 %v2463
      %v2496 = vunpack.c.l.b16 %v2464
      %v2497 = vunpack.c.l.b16 %v2465
      %v2498 = vunpack.c.l.b16 %v2466
      %v2499 = vunpack.c.l.b16 %v2467
      %v2500 = vunpack.c.l.b16 %v2468
      %v2501 = vunpack.c.l.b16 %v2469
      %v2502 = vunpack.c.l.b16 %v2470
      %v2503 = vunpack.c.l.b16 %v2471
      %v2504 = vunpack.c.l.b16 %v2472
      %v2505 = vunpack.c.l.b16 %v2473
      %v2506 = vunpack.c.l.b16 %v2474
      %v2507 = vunpack.c.l.b16 %v2475
      %v2508 = vunpack.c.l.b16 %v2476
      %v2509 = vunpack.c.l.b16 %v2477
      %v2510 = vpack.c.b16 %v2495, %v2494
      %v2511 = vpack.c.b16 %v2497, %v2496
      %v2512 = vpack.c.b16 %v2499, %v2498
      %v2513 = vpack.c.b16 %v2501, %v2500
      %v2514 = vpack.c.b16 %v2503, %v2502
      %v2515 = vpack.c.b16 %v2505, %v2504
      %v2516 = vpack.c.b16 %v2507, %v2506
      %v2517 = vpack.c.b16 %v2509, %v2508
      %2526 = vmatprep.subr.bf16.mxu0 0
      %2527 = vmatpush1.bf16.msra.mxu0 %v2510
      %2528 = vmatprep.subr.bf16.mxu0 0
      %2529 = vmatpush1.bf16.msra.mxu0 %v2511
      %2530 = vmatprep.subr.bf16.mxu0 0
      %2531 = vmatpush1.bf16.msra.mxu0 %v2512
      %2532 = vmatprep.subr.bf16.mxu0 0
      %2533 = vmatpush1.bf16.msra.mxu0 %v2513
      %2534 = vmatprep.subr.bf16.mxu0 0
      %2535 = vmatpush1.bf16.msra.mxu0 %v2514
      %2536 = vmatprep.subr.bf16.mxu0 0
      %2537 = vmatpush1.bf16.msra.mxu0 %v2515
      %2538 = vmatprep.subr.bf16.mxu0 0
      %2539 = vmatpush1.bf16.msra.mxu0 %v2516
      %2540 = vmatprep.subr.bf16.mxu0 0
      %2541 = vmatpush1.bf16.msra.mxu0 %v2517
      %2542 = vmatprep.subr.bf16.mxu0 0
      %2543 = vmatpush1.bf16.msra.mxu0 0
      %2544 = vmatprep.subr.bf16.mxu0 0
      %2545 = vmatpush1.bf16.msra.mxu0 0
      %2546 = vmatprep.subr.bf16.mxu0 0
      %2547 = vmatpush1.bf16.msra.mxu0 0
      %2548 = vmatprep.subr.bf16.mxu0 0
      %2549 = vmatpush1.bf16.msra.mxu0 0
      %2550 = vmatprep.subr.bf16.mxu0 0
      %2551 = vmatpush1.bf16.msra.mxu0 0
      %2552 = vmatprep.subr.bf16.mxu0 0
      %2553 = vmatpush1.bf16.msra.mxu0 0
      %2554 = vmatprep.subr.bf16.mxu0 0
      %2555 = vmatpush1.bf16.msra.mxu0 0
      %2556 = vmatprep.subr.bf16.mxu0 0
      %2557 = vmatpush1.bf16.msra.mxu0 0
      %2558 = vmatprep.mubr.bf16.mxu0 0
      %2559 = vmatmul.mubr.bf16.gmra.mrb[0].mxu0 %v2455
      %v2560 = vpop.f32.mrb[0].mxu0
      %v2561 = vadd.f32 0.0, %v2560
      %v2562 = vpop.f32.mrb[0].mxu0
      %v2563 = vpop.f32.mrb[0].mxu0
      %v2564 = vadd.f32 0.0, %v2563
      %v2565 = vpop.f32.mrb[0].mxu0
      %2566 = vmatprep.mubr.bf16.mxu0 0
      %2567 = vmatmul.mubr.bf16.gmra.mrb[0].mxu0 %v2456
      %v2568 = vpop.f32.mrb[0].mxu0
      %v2569 = vadd.f32 0.0, %v2568
      %v2570 = vpop.f32.mrb[0].mxu0
      %v2571 = vpop.f32.mrb[0].mxu0
      %v2572 = vadd.f32 0.0, %v2571
      %v2573 = vpop.f32.mrb[0].mxu0
      %2574 = vmatprep.mubr.bf16.mxu0 0
      %2575 = vmatmul.mubr.bf16.gmra.mrb[0].mxu0 %v2457
      %v2576 = vpop.f32.mrb[0].mxu0
      %v2577 = vadd.f32 0.0, %v2576
      %v2578 = vpop.f32.mrb[0].mxu0
      %v2579 = vpop.f32.mrb[0].mxu0
      %v2580 = vadd.f32 0.0, %v2579
      %v2581 = vpop.f32.mrb[0].mxu0
      %2582 = vmatprep.mubr.bf16.mxu0 0
      %2583 = vmatmul.mubr.bf16.gmra.mrb[0].mxu0 %v2458
      %v2584 = vpop.f32.mrb[0].mxu0
      %v2585 = vadd.f32 0.0, %v2584
      %v2586 = vpop.f32.mrb[0].mxu0
      %v2587 = vpop.f32.mrb[0].mxu0
      %v2588 = vadd.f32 0.0, %v2587
      %v2589 = vpop.f32.mrb[0].mxu0
      %2590 = vmatprep.mubr.bf16.mxu0 0
      %2591 = vmatmul.mubr.bf16.gmra.mrb[0].mxu0 %v2459
      %v2592 = vpop.f32.mrb[0].mxu0
      %v2593 = vadd.f32 0.0, %v2592
      %v2594 = vpop.f32.mrb[0].mxu0
      %v2595 = vpop.f32.mrb[0].mxu0
      %v2596 = vadd.f32 0.0, %v2595
      %v2597 = vpop.f32.mrb[0].mxu0
      %2598 = vmatprep.mubr.bf16.mxu0 0
      %2599 = vmatmul.mubr.bf16.gmra.mrb[0].mxu0 %v2460
      %v2600 = vpop.f32.mrb[0].mxu0
      %v2601 = vadd.f32 0.0, %v2600
      %v2602 = vpop.f32.mrb[0].mxu0
      %v2603 = vpop.f32.mrb[0].mxu0
      %v2604 = vadd.f32 0.0, %v2603
      %v2605 = vpop.f32.mrb[0].mxu0
      %2606 = vdwg.mxu0
      %v2607 = vadd.f32 %v2431, %v2561
      %v2608 = vadd.f32 %v2432, %v2564
      %v2609 = vadd.f32 %v2433, %v2569
      %v2610 = vadd.f32 %v2434, %v2572
      %v2611 = vadd.f32 %v2435, %v2577
      %v2612 = vadd.f32 %v2436, %v2580
      %v2613 = vadd.f32 %v2437, %v2585
      %v2614 = vadd.f32 %v2438, %v2588
      %v2615 = vadd.f32 %v2439, %v2593
      %v2616 = vadd.f32 %v2440, %v2596
      %v2617 = vadd.f32 %v2441, %v2601
      %v2618 = vadd.f32 %v2442, %v2604
      %v2619 = vld [vmem:[%s2266 + $0x1] sm:$0xff]
      %v2620 = vld [vmem:[%s2266 + $0x9] sm:$0xff]
      %v2621 = vld [vmem:[%s2266 + $0x31] sm:$0xff]
      %v2622 = vld [vmem:[%s2266 + $0x39] sm:$0xff]
      %v2623 = vld [vmem:[%s2266 + $0x61] sm:$0xff]
      %v2624 = vld [vmem:[%s2266 + $0x69] sm:$0xff]
      %v2625 = vld [vmem:[%s2266 + $0x91] sm:$0xff]
      %v2626 = vld [vmem:[%s2266 + $0x99] sm:$0xff]
      %v2627 = vld [vmem:[%s2266 + $0xc1] sm:$0xff]
      %v2628 = vld [vmem:[%s2266 + $0xc9] sm:$0xff]
      %v2629 = vld [vmem:[%s2266 + $0xf1] sm:$0xff]
      %v2630 = vld [vmem:[%s2266 + $0xf9] sm:$0xff]
      %v2631 = vpack.c.bf16 %v2620, %v2619
      %v2632 = vpack.c.bf16 %v2622, %v2621
      %v2633 = vpack.c.bf16 %v2624, %v2623
      %v2634 = vpack.c.bf16 %v2626, %v2625
      %v2635 = vpack.c.bf16 %v2628, %v2627
      %v2636 = vpack.c.bf16 %v2630, %v2629
      %s2637 = scalar_lea.vmem %s3, 448
      %v2638 = vld [vmem:[%s2637] sm:$0xf]
      %v2639 = vld [vmem:[%s2637 + $0x4] sm:$0xf]
      %v2640 = vld [vmem:[%s2637 + $0x8] sm:$0xf]
      %v2641 = vld [vmem:[%s2637 + $0xc] sm:$0xf]
      %v2642 = vld [vmem:[%s2637 + $0x10] sm:$0xf]
      %v2643 = vld [vmem:[%s2637 + $0x14] sm:$0xf]
      %v2644 = vld [vmem:[%s2637 + $0x18] sm:$0xf]
      %v2645 = vld [vmem:[%s2637 + $0x1c] sm:$0xf]
      %v2646 = vld [vmem:[%s2637 + $0x20] sm:$0xf]
      %v2647 = vld [vmem:[%s2637 + $0x24] sm:$0xf]
      %v2648 = vld [vmem:[%s2637 + $0x28] sm:$0xf]
      %v2649 = vld [vmem:[%s2637 + $0x2c] sm:$0xf]
      %v2650 = vld [vmem:[%s2637 + $0x30] sm:$0xf]
      %v2651 = vld [vmem:[%s2637 + $0x34] sm:$0xf]
      %v2652 = vld [vmem:[%s2637 + $0x38] sm:$0xf]
      %v2653 = vld [vmem:[%s2637 + $0x3c] sm:$0xf]
      %v2670 = vunpack.c.l.b16 %v2638
      %v2671 = vunpack.c.l.b16 %v2639
      %v2672 = vunpack.c.l.b16 %v2640
      %v2673 = vunpack.c.l.b16 %v2641
      %v2674 = vunpack.c.l.b16 %v2642
      %v2675 = vunpack.c.l.b16 %v2643
      %v2676 = vunpack.c.l.b16 %v2644
      %v2677 = vunpack.c.l.b16 %v2645
      %v2678 = vunpack.c.l.b16 %v2646
      %v2679 = vunpack.c.l.b16 %v2647
      %v2680 = vunpack.c.l.b16 %v2648
      %v2681 = vunpack.c.l.b16 %v2649
      %v2682 = vunpack.c.l.b16 %v2650
      %v2683 = vunpack.c.l.b16 %v2651
      %v2684 = vunpack.c.l.b16 %v2652
      %v2685 = vunpack.c.l.b16 %v2653
      %v2686 = vpack.c.b16 %v2671, %v2670
      %v2687 = vpack.c.b16 %v2673, %v2672
      %v2688 = vpack.c.b16 %v2675, %v2674
      %v2689 = vpack.c.b16 %v2677, %v2676
      %v2690 = vpack.c.b16 %v2679, %v2678
      %v2691 = vpack.c.b16 %v2681, %v2680
      %v2692 = vpack.c.b16 %v2683, %v2682
      %v2693 = vpack.c.b16 %v2685, %v2684
      %2702 = vmatprep.subr.bf16.mxu0 0
      %2703 = vmatpush1.bf16.msra.mxu0 %v2686
      %2704 = vmatprep.subr.bf16.mxu0 0
      %2705 = vmatpush1.bf16.msra.mxu0 %v2687
      %2706 = vmatprep.subr.bf16.mxu0 0
      %2707 = vmatpush1.bf16.msra.mxu0 %v2688
      %2708 = vmatprep.subr.bf16.mxu0 0
      %2709 = vmatpush1.bf16.msra.mxu0 %v2689
      %2710 = vmatprep.subr.bf16.mxu0 0
      %2711 = vmatpush1.bf16.msra.mxu0 %v2690
      %2712 = vmatprep.subr.bf16.mxu0 0
      %2713 = vmatpush1.bf16.msra.mxu0 %v2691
      %2714 = vmatprep.subr.bf16.mxu0 0
      %2715 = vmatpush1.bf16.msra.mxu0 %v2692
      %2716 = vmatprep.subr.bf16.mxu0 0
      %2717 = vmatpush1.bf16.msra.mxu0 %v2693
      %2718 = vmatprep.subr.bf16.mxu0 0
      %2719 = vmatpush1.bf16.msra.mxu0 0
      %2720 = vmatprep.subr.bf16.mxu0 0
      %2721 = vmatpush1.bf16.msra.mxu0 0
      %2722 = vmatprep.subr.bf16.mxu0 0
      %2723 = vmatpush1.bf16.msra.mxu0 0
      %2724 = vmatprep.subr.bf16.mxu0 0
      %2725 = vmatpush1.bf16.msra.mxu0 0
      %2726 = vmatprep.subr.bf16.mxu0 0
      %2727 = vmatpush1.bf16.msra.mxu0 0
      %2728 = vmatprep.subr.bf16.mxu0 0
      %2729 = vmatpush1.bf16.msra.mxu0 0
      %2730 = vmatprep.subr.bf16.mxu0 0
      %2731 = vmatpush1.bf16.msra.mxu0 0
      %2732 = vmatprep.subr.bf16.mxu0 0
      %2733 = vmatpush1.bf16.msra.mxu0 0
      %2734 = vmatprep.mubr.bf16.mxu0 0
      %2735 = vmatmul.mubr.bf16.gmra.mrb[0].mxu0 %v2631
      %v2736 = vpop.f32.mrb[0].mxu0
      %v2737 = vadd.f32 0.0, %v2736
      %v2738 = vpop.f32.mrb[0].mxu0
      %v2739 = vpop.f32.mrb[0].mxu0
      %v2740 = vadd.f32 0.0, %v2739
      %v2741 = vpop.f32.mrb[0].mxu0
      %2742 = vmatprep.mubr.bf16.mxu0 0
      %2743 = vmatmul.mubr.bf16.gmra.mrb[0].mxu0 %v2632
      %v2744 = vpop.f32.mrb[0].mxu0
      %v2745 = vadd.f32 0.0, %v2744
      %v2746 = vpop.f32.mrb[0].mxu0
      %v2747 = vpop.f32.mrb[0].mxu0
      %v2748 = vadd.f32 0.0, %v2747
      %v2749 = vpop.f32.mrb[0].mxu0
      %2750 = vmatprep.mubr.bf16.mxu0 0
      %2751 = vmatmul.mubr.bf16.gmra.mrb[0].mxu0 %v2633
      %v2752 = vpop.f32.mrb[0].mxu0
      %v2753 = vadd.f32 0.0, %v2752
      %v2754 = vpop.f32.mrb[0].mxu0
      %v2755 = vpop.f32.mrb[0].mxu0
      %v2756 = vadd.f32 0.0, %v2755
      %v2757 = vpop.f32.mrb[0].mxu0
      %2758 = vmatprep.mubr.bf16.mxu0 0
      %2759 = vmatmul.mubr.bf16.gmra.mrb[0].mxu0 %v2634
      %v2760 = vpop.f32.mrb[0].mxu0
      %v2761 = vadd.f32 0.0, %v2760
      %v2762 = vpop.f32.mrb[0].mxu0
      %v2763 = vpop.f32.mrb[0].mxu0
      %v2764 = vadd.f32 0.0, %v2763
      %v2765 = vpop.f32.mrb[0].mxu0
      %2766 = vmatprep.mubr.bf16.mxu0 0
      %2767 = vmatmul.mubr.bf16.gmra.mrb[0].mxu0 %v2635
      %v2768 = vpop.f32.mrb[0].mxu0
      %v2769 = vadd.f32 0.0, %v2768
      %v2770 = vpop.f32.mrb[0].mxu0
      %v2771 = vpop.f32.mrb[0].mxu0
      %v2772 = vadd.f32 0.0, %v2771
      %v2773 = vpop.f32.mrb[0].mxu0
      %2774 = vmatprep.mubr.bf16.mxu0 0
      %2775 = vmatmul.mubr.bf16.gmra.mrb[0].mxu0 %v2636
      %v2776 = vpop.f32.mrb[0].mxu0
      %v2777 = vadd.f32 0.0, %v2776
      %v2778 = vpop.f32.mrb[0].mxu0
      %v2779 = vpop.f32.mrb[0].mxu0
      %v2780 = vadd.f32 0.0, %v2779
      %v2781 = vpop.f32.mrb[0].mxu0
      %2782 = vdwg.mxu0
      %v2783 = vadd.f32 %v2607, %v2737
      %v2784 = vadd.f32 %v2608, %v2740
      %v2785 = vadd.f32 %v2609, %v2745
      %v2786 = vadd.f32 %v2610, %v2748
      %v2787 = vadd.f32 %v2611, %v2753
      %v2788 = vadd.f32 %v2612, %v2756
      %v2789 = vadd.f32 %v2613, %v2761
      %v2790 = vadd.f32 %v2614, %v2764
      %v2791 = vadd.f32 %v2615, %v2769
      %v2792 = vadd.f32 %v2616, %v2772
      %v2793 = vadd.f32 %v2617, %v2777
      %v2794 = vadd.f32 %v2618, %v2780
      %s2795 = scalar_lea.vmem [#allocation2], 48
      %v2796 = vld [vmem:[%s2795] sm:$0xff]
      %v2797 = vld [vmem:[%s2795 + $0x8] sm:$0xff]
      %v2798 = vld [vmem:[%s2795 + $0x30] sm:$0xff]
      %v2799 = vld [vmem:[%s2795 + $0x38] sm:$0xff]
      %v2800 = vld [vmem:[%s2795 + $0x60] sm:$0xff]
      %v2801 = vld [vmem:[%s2795 + $0x68] sm:$0xff]
      %v2802 = vld [vmem:[%s2795 + $0x90] sm:$0xff]
      %v2803 = vld [vmem:[%s2795 + $0x98] sm:$0xff]
      %v2804 = vld [vmem:[%s2795 + $0xc0] sm:$0xff]
      %v2805 = vld [vmem:[%s2795 + $0xc8] sm:$0xff]
      %v2806 = vld [vmem:[%s2795 + $0xf0] sm:$0xff]
      %v2807 = vld [vmem:[%s2795 + $0xf8] sm:$0xff]
      %v2808 = vpack.c.bf16 %v2797, %v2796
      %v2809 = vpack.c.bf16 %v2799, %v2798
      %v2810 = vpack.c.bf16 %v2801, %v2800
      %v2811 = vpack.c.bf16 %v2803, %v2802
      %v2812 = vpack.c.bf16 %v2805, %v2804
      %v2813 = vpack.c.bf16 %v2807, %v2806
      %s2814 = scalar_lea.vmem %s3, 512
      %v2815 = vld [vmem:[%s2814] sm:$0xf]
      %v2816 = vld [vmem:[%s2814 + $0x4] sm:$0xf]
      %v2817 = vld [vmem:[%s2814 + $0x8] sm:$0xf]
      %v2818 = vld [vmem:[%s2814 + $0xc] sm:$0xf]
      %v2819 = vld [vmem:[%s2814 + $0x10] sm:$0xf]
      %v2820 = vld [vmem:[%s2814 + $0x14] sm:$0xf]
      %v2821 = vld [vmem:[%s2814 + $0x18] sm:$0xf]
      %v2822 = vld [vmem:[%s2814 + $0x1c] sm:$0xf]
      %v2823 = vld [vmem:[%s2814 + $0x20] sm:$0xf]
      %v2824 = vld [vmem:[%s2814 + $0x24] sm:$0xf]
      %v2825 = vld [vmem:[%s2814 + $0x28] sm:$0xf]
      %v2826 = vld [vmem:[%s2814 + $0x2c] sm:$0xf]
      %v2827 = vld [vmem:[%s2814 + $0x30] sm:$0xf]
      %v2828 = vld [vmem:[%s2814 + $0x34] sm:$0xf]
      %v2829 = vld [vmem:[%s2814 + $0x38] sm:$0xf]
      %v2830 = vld [vmem:[%s2814 + $0x3c] sm:$0xf]
      %v2847 = vunpack.c.l.b16 %v2815
      %v2848 = vunpack.c.l.b16 %v2816
      %v2849 = vunpack.c.l.b16 %v2817
      %v2850 = vunpack.c.l.b16 %v2818
      %v2851 = vunpack.c.l.b16 %v2819
      %v2852 = vunpack.c.l.b16 %v2820
      %v2853 = vunpack.c.l.b16 %v2821
      %v2854 = vunpack.c.l.b16 %v2822
      %v2855 = vunpack.c.l.b16 %v2823
      %v2856 = vunpack.c.l.b16 %v2824
      %v2857 = vunpack.c.l.b16 %v2825
      %v2858 = vunpack.c.l.b16 %v2826
      %v2859 = vunpack.c.l.b16 %v2827
      %v2860 = vunpack.c.l.b16 %v2828
      %v2861 = vunpack.c.l.b16 %v2829
      %v2862 = vunpack.c.l.b16 %v2830
      %v2863 = vpack.c.b16 %v2848, %v2847
      %v2864 = vpack.c.b16 %v2850, %v2849
      %v2865 = vpack.c.b16 %v2852, %v2851
      %v2866 = vpack.c.b16 %v2854, %v2853
      %v2867 = vpack.c.b16 %v2856, %v2855
      %v2868 = vpack.c.b16 %v2858, %v2857
      %v2869 = vpack.c.b16 %v2860, %v2859
      %v2870 = vpack.c.b16 %v2862, %v2861
      %2879 = vmatprep.subr.bf16.mxu0 0
      %2880 = vmatpush1.bf16.msra.mxu0 %v2863
      %2881 = vmatprep.subr.bf16.mxu0 0
      %2882 = vmatpush1.bf16.msra.mxu0 %v2864
      %2883 = vmatprep.subr.bf16.mxu0 0
      %2884 = vmatpush1.bf16.msra.mxu0 %v2865
      %2885 = vmatprep.subr.bf16.mxu0 0
      %2886 = vmatpush1.bf16.msra.mxu0 %v2866
      %2887 = vmatprep.subr.bf16.mxu0 0
      %2888 = vmatpush1.bf16.msra.mxu0 %v2867
      %2889 = vmatprep.subr.bf16.mxu0 0
      %2890 = vmatpush1.bf16.msra.mxu0 %v2868
      %2891 = vmatprep.subr.bf16.mxu0 0
      %2892 = vmatpush1.bf16.msra.mxu0 %v2869
      %2893 = vmatprep.subr.bf16.mxu0 0
      %2894 = vmatpush1.bf16.msra.mxu0 %v2870
      %2895 = vmatprep.subr.bf16.mxu0 0
      %2896 = vmatpush1.bf16.msra.mxu0 0
      %2897 = vmatprep.subr.bf16.mxu0 0
      %2898 = vmatpush1.bf16.msra.mxu0 0
      %2899 = vmatprep.subr.bf16.mxu0 0
      %2900 = vmatpush1.bf16.msra.mxu0 0
      %2901 = vmatprep.subr.bf16.mxu0 0
      %2902 = vmatpush1.bf16.msra.mxu0 0
      %2903 = vmatprep.subr.bf16.mxu0 0
      %2904 = vmatpush1.bf16.msra.mxu0 0
      %2905 = vmatprep.subr.bf16.mxu0 0
      %2906 = vmatpush1.bf16.msra.mxu0 0
      %2907 = vmatprep.subr.bf16.mxu0 0
      %2908 = vmatpush1.bf16.msra.mxu0 0
      %2909 = vmatprep.subr.bf16.mxu0 0
      %2910 = vmatpush1.bf16.msra.mxu0 0
      %2911 = vmatprep.mubr.bf16.mxu0 0
      %2912 = vmatmul.mubr.bf16.gmra.mrb[0].mxu0 %v2808
      %v2913 = vpop.f32.mrb[0].mxu0
      %v2914 = vadd.f32 0.0, %v2913
      %v2915 = vpop.f32.mrb[0].mxu0
      %v2916 = vpop.f32.mrb[0].mxu0
      %v2917 = vadd.f32 0.0, %v2916
      %v2918 = vpop.f32.mrb[0].mxu0
      %2919 = vmatprep.mubr.bf16.mxu0 0
      %2920 = vmatmul.mubr.bf16.gmra.mrb[0].mxu0 %v2809
      %v2921 = vpop.f32.mrb[0].mxu0
      %v2922 = vadd.f32 0.0, %v2921
      %v2923 = vpop.f32.mrb[0].mxu0
      %v2924 = vpop.f32.mrb[0].mxu0
      %v2925 = vadd.f32 0.0, %v2924
      %v2926 = vpop.f32.mrb[0].mxu0
      %2927 = vmatprep.mubr.bf16.mxu0 0
      %2928 = vmatmul.mubr.bf16.gmra.mrb[0].mxu0 %v2810
      %v2929 = vpop.f32.mrb[0].mxu0
      %v2930 = vadd.f32 0.0, %v2929
      %v2931 = vpop.f32.mrb[0].mxu0
      %v2932 = vpop.f32.mrb[0].mxu0
      %v2933 = vadd.f32 0.0, %v2932
      %v2934 = vpop.f32.mrb[0].mxu0
      %2935 = vmatprep.mubr.bf16.mxu0 0
      %2936 = vmatmul.mubr.bf16.gmra.mrb[0].mxu0 %v2811
      %v2937 = vpop.f32.mrb[0].mxu0
      %v2938 = vadd.f32 0.0, %v2937
      %v2939 = vpop.f32.mrb[0].mxu0
      %v2940 = vpop.f32.mrb[0].mxu0
      %v2941 = vadd.f32 0.0, %v2940
      %v2942 = vpop.f32.mrb[0].mxu0
      %2943 = vmatprep.mubr.bf16.mxu0 0
      %2944 = vmatmul.mubr.bf16.gmra.mrb[0].mxu0 %v2812
      %v2945 = vpop.f32.mrb[0].mxu0
      %v2946 = vadd.f32 0.0, %v2945
      %v2947 = vpop.f32.mrb[0].mxu0
      %v2948 = vpop.f32.mrb[0].mxu0
      %v2949 = vadd.f32 0.0, %v2948
      %v2950 = vpop.f32.mrb[0].mxu0
      %2951 = vmatprep.mubr.bf16.mxu0 0
      %2952 = vmatmul.mubr.bf16.gmra.mrb[0].mxu0 %v2813
      %v2953 = vpop.f32.mrb[0].mxu0
      %v2954 = vadd.f32 0.0, %v2953
      %v2955 = vpop.f32.mrb[0].mxu0
      %v2956 = vpop.f32.mrb[0].mxu0
      %v2957 = vadd.f32 0.0, %v2956
      %v2958 = vpop.f32.mrb[0].mxu0
      %2959 = vdwg.mxu0
      %v2960 = vadd.f32 %v2783, %v2914
      %v2961 = vadd.f32 %v2784, %v2917
      %v2962 = vadd.f32 %v2785, %v2922
      %v2963 = vadd.f32 %v2786, %v2925
      %v2964 = vadd.f32 %v2787, %v2930
      %v2965 = vadd.f32 %v2788, %v2933
      %v2966 = vadd.f32 %v2789, %v2938
      %v2967 = vadd.f32 %v2790, %v2941
      %v2968 = vadd.f32 %v2791, %v2946
      %v2969 = vadd.f32 %v2792, %v2949
      %v2970 = vadd.f32 %v2793, %v2954
      %v2971 = vadd.f32 %v2794, %v2957
      %s2972 = scalar_lea.vmem [#allocation2], 72
      %v2973 = vld [vmem:[%s2972] sm:$0xff]
      %v2974 = vld [vmem:[%s2972 + $0x8] sm:$0xff]
      %v2975 = vld [vmem:[%s2972 + $0x30] sm:$0xff]
      %v2976 = vld [vmem:[%s2972 + $0x38] sm:$0xff]
      %v2977 = vld [vmem:[%s2972 + $0x60] sm:$0xff]
      %v2978 = vld [vmem:[%s2972 + $0x68] sm:$0xff]
      %v2979 = vld [vmem:[%s2972 + $0x90] sm:$0xff]
      %v2980 = vld [vmem:[%s2972 + $0x98] sm:$0xff]
      %v2981 = vld [vmem:[%s2972 + $0xc0] sm:$0xff]
      %v2982 = vld [vmem:[%s2972 + $0xc8] sm:$0xff]
      %v2983 = vld [vmem:[%s2972 + $0xf0] sm:$0xff]
      %v2984 = vld [vmem:[%s2972 + $0xf8] sm:$0xff]
      %v2985 = vpack.c.bf16 %v2974, %v2973
      %v2986 = vpack.c.bf16 %v2976, %v2975
      %v2987 = vpack.c.bf16 %v2978, %v2977
      %v2988 = vpack.c.bf16 %v2980, %v2979
      %v2989 = vpack.c.bf16 %v2982, %v2981
      %v2990 = vpack.c.bf16 %v2984, %v2983
      %s2991 = scalar_lea.vmem %s3, 576
      %v2992 = vld [vmem:[%s2991] sm:$0xf]
      %v2993 = vld [vmem:[%s2991 + $0x4] sm:$0xf]
      %v2994 = vld [vmem:[%s2991 + $0x8] sm:$0xf]
      %v2995 = vld [vmem:[%s2991 + $0xc] sm:$0xf]
      %v2996 = vld [vmem:[%s2991 + $0x10] sm:$0xf]
      %v2997 = vld [vmem:[%s2991 + $0x14] sm:$0xf]
      %v2998 = vld [vmem:[%s2991 + $0x18] sm:$0xf]
      %v2999 = vld [vmem:[%s2991 + $0x1c] sm:$0xf]
      %v3000 = vld [vmem:[%s2991 + $0x20] sm:$0xf]
      %v3001 = vld [vmem:[%s2991 + $0x24] sm:$0xf]
      %v3002 = vld [vmem:[%s2991 + $0x28] sm:$0xf]
      %v3003 = vld [vmem:[%s2991 + $0x2c] sm:$0xf]
      %v3004 = vld [vmem:[%s2991 + $0x30] sm:$0xf]
      %v3005 = vld [vmem:[%s2991 + $0x34] sm:$0xf]
      %v3006 = vld [vmem:[%s2991 + $0x38] sm:$0xf]
      %v3007 = vld [vmem:[%s2991 + $0x3c] sm:$0xf]
      %v3024 = vunpack.c.l.b16 %v2992
      %v3025 = vunpack.c.l.b16 %v2993
      %v3026 = vunpack.c.l.b16 %v2994
      %v3027 = vunpack.c.l.b16 %v2995
      %v3028 = vunpack.c.l.b16 %v2996
      %v3029 = vunpack.c.l.b16 %v2997
      %v3030 = vunpack.c.l.b16 %v2998
      %v3031 = vunpack.c.l.b16 %v2999
      %v3032 = vunpack.c.l.b16 %v3000
      %v3033 = vunpack.c.l.b16 %v3001
      %v3034 = vunpack.c.l.b16 %v3002
      %v3035 = vunpack.c.l.b16 %v3003
      %v3036 = vunpack.c.l.b16 %v3004
      %v3037 = vunpack.c.l.b16 %v3005
      %v3038 = vunpack.c.l.b16 %v3006
      %v3039 = vunpack.c.l.b16 %v3007
      %v3040 = vpack.c.b16 %v3025, %v3024
      %v3041 = vpack.c.b16 %v3027, %v3026
      %v3042 = vpack.c.b16 %v3029, %v3028
      %v3043 = vpack.c.b16 %v3031, %v3030
      %v3044 = vpack.c.b16 %v3033, %v3032
      %v3045 = vpack.c.b16 %v3035, %v3034
      %v3046 = vpack.c.b16 %v3037, %v3036
      %v3047 = vpack.c.b16 %v3039, %v3038
      %3056 = vmatprep.subr.bf16.mxu0 0
      %3057 = vmatpush1.bf16.msra.mxu0 %v3040
      %3058 = vmatprep.subr.bf16.mxu0 0
      %3059 = vmatpush1.bf16.msra.mxu0 %v3041
      %3060 = vmatprep.subr.bf16.mxu0 0
      %3061 = vmatpush1.bf16.msra.mxu0 %v3042
      %3062 = vmatprep.subr.bf16.mxu0 0
      %3063 = vmatpush1.bf16.msra.mxu0 %v3043
      %3064 = vmatprep.subr.bf16.mxu0 0
      %3065 = vmatpush1.bf16.msra.mxu0 %v3044
      %3066 = vmatprep.subr.bf16.mxu0 0
      %3067 = vmatpush1.bf16.msra.mxu0 %v3045
      %3068 = vmatprep.subr.bf16.mxu0 0
      %3069 = vmatpush1.bf16.msra.mxu0 %v3046
      %3070 = vmatprep.subr.bf16.mxu0 0
      %3071 = vmatpush1.bf16.msra.mxu0 %v3047
      %3072 = vmatprep.subr.bf16.mxu0 0
      %3073 = vmatpush1.bf16.msra.mxu0 0
      %3074 = vmatprep.subr.bf16.mxu0 0
      %3075 = vmatpush1.bf16.msra.mxu0 0
      %3076 = vmatprep.subr.bf16.mxu0 0
      %3077 = vmatpush1.bf16.msra.mxu0 0
      %3078 = vmatprep.subr.bf16.mxu0 0
      %3079 = vmatpush1.bf16.msra.mxu0 0
      %3080 = vmatprep.subr.bf16.mxu0 0
      %3081 = vmatpush1.bf16.msra.mxu0 0
      %3082 = vmatprep.subr.bf16.mxu0 0
      %3083 = vmatpush1.bf16.msra.mxu0 0
      %3084 = vmatprep.subr.bf16.mxu0 0
      %3085 = vmatpush1.bf16.msra.mxu0 0
      %3086 = vmatprep.subr.bf16.mxu0 0
      %3087 = vmatpush1.bf16.msra.mxu0 0
      %3088 = vmatprep.mubr.bf16.mxu0 0
      %3089 = vmatmul.mubr.bf16.gmra.mrb[0].mxu0 %v2985
      %v3090 = vpop.f32.mrb[0].mxu0
      %v3091 = vadd.f32 0.0, %v3090
      %v3092 = vpop.f32.mrb[0].mxu0
      %v3093 = vpop.f32.mrb[0].mxu0
      %v3094 = vadd.f32 0.0, %v3093
      %v3095 = vpop.f32.mrb[0].mxu0
      %3096 = vmatprep.mubr.bf16.mxu0 0
      %3097 = vmatmul.mubr.bf16.gmra.mrb[0].mxu0 %v2986
      %v3098 = vpop.f32.mrb[0].mxu0
      %v3099 = vadd.f32 0.0, %v3098
      %v3100 = vpop.f32.mrb[0].mxu0
      %v3101 = vpop.f32.mrb[0].mxu0
      %v3102 = vadd.f32 0.0, %v3101
      %v3103 = vpop.f32.mrb[0].mxu0
      %3104 = vmatprep.mubr.bf16.mxu0 0
      %3105 = vmatmul.mubr.bf16.gmra.mrb[0].mxu0 %v2987
      %v3106 = vpop.f32.mrb[0].mxu0
      %v3107 = vadd.f32 0.0, %v3106
      %v3108 = vpop.f32.mrb[0].mxu0
      %v3109 = vpop.f32.mrb[0].mxu0
      %v3110 = vadd.f32 0.0, %v3109
      %v3111 = vpop.f32.mrb[0].mxu0
      %3112 = vmatprep.mubr.bf16.mxu0 0
      %3113 = vmatmul.mubr.bf16.gmra.mrb[0].mxu0 %v2988
      %v3114 = vpop.f32.mrb[0].mxu0
      %v3115 = vadd.f32 0.0, %v3114
      %v3116 = vpop.f32.mrb[0].mxu0
      %v3117 = vpop.f32.mrb[0].mxu0
      %v3118 = vadd.f32 0.0, %v3117
      %v3119 = vpop.f32.mrb[0].mxu0
      %3120 = vmatprep.mubr.bf16.mxu0 0
      %3121 = vmatmul.mubr.bf16.gmra.mrb[0].mxu0 %v2989
      %v3122 = vpop.f32.mrb[0].mxu0
      %v3123 = vadd.f32 0.0, %v3122
      %v3124 = vpop.f32.mrb[0].mxu0
      %v3125 = vpop.f32.mrb[0].mxu0
      %v3126 = vadd.f32 0.0, %v3125
      %v3127 = vpop.f32.mrb[0].mxu0
      %3128 = vmatprep.mubr.bf16.mxu0 0
      %3129 = vmatmul.mubr.bf16.gmra.mrb[0].mxu0 %v2990
      %v3130 = vpop.f32.mrb[0].mxu0
      %v3131 = vadd.f32 0.0, %v3130
      %v3132 = vpop.f32.mrb[0].mxu0
      %v3133 = vpop.f32.mrb[0].mxu0
      %v3134 = vadd.f32 0.0, %v3133
      %v3135 = vpop.f32.mrb[0].mxu0
      %3136 = vdwg.mxu0
      %v3137 = vadd.f32 %v2960, %v3091
      %v3138 = vadd.f32 %v2961, %v3094
      %v3139 = vadd.f32 %v2962, %v3099
      %v3140 = vadd.f32 %v2963, %v3102
      %v3141 = vadd.f32 %v2964, %v3107
      %v3142 = vadd.f32 %v2965, %v3110
      %v3143 = vadd.f32 %v2966, %v3115
      %v3144 = vadd.f32 %v2967, %v3118
      %v3145 = vadd.f32 %v2968, %v3123
      %v3146 = vadd.f32 %v2969, %v3126
      %v3147 = vadd.f32 %v2970, %v3131
      %v3148 = vadd.f32 %v2971, %v3134
      %v3149 = vld [vmem:[%s2795 + $0x1] sm:$0xff]
      %v3150 = vld [vmem:[%s2795 + $0x9] sm:$0xff]
      %v3151 = vld [vmem:[%s2795 + $0x31] sm:$0xff]
      %v3152 = vld [vmem:[%s2795 + $0x39] sm:$0xff]
      %v3153 = vld [vmem:[%s2795 + $0x61] sm:$0xff]
      %v3154 = vld [vmem:[%s2795 + $0x69] sm:$0xff]
      %v3155 = vld [vmem:[%s2795 + $0x91] sm:$0xff]
      %v3156 = vld [vmem:[%s2795 + $0x99] sm:$0xff]
      %v3157 = vld [vmem:[%s2795 + $0xc1] sm:$0xff]
      %v3158 = vld [vmem:[%s2795 + $0xc9] sm:$0xff]
      %v3159 = vld [vmem:[%s2795 + $0xf1] sm:$0xff]
      %v3160 = vld [vmem:[%s2795 + $0xf9] sm:$0xff]
      %v3161 = vpack.c.bf16 %v3150, %v3149
      %v3162 = vpack.c.bf16 %v3152, %v3151
      %v3163 = vpack.c.bf16 %v3154, %v3153
      %v3164 = vpack.c.bf16 %v3156, %v3155
      %v3165 = vpack.c.bf16 %v3158, %v3157
      %v3166 = vpack.c.bf16 %v3160, %v3159
      %s3167 = scalar_lea.vmem %s3, 640
      %v3168 = vld [vmem:[%s3167] sm:$0xf]
      %v3169 = vld [vmem:[%s3167 + $0x4] sm:$0xf]
      %v3170 = vld [vmem:[%s3167 + $0x8] sm:$0xf]
      %v3171 = vld [vmem:[%s3167 + $0xc] sm:$0xf]
      %v3172 = vld [vmem:[%s3167 + $0x10] sm:$0xf]
      %v3173 = vld [vmem:[%s3167 + $0x14] sm:$0xf]
      %v3174 = vld [vmem:[%s3167 + $0x18] sm:$0xf]
      %v3175 = vld [vmem:[%s3167 + $0x1c] sm:$0xf]
      %v3176 = vld [vmem:[%s3167 + $0x20] sm:$0xf]
      %v3177 = vld [vmem:[%s3167 + $0x24] sm:$0xf]
      %v3178 = vld [vmem:[%s3167 + $0x28] sm:$0xf]
      %v3179 = vld [vmem:[%s3167 + $0x2c] sm:$0xf]
      %v3180 = vld [vmem:[%s3167 + $0x30] sm:$0xf]
      %v3181 = vld [vmem:[%s3167 + $0x34] sm:$0xf]
      %v3182 = vld [vmem:[%s3167 + $0x38] sm:$0xf]
      %v3183 = vld [vmem:[%s3167 + $0x3c] sm:$0xf]
      %v3200 = vunpack.c.l.b16 %v3168
      %v3201 = vunpack.c.l.b16 %v3169
      %v3202 = vunpack.c.l.b16 %v3170
      %v3203 = vunpack.c.l.b16 %v3171
      %v3204 = vunpack.c.l.b16 %v3172
      %v3205 = vunpack.c.l.b16 %v3173
      %v3206 = vunpack.c.l.b16 %v3174
      %v3207 = vunpack.c.l.b16 %v3175
      %v3208 = vunpack.c.l.b16 %v3176
      %v3209 = vunpack.c.l.b16 %v3177
      %v3210 = vunpack.c.l.b16 %v3178
      %v3211 = vunpack.c.l.b16 %v3179
      %v3212 = vunpack.c.l.b16 %v3180
      %v3213 = vunpack.c.l.b16 %v3181
      %v3214 = vunpack.c.l.b16 %v3182
      %v3215 = vunpack.c.l.b16 %v3183
      %v3216 = vpack.c.b16 %v3201, %v3200
      %v3217 = vpack.c.b16 %v3203, %v3202
      %v3218 = vpack.c.b16 %v3205, %v3204
      %v3219 = vpack.c.b16 %v3207, %v3206
      %v3220 = vpack.c.b16 %v3209, %v3208
      %v3221 = vpack.c.b16 %v3211, %v3210
      %v3222 = vpack.c.b16 %v3213, %v3212
      %v3223 = vpack.c.b16 %v3215, %v3214
      %3232 = vmatprep.subr.bf16.mxu0 0
      %3233 = vmatpush1.bf16.msra.mxu0 %v3216
      %3234 = vmatprep.subr.bf16.mxu0 0
      %3235 = vmatpush1.bf16.msra.mxu0 %v3217
      %3236 = vmatprep.subr.bf16.mxu0 0
      %3237 = vmatpush1.bf16.msra.mxu0 %v3218
      %3238 = vmatprep.subr.bf16.mxu0 0
      %3239 = vmatpush1.bf16.msra.mxu0 %v3219
      %3240 = vmatprep.subr.bf16.mxu0 0
      %3241 = vmatpush1.bf16.msra.mxu0 %v3220
      %3242 = vmatprep.subr.bf16.mxu0 0
      %3243 = vmatpush1.bf16.msra.mxu0 %v3221
      %3244 = vmatprep.subr.bf16.mxu0 0
      %3245 = vmatpush1.bf16.msra.mxu0 %v3222
      %3246 = vmatprep.subr.bf16.mxu0 0
      %3247 = vmatpush1.bf16.msra.mxu0 %v3223
      %3248 = vmatprep.subr.bf16.mxu0 0
      %3249 = vmatpush1.bf16.msra.mxu0 0
      %3250 = vmatprep.subr.bf16.mxu0 0
      %3251 = vmatpush1.bf16.msra.mxu0 0
      %3252 = vmatprep.subr.bf16.mxu0 0
      %3253 = vmatpush1.bf16.msra.mxu0 0
      %3254 = vmatprep.subr.bf16.mxu0 0
      %3255 = vmatpush1.bf16.msra.mxu0 0
      %3256 = vmatprep.subr.bf16.mxu0 0
      %3257 = vmatpush1.bf16.msra.mxu0 0
      %3258 = vmatprep.subr.bf16.mxu0 0
      %3259 = vmatpush1.bf16.msra.mxu0 0
      %3260 = vmatprep.subr.bf16.mxu0 0
      %3261 = vmatpush1.bf16.msra.mxu0 0
      %3262 = vmatprep.subr.bf16.mxu0 0
      %3263 = vmatpush1.bf16.msra.mxu0 0
      %3264 = vmatprep.mubr.bf16.mxu0 0
      %3265 = vmatmul.mubr.bf16.gmra.mrb[0].mxu0 %v3161
      %v3266 = vpop.f32.mrb[0].mxu0
      %v3267 = vadd.f32 0.0, %v3266
      %v3268 = vpop.f32.mrb[0].mxu0
      %v3269 = vpop.f32.mrb[0].mxu0
      %v3270 = vadd.f32 0.0, %v3269
      %v3271 = vpop.f32.mrb[0].mxu0
      %3272 = vmatprep.mubr.bf16.mxu0 0
      %3273 = vmatmul.mubr.bf16.gmra.mrb[0].mxu0 %v3162
      %v3274 = vpop.f32.mrb[0].mxu0
      %v3275 = vadd.f32 0.0, %v3274
      %v3276 = vpop.f32.mrb[0].mxu0
      %v3277 = vpop.f32.mrb[0].mxu0
      %v3278 = vadd.f32 0.0, %v3277
      %v3279 = vpop.f32.mrb[0].mxu0
      %3280 = vmatprep.mubr.bf16.mxu0 0
      %3281 = vmatmul.mubr.bf16.gmra.mrb[0].mxu0 %v3163
      %v3282 = vpop.f32.mrb[0].mxu0
      %v3283 = vadd.f32 0.0, %v3282
      %v3284 = vpop.f32.mrb[0].mxu0
      %v3285 = vpop.f32.mrb[0].mxu0
      %v3286 = vadd.f32 0.0, %v3285
      %v3287 = vpop.f32.mrb[0].mxu0
      %3288 = vmatprep.mubr.bf16.mxu0 0
      %3289 = vmatmul.mubr.bf16.gmra.mrb[0].mxu0 %v3164
      %v3290 = vpop.f32.mrb[0].mxu0
      %v3291 = vadd.f32 0.0, %v3290
      %v3292 = vpop.f32.mrb[0].mxu0
      %v3293 = vpop.f32.mrb[0].mxu0
      %v3294 = vadd.f32 0.0, %v3293
      %v3295 = vpop.f32.mrb[0].mxu0
      %3296 = vmatprep.mubr.bf16.mxu0 0
      %3297 = vmatmul.mubr.bf16.gmra.mrb[0].mxu0 %v3165
      %v3298 = vpop.f32.mrb[0].mxu0
      %v3299 = vadd.f32 0.0, %v3298
      %v3300 = vpop.f32.mrb[0].mxu0
      %v3301 = vpop.f32.mrb[0].mxu0
      %v3302 = vadd.f32 0.0, %v3301
      %v3303 = vpop.f32.mrb[0].mxu0
      %3304 = vmatprep.mubr.bf16.mxu0 0
      %3305 = vmatmul.mubr.bf16.gmra.mrb[0].mxu0 %v3166
      %v3306 = vpop.f32.mrb[0].mxu0
      %v3307 = vadd.f32 0.0, %v3306
      %v3308 = vpop.f32.mrb[0].mxu0
      %v3309 = vpop.f32.mrb[0].mxu0
      %v3310 = vadd.f32 0.0, %v3309
      %v3311 = vpop.f32.mrb[0].mxu0
      %3312 = vdwg.mxu0
      %v3313 = vadd.f32 %v3137, %v3267
      %v3314 = vadd.f32 %v3138, %v3270
      %v3315 = vadd.f32 %v3139, %v3275
      %v3316 = vadd.f32 %v3140, %v3278
      %v3317 = vadd.f32 %v3141, %v3283
      %v3318 = vadd.f32 %v3142, %v3286
      %v3319 = vadd.f32 %v3143, %v3291
      %v3320 = vadd.f32 %v3144, %v3294
      %v3321 = vadd.f32 %v3145, %v3299
      %v3322 = vadd.f32 %v3146, %v3302
      %v3323 = vadd.f32 %v3147, %v3307
      %v3324 = vadd.f32 %v3148, %v3310
      %v3325 = vld [vmem:[%s2972 + $0x1] sm:$0xff]
      %v3326 = vld [vmem:[%s2972 + $0x9] sm:$0xff]
      %v3327 = vld [vmem:[%s2972 + $0x31] sm:$0xff]
      %v3328 = vld [vmem:[%s2972 + $0x39] sm:$0xff]
      %v3329 = vld [vmem:[%s2972 + $0x61] sm:$0xff]
      %v3330 = vld [vmem:[%s2972 + $0x69] sm:$0xff]
      %v3331 = vld [vmem:[%s2972 + $0x91] sm:$0xff]
      %v3332 = vld [vmem:[%s2972 + $0x99] sm:$0xff]
      %v3333 = vld [vmem:[%s2972 + $0xc1] sm:$0xff]
      %v3334 = vld [vmem:[%s2972 + $0xc9] sm:$0xff]
      %v3335 = vld [vmem:[%s2972 + $0xf1] sm:$0xff]
      %v3336 = vld [vmem:[%s2972 + $0xf9] sm:$0xff]
      %v3337 = vpack.c.bf16 %v3326, %v3325
      %v3338 = vpack.c.bf16 %v3328, %v3327
      %v3339 = vpack.c.bf16 %v3330, %v3329
      %v3340 = vpack.c.bf16 %v3332, %v3331
      %v3341 = vpack.c.bf16 %v3334, %v3333
      %v3342 = vpack.c.bf16 %v3336, %v3335
      %s3343 = scalar_lea.vmem %s3, 704
      %v3344 = vld [vmem:[%s3343] sm:$0xf]
      %v3345 = vld [vmem:[%s3343 + $0x4] sm:$0xf]
      %v3346 = vld [vmem:[%s3343 + $0x8] sm:$0xf]
      %v3347 = vld [vmem:[%s3343 + $0xc] sm:$0xf]
      %v3348 = vld [vmem:[%s3343 + $0x10] sm:$0xf]
      %v3349 = vld [vmem:[%s3343 + $0x14] sm:$0xf]
      %v3350 = vld [vmem:[%s3343 + $0x18] sm:$0xf]
      %v3351 = vld [vmem:[%s3343 + $0x1c] sm:$0xf]
      %v3352 = vld [vmem:[%s3343 + $0x20] sm:$0xf]
      %v3353 = vld [vmem:[%s3343 + $0x24] sm:$0xf]
      %v3354 = vld [vmem:[%s3343 + $0x28] sm:$0xf]
      %v3355 = vld [vmem:[%s3343 + $0x2c] sm:$0xf]
      %v3356 = vld [vmem:[%s3343 + $0x30] sm:$0xf]
      %v3357 = vld [vmem:[%s3343 + $0x34] sm:$0xf]
      %v3358 = vld [vmem:[%s3343 + $0x38] sm:$0xf]
      %v3359 = vld [vmem:[%s3343 + $0x3c] sm:$0xf]
      %v3376 = vunpack.c.l.b16 %v3344
      %v3377 = vunpack.c.l.b16 %v3345
      %v3378 = vunpack.c.l.b16 %v3346
      %v3379 = vunpack.c.l.b16 %v3347
      %v3380 = vunpack.c.l.b16 %v3348
      %v3381 = vunpack.c.l.b16 %v3349
      %v3382 = vunpack.c.l.b16 %v3350
      %v3383 = vunpack.c.l.b16 %v3351
      %v3384 = vunpack.c.l.b16 %v3352
      %v3385 = vunpack.c.l.b16 %v3353
      %v3386 = vunpack.c.l.b16 %v3354
      %v3387 = vunpack.c.l.b16 %v3355
      %v3388 = vunpack.c.l.b16 %v3356
      %v3389 = vunpack.c.l.b16 %v3357
      %v3390 = vunpack.c.l.b16 %v3358
      %v3391 = vunpack.c.l.b16 %v3359
      %v3392 = vpack.c.b16 %v3377, %v3376
      %v3393 = vpack.c.b16 %v3379, %v3378
      %v3394 = vpack.c.b16 %v3381, %v3380
      %v3395 = vpack.c.b16 %v3383, %v3382
      %v3396 = vpack.c.b16 %v3385, %v3384
      %v3397 = vpack.c.b16 %v3387, %v3386
      %v3398 = vpack.c.b16 %v3389, %v3388
      %v3399 = vpack.c.b16 %v3391, %v3390
      %3408 = vmatprep.subr.bf16.mxu0 0
      %3409 = vmatpush1.bf16.msra.mxu0 %v3392
      %3410 = vmatprep.subr.bf16.mxu0 0
      %3411 = vmatpush1.bf16.msra.mxu0 %v3393
      %3412 = vmatprep.subr.bf16.mxu0 0
      %3413 = vmatpush1.bf16.msra.mxu0 %v3394
      %3414 = vmatprep.subr.bf16.mxu0 0
      %3415 = vmatpush1.bf16.msra.mxu0 %v3395
      %3416 = vmatprep.subr.bf16.mxu0 0
      %3417 = vmatpush1.bf16.msra.mxu0 %v3396
      %3418 = vmatprep.subr.bf16.mxu0 0
      %3419 = vmatpush1.bf16.msra.mxu0 %v3397
      %3420 = vmatprep.subr.bf16.mxu0 0
      %3421 = vmatpush1.bf16.msra.mxu0 %v3398
      %3422 = vmatprep.subr.bf16.mxu0 0
      %3423 = vmatpush1.bf16.msra.mxu0 %v3399
      %3424 = vmatprep.subr.bf16.mxu0 0
      %3425 = vmatpush1.bf16.msra.mxu0 0
      %3426 = vmatprep.subr.bf16.mxu0 0
      %3427 = vmatpush1.bf16.msra.mxu0 0
      %3428 = vmatprep.subr.bf16.mxu0 0
      %3429 = vmatpush1.bf16.msra.mxu0 0
      %3430 = vmatprep.subr.bf16.mxu0 0
      %3431 = vmatpush1.bf16.msra.mxu0 0
      %3432 = vmatprep.subr.bf16.mxu0 0
      %3433 = vmatpush1.bf16.msra.mxu0 0
      %3434 = vmatprep.subr.bf16.mxu0 0
      %3435 = vmatpush1.bf16.msra.mxu0 0
      %3436 = vmatprep.subr.bf16.mxu0 0
      %3437 = vmatpush1.bf16.msra.mxu0 0
      %3438 = vmatprep.subr.bf16.mxu0 0
      %3439 = vmatpush1.bf16.msra.mxu0 0
      %3440 = vmatprep.mubr.bf16.mxu0 0
      %3441 = vmatmul.mubr.bf16.gmra.mrb[0].mxu0 %v3337
      %v3442 = vpop.f32.mrb[0].mxu0
      %v3443 = vadd.f32 0.0, %v3442
      %v3444 = vpop.f32.mrb[0].mxu0
      %v3445 = vpop.f32.mrb[0].mxu0
      %v3446 = vadd.f32 0.0, %v3445
      %v3447 = vpop.f32.mrb[0].mxu0
      %3448 = vmatprep.mubr.bf16.mxu0 0
      %3449 = vmatmul.mubr.bf16.gmra.mrb[0].mxu0 %v3338
      %v3450 = vpop.f32.mrb[0].mxu0
      %v3451 = vadd.f32 0.0, %v3450
      %v3452 = vpop.f32.mrb[0].mxu0
      %v3453 = vpop.f32.mrb[0].mxu0
      %v3454 = vadd.f32 0.0, %v3453
      %v3455 = vpop.f32.mrb[0].mxu0
      %3456 = vmatprep.mubr.bf16.mxu0 0
      %3457 = vmatmul.mubr.bf16.gmra.mrb[0].mxu0 %v3339
      %v3458 = vpop.f32.mrb[0].mxu0
      %v3459 = vadd.f32 0.0, %v3458
      %v3460 = vpop.f32.mrb[0].mxu0
      %v3461 = vpop.f32.mrb[0].mxu0
      %v3462 = vadd.f32 0.0, %v3461
      %v3463 = vpop.f32.mrb[0].mxu0
      %3464 = vmatprep.mubr.bf16.mxu0 0
      %3465 = vmatmul.mubr.bf16.gmra.mrb[0].mxu0 %v3340
      %v3466 = vpop.f32.mrb[0].mxu0
      %v3467 = vadd.f32 0.0, %v3466
      %v3468 = vpop.f32.mrb[0].mxu0
      %v3469 = vpop.f32.mrb[0].mxu0
      %v3470 = vadd.f32 0.0, %v3469
      %v3471 = vpop.f32.mrb[0].mxu0
      %3472 = vmatprep.mubr.bf16.mxu0 0
      %3473 = vmatmul.mubr.bf16.gmra.mrb[0].mxu0 %v3341
      %v3474 = vpop.f32.mrb[0].mxu0
      %v3475 = vadd.f32 0.0, %v3474
      %v3476 = vpop.f32.mrb[0].mxu0
      %v3477 = vpop.f32.mrb[0].mxu0
      %v3478 = vadd.f32 0.0, %v3477
      %v3479 = vpop.f32.mrb[0].mxu0
      %3480 = vmatprep.mubr.bf16.mxu0 0
      %3481 = vmatmul.mubr.bf16.gmra.mrb[0].mxu0 %v3342
      %v3482 = vpop.f32.mrb[0].mxu0
      %v3483 = vadd.f32 0.0, %v3482
      %v3484 = vpop.f32.mrb[0].mxu0
      %v3485 = vpop.f32.mrb[0].mxu0
      %v3486 = vadd.f32 0.0, %v3485
      %v3487 = vpop.f32.mrb[0].mxu0
      %3488 = vdwg.mxu0
      %v3489 = vadd.f32 %v3313, %v3443
      %v3490 = vadd.f32 %v3314, %v3446
      %v3491 = vadd.f32 %v3315, %v3451
      %v3492 = vadd.f32 %v3316, %v3454
      %v3493 = vadd.f32 %v3317, %v3459
      %v3494 = vadd.f32 %v3318, %v3462
      %v3495 = vadd.f32 %v3319, %v3467
      %v3496 = vadd.f32 %v3320, %v3470
      %v3497 = vadd.f32 %v3321, %v3475
      %v3498 = vadd.f32 %v3322, %v3478
      %v3499 = vadd.f32 %v3323, %v3483
      %v3500 = vadd.f32 %v3324, %v3486
      %s3501 = scalar_lea.vmem [#allocation2], 432
      %v3502 = vld [vmem:[%s3501] sm:$0xff]
      %v3503 = vld [vmem:[%s3501 + $0x8] sm:$0xff]
      %v3504 = vld [vmem:[%s3501 + $0x30] sm:$0xff]
      %v3505 = vld [vmem:[%s3501 + $0x38] sm:$0xff]
      %v3506 = vld [vmem:[%s3501 + $0x60] sm:$0xff]
      %v3507 = vld [vmem:[%s3501 + $0x68] sm:$0xff]
      %v3508 = vld [vmem:[%s3501 + $0x90] sm:$0xff]
      %v3509 = vld [vmem:[%s3501 + $0x98] sm:$0xff]
      %v3510 = vld [vmem:[%s3501 + $0xc0] sm:$0xff]
      %v3511 = vld [vmem:[%s3501 + $0xc8] sm:$0xff]
      %v3512 = vld [vmem:[%s3501 + $0xf0] sm:$0xff]
      %v3513 = vld [vmem:[%s3501 + $0xf8] sm:$0xff]
      %v3514 = vpack.c.bf16 %v3503, %v3502
      %v3515 = vpack.c.bf16 %v3505, %v3504
      %v3516 = vpack.c.bf16 %v3507, %v3506
      %v3517 = vpack.c.bf16 %v3509, %v3508
      %v3518 = vpack.c.bf16 %v3511, %v3510
      %v3519 = vpack.c.bf16 %v3513, %v3512
      %s3520 = scalar_lea.vmem %s3, 768
      %v3521 = vld [vmem:[%s3520] sm:$0xf]
      %v3522 = vld [vmem:[%s3520 + $0x4] sm:$0xf]
      %v3523 = vld [vmem:[%s3520 + $0x8] sm:$0xf]
      %v3524 = vld [vmem:[%s3520 + $0xc] sm:$0xf]
      %v3525 = vld [vmem:[%s3520 + $0x10] sm:$0xf]
      %v3526 = vld [vmem:[%s3520 + $0x14] sm:$0xf]
      %v3527 = vld [vmem:[%s3520 + $0x18] sm:$0xf]
      %v3528 = vld [vmem:[%s3520 + $0x1c] sm:$0xf]
      %v3529 = vld [vmem:[%s3520 + $0x20] sm:$0xf]
      %v3530 = vld [vmem:[%s3520 + $0x24] sm:$0xf]
      %v3531 = vld [vmem:[%s3520 + $0x28] sm:$0xf]
      %v3532 = vld [vmem:[%s3520 + $0x2c] sm:$0xf]
      %v3533 = vld [vmem:[%s3520 + $0x30] sm:$0xf]
      %v3534 = vld [vmem:[%s3520 + $0x34] sm:$0xf]
      %v3535 = vld [vmem:[%s3520 + $0x38] sm:$0xf]
      %v3536 = vld [vmem:[%s3520 + $0x3c] sm:$0xf]
      %v3553 = vunpack.c.l.b16 %v3521
      %v3554 = vunpack.c.l.b16 %v3522
      %v3555 = vunpack.c.l.b16 %v3523
      %v3556 = vunpack.c.l.b16 %v3524
      %v3557 = vunpack.c.l.b16 %v3525
      %v3558 = vunpack.c.l.b16 %v3526
      %v3559 = vunpack.c.l.b16 %v3527
      %v3560 = vunpack.c.l.b16 %v3528
      %v3561 = vunpack.c.l.b16 %v3529
      %v3562 = vunpack.c.l.b16 %v3530
      %v3563 = vunpack.c.l.b16 %v3531
      %v3564 = vunpack.c.l.b16 %v3532
      %v3565 = vunpack.c.l.b16 %v3533
      %v3566 = vunpack.c.l.b16 %v3534
      %v3567 = vunpack.c.l.b16 %v3535
      %v3568 = vunpack.c.l.b16 %v3536
      %v3569 = vpack.c.b16 %v3554, %v3553
      %v3570 = vpack.c.b16 %v3556, %v3555
      %v3571 = vpack.c.b16 %v3558, %v3557
      %v3572 = vpack.c.b16 %v3560, %v3559
      %v3573 = vpack.c.b16 %v3562, %v3561
      %v3574 = vpack.c.b16 %v3564, %v3563
      %v3575 = vpack.c.b16 %v3566, %v3565
      %v3576 = vpack.c.b16 %v3568, %v3567
      %3585 = vmatprep.subr.bf16.mxu0 0
      %3586 = vmatpush1.bf16.msra.mxu0 %v3569
      %3587 = vmatprep.subr.bf16.mxu0 0
      %3588 = vmatpush1.bf16.msra.mxu0 %v3570
      %3589 = vmatprep.subr.bf16.mxu0 0
      %3590 = vmatpush1.bf16.msra.mxu0 %v3571
      %3591 = vmatprep.subr.bf16.mxu0 0
      %3592 = vmatpush1.bf16.msra.mxu0 %v3572
      %3593 = vmatprep.subr.bf16.mxu0 0
      %3594 = vmatpush1.bf16.msra.mxu0 %v3573
      %3595 = vmatprep.subr.bf16.mxu0 0
      %3596 = vmatpush1.bf16.msra.mxu0 %v3574
      %3597 = vmatprep.subr.bf16.mxu0 0
      %3598 = vmatpush1.bf16.msra.mxu0 %v3575
      %3599 = vmatprep.subr.bf16.mxu0 0
      %3600 = vmatpush1.bf16.msra.mxu0 %v3576
      %3601 = vmatprep.subr.bf16.mxu0 0
      %3602 = vmatpush1.bf16.msra.mxu0 0
      %3603 = vmatprep.subr.bf16.mxu0 0
      %3604 = vmatpush1.bf16.msra.mxu0 0
      %3605 = vmatprep.subr.bf16.mxu0 0
      %3606 = vmatpush1.bf16.msra.mxu0 0
      %3607 = vmatprep.subr.bf16.mxu0 0
      %3608 = vmatpush1.bf16.msra.mxu0 0
      %3609 = vmatprep.subr.bf16.mxu0 0
      %3610 = vmatpush1.bf16.msra.mxu0 0
      %3611 = vmatprep.subr.bf16.mxu0 0
      %3612 = vmatpush1.bf16.msra.mxu0 0
      %3613 = vmatprep.subr.bf16.mxu0 0
      %3614 = vmatpush1.bf16.msra.mxu0 0
      %3615 = vmatprep.subr.bf16.mxu0 0
      %3616 = vmatpush1.bf16.msra.mxu0 0
      %3617 = vmatprep.mubr.bf16.mxu0 0
      %3618 = vmatmul.mubr.bf16.gmra.mrb[0].mxu0 %v3514
      %v3619 = vpop.f32.mrb[0].mxu0
      %v3620 = vadd.f32 0.0, %v3619
      %v3621 = vpop.f32.mrb[0].mxu0
      %v3622 = vpop.f32.mrb[0].mxu0
      %v3623 = vadd.f32 0.0, %v3622
      %v3624 = vpop.f32.mrb[0].mxu0
      %3625 = vmatprep.mubr.bf16.mxu0 0
      %3626 = vmatmul.mubr.bf16.gmra.mrb[0].mxu0 %v3515
      %v3627 = vpop.f32.mrb[0].mxu0
      %v3628 = vadd.f32 0.0, %v3627
      %v3629 = vpop.f32.mrb[0].mxu0
      %v3630 = vpop.f32.mrb[0].mxu0
      %v3631 = vadd.f32 0.0, %v3630
      %v3632 = vpop.f32.mrb[0].mxu0
      %3633 = vmatprep.mubr.bf16.mxu0 0
      %3634 = vmatmul.mubr.bf16.gmra.mrb[0].mxu0 %v3516
      %v3635 = vpop.f32.mrb[0].mxu0
      %v3636 = vadd.f32 0.0, %v3635
      %v3637 = vpop.f32.mrb[0].mxu0
      %v3638 = vpop.f32.mrb[0].mxu0
      %v3639 = vadd.f32 0.0, %v3638
      %v3640 = vpop.f32.mrb[0].mxu0
      %3641 = vmatprep.mubr.bf16.mxu0 0
      %3642 = vmatmul.mubr.bf16.gmra.mrb[0].mxu0 %v3517
      %v3643 = vpop.f32.mrb[0].mxu0
      %v3644 = vadd.f32 0.0, %v3643
      %v3645 = vpop.f32.mrb[0].mxu0
      %v3646 = vpop.f32.mrb[0].mxu0
      %v3647 = vadd.f32 0.0, %v3646
      %v3648 = vpop.f32.mrb[0].mxu0
      %3649 = vmatprep.mubr.bf16.mxu0 0
      %3650 = vmatmul.mubr.bf16.gmra.mrb[0].mxu0 %v3518
      %v3651 = vpop.f32.mrb[0].mxu0
      %v3652 = vadd.f32 0.0, %v3651
      %v3653 = vpop.f32.mrb[0].mxu0
      %v3654 = vpop.f32.mrb[0].mxu0
      %v3655 = vadd.f32 0.0, %v3654
      %v3656 = vpop.f32.mrb[0].mxu0
      %3657 = vmatprep.mubr.bf16.mxu0 0
      %3658 = vmatmul.mubr.bf16.gmra.mrb[0].mxu0 %v3519
      %v3659 = vpop.f32.mrb[0].mxu0
      %v3660 = vadd.f32 0.0, %v3659
      %v3661 = vpop.f32.mrb[0].mxu0
      %v3662 = vpop.f32.mrb[0].mxu0
      %v3663 = vadd.f32 0.0, %v3662
      %v3664 = vpop.f32.mrb[0].mxu0
      %3665 = vdwg.mxu0
      %v3666 = vadd.f32 %v3489, %v3620
      %v3667 = vadd.f32 %v3490, %v3623
      %v3668 = vadd.f32 %v3491, %v3628
      %v3669 = vadd.f32 %v3492, %v3631
      %v3670 = vadd.f32 %v3493, %v3636
      %v3671 = vadd.f32 %v3494, %v3639
      %v3672 = vadd.f32 %v3495, %v3644
      %v3673 = vadd.f32 %v3496, %v3647
      %v3674 = vadd.f32 %v3497, %v3652
      %v3675 = vadd.f32 %v3498, %v3655
      %v3676 = vadd.f32 %v3499, %v3660
      %v3677 = vadd.f32 %v3500, %v3663
      %s3678 = scalar_lea.vmem [#allocation2], 456
      %v3679 = vld [vmem:[%s3678] sm:$0xff]
      %v3680 = vld [vmem:[%s3678 + $0x8] sm:$0xff]
      %v3681 = vld [vmem:[%s3678 + $0x30] sm:$0xff]
      %v3682 = vld [vmem:[%s3678 + $0x38] sm:$0xff]
      %v3683 = vld [vmem:[%s3678 + $0x60] sm:$0xff]
      %v3684 = vld [vmem:[%s3678 + $0x68] sm:$0xff]
      %v3685 = vld [vmem:[%s3678 + $0x90] sm:$0xff]
      %v3686 = vld [vmem:[%s3678 + $0x98] sm:$0xff]
      %v3687 = vld [vmem:[%s3678 + $0xc0] sm:$0xff]
      %v3688 = vld [vmem:[%s3678 + $0xc8] sm:$0xff]
      %v3689 = vld [vmem:[%s3678 + $0xf0] sm:$0xff]
      %v3690 = vld [vmem:[%s3678 + $0xf8] sm:$0xff]
      %v3691 = vpack.c.bf16 %v3680, %v3679
      %v3692 = vpack.c.bf16 %v3682, %v3681
      %v3693 = vpack.c.bf16 %v3684, %v3683
      %v3694 = vpack.c.bf16 %v3686, %v3685
      %v3695 = vpack.c.bf16 %v3688, %v3687
      %v3696 = vpack.c.bf16 %v3690, %v3689
      %s3697 = scalar_lea.vmem %s3, 832
      %v3698 = vld [vmem:[%s3697] sm:$0xf]
      %v3699 = vld [vmem:[%s3697 + $0x4] sm:$0xf]
      %v3700 = vld [vmem:[%s3697 + $0x8] sm:$0xf]
      %v3701 = vld [vmem:[%s3697 + $0xc] sm:$0xf]
      %v3702 = vld [vmem:[%s3697 + $0x10] sm:$0xf]
      %v3703 = vld [vmem:[%s3697 + $0x14] sm:$0xf]
      %v3704 = vld [vmem:[%s3697 + $0x18] sm:$0xf]
      %v3705 = vld [vmem:[%s3697 + $0x1c] sm:$0xf]
      %v3706 = vld [vmem:[%s3697 + $0x20] sm:$0xf]
      %v3707 = vld [vmem:[%s3697 + $0x24] sm:$0xf]
      %v3708 = vld [vmem:[%s3697 + $0x28] sm:$0xf]
      %v3709 = vld [vmem:[%s3697 + $0x2c] sm:$0xf]
      %v3710 = vld [vmem:[%s3697 + $0x30] sm:$0xf]
      %v3711 = vld [vmem:[%s3697 + $0x34] sm:$0xf]
      %v3712 = vld [vmem:[%s3697 + $0x38] sm:$0xf]
      %v3713 = vld [vmem:[%s3697 + $0x3c] sm:$0xf]
      %v3730 = vunpack.c.l.b16 %v3698
      %v3731 = vunpack.c.l.b16 %v3699
      %v3732 = vunpack.c.l.b16 %v3700
      %v3733 = vunpack.c.l.b16 %v3701
      %v3734 = vunpack.c.l.b16 %v3702
      %v3735 = vunpack.c.l.b16 %v3703
      %v3736 = vunpack.c.l.b16 %v3704
      %v3737 = vunpack.c.l.b16 %v3705
      %v3738 = vunpack.c.l.b16 %v3706
      %v3739 = vunpack.c.l.b16 %v3707
      %v3740 = vunpack.c.l.b16 %v3708
      %v3741 = vunpack.c.l.b16 %v3709
      %v3742 = vunpack.c.l.b16 %v3710
      %v3743 = vunpack.c.l.b16 %v3711
      %v3744 = vunpack.c.l.b16 %v3712
      %v3745 = vunpack.c.l.b16 %v3713
      %v3746 = vpack.c.b16 %v3731, %v3730
      %v3747 = vpack.c.b16 %v3733, %v3732
      %v3748 = vpack.c.b16 %v3735, %v3734
      %v3749 = vpack.c.b16 %v3737, %v3736
      %v3750 = vpack.c.b16 %v3739, %v3738
      %v3751 = vpack.c.b16 %v3741, %v3740
      %v3752 = vpack.c.b16 %v3743, %v3742
      %v3753 = vpack.c.b16 %v3745, %v3744
      %3762 = vmatprep.subr.bf16.mxu0 0
      %3763 = vmatpush1.bf16.msra.mxu0 %v3746
      %3764 = vmatprep.subr.bf16.mxu0 0
      %3765 = vmatpush1.bf16.msra.mxu0 %v3747
      %3766 = vmatprep.subr.bf16.mxu0 0
      %3767 = vmatpush1.bf16.msra.mxu0 %v3748
      %3768 = vmatprep.subr.bf16.mxu0 0
      %3769 = vmatpush1.bf16.msra.mxu0 %v3749
      %3770 = vmatprep.subr.bf16.mxu0 0
      %3771 = vmatpush1.bf16.msra.mxu0 %v3750
      %3772 = vmatprep.subr.bf16.mxu0 0
      %3773 = vmatpush1.bf16.msra.mxu0 %v3751
      %3774 = vmatprep.subr.bf16.mxu0 0
      %3775 = vmatpush1.bf16.msra.mxu0 %v3752
      %3776 = vmatprep.subr.bf16.mxu0 0
      %3777 = vmatpush1.bf16.msra.mxu0 %v3753
      %3778 = vmatprep.subr.bf16.mxu0 0
      %3779 = vmatpush1.bf16.msra.mxu0 0
      %3780 = vmatprep.subr.bf16.mxu0 0
      %3781 = vmatpush1.bf16.msra.mxu0 0
      %3782 = vmatprep.subr.bf16.mxu0 0
      %3783 = vmatpush1.bf16.msra.mxu0 0
      %3784 = vmatprep.subr.bf16.mxu0 0
      %3785 = vmatpush1.bf16.msra.mxu0 0
      %3786 = vmatprep.subr.bf16.mxu0 0
      %3787 = vmatpush1.bf16.msra.mxu0 0
      %3788 = vmatprep.subr.bf16.mxu0 0
      %3789 = vmatpush1.bf16.msra.mxu0 0
      %3790 = vmatprep.subr.bf16.mxu0 0
      %3791 = vmatpush1.bf16.msra.mxu0 0
      %3792 = vmatprep.subr.bf16.mxu0 0
      %3793 = vmatpush1.bf16.msra.mxu0 0
      %3794 = vmatprep.mubr.bf16.mxu0 0
      %3795 = vmatmul.mubr.bf16.gmra.mrb[0].mxu0 %v3691
      %v3796 = vpop.f32.mrb[0].mxu0
      %v3797 = vadd.f32 0.0, %v3796
      %v3798 = vpop.f32.mrb[0].mxu0
      %v3799 = vpop.f32.mrb[0].mxu0
      %v3800 = vadd.f32 0.0, %v3799
      %v3801 = vpop.f32.mrb[0].mxu0
      %3802 = vmatprep.mubr.bf16.mxu0 0
      %3803 = vmatmul.mubr.bf16.gmra.mrb[0].mxu0 %v3692
      %v3804 = vpop.f32.mrb[0].mxu0
      %v3805 = vadd.f32 0.0, %v3804
      %v3806 = vpop.f32.mrb[0].mxu0
      %v3807 = vpop.f32.mrb[0].mxu0
      %v3808 = vadd.f32 0.0, %v3807
      %v3809 = vpop.f32.mrb[0].mxu0
      %3810 = vmatprep.mubr.bf16.mxu0 0
      %3811 = vmatmul.mubr.bf16.gmra.mrb[0].mxu0 %v3693
      %v3812 = vpop.f32.mrb[0].mxu0
      %v3813 = vadd.f32 0.0, %v3812
      %v3814 = vpop.f32.mrb[0].mxu0
      %v3815 = vpop.f32.mrb[0].mxu0
      %v3816 = vadd.f32 0.0, %v3815
      %v3817 = vpop.f32.mrb[0].mxu0
      %3818 = vmatprep.mubr.bf16.mxu0 0
      %3819 = vmatmul.mubr.bf16.gmra.mrb[0].mxu0 %v3694
      %v3820 = vpop.f32.mrb[0].mxu0
      %v3821 = vadd.f32 0.0, %v3820
      %v3822 = vpop.f32.mrb[0].mxu0
      %v3823 = vpop.f32.mrb[0].mxu0
      %v3824 = vadd.f32 0.0, %v3823
      %v3825 = vpop.f32.mrb[0].mxu0
      %3826 = vmatprep.mubr.bf16.mxu0 0
      %3827 = vmatmul.mubr.bf16.gmra.mrb[0].mxu0 %v3695
      %v3828 = vpop.f32.mrb[0].mxu0
      %v3829 = vadd.f32 0.0, %v3828
      %v3830 = vpop.f32.mrb[0].mxu0
      %v3831 = vpop.f32.mrb[0].mxu0
      %v3832 = vadd.f32 0.0, %v3831
      %v3833 = vpop.f32.mrb[0].mxu0
      %3834 = vmatprep.mubr.bf16.mxu0 0
      %3835 = vmatmul.mubr.bf16.gmra.mrb[0].mxu0 %v3696
      %v3836 = vpop.f32.mrb[0].mxu0
      %v3837 = vadd.f32 0.0, %v3836
      %v3838 = vpop.f32.mrb[0].mxu0
      %v3839 = vpop.f32.mrb[0].mxu0
      %v3840 = vadd.f32 0.0, %v3839
      %v3841 = vpop.f32.mrb[0].mxu0
      %3842 = vdwg.mxu0
      %v3843 = vadd.f32 %v3666, %v3797
      %v3844 = vadd.f32 %v3667, %v3800
      %v3845 = vadd.f32 %v3668, %v3805
      %v3846 = vadd.f32 %v3669, %v3808
      %v3847 = vadd.f32 %v3670, %v3813
      %v3848 = vadd.f32 %v3671, %v3816
      %v3849 = vadd.f32 %v3672, %v3821
      %v3850 = vadd.f32 %v3673, %v3824
      %v3851 = vadd.f32 %v3674, %v3829
      %v3852 = vadd.f32 %v3675, %v3832
      %v3853 = vadd.f32 %v3676, %v3837
      %v3854 = vadd.f32 %v3677, %v3840
      %v3855 = vld [vmem:[%s3501 + $0x1] sm:$0xff]
      %v3856 = vld [vmem:[%s3501 + $0x9] sm:$0xff]
      %v3857 = vld [vmem:[%s3501 + $0x31] sm:$0xff]
      %v3858 = vld [vmem:[%s3501 + $0x39] sm:$0xff]
      %v3859 = vld [vmem:[%s3501 + $0x61] sm:$0xff]
      %v3860 = vld [vmem:[%s3501 + $0x69] sm:$0xff]
      %v3861 = vld [vmem:[%s3501 + $0x91] sm:$0xff]
      %v3862 = vld [vmem:[%s3501 + $0x99] sm:$0xff]
      %v3863 = vld [vmem:[%s3501 + $0xc1] sm:$0xff]
      %v3864 = vld [vmem:[%s3501 + $0xc9] sm:$0xff]
      %v3865 = vld [vmem:[%s3501 + $0xf1] sm:$0xff]
      %v3866 = vld [vmem:[%s3501 + $0xf9] sm:$0xff]
      %v3867 = vpack.c.bf16 %v3856, %v3855
      %v3868 = vpack.c.bf16 %v3858, %v3857
      %v3869 = vpack.c.bf16 %v3860, %v3859
      %v3870 = vpack.c.bf16 %v3862, %v3861
      %v3871 = vpack.c.bf16 %v3864, %v3863
      %v3872 = vpack.c.bf16 %v3866, %v3865
      %s3873 = scalar_lea.vmem %s3, 896
      %v3874 = vld [vmem:[%s3873] sm:$0xf]
      %v3875 = vld [vmem:[%s3873 + $0x4] sm:$0xf]
      %v3876 = vld [vmem:[%s3873 + $0x8] sm:$0xf]
      %v3877 = vld [vmem:[%s3873 + $0xc] sm:$0xf]
      %v3878 = vld [vmem:[%s3873 + $0x10] sm:$0xf]
      %v3879 = vld [vmem:[%s3873 + $0x14] sm:$0xf]
      %v3880 = vld [vmem:[%s3873 + $0x18] sm:$0xf]
      %v3881 = vld [vmem:[%s3873 + $0x1c] sm:$0xf]
      %v3882 = vld [vmem:[%s3873 + $0x20] sm:$0xf]
      %v3883 = vld [vmem:[%s3873 + $0x24] sm:$0xf]
      %v3884 = vld [vmem:[%s3873 + $0x28] sm:$0xf]
      %v3885 = vld [vmem:[%s3873 + $0x2c] sm:$0xf]
      %v3886 = vld [vmem:[%s3873 + $0x30] sm:$0xf]
      %v3887 = vld [vmem:[%s3873 + $0x34] sm:$0xf]
      %v3888 = vld [vmem:[%s3873 + $0x38] sm:$0xf]
      %v3889 = vld [vmem:[%s3873 + $0x3c] sm:$0xf]
      %v3906 = vunpack.c.l.b16 %v3874
      %v3907 = vunpack.c.l.b16 %v3875
      %v3908 = vunpack.c.l.b16 %v3876
      %v3909 = vunpack.c.l.b16 %v3877
      %v3910 = vunpack.c.l.b16 %v3878
      %v3911 = vunpack.c.l.b16 %v3879
      %v3912 = vunpack.c.l.b16 %v3880
      %v3913 = vunpack.c.l.b16 %v3881
      %v3914 = vunpack.c.l.b16 %v3882
      %v3915 = vunpack.c.l.b16 %v3883
      %v3916 = vunpack.c.l.b16 %v3884
      %v3917 = vunpack.c.l.b16 %v3885
      %v3918 = vunpack.c.l.b16 %v3886
      %v3919 = vunpack.c.l.b16 %v3887
      %v3920 = vunpack.c.l.b16 %v3888
      %v3921 = vunpack.c.l.b16 %v3889
      %v3922 = vpack.c.b16 %v3907, %v3906
      %v3923 = vpack.c.b16 %v3909, %v3908
      %v3924 = vpack.c.b16 %v3911, %v3910
      %v3925 = vpack.c.b16 %v3913, %v3912
      %v3926 = vpack.c.b16 %v3915, %v3914
      %v3927 = vpack.c.b16 %v3917, %v3916
      %v3928 = vpack.c.b16 %v3919, %v3918
      %v3929 = vpack.c.b16 %v3921, %v3920
      %3938 = vmatprep.subr.bf16.mxu0 0
      %3939 = vmatpush1.bf16.msra.mxu0 %v3922
      %3940 = vmatprep.subr.bf16.mxu0 0
      %3941 = vmatpush1.bf16.msra.mxu0 %v3923
      %3942 = vmatprep.subr.bf16.mxu0 0
      %3943 = vmatpush1.bf16.msra.mxu0 %v3924
      %3944 = vmatprep.subr.bf16.mxu0 0
      %3945 = vmatpush1.bf16.msra.mxu0 %v3925
      %3946 = vmatprep.subr.bf16.mxu0 0
      %3947 = vmatpush1.bf16.msra.mxu0 %v3926
      %3948 = vmatprep.subr.bf16.mxu0 0
      %3949 = vmatpush1.bf16.msra.mxu0 %v3927
      %3950 = vmatprep.subr.bf16.mxu0 0
      %3951 = vmatpush1.bf16.msra.mxu0 %v3928
      %3952 = vmatprep.subr.bf16.mxu0 0
      %3953 = vmatpush1.bf16.msra.mxu0 %v3929
      %3954 = vmatprep.subr.bf16.mxu0 0
      %3955 = vmatpush1.bf16.msra.mxu0 0
      %3956 = vmatprep.subr.bf16.mxu0 0
      %3957 = vmatpush1.bf16.msra.mxu0 0
      %3958 = vmatprep.subr.bf16.mxu0 0
      %3959 = vmatpush1.bf16.msra.mxu0 0
      %3960 = vmatprep.subr.bf16.mxu0 0
      %3961 = vmatpush1.bf16.msra.mxu0 0
      %3962 = vmatprep.subr.bf16.mxu0 0
      %3963 = vmatpush1.bf16.msra.mxu0 0
      %3964 = vmatprep.subr.bf16.mxu0 0
      %3965 = vmatpush1.bf16.msra.mxu0 0
      %3966 = vmatprep.subr.bf16.mxu0 0
      %3967 = vmatpush1.bf16.msra.mxu0 0
      %3968 = vmatprep.subr.bf16.mxu0 0
      %3969 = vmatpush1.bf16.msra.mxu0 0
      %3970 = vmatprep.mubr.bf16.mxu0 0
      %3971 = vmatmul.mubr.bf16.gmra.mrb[0].mxu0 %v3867
      %v3972 = vpop.f32.mrb[0].mxu0
      %v3973 = vadd.f32 0.0, %v3972
      %v3974 = vpop.f32.mrb[0].mxu0
      %v3975 = vpop.f32.mrb[0].mxu0
      %v3976 = vadd.f32 0.0, %v3975
      %v3977 = vpop.f32.mrb[0].mxu0
      %3978 = vmatprep.mubr.bf16.mxu0 0
      %3979 = vmatmul.mubr.bf16.gmra.mrb[0].mxu0 %v3868
      %v3980 = vpop.f32.mrb[0].mxu0
      %v3981 = vadd.f32 0.0, %v3980
      %v3982 = vpop.f32.mrb[0].mxu0
      %v3983 = vpop.f32.mrb[0].mxu0
      %v3984 = vadd.f32 0.0, %v3983
      %v3985 = vpop.f32.mrb[0].mxu0
      %3986 = vmatprep.mubr.bf16.mxu0 0
      %3987 = vmatmul.mubr.bf16.gmra.mrb[0].mxu0 %v3869
      %v3988 = vpop.f32.mrb[0].mxu0
      %v3989 = vadd.f32 0.0, %v3988
      %v3990 = vpop.f32.mrb[0].mxu0
      %v3991 = vpop.f32.mrb[0].mxu0
      %v3992 = vadd.f32 0.0, %v3991
      %v3993 = vpop.f32.mrb[0].mxu0
      %3994 = vmatprep.mubr.bf16.mxu0 0
      %3995 = vmatmul.mubr.bf16.gmra.mrb[0].mxu0 %v3870
      %v3996 = vpop.f32.mrb[0].mxu0
      %v3997 = vadd.f32 0.0, %v3996
      %v3998 = vpop.f32.mrb[0].mxu0
      %v3999 = vpop.f32.mrb[0].mxu0
      %v4000 = vadd.f32 0.0, %v3999
      %v4001 = vpop.f32.mrb[0].mxu0
      %4002 = vmatprep.mubr.bf16.mxu0 0
      %4003 = vmatmul.mubr.bf16.gmra.mrb[0].mxu0 %v3871
      %v4004 = vpop.f32.mrb[0].mxu0
      %v4005 = vadd.f32 0.0, %v4004
      %v4006 = vpop.f32.mrb[0].mxu0
      %v4007 = vpop.f32.mrb[0].mxu0
      %v4008 = vadd.f32 0.0, %v4007
      %v4009 = vpop.f32.mrb[0].mxu0
      %4010 = vmatprep.mubr.bf16.mxu0 0
      %4011 = vmatmul.mubr.bf16.gmra.mrb[0].mxu0 %v3872
      %v4012 = vpop.f32.mrb[0].mxu0
      %v4013 = vadd.f32 0.0, %v4012
      %v4014 = vpop.f32.mrb[0].mxu0
      %v4015 = vpop.f32.mrb[0].mxu0
      %v4016 = vadd.f32 0.0, %v4015
      %v4017 = vpop.f32.mrb[0].mxu0
      %4018 = vdwg.mxu0
      %v4019 = vadd.f32 %v3843, %v3973
      %v4020 = vadd.f32 %v3844, %v3976
      %v4021 = vadd.f32 %v3845, %v3981
      %v4022 = vadd.f32 %v3846, %v3984
      %v4023 = vadd.f32 %v3847, %v3989
      %v4024 = vadd.f32 %v3848, %v3992
      %v4025 = vadd.f32 %v3849, %v3997
      %v4026 = vadd.f32 %v3850, %v4000
      %v4027 = vadd.f32 %v3851, %v4005
      %v4028 = vadd.f32 %v3852, %v4008
      %v4029 = vadd.f32 %v3853, %v4013
      %v4030 = vadd.f32 %v3854, %v4016
      %v4031 = vld [vmem:[%s3678 + $0x1] sm:$0xff]
      %v4032 = vld [vmem:[%s3678 + $0x9] sm:$0xff]
      %v4033 = vld [vmem:[%s3678 + $0x31] sm:$0xff]
      %v4034 = vld [vmem:[%s3678 + $0x39] sm:$0xff]
      %v4035 = vld [vmem:[%s3678 + $0x61] sm:$0xff]
      %v4036 = vld [vmem:[%s3678 + $0x69] sm:$0xff]
      %v4037 = vld [vmem:[%s3678 + $0x91] sm:$0xff]
      %v4038 = vld [vmem:[%s3678 + $0x99] sm:$0xff]
      %v4039 = vld [vmem:[%s3678 + $0xc1] sm:$0xff]
      %v4040 = vld [vmem:[%s3678 + $0xc9] sm:$0xff]
      %v4041 = vld [vmem:[%s3678 + $0xf1] sm:$0xff]
      %v4042 = vld [vmem:[%s3678 + $0xf9] sm:$0xff]
      %v4043 = vpack.c.bf16 %v4032, %v4031
      %v4044 = vpack.c.bf16 %v4034, %v4033
      %v4045 = vpack.c.bf16 %v4036, %v4035
      %v4046 = vpack.c.bf16 %v4038, %v4037
      %v4047 = vpack.c.bf16 %v4040, %v4039
      %v4048 = vpack.c.bf16 %v4042, %v4041
      %s4049 = scalar_lea.vmem %s3, 960
      %v4050 = vld [vmem:[%s4049] sm:$0xf]
      %v4051 = vld [vmem:[%s4049 + $0x4] sm:$0xf]
      %v4052 = vld [vmem:[%s4049 + $0x8] sm:$0xf]
      %v4053 = vld [vmem:[%s4049 + $0xc] sm:$0xf]
      %v4054 = vld [vmem:[%s4049 + $0x10] sm:$0xf]
      %v4055 = vld [vmem:[%s4049 + $0x14] sm:$0xf]
      %v4056 = vld [vmem:[%s4049 + $0x18] sm:$0xf]
      %v4057 = vld [vmem:[%s4049 + $0x1c] sm:$0xf]
      %v4058 = vld [vmem:[%s4049 + $0x20] sm:$0xf]
      %v4059 = vld [vmem:[%s4049 + $0x24] sm:$0xf]
      %v4060 = vld [vmem:[%s4049 + $0x28] sm:$0xf]
      %v4061 = vld [vmem:[%s4049 + $0x2c] sm:$0xf]
      %v4062 = vld [vmem:[%s4049 + $0x30] sm:$0xf]
      %v4063 = vld [vmem:[%s4049 + $0x34] sm:$0xf]
      %v4064 = vld [vmem:[%s4049 + $0x38] sm:$0xf]
      %v4065 = vld [vmem:[%s4049 + $0x3c] sm:$0xf]
      %v4082 = vunpack.c.l.b16 %v4050
      %v4083 = vunpack.c.l.b16 %v4051
      %v4084 = vunpack.c.l.b16 %v4052
      %v4085 = vunpack.c.l.b16 %v4053
      %v4086 = vunpack.c.l.b16 %v4054
      %v4087 = vunpack.c.l.b16 %v4055
      %v4088 = vunpack.c.l.b16 %v4056
      %v4089 = vunpack.c.l.b16 %v4057
      %v4090 = vunpack.c.l.b16 %v4058
      %v4091 = vunpack.c.l.b16 %v4059
      %v4092 = vunpack.c.l.b16 %v4060
      %v4093 = vunpack.c.l.b16 %v4061
      %v4094 = vunpack.c.l.b16 %v4062
      %v4095 = vunpack.c.l.b16 %v4063
      %v4096 = vunpack.c.l.b16 %v4064
      %v4097 = vunpack.c.l.b16 %v4065
      %v4098 = vpack.c.b16 %v4083, %v4082
      %v4099 = vpack.c.b16 %v4085, %v4084
      %v4100 = vpack.c.b16 %v4087, %v4086
      %v4101 = vpack.c.b16 %v4089, %v4088
      %v4102 = vpack.c.b16 %v4091, %v4090
      %v4103 = vpack.c.b16 %v4093, %v4092
      %v4104 = vpack.c.b16 %v4095, %v4094
      %v4105 = vpack.c.b16 %v4097, %v4096
      %4114 = vmatprep.subr.bf16.mxu0 0
      %4115 = vmatpush1.bf16.msra.mxu0 %v4098
      %4116 = vmatprep.subr.bf16.mxu0 0
      %4117 = vmatpush1.bf16.msra.mxu0 %v4099
      %4118 = vmatprep.subr.bf16.mxu0 0
      %4119 = vmatpush1.bf16.msra.mxu0 %v4100
      %4120 = vmatprep.subr.bf16.mxu0 0
      %4121 = vmatpush1.bf16.msra.mxu0 %v4101
      %4122 = vmatprep.subr.bf16.mxu0 0
      %4123 = vmatpush1.bf16.msra.mxu0 %v4102
      %4124 = vmatprep.subr.bf16.mxu0 0
      %4125 = vmatpush1.bf16.msra.mxu0 %v4103
      %4126 = vmatprep.subr.bf16.mxu0 0
      %4127 = vmatpush1.bf16.msra.mxu0 %v4104
      %4128 = vmatprep.subr.bf16.mxu0 0
      %4129 = vmatpush1.bf16.msra.mxu0 %v4105
      %4130 = vmatprep.subr.bf16.mxu0 0
      %4131 = vmatpush1.bf16.msra.mxu0 0
      %4132 = vmatprep.subr.bf16.mxu0 0
      %4133 = vmatpush1.bf16.msra.mxu0 0
      %4134 = vmatprep.subr.bf16.mxu0 0
      %4135 = vmatpush1.bf16.msra.mxu0 0
      %4136 = vmatprep.subr.bf16.mxu0 0
      %4137 = vmatpush1.bf16.msra.mxu0 0
      %4138 = vmatprep.subr.bf16.mxu0 0
      %4139 = vmatpush1.bf16.msra.mxu0 0
      %4140 = vmatprep.subr.bf16.mxu0 0
      %4141 = vmatpush1.bf16.msra.mxu0 0
      %4142 = vmatprep.subr.bf16.mxu0 0
      %4143 = vmatpush1.bf16.msra.mxu0 0
      %4144 = vmatprep.subr.bf16.mxu0 0
      %4145 = vmatpush1.bf16.msra.mxu0 0
      %4146 = vmatprep.mubr.bf16.mxu0 0
      %4147 = vmatmul.mubr.bf16.gmra.mrb[0].mxu0 %v4043
      %v4148 = vpop.f32.mrb[0].mxu0
      %v4149 = vadd.f32 0.0, %v4148
      %v4150 = vpop.f32.mrb[0].mxu0
      %v4151 = vpop.f32.mrb[0].mxu0
      %v4152 = vadd.f32 0.0, %v4151
      %v4153 = vpop.f32.mrb[0].mxu0
      %4154 = vmatprep.mubr.bf16.mxu0 0
      %4155 = vmatmul.mubr.bf16.gmra.mrb[0].mxu0 %v4044
      %v4156 = vpop.f32.mrb[0].mxu0
      %v4157 = vadd.f32 0.0, %v4156
      %v4158 = vpop.f32.mrb[0].mxu0
      %v4159 = vpop.f32.mrb[0].mxu0
      %v4160 = vadd.f32 0.0, %v4159
      %v4161 = vpop.f32.mrb[0].mxu0
      %4162 = vmatprep.mubr.bf16.mxu0 0
      %4163 = vmatmul.mubr.bf16.gmra.mrb[0].mxu0 %v4045
      %v4164 = vpop.f32.mrb[0].mxu0
      %v4165 = vadd.f32 0.0, %v4164
      %v4166 = vpop.f32.mrb[0].mxu0
      %v4167 = vpop.f32.mrb[0].mxu0
      %v4168 = vadd.f32 0.0, %v4167
      %v4169 = vpop.f32.mrb[0].mxu0
      %4170 = vmatprep.mubr.bf16.mxu0 0
      %4171 = vmatmul.mubr.bf16.gmra.mrb[0].mxu0 %v4046
      %v4172 = vpop.f32.mrb[0].mxu0
      %v4173 = vadd.f32 0.0, %v4172
      %v4174 = vpop.f32.mrb[0].mxu0
      %v4175 = vpop.f32.mrb[0].mxu0
      %v4176 = vadd.f32 0.0, %v4175
      %v4177 = vpop.f32.mrb[0].mxu0
      %4178 = vmatprep.mubr.bf16.mxu0 0
      %4179 = vmatmul.mubr.bf16.gmra.mrb[0].mxu0 %v4047
      %v4180 = vpop.f32.mrb[0].mxu0
      %v4181 = vadd.f32 0.0, %v4180
      %v4182 = vpop.f32.mrb[0].mxu0
      %v4183 = vpop.f32.mrb[0].mxu0
      %v4184 = vadd.f32 0.0, %v4183
      %v4185 = vpop.f32.mrb[0].mxu0
      %4186 = vmatprep.mubr.bf16.mxu0 0
      %4187 = vmatmul.mubr.bf16.gmra.mrb[0].mxu0 %v4048
      %v4188 = vpop.f32.mrb[0].mxu0
      %v4189 = vadd.f32 0.0, %v4188
      %v4190 = vpop.f32.mrb[0].mxu0
      %v4191 = vpop.f32.mrb[0].mxu0
      %v4192 = vadd.f32 0.0, %v4191
      %v4193 = vpop.f32.mrb[0].mxu0
      %4194 = vdwg.mxu0
      %v4195 = vadd.f32 %v4019, %v4149
      %v4196 = vadd.f32 %v4020, %v4152
      %v4197 = vadd.f32 %v4021, %v4157
      %v4198 = vadd.f32 %v4022, %v4160
      %v4199 = vadd.f32 %v4023, %v4165
      %v4200 = vadd.f32 %v4024, %v4168
      %v4201 = vadd.f32 %v4025, %v4173
      %v4202 = vadd.f32 %v4026, %v4176
      %v4203 = vadd.f32 %v4027, %v4181
      %v4204 = vadd.f32 %v4028, %v4184
      %v4205 = vadd.f32 %v4029, %v4189
      %v4206 = vadd.f32 %v4030, %v4192
      %v4207 = vld [vmem:[%s4] sm:$0x1]
      %v4209 = vlaneseq
      %v4210 = vshrl.u32 %v4209, 7
      %v4211 = vsub.s32 0, %v4210
      %v4212 = vrot.slane %v4207, %v4211
      %v4214 = vadd.f32 %v4195, %v4212
      %v4215 = vadd.f32 %v4196, %v4212
      %v4216 = vadd.f32 %v4197, %v4212
      %v4217 = vadd.f32 %v4198, %v4212
      %v4218 = vadd.f32 %v4199, %v4212
      %v4219 = vadd.f32 %v4200, %v4212
      %v4220 = vadd.f32 %v4201, %v4212
      %v4221 = vadd.f32 %v4202, %v4212
      %v4222 = vadd.f32 %v4203, %v4212
      %v4223 = vadd.f32 %v4204, %v4212
      %v4224 = vadd.f32 %v4205, %v4212
      %v4225 = vadd.f32 %v4206, %v4212
      %v4226 = vmax.f32 %v4214, 0.0
      %v4227 = vmax.f32 %v4215, 0.0
      %v4228 = vmax.f32 %v4216, 0.0
      %v4229 = vmax.f32 %v4217, 0.0
      %v4230 = vmax.f32 %v4218, 0.0
      %v4231 = vmax.f32 %v4219, 0.0
      %v4232 = vmax.f32 %v4220, 0.0
      %v4233 = vmax.f32 %v4221, 0.0
      %v4234 = vmax.f32 %v4222, 0.0
      %v4235 = vmax.f32 %v4223, 0.0
      %v4236 = vmax.f32 %v4224, 0.0
      %v4237 = vmax.f32 %v4225, 0.0
      %4238 = vst [vmem:[#allocation3] sm:$0xff] %v4226
      %4239 = vst [vmem:[#allocation3 + $0x8] sm:$0xff] %v4227
      %4240 = vst [vmem:[#allocation3 + $0x10] sm:$0xff] %v4228
      %4241 = vst [vmem:[#allocation3 + $0x18] sm:$0xff] %v4229
      %4242 = vst [vmem:[#allocation3 + $0x20] sm:$0xff] %v4230
      %4243 = vst [vmem:[#allocation3 + $0x28] sm:$0xff] %v4231
      %4244 = vst [vmem:[#allocation3 + $0x30] sm:$0xff] %v4232
      %4245 = vst [vmem:[#allocation3 + $0x38] sm:$0xff] %v4233
      %4246 = vst [vmem:[#allocation3 + $0x40] sm:$0xff] %v4234
      %4247 = vst [vmem:[#allocation3 + $0x48] sm:$0xff] %v4235
      %4248 = vst [vmem:[#allocation3 + $0x50] sm:$0xff] %v4236
      %4249 = vst [vmem:[#allocation3 + $0x58] sm:$0xff] %v4237
      %v4250 = vld [vmem:[#allocation3] sm:$0xff]
      %v4251 = vld [vmem:[#allocation3 + $0x10] sm:$0xff]
      %v4252 = vld [vmem:[#allocation3 + $0x20] sm:$0xff]
      %v4253 = vpack.c.bf16 %v4251, %v4250
      %v4254 = vpack.c.bf16 %v4252, %v4252
      %v4255 = vld [vmem:[%s5] sm:$0xf]
      %v4256 = vld [vmem:[%s5 + $0x4] sm:$0xf]
      %v4257 = vld [vmem:[%s5 + $0x8] sm:$0xf]
      %v4258 = vld [vmem:[%s5 + $0xc] sm:$0xf]
      %v4259 = vld [vmem:[%s5 + $0x10] sm:$0xf]
      %v4260 = vld [vmem:[%s5 + $0x14] sm:$0xf]
      %v4261 = vld [vmem:[%s5 + $0x18] sm:$0xf]
      %v4262 = vld [vmem:[%s5 + $0x1c] sm:$0xf]
      %v4263 = vld [vmem:[%s5 + $0x20] sm:$0xf]
      %v4264 = vld [vmem:[%s5 + $0x24] sm:$0xf]
      %v4265 = vld [vmem:[%s5 + $0x28] sm:$0xf]
      %v4266 = vld [vmem:[%s5 + $0x2c] sm:$0xf]
      %v4267 = vld [vmem:[%s5 + $0x30] sm:$0xf]
      %v4268 = vld [vmem:[%s5 + $0x34] sm:$0xf]
      %v4269 = vld [vmem:[%s5 + $0x38] sm:$0xf]
      %v4270 = vld [vmem:[%s5 + $0x3c] sm:$0xf]
      %v4271 = vld [vmem:[#allocation3 + $0x1] sm:$0xff]
      %v4272 = vld [vmem:[#allocation3 + $0x11] sm:$0xff]
      %v4273 = vld [vmem:[#allocation3 + $0x21] sm:$0xff]
      %v4274 = vpack.c.bf16 %v4272, %v4271
      %v4275 = vpack.c.bf16 %v4273, %v4273
      %s4276 = scalar_lea.vmem %s5, 64
      %v4277 = vld [vmem:[%s4276] sm:$0xf]
      %v4278 = vld [vmem:[%s4276 + $0x4] sm:$0xf]
      %v4279 = vld [vmem:[%s4276 + $0x8] sm:$0xf]
      %v4280 = vld [vmem:[%s4276 + $0xc] sm:$0xf]
      %v4281 = vld [vmem:[%s4276 + $0x10] sm:$0xf]
      %v4282 = vld [vmem:[%s4276 + $0x14] sm:$0xf]
      %v4283 = vld [vmem:[%s4276 + $0x18] sm:$0xf]
      %v4284 = vld [vmem:[%s4276 + $0x1c] sm:$0xf]
      %v4285 = vld [vmem:[%s4276 + $0x20] sm:$0xf]
      %v4286 = vld [vmem:[%s4276 + $0x24] sm:$0xf]
      %v4287 = vld [vmem:[%s4276 + $0x28] sm:$0xf]
      %v4288 = vld [vmem:[%s4276 + $0x2c] sm:$0xf]
      %v4289 = vld [vmem:[%s4276 + $0x30] sm:$0xf]
      %v4290 = vld [vmem:[%s4276 + $0x34] sm:$0xf]
      %v4291 = vld [vmem:[%s4276 + $0x38] sm:$0xf]
      %v4292 = vld [vmem:[%s4276 + $0x3c] sm:$0xf]
      %v4309 = vunpack.c.l.b16 %v4277
      %v4310 = vunpack.c.l.b16 %v4278
      %v4311 = vunpack.c.l.b16 %v4279
      %v4312 = vunpack.c.l.b16 %v4280
      %v4313 = vunpack.c.l.b16 %v4281
      %v4314 = vunpack.c.l.b16 %v4282
      %v4315 = vunpack.c.l.b16 %v4283
      %v4316 = vunpack.c.l.b16 %v4284
      %v4317 = vunpack.c.l.b16 %v4285
      %v4318 = vunpack.c.l.b16 %v4286
      %v4319 = vunpack.c.l.b16 %v4287
      %v4320 = vunpack.c.l.b16 %v4288
      %v4321 = vunpack.c.l.b16 %v4289
      %v4322 = vunpack.c.l.b16 %v4290
      %v4323 = vunpack.c.l.b16 %v4291
      %v4324 = vunpack.c.l.b16 %v4292
      %v4325 = vpack.c.b16 %v4310, %v4309
      %v4326 = vpack.c.b16 %v4312, %v4311
      %v4327 = vpack.c.b16 %v4314, %v4313
      %v4328 = vpack.c.b16 %v4316, %v4315
      %v4329 = vpack.c.b16 %v4318, %v4317
      %v4330 = vpack.c.b16 %v4320, %v4319
      %v4331 = vpack.c.b16 %v4322, %v4321
      %v4332 = vpack.c.b16 %v4324, %v4323
      %4341 = vmatprep.subr.bf16.mxu0 0
      %4342 = vmatpush1.bf16.msra.mxu0 %v4325
      %4343 = vmatprep.subr.bf16.mxu0 0
      %4344 = vmatpush1.bf16.msra.mxu0 %v4326
      %4345 = vmatprep.subr.bf16.mxu0 0
      %4346 = vmatpush1.bf16.msra.mxu0 %v4327
      %4347 = vmatprep.subr.bf16.mxu0 0
      %4348 = vmatpush1.bf16.msra.mxu0 %v4328
      %4349 = vmatprep.subr.bf16.mxu0 0
      %4350 = vmatpush1.bf16.msra.mxu0 %v4329
      %4351 = vmatprep.subr.bf16.mxu0 0
      %4352 = vmatpush1.bf16.msra.mxu0 %v4330
      %4353 = vmatprep.subr.bf16.mxu0 0
      %4354 = vmatpush1.bf16.msra.mxu0 %v4331
      %4355 = vmatprep.subr.bf16.mxu0 0
      %4356 = vmatpush1.bf16.msra.mxu0 %v4332
      %4357 = vmatprep.subr.bf16.mxu0 0
      %4358 = vmatpush1.bf16.msra.mxu0 0
      %4359 = vmatprep.subr.bf16.mxu0 0
      %4360 = vmatpush1.bf16.msra.mxu0 0
      %4361 = vmatprep.subr.bf16.mxu0 0
      %4362 = vmatpush1.bf16.msra.mxu0 0
      %4363 = vmatprep.subr.bf16.mxu0 0
      %4364 = vmatpush1.bf16.msra.mxu0 0
      %4365 = vmatprep.subr.bf16.mxu0 0
      %4366 = vmatpush1.bf16.msra.mxu0 0
      %4367 = vmatprep.subr.bf16.mxu0 0
      %4368 = vmatpush1.bf16.msra.mxu0 0
      %4369 = vmatprep.subr.bf16.mxu0 0
      %4370 = vmatpush1.bf16.msra.mxu0 0
      %4371 = vmatprep.subr.bf16.mxu0 0
      %4372 = vmatpush1.bf16.msra.mxu0 0
      %4373 = vmatprep.mubr.bf16.mxu0 0
      %4374 = vmatmul.mubr.bf16.gmra.mrb[0].mxu0 %v4274
      %v4375 = vpop.f32.mrb[0].mxu0
      %v4376 = vadd.f32 0.0, %v4375
      %v4377 = vpop.f32.mrb[0].mxu0
      %v4378 = vpop.f32.mrb[0].mxu0
      %v4379 = vadd.f32 0.0, %v4378
      %v4380 = vpop.f32.mrb[0].mxu0
      %4381 = vmatprep.mubr.bf16.mxu0 0
      %4382 = vmatmul.mubr.bf16.gmra.mrb[0].mxu0 %v4275
      %v4383 = vpop.f32.mrb[0].mxu0
      %v4384 = vadd.f32 0.0, %v4383
      %v4385 = vpop.f32.mrb[0].mxu0
      %v4386 = vpop.f32.mrb[0].mxu0
      %v4387 = vpop.f32.mrb[0].mxu0
      %4388 = vdwg.mxu0
      %v4405 = vunpack.c.l.b16 %v4255
      %v4406 = vunpack.c.l.b16 %v4256
      %v4407 = vunpack.c.l.b16 %v4257
      %v4408 = vunpack.c.l.b16 %v4258
      %v4409 = vunpack.c.l.b16 %v4259
      %v4410 = vunpack.c.l.b16 %v4260
      %v4411 = vunpack.c.l.b16 %v4261
      %v4412 = vunpack.c.l.b16 %v4262
      %v4413 = vunpack.c.l.b16 %v4263
      %v4414 = vunpack.c.l.b16 %v4264
      %v4415 = vunpack.c.l.b16 %v4265
      %v4416 = vunpack.c.l.b16 %v4266
      %v4417 = vunpack.c.l.b16 %v4267
      %v4418 = vunpack.c.l.b16 %v4268
      %v4419 = vunpack.c.l.b16 %v4269
      %v4420 = vunpack.c.l.b16 %v4270
      %v4421 = vpack.c.b16 %v4406, %v4405
      %v4422 = vpack.c.b16 %v4408, %v4407
      %v4423 = vpack.c.b16 %v4410, %v4409
      %v4424 = vpack.c.b16 %v4412, %v4411
      %v4425 = vpack.c.b16 %v4414, %v4413
      %v4426 = vpack.c.b16 %v4416, %v4415
      %v4427 = vpack.c.b16 %v4418, %v4417
      %v4428 = vpack.c.b16 %v4420, %v4419
      %4437 = vmatprep.subr.bf16.mxu0 0
      %4438 = vmatpush1.bf16.msra.mxu0 %v4421
      %4439 = vmatprep.subr.bf16.mxu0 0
      %4440 = vmatpush1.bf16.msra.mxu0 %v4422
      %4441 = vmatprep.subr.bf16.mxu0 0
      %4442 = vmatpush1.bf16.msra.mxu0 %v4423
      %4443 = vmatprep.subr.bf16.mxu0 0
      %4444 = vmatpush1.bf16.msra.mxu0 %v4424
      %4445 = vmatprep.subr.bf16.mxu0 0
      %4446 = vmatpush1.bf16.msra.mxu0 %v4425
      %4447 = vmatprep.subr.bf16.mxu0 0
      %4448 = vmatpush1.bf16.msra.mxu0 %v4426
      %4449 = vmatprep.subr.bf16.mxu0 0
      %4450 = vmatpush1.bf16.msra.mxu0 %v4427
      %4451 = vmatprep.subr.bf16.mxu0 0
      %4452 = vmatpush1.bf16.msra.mxu0 %v4428
      %4453 = vmatprep.subr.bf16.mxu0 0
      %4454 = vmatpush1.bf16.msra.mxu0 0
      %4455 = vmatprep.subr.bf16.mxu0 0
      %4456 = vmatpush1.bf16.msra.mxu0 0
      %4457 = vmatprep.subr.bf16.mxu0 0
      %4458 = vmatpush1.bf16.msra.mxu0 0
      %4459 = vmatprep.subr.bf16.mxu0 0
      %4460 = vmatpush1.bf16.msra.mxu0 0
      %4461 = vmatprep.subr.bf16.mxu0 0
      %4462 = vmatpush1.bf16.msra.mxu0 0
      %4463 = vmatprep.subr.bf16.mxu0 0
      %4464 = vmatpush1.bf16.msra.mxu0 0
      %4465 = vmatprep.subr.bf16.mxu0 0
      %4466 = vmatpush1.bf16.msra.mxu0 0
      %4467 = vmatprep.subr.bf16.mxu0 0
      %4468 = vmatpush1.bf16.msra.mxu0 0
      %4469 = vmatprep.mubr.bf16.mxu0 0
      %4470 = vmatmul.mubr.bf16.gmra.mrb[0].mxu0 %v4253
      %v4471 = vpop.f32.mrb[0].mxu0
      %v4472 = vadd.f32 %v4376, %v4471
      %v4473 = vpop.f32.mrb[0].mxu0
      %v4474 = vpop.f32.mrb[0].mxu0
      %v4475 = vadd.f32 %v4379, %v4474
      %v4476 = vpop.f32.mrb[0].mxu0
      %4477 = vmatprep.mubr.bf16.mxu0 0
      %4478 = vmatmul.mubr.bf16.gmra.mrb[0].mxu0 %v4254
      %v4479 = vpop.f32.mrb[0].mxu0
      %v4480 = vadd.f32 %v4384, %v4479
      %v4481 = vpop.f32.mrb[0].mxu0
      %v4482 = vpop.f32.mrb[0].mxu0
      %v4483 = vpop.f32.mrb[0].mxu0
      %4484 = vdwg.mxu0
      %v4485 = vld [vmem:[#allocation3 + $0x2] sm:$0xff]
      %v4486 = vld [vmem:[#allocation3 + $0x12] sm:$0xff]
      %v4487 = vld [vmem:[#allocation3 + $0x22] sm:$0xff]
      %v4488 = vpack.c.bf16 %v4486, %v4485
      %v4489 = vpack.c.bf16 %v4487, %v4487
      %s4490 = scalar_lea.vmem %s5, 128
      %v4491 = vld [vmem:[%s4490] sm:$0xf]
      %v4492 = vld [vmem:[%s4490 + $0x4] sm:$0xf]
      %v4493 = vld [vmem:[%s4490 + $0x8] sm:$0xf]
      %v4494 = vld [vmem:[%s4490 + $0xc] sm:$0xf]
      %v4495 = vld [vmem:[%s4490 + $0x10] sm:$0xf]
      %v4496 = vld [vmem:[%s4490 + $0x14] sm:$0xf]
      %v4497 = vld [vmem:[%s4490 + $0x18] sm:$0xf]
      %v4498 = vld [vmem:[%s4490 + $0x1c] sm:$0xf]
      %v4499 = vld [vmem:[%s4490 + $0x20] sm:$0xf]
      %v4500 = vld [vmem:[%s4490 + $0x24] sm:$0xf]
      %v4501 = vld [vmem:[%s4490 + $0x28] sm:$0xf]
      %v4502 = vld [vmem:[%s4490 + $0x2c] sm:$0xf]
      %v4503 = vld [vmem:[%s4490 + $0x30] sm:$0xf]
      %v4504 = vld [vmem:[%s4490 + $0x34] sm:$0xf]
      %v4505 = vld [vmem:[%s4490 + $0x38] sm:$0xf]
      %v4506 = vld [vmem:[%s4490 + $0x3c] sm:$0xf]
      %v4523 = vunpack.c.l.b16 %v4491
      %v4524 = vunpack.c.l.b16 %v4492
      %v4525 = vunpack.c.l.b16 %v4493
      %v4526 = vunpack.c.l.b16 %v4494
      %v4527 = vunpack.c.l.b16 %v4495
      %v4528 = vunpack.c.l.b16 %v4496
      %v4529 = vunpack.c.l.b16 %v4497
      %v4530 = vunpack.c.l.b16 %v4498
      %v4531 = vunpack.c.l.b16 %v4499
      %v4532 = vunpack.c.l.b16 %v4500
      %v4533 = vunpack.c.l.b16 %v4501
      %v4534 = vunpack.c.l.b16 %v4502
      %v4535 = vunpack.c.l.b16 %v4503
      %v4536 = vunpack.c.l.b16 %v4504
      %v4537 = vunpack.c.l.b16 %v4505
      %v4538 = vunpack.c.l.b16 %v4506
      %v4539 = vpack.c.b16 %v4524, %v4523
      %v4540 = vpack.c.b16 %v4526, %v4525
      %v4541 = vpack.c.b16 %v4528, %v4527
      %v4542 = vpack.c.b16 %v4530, %v4529
      %v4543 = vpack.c.b16 %v4532, %v4531
      %v4544 = vpack.c.b16 %v4534, %v4533
      %v4545 = vpack.c.b16 %v4536, %v4535
      %v4546 = vpack.c.b16 %v4538, %v4537
      %4555 = vmatprep.subr.bf16.mxu0 0
      %4556 = vmatpush1.bf16.msra.mxu0 %v4539
      %4557 = vmatprep.subr.bf16.mxu0 0
      %4558 = vmatpush1.bf16.msra.mxu0 %v4540
      %4559 = vmatprep.subr.bf16.mxu0 0
      %4560 = vmatpush1.bf16.msra.mxu0 %v4541
      %4561 = vmatprep.subr.bf16.mxu0 0
      %4562 = vmatpush1.bf16.msra.mxu0 %v4542
      %4563 = vmatprep.subr.bf16.mxu0 0
      %4564 = vmatpush1.bf16.msra.mxu0 %v4543
      %4565 = vmatprep.subr.bf16.mxu0 0
      %4566 = vmatpush1.bf16.msra.mxu0 %v4544
      %4567 = vmatprep.subr.bf16.mxu0 0
      %4568 = vmatpush1.bf16.msra.mxu0 %v4545
      %4569 = vmatprep.subr.bf16.mxu0 0
      %4570 = vmatpush1.bf16.msra.mxu0 %v4546
      %4571 = vmatprep.subr.bf16.mxu0 0
      %4572 = vmatpush1.bf16.msra.mxu0 0
      %4573 = vmatprep.subr.bf16.mxu0 0
      %4574 = vmatpush1.bf16.msra.mxu0 0
      %4575 = vmatprep.subr.bf16.mxu0 0
      %4576 = vmatpush1.bf16.msra.mxu0 0
      %4577 = vmatprep.subr.bf16.mxu0 0
      %4578 = vmatpush1.bf16.msra.mxu0 0
      %4579 = vmatprep.subr.bf16.mxu0 0
      %4580 = vmatpush1.bf16.msra.mxu0 0
      %4581 = vmatprep.subr.bf16.mxu0 0
      %4582 = vmatpush1.bf16.msra.mxu0 0
      %4583 = vmatprep.subr.bf16.mxu0 0
      %4584 = vmatpush1.bf16.msra.mxu0 0
      %4585 = vmatprep.subr.bf16.mxu0 0
      %4586 = vmatpush1.bf16.msra.mxu0 0
      %4587 = vmatprep.mubr.bf16.mxu0 0
      %4588 = vmatmul.mubr.bf16.gmra.mrb[0].mxu0 %v4488
      %v4589 = vpop.f32.mrb[0].mxu0
      %v4590 = vadd.f32 0.0, %v4589
      %v4591 = vpop.f32.mrb[0].mxu0
      %v4592 = vpop.f32.mrb[0].mxu0
      %v4593 = vadd.f32 0.0, %v4592
      %v4594 = vpop.f32.mrb[0].mxu0
      %4595 = vmatprep.mubr.bf16.mxu0 0
      %4596 = vmatmul.mubr.bf16.gmra.mrb[0].mxu0 %v4489
      %v4597 = vpop.f32.mrb[0].mxu0
      %v4598 = vadd.f32 0.0, %v4597
      %v4599 = vpop.f32.mrb[0].mxu0
      %v4600 = vpop.f32.mrb[0].mxu0
      %v4601 = vpop.f32.mrb[0].mxu0
      %4602 = vdwg.mxu0
      %v4603 = vadd.f32 %v4472, %v4590
      %v4604 = vadd.f32 %v4475, %v4593
      %v4605 = vadd.f32 %v4480, %v4598
      %v4606 = vld [vmem:[#allocation3 + $0x3] sm:$0xff]
      %v4607 = vld [vmem:[#allocation3 + $0x13] sm:$0xff]
      %v4608 = vld [vmem:[#allocation3 + $0x23] sm:$0xff]
      %v4609 = vpack.c.bf16 %v4607, %v4606
      %v4610 = vpack.c.bf16 %v4608, %v4608
      %s4611 = scalar_lea.vmem %s5, 192
      %v4612 = vld [vmem:[%s4611] sm:$0xf]
      %v4613 = vld [vmem:[%s4611 + $0x4] sm:$0xf]
      %v4614 = vld [vmem:[%s4611 + $0x8] sm:$0xf]
      %v4615 = vld [vmem:[%s4611 + $0xc] sm:$0xf]
      %v4616 = vld [vmem:[%s4611 + $0x10] sm:$0xf]
      %v4617 = vld [vmem:[%s4611 + $0x14] sm:$0xf]
      %v4618 = vld [vmem:[%s4611 + $0x18] sm:$0xf]
      %v4619 = vld [vmem:[%s4611 + $0x1c] sm:$0xf]
      %v4620 = vld [vmem:[%s4611 + $0x20] sm:$0xf]
      %v4621 = vld [vmem:[%s4611 + $0x24] sm:$0xf]
      %v4622 = vld [vmem:[%s4611 + $0x28] sm:$0xf]
      %v4623 = vld [vmem:[%s4611 + $0x2c] sm:$0xf]
      %v4624 = vld [vmem:[%s4611 + $0x30] sm:$0xf]
      %v4625 = vld [vmem:[%s4611 + $0x34] sm:$0xf]
      %v4626 = vld [vmem:[%s4611 + $0x38] sm:$0xf]
      %v4627 = vld [vmem:[%s4611 + $0x3c] sm:$0xf]
      %v4644 = vunpack.c.l.b16 %v4612
      %v4645 = vunpack.c.l.b16 %v4613
      %v4646 = vunpack.c.l.b16 %v4614
      %v4647 = vunpack.c.l.b16 %v4615
      %v4648 = vunpack.c.l.b16 %v4616
      %v4649 = vunpack.c.l.b16 %v4617
      %v4650 = vunpack.c.l.b16 %v4618
      %v4651 = vunpack.c.l.b16 %v4619
      %v4652 = vunpack.c.l.b16 %v4620
      %v4653 = vunpack.c.l.b16 %v4621
      %v4654 = vunpack.c.l.b16 %v4622
      %v4655 = vunpack.c.l.b16 %v4623
      %v4656 = vunpack.c.l.b16 %v4624
      %v4657 = vunpack.c.l.b16 %v4625
      %v4658 = vunpack.c.l.b16 %v4626
      %v4659 = vunpack.c.l.b16 %v4627
      %v4660 = vpack.c.b16 %v4645, %v4644
      %v4661 = vpack.c.b16 %v4647, %v4646
      %v4662 = vpack.c.b16 %v4649, %v4648
      %v4663 = vpack.c.b16 %v4651, %v4650
      %v4664 = vpack.c.b16 %v4653, %v4652
      %v4665 = vpack.c.b16 %v4655, %v4654
      %v4666 = vpack.c.b16 %v4657, %v4656
      %v4667 = vpack.c.b16 %v4659, %v4658
      %4676 = vmatprep.subr.bf16.mxu0 0
      %4677 = vmatpush1.bf16.msra.mxu0 %v4660
      %4678 = vmatprep.subr.bf16.mxu0 0
      %4679 = vmatpush1.bf16.msra.mxu0 %v4661
      %4680 = vmatprep.subr.bf16.mxu0 0
      %4681 = vmatpush1.bf16.msra.mxu0 %v4662
      %4682 = vmatprep.subr.bf16.mxu0 0
      %4683 = vmatpush1.bf16.msra.mxu0 %v4663
      %4684 = vmatprep.subr.bf16.mxu0 0
      %4685 = vmatpush1.bf16.msra.mxu0 %v4664
      %4686 = vmatprep.subr.bf16.mxu0 0
      %4687 = vmatpush1.bf16.msra.mxu0 %v4665
      %4688 = vmatprep.subr.bf16.mxu0 0
      %4689 = vmatpush1.bf16.msra.mxu0 %v4666
      %4690 = vmatprep.subr.bf16.mxu0 0
      %4691 = vmatpush1.bf16.msra.mxu0 %v4667
      %4692 = vmatprep.subr.bf16.mxu0 0
      %4693 = vmatpush1.bf16.msra.mxu0 0
      %4694 = vmatprep.subr.bf16.mxu0 0
      %4695 = vmatpush1.bf16.msra.mxu0 0
      %4696 = vmatprep.subr.bf16.mxu0 0
      %4697 = vmatpush1.bf16.msra.mxu0 0
      %4698 = vmatprep.subr.bf16.mxu0 0
      %4699 = vmatpush1.bf16.msra.mxu0 0
      %4700 = vmatprep.subr.bf16.mxu0 0
      %4701 = vmatpush1.bf16.msra.mxu0 0
      %4702 = vmatprep.subr.bf16.mxu0 0
      %4703 = vmatpush1.bf16.msra.mxu0 0
      %4704 = vmatprep.subr.bf16.mxu0 0
      %4705 = vmatpush1.bf16.msra.mxu0 0
      %4706 = vmatprep.subr.bf16.mxu0 0
      %4707 = vmatpush1.bf16.msra.mxu0 0
      %4708 = vmatprep.mubr.bf16.mxu0 0
      %4709 = vmatmul.mubr.bf16.gmra.mrb[0].mxu0 %v4609
      %v4710 = vpop.f32.mrb[0].mxu0
      %v4711 = vadd.f32 0.0, %v4710
      %v4712 = vpop.f32.mrb[0].mxu0
      %v4713 = vpop.f32.mrb[0].mxu0
      %v4714 = vadd.f32 0.0, %v4713
      %v4715 = vpop.f32.mrb[0].mxu0
      %4716 = vmatprep.mubr.bf16.mxu0 0
      %4717 = vmatmul.mubr.bf16.gmra.mrb[0].mxu0 %v4610
      %v4718 = vpop.f32.mrb[0].mxu0
      %v4719 = vadd.f32 0.0, %v4718
      %v4720 = vpop.f32.mrb[0].mxu0
      %v4721 = vpop.f32.mrb[0].mxu0
      %v4722 = vpop.f32.mrb[0].mxu0
      %4723 = vdwg.mxu0
      %v4724 = vadd.f32 %v4603, %v4711
      %v4725 = vadd.f32 %v4604, %v4714
      %v4726 = vadd.f32 %v4605, %v4719
      %s4727 = scalar_lea.vmem [#allocation3], 16
      %v4728 = vld [vmem:[%s4727] sm:$0xff]
      %v4729 = vld [vmem:[%s4727 + $0x10] sm:$0xff]
      %v4730 = vld [vmem:[%s4727 + $0x20] sm:$0xff]
      %v4731 = vpack.c.bf16 %v4729, %v4728
      %v4732 = vpack.c.bf16 %v4730, %v4730
      %s4733 = scalar_lea.vmem %s5, 256
      %v4734 = vld [vmem:[%s4733] sm:$0xf]
      %v4735 = vld [vmem:[%s4733 + $0x4] sm:$0xf]
      %v4736 = vld [vmem:[%s4733 + $0x8] sm:$0xf]
      %v4737 = vld [vmem:[%s4733 + $0xc] sm:$0xf]
      %v4738 = vld [vmem:[%s4733 + $0x10] sm:$0xf]
      %v4739 = vld [vmem:[%s4733 + $0x14] sm:$0xf]
      %v4740 = vld [vmem:[%s4733 + $0x18] sm:$0xf]
      %v4741 = vld [vmem:[%s4733 + $0x1c] sm:$0xf]
      %v4742 = vld [vmem:[%s4733 + $0x20] sm:$0xf]
      %v4743 = vld [vmem:[%s4733 + $0x24] sm:$0xf]
      %v4744 = vld [vmem:[%s4733 + $0x28] sm:$0xf]
      %v4745 = vld [vmem:[%s4733 + $0x2c] sm:$0xf]
      %v4746 = vld [vmem:[%s4733 + $0x30] sm:$0xf]
      %v4747 = vld [vmem:[%s4733 + $0x34] sm:$0xf]
      %v4748 = vld [vmem:[%s4733 + $0x38] sm:$0xf]
      %v4749 = vld [vmem:[%s4733 + $0x3c] sm:$0xf]
      %v4766 = vunpack.c.l.b16 %v4734
      %v4767 = vunpack.c.l.b16 %v4735
      %v4768 = vunpack.c.l.b16 %v4736
      %v4769 = vunpack.c.l.b16 %v4737
      %v4770 = vunpack.c.l.b16 %v4738
      %v4771 = vunpack.c.l.b16 %v4739
      %v4772 = vunpack.c.l.b16 %v4740
      %v4773 = vunpack.c.l.b16 %v4741
      %v4774 = vunpack.c.l.b16 %v4742
      %v4775 = vunpack.c.l.b16 %v4743
      %v4776 = vunpack.c.l.b16 %v4744
      %v4777 = vunpack.c.l.b16 %v4745
      %v4778 = vunpack.c.l.b16 %v4746
      %v4779 = vunpack.c.l.b16 %v4747
      %v4780 = vunpack.c.l.b16 %v4748
      %v4781 = vunpack.c.l.b16 %v4749
      %v4782 = vpack.c.b16 %v4767, %v4766
      %v4783 = vpack.c.b16 %v4769, %v4768
      %v4784 = vpack.c.b16 %v4771, %v4770
      %v4785 = vpack.c.b16 %v4773, %v4772
      %v4786 = vpack.c.b16 %v4775, %v4774
      %v4787 = vpack.c.b16 %v4777, %v4776
      %v4788 = vpack.c.b16 %v4779, %v4778
      %v4789 = vpack.c.b16 %v4781, %v4780
      %4798 = vmatprep.subr.bf16.mxu0 0
      %4799 = vmatpush1.bf16.msra.mxu0 %v4782
      %4800 = vmatprep.subr.bf16.mxu0 0
      %4801 = vmatpush1.bf16.msra.mxu0 %v4783
      %4802 = vmatprep.subr.bf16.mxu0 0
      %4803 = vmatpush1.bf16.msra.mxu0 %v4784
      %4804 = vmatprep.subr.bf16.mxu0 0
      %4805 = vmatpush1.bf16.msra.mxu0 %v4785
      %4806 = vmatprep.subr.bf16.mxu0 0
      %4807 = vmatpush1.bf16.msra.mxu0 %v4786
      %4808 = vmatprep.subr.bf16.mxu0 0
      %4809 = vmatpush1.bf16.msra.mxu0 %v4787
      %4810 = vmatprep.subr.bf16.mxu0 0
      %4811 = vmatpush1.bf16.msra.mxu0 %v4788
      %4812 = vmatprep.subr.bf16.mxu0 0
      %4813 = vmatpush1.bf16.msra.mxu0 %v4789
      %4814 = vmatprep.subr.bf16.mxu0 0
      %4815 = vmatpush1.bf16.msra.mxu0 0
      %4816 = vmatprep.subr.bf16.mxu0 0
      %4817 = vmatpush1.bf16.msra.mxu0 0
      %4818 = vmatprep.subr.bf16.mxu0 0
      %4819 = vmatpush1.bf16.msra.mxu0 0
      %4820 = vmatprep.subr.bf16.mxu0 0
      %4821 = vmatpush1.bf16.msra.mxu0 0
      %4822 = vmatprep.subr.bf16.mxu0 0
      %4823 = vmatpush1.bf16.msra.mxu0 0
      %4824 = vmatprep.subr.bf16.mxu0 0
      %4825 = vmatpush1.bf16.msra.mxu0 0
      %4826 = vmatprep.subr.bf16.mxu0 0
      %4827 = vmatpush1.bf16.msra.mxu0 0
      %4828 = vmatprep.subr.bf16.mxu0 0
      %4829 = vmatpush1.bf16.msra.mxu0 0
      %4830 = vmatprep.mubr.bf16.mxu0 0
      %4831 = vmatmul.mubr.bf16.gmra.mrb[0].mxu0 %v4731
      %v4832 = vpop.f32.mrb[0].mxu0
      %v4833 = vadd.f32 0.0, %v4832
      %v4834 = vpop.f32.mrb[0].mxu0
      %v4835 = vpop.f32.mrb[0].mxu0
      %v4836 = vadd.f32 0.0, %v4835
      %v4837 = vpop.f32.mrb[0].mxu0
      %4838 = vmatprep.mubr.bf16.mxu0 0
      %4839 = vmatmul.mubr.bf16.gmra.mrb[0].mxu0 %v4732
      %v4840 = vpop.f32.mrb[0].mxu0
      %v4841 = vadd.f32 0.0, %v4840
      %v4842 = vpop.f32.mrb[0].mxu0
      %v4843 = vpop.f32.mrb[0].mxu0
      %v4844 = vpop.f32.mrb[0].mxu0
      %4845 = vdwg.mxu0
      %v4846 = vadd.f32 %v4724, %v4833
      %v4847 = vadd.f32 %v4725, %v4836
      %v4848 = vadd.f32 %v4726, %v4841
      %v4849 = vld [vmem:[%s4727 + $0x1] sm:$0xff]
      %v4850 = vld [vmem:[%s4727 + $0x11] sm:$0xff]
      %v4851 = vld [vmem:[%s4727 + $0x21] sm:$0xff]
      %v4852 = vpack.c.bf16 %v4850, %v4849
      %v4853 = vpack.c.bf16 %v4851, %v4851
      %s4854 = scalar_lea.vmem %s5, 320
      %v4855 = vld [vmem:[%s4854] sm:$0xf]
      %v4856 = vld [vmem:[%s4854 + $0x4] sm:$0xf]
      %v4857 = vld [vmem:[%s4854 + $0x8] sm:$0xf]
      %v4858 = vld [vmem:[%s4854 + $0xc] sm:$0xf]
      %v4859 = vld [vmem:[%s4854 + $0x10] sm:$0xf]
      %v4860 = vld [vmem:[%s4854 + $0x14] sm:$0xf]
      %v4861 = vld [vmem:[%s4854 + $0x18] sm:$0xf]
      %v4862 = vld [vmem:[%s4854 + $0x1c] sm:$0xf]
      %v4863 = vld [vmem:[%s4854 + $0x20] sm:$0xf]
      %v4864 = vld [vmem:[%s4854 + $0x24] sm:$0xf]
      %v4865 = vld [vmem:[%s4854 + $0x28] sm:$0xf]
      %v4866 = vld [vmem:[%s4854 + $0x2c] sm:$0xf]
      %v4867 = vld [vmem:[%s4854 + $0x30] sm:$0xf]
      %v4868 = vld [vmem:[%s4854 + $0x34] sm:$0xf]
      %v4869 = vld [vmem:[%s4854 + $0x38] sm:$0xf]
      %v4870 = vld [vmem:[%s4854 + $0x3c] sm:$0xf]
      %v4887 = vunpack.c.l.b16 %v4855
      %v4888 = vunpack.c.l.b16 %v4856
      %v4889 = vunpack.c.l.b16 %v4857
      %v4890 = vunpack.c.l.b16 %v4858
      %v4891 = vunpack.c.l.b16 %v4859
      %v4892 = vunpack.c.l.b16 %v4860
      %v4893 = vunpack.c.l.b16 %v4861
      %v4894 = vunpack.c.l.b16 %v4862
      %v4895 = vunpack.c.l.b16 %v4863
      %v4896 = vunpack.c.l.b16 %v4864
      %v4897 = vunpack.c.l.b16 %v4865
      %v4898 = vunpack.c.l.b16 %v4866
      %v4899 = vunpack.c.l.b16 %v4867
      %v4900 = vunpack.c.l.b16 %v4868
      %v4901 = vunpack.c.l.b16 %v4869
      %v4902 = vunpack.c.l.b16 %v4870
      %v4903 = vpack.c.b16 %v4888, %v4887
      %v4904 = vpack.c.b16 %v4890, %v4889
      %v4905 = vpack.c.b16 %v4892, %v4891
      %v4906 = vpack.c.b16 %v4894, %v4893
      %v4907 = vpack.c.b16 %v4896, %v4895
      %v4908 = vpack.c.b16 %v4898, %v4897
      %v4909 = vpack.c.b16 %v4900, %v4899
      %v4910 = vpack.c.b16 %v4902, %v4901
      %4919 = vmatprep.subr.bf16.mxu0 0
      %4920 = vmatpush1.bf16.msra.mxu0 %v4903
      %4921 = vmatprep.subr.bf16.mxu0 0
      %4922 = vmatpush1.bf16.msra.mxu0 %v4904
      %4923 = vmatprep.subr.bf16.mxu0 0
      %4924 = vmatpush1.bf16.msra.mxu0 %v4905
      %4925 = vmatprep.subr.bf16.mxu0 0
      %4926 = vmatpush1.bf16.msra.mxu0 %v4906
      %4927 = vmatprep.subr.bf16.mxu0 0
      %4928 = vmatpush1.bf16.msra.mxu0 %v4907
      %4929 = vmatprep.subr.bf16.mxu0 0
      %4930 = vmatpush1.bf16.msra.mxu0 %v4908
      %4931 = vmatprep.subr.bf16.mxu0 0
      %4932 = vmatpush1.bf16.msra.mxu0 %v4909
      %4933 = vmatprep.subr.bf16.mxu0 0
      %4934 = vmatpush1.bf16.msra.mxu0 %v4910
      %4935 = vmatprep.subr.bf16.mxu0 0
      %4936 = vmatpush1.bf16.msra.mxu0 0
      %4937 = vmatprep.subr.bf16.mxu0 0
      %4938 = vmatpush1.bf16.msra.mxu0 0
      %4939 = vmatprep.subr.bf16.mxu0 0
      %4940 = vmatpush1.bf16.msra.mxu0 0
      %4941 = vmatprep.subr.bf16.mxu0 0
      %4942 = vmatpush1.bf16.msra.mxu0 0
      %4943 = vmatprep.subr.bf16.mxu0 0
      %4944 = vmatpush1.bf16.msra.mxu0 0
      %4945 = vmatprep.subr.bf16.mxu0 0
      %4946 = vmatpush1.bf16.msra.mxu0 0
      %4947 = vmatprep.subr.bf16.mxu0 0
      %4948 = vmatpush1.bf16.msra.mxu0 0
      %4949 = vmatprep.subr.bf16.mxu0 0
      %4950 = vmatpush1.bf16.msra.mxu0 0
      %4951 = vmatprep.mubr.bf16.mxu0 0
      %4952 = vmatmul.mubr.bf16.gmra.mrb[0].mxu0 %v4852
      %v4953 = vpop.f32.mrb[0].mxu0
      %v4954 = vadd.f32 0.0, %v4953
      %v4955 = vpop.f32.mrb[0].mxu0
      %v4956 = vpop.f32.mrb[0].mxu0
      %v4957 = vadd.f32 0.0, %v4956
      %v4958 = vpop.f32.mrb[0].mxu0
      %4959 = vmatprep.mubr.bf16.mxu0 0
      %4960 = vmatmul.mubr.bf16.gmra.mrb[0].mxu0 %v4853
      %v4961 = vpop.f32.mrb[0].mxu0
      %v4962 = vadd.f32 0.0, %v4961
      %v4963 = vpop.f32.mrb[0].mxu0
      %v4964 = vpop.f32.mrb[0].mxu0
      %v4965 = vpop.f32.mrb[0].mxu0
      %4966 = vdwg.mxu0
      %v4967 = vadd.f32 %v4846, %v4954
      %v4968 = vadd.f32 %v4847, %v4957
      %v4969 = vadd.f32 %v4848, %v4962
      %v4970 = vld [vmem:[%s4727 + $0x2] sm:$0xff]
      %v4971 = vld [vmem:[%s4727 + $0x12] sm:$0xff]
      %v4972 = vld [vmem:[%s4727 + $0x22] sm:$0xff]
      %v4973 = vpack.c.bf16 %v4971, %v4970
      %v4974 = vpack.c.bf16 %v4972, %v4972
      %s4975 = scalar_lea.vmem %s5, 384
      %v4976 = vld [vmem:[%s4975] sm:$0xf]
      %v4977 = vld [vmem:[%s4975 + $0x4] sm:$0xf]
      %v4978 = vld [vmem:[%s4975 + $0x8] sm:$0xf]
      %v4979 = vld [vmem:[%s4975 + $0xc] sm:$0xf]
      %v4980 = vld [vmem:[%s4975 + $0x10] sm:$0xf]
      %v4981 = vld [vmem:[%s4975 + $0x14] sm:$0xf]
      %v4982 = vld [vmem:[%s4975 + $0x18] sm:$0xf]
      %v4983 = vld [vmem:[%s4975 + $0x1c] sm:$0xf]
      %v4984 = vld [vmem:[%s4975 + $0x20] sm:$0xf]
      %v4985 = vld [vmem:[%s4975 + $0x24] sm:$0xf]
      %v4986 = vld [vmem:[%s4975 + $0x28] sm:$0xf]
      %v4987 = vld [vmem:[%s4975 + $0x2c] sm:$0xf]
      %v4988 = vld [vmem:[%s4975 + $0x30] sm:$0xf]
      %v4989 = vld [vmem:[%s4975 + $0x34] sm:$0xf]
      %v4990 = vld [vmem:[%s4975 + $0x38] sm:$0xf]
      %v4991 = vld [vmem:[%s4975 + $0x3c] sm:$0xf]
      %v5008 = vunpack.c.l.b16 %v4976
      %v5009 = vunpack.c.l.b16 %v4977
      %v5010 = vunpack.c.l.b16 %v4978
      %v5011 = vunpack.c.l.b16 %v4979
      %v5012 = vunpack.c.l.b16 %v4980
      %v5013 = vunpack.c.l.b16 %v4981
      %v5014 = vunpack.c.l.b16 %v4982
      %v5015 = vunpack.c.l.b16 %v4983
      %v5016 = vunpack.c.l.b16 %v4984
      %v5017 = vunpack.c.l.b16 %v4985
      %v5018 = vunpack.c.l.b16 %v4986
      %v5019 = vunpack.c.l.b16 %v4987
      %v5020 = vunpack.c.l.b16 %v4988
      %v5021 = vunpack.c.l.b16 %v4989
      %v5022 = vunpack.c.l.b16 %v4990
      %v5023 = vunpack.c.l.b16 %v4991
      %v5024 = vpack.c.b16 %v5009, %v5008
      %v5025 = vpack.c.b16 %v5011, %v5010
      %v5026 = vpack.c.b16 %v5013, %v5012
      %v5027 = vpack.c.b16 %v5015, %v5014
      %v5028 = vpack.c.b16 %v5017, %v5016
      %v5029 = vpack.c.b16 %v5019, %v5018
      %v5030 = vpack.c.b16 %v5021, %v5020
      %v5031 = vpack.c.b16 %v5023, %v5022
      %5040 = vmatprep.subr.bf16.mxu0 0
      %5041 = vmatpush1.bf16.msra.mxu0 %v5024
      %5042 = vmatprep.subr.bf16.mxu0 0
      %5043 = vmatpush1.bf16.msra.mxu0 %v5025
      %5044 = vmatprep.subr.bf16.mxu0 0
      %5045 = vmatpush1.bf16.msra.mxu0 %v5026
      %5046 = vmatprep.subr.bf16.mxu0 0
      %5047 = vmatpush1.bf16.msra.mxu0 %v5027
      %5048 = vmatprep.subr.bf16.mxu0 0
      %5049 = vmatpush1.bf16.msra.mxu0 %v5028
      %5050 = vmatprep.subr.bf16.mxu0 0
      %5051 = vmatpush1.bf16.msra.mxu0 %v5029
      %5052 = vmatprep.subr.bf16.mxu0 0
      %5053 = vmatpush1.bf16.msra.mxu0 %v5030
      %5054 = vmatprep.subr.bf16.mxu0 0
      %5055 = vmatpush1.bf16.msra.mxu0 %v5031
      %5056 = vmatprep.subr.bf16.mxu0 0
      %5057 = vmatpush1.bf16.msra.mxu0 0
      %5058 = vmatprep.subr.bf16.mxu0 0
      %5059 = vmatpush1.bf16.msra.mxu0 0
      %5060 = vmatprep.subr.bf16.mxu0 0
      %5061 = vmatpush1.bf16.msra.mxu0 0
      %5062 = vmatprep.subr.bf16.mxu0 0
      %5063 = vmatpush1.bf16.msra.mxu0 0
      %5064 = vmatprep.subr.bf16.mxu0 0
      %5065 = vmatpush1.bf16.msra.mxu0 0
      %5066 = vmatprep.subr.bf16.mxu0 0
      %5067 = vmatpush1.bf16.msra.mxu0 0
      %5068 = vmatprep.subr.bf16.mxu0 0
      %5069 = vmatpush1.bf16.msra.mxu0 0
      %5070 = vmatprep.subr.bf16.mxu0 0
      %5071 = vmatpush1.bf16.msra.mxu0 0
      %5072 = vmatprep.mubr.bf16.mxu0 0
      %5073 = vmatmul.mubr.bf16.gmra.mrb[0].mxu0 %v4973
      %v5074 = vpop.f32.mrb[0].mxu0
      %v5075 = vadd.f32 0.0, %v5074
      %v5076 = vpop.f32.mrb[0].mxu0
      %v5077 = vpop.f32.mrb[0].mxu0
      %v5078 = vadd.f32 0.0, %v5077
      %v5079 = vpop.f32.mrb[0].mxu0
      %5080 = vmatprep.mubr.bf16.mxu0 0
      %5081 = vmatmul.mubr.bf16.gmra.mrb[0].mxu0 %v4974
      %v5082 = vpop.f32.mrb[0].mxu0
      %v5083 = vadd.f32 0.0, %v5082
      %v5084 = vpop.f32.mrb[0].mxu0
      %v5085 = vpop.f32.mrb[0].mxu0
      %v5086 = vpop.f32.mrb[0].mxu0
      %5087 = vdwg.mxu0
      %v5088 = vadd.f32 %v4967, %v5075
      %v5089 = vadd.f32 %v4968, %v5078
      %v5090 = vadd.f32 %v4969, %v5083
      %v5091 = vld [vmem:[%s4727 + $0x3] sm:$0xff]
      %v5092 = vld [vmem:[%s4727 + $0x13] sm:$0xff]
      %v5093 = vld [vmem:[%s4727 + $0x23] sm:$0xff]
      %v5094 = vpack.c.bf16 %v5092, %v5091
      %v5095 = vpack.c.bf16 %v5093, %v5093
      %s5096 = scalar_lea.vmem %s5, 448
      %v5097 = vld [vmem:[%s5096] sm:$0xf]
      %v5098 = vld [vmem:[%s5096 + $0x4] sm:$0xf]
      %v5099 = vld [vmem:[%s5096 + $0x8] sm:$0xf]
      %v5100 = vld [vmem:[%s5096 + $0xc] sm:$0xf]
      %v5101 = vld [vmem:[%s5096 + $0x10] sm:$0xf]
      %v5102 = vld [vmem:[%s5096 + $0x14] sm:$0xf]
      %v5103 = vld [vmem:[%s5096 + $0x18] sm:$0xf]
      %v5104 = vld [vmem:[%s5096 + $0x1c] sm:$0xf]
      %v5105 = vld [vmem:[%s5096 + $0x20] sm:$0xf]
      %v5106 = vld [vmem:[%s5096 + $0x24] sm:$0xf]
      %v5107 = vld [vmem:[%s5096 + $0x28] sm:$0xf]
      %v5108 = vld [vmem:[%s5096 + $0x2c] sm:$0xf]
      %v5109 = vld [vmem:[%s5096 + $0x30] sm:$0xf]
      %v5110 = vld [vmem:[%s5096 + $0x34] sm:$0xf]
      %v5111 = vld [vmem:[%s5096 + $0x38] sm:$0xf]
      %v5112 = vld [vmem:[%s5096 + $0x3c] sm:$0xf]
      %v5129 = vunpack.c.l.b16 %v5097
      %v5130 = vunpack.c.l.b16 %v5098
      %v5131 = vunpack.c.l.b16 %v5099
      %v5132 = vunpack.c.l.b16 %v5100
      %v5133 = vunpack.c.l.b16 %v5101
      %v5134 = vunpack.c.l.b16 %v5102
      %v5135 = vunpack.c.l.b16 %v5103
      %v5136 = vunpack.c.l.b16 %v5104
      %v5137 = vunpack.c.l.b16 %v5105
      %v5138 = vunpack.c.l.b16 %v5106
      %v5139 = vunpack.c.l.b16 %v5107
      %v5140 = vunpack.c.l.b16 %v5108
      %v5141 = vunpack.c.l.b16 %v5109
      %v5142 = vunpack.c.l.b16 %v5110
      %v5143 = vunpack.c.l.b16 %v5111
      %v5144 = vunpack.c.l.b16 %v5112
      %v5145 = vpack.c.b16 %v5130, %v5129
      %v5146 = vpack.c.b16 %v5132, %v5131
      %v5147 = vpack.c.b16 %v5134, %v5133
      %v5148 = vpack.c.b16 %v5136, %v5135
      %v5149 = vpack.c.b16 %v5138, %v5137
      %v5150 = vpack.c.b16 %v5140, %v5139
      %v5151 = vpack.c.b16 %v5142, %v5141
      %v5152 = vpack.c.b16 %v5144, %v5143
      %5161 = vmatprep.subr.bf16.mxu0 0
      %5162 = vmatpush1.bf16.msra.mxu0 %v5145
      %5163 = vmatprep.subr.bf16.mxu0 0
      %5164 = vmatpush1.bf16.msra.mxu0 %v5146
      %5165 = vmatprep.subr.bf16.mxu0 0
      %5166 = vmatpush1.bf16.msra.mxu0 %v5147
      %5167 = vmatprep.subr.bf16.mxu0 0
      %5168 = vmatpush1.bf16.msra.mxu0 %v5148
      %5169 = vmatprep.subr.bf16.mxu0 0
      %5170 = vmatpush1.bf16.msra.mxu0 %v5149
      %5171 = vmatprep.subr.bf16.mxu0 0
      %5172 = vmatpush1.bf16.msra.mxu0 %v5150
      %5173 = vmatprep.subr.bf16.mxu0 0
      %5174 = vmatpush1.bf16.msra.mxu0 %v5151
      %5175 = vmatprep.subr.bf16.mxu0 0
      %5176 = vmatpush1.bf16.msra.mxu0 %v5152
      %5177 = vmatprep.subr.bf16.mxu0 0
      %5178 = vmatpush1.bf16.msra.mxu0 0
      %5179 = vmatprep.subr.bf16.mxu0 0
      %5180 = vmatpush1.bf16.msra.mxu0 0
      %5181 = vmatprep.subr.bf16.mxu0 0
      %5182 = vmatpush1.bf16.msra.mxu0 0
      %5183 = vmatprep.subr.bf16.mxu0 0
      %5184 = vmatpush1.bf16.msra.mxu0 0
      %5185 = vmatprep.subr.bf16.mxu0 0
      %5186 = vmatpush1.bf16.msra.mxu0 0
      %5187 = vmatprep.subr.bf16.mxu0 0
      %5188 = vmatpush1.bf16.msra.mxu0 0
      %5189 = vmatprep.subr.bf16.mxu0 0
      %5190 = vmatpush1.bf16.msra.mxu0 0
      %5191 = vmatprep.subr.bf16.mxu0 0
      %5192 = vmatpush1.bf16.msra.mxu0 0
      %5193 = vmatprep.mubr.bf16.mxu0 0
      %5194 = vmatmul.mubr.bf16.gmra.mrb[0].mxu0 %v5094
      %v5195 = vpop.f32.mrb[0].mxu0
      %v5196 = vadd.f32 0.0, %v5195
      %v5197 = vpop.f32.mrb[0].mxu0
      %v5198 = vpop.f32.mrb[0].mxu0
      %v5199 = vadd.f32 0.0, %v5198
      %v5200 = vpop.f32.mrb[0].mxu0
      %5201 = vmatprep.mubr.bf16.mxu0 0
      %5202 = vmatmul.mubr.bf16.gmra.mrb[0].mxu0 %v5095
      %v5203 = vpop.f32.mrb[0].mxu0
      %v5204 = vadd.f32 0.0, %v5203
      %v5205 = vpop.f32.mrb[0].mxu0
      %v5206 = vpop.f32.mrb[0].mxu0
      %v5207 = vpop.f32.mrb[0].mxu0
      %5208 = vdwg.mxu0
      %v5209 = vadd.f32 %v5088, %v5196
      %v5210 = vadd.f32 %v5089, %v5199
      %v5211 = vadd.f32 %v5090, %v5204
      %s5212 = scalar_lea.vmem [#allocation3], 32
      %v5213 = vld [vmem:[%s5212] sm:$0xff]
      %v5214 = vld [vmem:[%s5212 + $0x10] sm:$0xff]
      %v5215 = vld [vmem:[%s5212 + $0x20] sm:$0xff]
      %v5216 = vpack.c.bf16 %v5214, %v5213
      %v5217 = vpack.c.bf16 %v5215, %v5215
      %s5218 = scalar_lea.vmem %s5, 512
      %v5219 = vld [vmem:[%s5218] sm:$0xf]
      %v5220 = vld [vmem:[%s5218 + $0x4] sm:$0xf]
      %v5221 = vld [vmem:[%s5218 + $0x8] sm:$0xf]
      %v5222 = vld [vmem:[%s5218 + $0xc] sm:$0xf]
      %v5223 = vld [vmem:[%s5218 + $0x10] sm:$0xf]
      %v5224 = vld [vmem:[%s5218 + $0x14] sm:$0xf]
      %v5225 = vld [vmem:[%s5218 + $0x18] sm:$0xf]
      %v5226 = vld [vmem:[%s5218 + $0x1c] sm:$0xf]
      %v5227 = vld [vmem:[%s5218 + $0x20] sm:$0xf]
      %v5228 = vld [vmem:[%s5218 + $0x24] sm:$0xf]
      %v5229 = vld [vmem:[%s5218 + $0x28] sm:$0xf]
      %v5230 = vld [vmem:[%s5218 + $0x2c] sm:$0xf]
      %v5231 = vld [vmem:[%s5218 + $0x30] sm:$0xf]
      %v5232 = vld [vmem:[%s5218 + $0x34] sm:$0xf]
      %v5233 = vld [vmem:[%s5218 + $0x38] sm:$0xf]
      %v5234 = vld [vmem:[%s5218 + $0x3c] sm:$0xf]
      %v5251 = vunpack.c.l.b16 %v5219
      %v5252 = vunpack.c.l.b16 %v5220
      %v5253 = vunpack.c.l.b16 %v5221
      %v5254 = vunpack.c.l.b16 %v5222
      %v5255 = vunpack.c.l.b16 %v5223
      %v5256 = vunpack.c.l.b16 %v5224
      %v5257 = vunpack.c.l.b16 %v5225
      %v5258 = vunpack.c.l.b16 %v5226
      %v5259 = vunpack.c.l.b16 %v5227
      %v5260 = vunpack.c.l.b16 %v5228
      %v5261 = vunpack.c.l.b16 %v5229
      %v5262 = vunpack.c.l.b16 %v5230
      %v5263 = vunpack.c.l.b16 %v5231
      %v5264 = vunpack.c.l.b16 %v5232
      %v5265 = vunpack.c.l.b16 %v5233
      %v5266 = vunpack.c.l.b16 %v5234
      %v5267 = vpack.c.b16 %v5252, %v5251
      %v5268 = vpack.c.b16 %v5254, %v5253
      %v5269 = vpack.c.b16 %v5256, %v5255
      %v5270 = vpack.c.b16 %v5258, %v5257
      %v5271 = vpack.c.b16 %v5260, %v5259
      %v5272 = vpack.c.b16 %v5262, %v5261
      %v5273 = vpack.c.b16 %v5264, %v5263
      %v5274 = vpack.c.b16 %v5266, %v5265
      %5283 = vmatprep.subr.bf16.mxu0 0
      %5284 = vmatpush1.bf16.msra.mxu0 %v5267
      %5285 = vmatprep.subr.bf16.mxu0 0
      %5286 = vmatpush1.bf16.msra.mxu0 %v5268
      %5287 = vmatprep.subr.bf16.mxu0 0
      %5288 = vmatpush1.bf16.msra.mxu0 %v5269
      %5289 = vmatprep.subr.bf16.mxu0 0
      %5290 = vmatpush1.bf16.msra.mxu0 %v5270
      %5291 = vmatprep.subr.bf16.mxu0 0
      %5292 = vmatpush1.bf16.msra.mxu0 %v5271
      %5293 = vmatprep.subr.bf16.mxu0 0
      %5294 = vmatpush1.bf16.msra.mxu0 %v5272
      %5295 = vmatprep.subr.bf16.mxu0 0
      %5296 = vmatpush1.bf16.msra.mxu0 %v5273
      %5297 = vmatprep.subr.bf16.mxu0 0
      %5298 = vmatpush1.bf16.msra.mxu0 %v5274
      %5299 = vmatprep.subr.bf16.mxu0 0
      %5300 = vmatpush1.bf16.msra.mxu0 0
      %5301 = vmatprep.subr.bf16.mxu0 0
      %5302 = vmatpush1.bf16.msra.mxu0 0
      %5303 = vmatprep.subr.bf16.mxu0 0
      %5304 = vmatpush1.bf16.msra.mxu0 0
      %5305 = vmatprep.subr.bf16.mxu0 0
      %5306 = vmatpush1.bf16.msra.mxu0 0
      %5307 = vmatprep.subr.bf16.mxu0 0
      %5308 = vmatpush1.bf16.msra.mxu0 0
      %5309 = vmatprep.subr.bf16.mxu0 0
      %5310 = vmatpush1.bf16.msra.mxu0 0
      %5311 = vmatprep.subr.bf16.mxu0 0
      %5312 = vmatpush1.bf16.msra.mxu0 0
      %5313 = vmatprep.subr.bf16.mxu0 0
      %5314 = vmatpush1.bf16.msra.mxu0 0
      %5315 = vmatprep.mubr.bf16.mxu0 0
      %5316 = vmatmul.mubr.bf16.gmra.mrb[0].mxu0 %v5216
      %v5317 = vpop.f32.mrb[0].mxu0
      %v5318 = vadd.f32 0.0, %v5317
      %v5319 = vpop.f32.mrb[0].mxu0
      %v5320 = vpop.f32.mrb[0].mxu0
      %v5321 = vadd.f32 0.0, %v5320
      %v5322 = vpop.f32.mrb[0].mxu0
      %5323 = vmatprep.mubr.bf16.mxu0 0
      %5324 = vmatmul.mubr.bf16.gmra.mrb[0].mxu0 %v5217
      %v5325 = vpop.f32.mrb[0].mxu0
      %v5326 = vadd.f32 0.0, %v5325
      %v5327 = vpop.f32.mrb[0].mxu0
      %v5328 = vpop.f32.mrb[0].mxu0
      %v5329 = vpop.f32.mrb[0].mxu0
      %5330 = vdwg.mxu0
      %v5331 = vadd.f32 %v5209, %v5318
      %v5332 = vadd.f32 %v5210, %v5321
      %v5333 = vadd.f32 %v5211, %v5326
      %v5334 = vld [vmem:[%s5212 + $0x1] sm:$0xff]
      %v5335 = vld [vmem:[%s5212 + $0x11] sm:$0xff]
      %v5336 = vld [vmem:[%s5212 + $0x21] sm:$0xff]
      %v5337 = vpack.c.bf16 %v5335, %v5334
      %v5338 = vpack.c.bf16 %v5336, %v5336
      %s5339 = scalar_lea.vmem %s5, 576
      %v5340 = vld [vmem:[%s5339] sm:$0xf]
      %v5341 = vld [vmem:[%s5339 + $0x4] sm:$0xf]
      %v5342 = vld [vmem:[%s5339 + $0x8] sm:$0xf]
      %v5343 = vld [vmem:[%s5339 + $0xc] sm:$0xf]
      %v5344 = vld [vmem:[%s5339 + $0x10] sm:$0xf]
      %v5345 = vld [vmem:[%s5339 + $0x14] sm:$0xf]
      %v5346 = vld [vmem:[%s5339 + $0x18] sm:$0xf]
      %v5347 = vld [vmem:[%s5339 + $0x1c] sm:$0xf]
      %v5348 = vld [vmem:[%s5339 + $0x20] sm:$0xf]
      %v5349 = vld [vmem:[%s5339 + $0x24] sm:$0xf]
      %v5350 = vld [vmem:[%s5339 + $0x28] sm:$0xf]
      %v5351 = vld [vmem:[%s5339 + $0x2c] sm:$0xf]
      %v5352 = vld [vmem:[%s5339 + $0x30] sm:$0xf]
      %v5353 = vld [vmem:[%s5339 + $0x34] sm:$0xf]
      %v5354 = vld [vmem:[%s5339 + $0x38] sm:$0xf]
      %v5355 = vld [vmem:[%s5339 + $0x3c] sm:$0xf]
      %v5372 = vunpack.c.l.b16 %v5340
      %v5373 = vunpack.c.l.b16 %v5341
      %v5374 = vunpack.c.l.b16 %v5342
      %v5375 = vunpack.c.l.b16 %v5343
      %v5376 = vunpack.c.l.b16 %v5344
      %v5377 = vunpack.c.l.b16 %v5345
      %v5378 = vunpack.c.l.b16 %v5346
      %v5379 = vunpack.c.l.b16 %v5347
      %v5380 = vunpack.c.l.b16 %v5348
      %v5381 = vunpack.c.l.b16 %v5349
      %v5382 = vunpack.c.l.b16 %v5350
      %v5383 = vunpack.c.l.b16 %v5351
      %v5384 = vunpack.c.l.b16 %v5352
      %v5385 = vunpack.c.l.b16 %v5353
      %v5386 = vunpack.c.l.b16 %v5354
      %v5387 = vunpack.c.l.b16 %v5355
      %v5388 = vpack.c.b16 %v5373, %v5372
      %v5389 = vpack.c.b16 %v5375, %v5374
      %v5390 = vpack.c.b16 %v5377, %v5376
      %v5391 = vpack.c.b16 %v5379, %v5378
      %v5392 = vpack.c.b16 %v5381, %v5380
      %v5393 = vpack.c.b16 %v5383, %v5382
      %v5394 = vpack.c.b16 %v5385, %v5384
      %v5395 = vpack.c.b16 %v5387, %v5386
      %5404 = vmatprep.subr.bf16.mxu0 0
      %5405 = vmatpush1.bf16.msra.mxu0 %v5388
      %5406 = vmatprep.subr.bf16.mxu0 0
      %5407 = vmatpush1.bf16.msra.mxu0 %v5389
      %5408 = vmatprep.subr.bf16.mxu0 0
      %5409 = vmatpush1.bf16.msra.mxu0 %v5390
      %5410 = vmatprep.subr.bf16.mxu0 0
      %5411 = vmatpush1.bf16.msra.mxu0 %v5391
      %5412 = vmatprep.subr.bf16.mxu0 0
      %5413 = vmatpush1.bf16.msra.mxu0 %v5392
      %5414 = vmatprep.subr.bf16.mxu0 0
      %5415 = vmatpush1.bf16.msra.mxu0 %v5393
      %5416 = vmatprep.subr.bf16.mxu0 0
      %5417 = vmatpush1.bf16.msra.mxu0 %v5394
      %5418 = vmatprep.subr.bf16.mxu0 0
      %5419 = vmatpush1.bf16.msra.mxu0 %v5395
      %5420 = vmatprep.subr.bf16.mxu0 0
      %5421 = vmatpush1.bf16.msra.mxu0 0
      %5422 = vmatprep.subr.bf16.mxu0 0
      %5423 = vmatpush1.bf16.msra.mxu0 0
      %5424 = vmatprep.subr.bf16.mxu0 0
      %5425 = vmatpush1.bf16.msra.mxu0 0
      %5426 = vmatprep.subr.bf16.mxu0 0
      %5427 = vmatpush1.bf16.msra.mxu0 0
      %5428 = vmatprep.subr.bf16.mxu0 0
      %5429 = vmatpush1.bf16.msra.mxu0 0
      %5430 = vmatprep.subr.bf16.mxu0 0
      %5431 = vmatpush1.bf16.msra.mxu0 0
      %5432 = vmatprep.subr.bf16.mxu0 0
      %5433 = vmatpush1.bf16.msra.mxu0 0
      %5434 = vmatprep.subr.bf16.mxu0 0
      %5435 = vmatpush1.bf16.msra.mxu0 0
      %5436 = vmatprep.mubr.bf16.mxu0 0
      %5437 = vmatmul.mubr.bf16.gmra.mrb[0].mxu0 %v5337
      %v5438 = vpop.f32.mrb[0].mxu0
      %v5439 = vadd.f32 0.0, %v5438
      %v5440 = vpop.f32.mrb[0].mxu0
      %v5441 = vpop.f32.mrb[0].mxu0
      %v5442 = vadd.f32 0.0, %v5441
      %v5443 = vpop.f32.mrb[0].mxu0
      %5444 = vmatprep.mubr.bf16.mxu0 0
      %5445 = vmatmul.mubr.bf16.gmra.mrb[0].mxu0 %v5338
      %v5446 = vpop.f32.mrb[0].mxu0
      %v5447 = vadd.f32 0.0, %v5446
      %v5448 = vpop.f32.mrb[0].mxu0
      %v5449 = vpop.f32.mrb[0].mxu0
      %v5450 = vpop.f32.mrb[0].mxu0
      %5451 = vdwg.mxu0
      %v5452 = vadd.f32 %v5331, %v5439
      %v5453 = vadd.f32 %v5332, %v5442
      %v5454 = vadd.f32 %v5333, %v5447
      %v5455 = vld [vmem:[%s5212 + $0x2] sm:$0xff]
      %v5456 = vld [vmem:[%s5212 + $0x12] sm:$0xff]
      %v5457 = vld [vmem:[%s5212 + $0x22] sm:$0xff]
      %v5458 = vpack.c.bf16 %v5456, %v5455
      %v5459 = vpack.c.bf16 %v5457, %v5457
      %s5460 = scalar_lea.vmem %s5, 640
      %v5461 = vld [vmem:[%s5460] sm:$0xf]
      %v5462 = vld [vmem:[%s5460 + $0x4] sm:$0xf]
      %v5463 = vld [vmem:[%s5460 + $0x8] sm:$0xf]
      %v5464 = vld [vmem:[%s5460 + $0xc] sm:$0xf]
      %v5465 = vld [vmem:[%s5460 + $0x10] sm:$0xf]
      %v5466 = vld [vmem:[%s5460 + $0x14] sm:$0xf]
      %v5467 = vld [vmem:[%s5460 + $0x18] sm:$0xf]
      %v5468 = vld [vmem:[%s5460 + $0x1c] sm:$0xf]
      %v5469 = vld [vmem:[%s5460 + $0x20] sm:$0xf]
      %v5470 = vld [vmem:[%s5460 + $0x24] sm:$0xf]
      %v5471 = vld [vmem:[%s5460 + $0x28] sm:$0xf]
      %v5472 = vld [vmem:[%s5460 + $0x2c] sm:$0xf]
      %v5473 = vld [vmem:[%s5460 + $0x30] sm:$0xf]
      %v5474 = vld [vmem:[%s5460 + $0x34] sm:$0xf]
      %v5475 = vld [vmem:[%s5460 + $0x38] sm:$0xf]
      %v5476 = vld [vmem:[%s5460 + $0x3c] sm:$0xf]
      %v5493 = vunpack.c.l.b16 %v5461
      %v5494 = vunpack.c.l.b16 %v5462
      %v5495 = vunpack.c.l.b16 %v5463
      %v5496 = vunpack.c.l.b16 %v5464
      %v5497 = vunpack.c.l.b16 %v5465
      %v5498 = vunpack.c.l.b16 %v5466
      %v5499 = vunpack.c.l.b16 %v5467
      %v5500 = vunpack.c.l.b16 %v5468
      %v5501 = vunpack.c.l.b16 %v5469
      %v5502 = vunpack.c.l.b16 %v5470
      %v5503 = vunpack.c.l.b16 %v5471
      %v5504 = vunpack.c.l.b16 %v5472
      %v5505 = vunpack.c.l.b16 %v5473
      %v5506 = vunpack.c.l.b16 %v5474
      %v5507 = vunpack.c.l.b16 %v5475
      %v5508 = vunpack.c.l.b16 %v5476
      %v5509 = vpack.c.b16 %v5494, %v5493
      %v5510 = vpack.c.b16 %v5496, %v5495
      %v5511 = vpack.c.b16 %v5498, %v5497
      %v5512 = vpack.c.b16 %v5500, %v5499
      %v5513 = vpack.c.b16 %v5502, %v5501
      %v5514 = vpack.c.b16 %v5504, %v5503
      %v5515 = vpack.c.b16 %v5506, %v5505
      %v5516 = vpack.c.b16 %v5508, %v5507
      %5525 = vmatprep.subr.bf16.mxu0 0
      %5526 = vmatpush1.bf16.msra.mxu0 %v5509
      %5527 = vmatprep.subr.bf16.mxu0 0
      %5528 = vmatpush1.bf16.msra.mxu0 %v5510
      %5529 = vmatprep.subr.bf16.mxu0 0
      %5530 = vmatpush1.bf16.msra.mxu0 %v5511
      %5531 = vmatprep.subr.bf16.mxu0 0
      %5532 = vmatpush1.bf16.msra.mxu0 %v5512
      %5533 = vmatprep.subr.bf16.mxu0 0
      %5534 = vmatpush1.bf16.msra.mxu0 %v5513
      %5535 = vmatprep.subr.bf16.mxu0 0
      %5536 = vmatpush1.bf16.msra.mxu0 %v5514
      %5537 = vmatprep.subr.bf16.mxu0 0
      %5538 = vmatpush1.bf16.msra.mxu0 %v5515
      %5539 = vmatprep.subr.bf16.mxu0 0
      %5540 = vmatpush1.bf16.msra.mxu0 %v5516
      %5541 = vmatprep.subr.bf16.mxu0 0
      %5542 = vmatpush1.bf16.msra.mxu0 0
      %5543 = vmatprep.subr.bf16.mxu0 0
      %5544 = vmatpush1.bf16.msra.mxu0 0
      %5545 = vmatprep.subr.bf16.mxu0 0
      %5546 = vmatpush1.bf16.msra.mxu0 0
      %5547 = vmatprep.subr.bf16.mxu0 0
      %5548 = vmatpush1.bf16.msra.mxu0 0
      %5549 = vmatprep.subr.bf16.mxu0 0
      %5550 = vmatpush1.bf16.msra.mxu0 0
      %5551 = vmatprep.subr.bf16.mxu0 0
      %5552 = vmatpush1.bf16.msra.mxu0 0
      %5553 = vmatprep.subr.bf16.mxu0 0
      %5554 = vmatpush1.bf16.msra.mxu0 0
      %5555 = vmatprep.subr.bf16.mxu0 0
      %5556 = vmatpush1.bf16.msra.mxu0 0
      %5557 = vmatprep.mubr.bf16.mxu0 0
      %5558 = vmatmul.mubr.bf16.gmra.mrb[0].mxu0 %v5458
      %v5559 = vpop.f32.mrb[0].mxu0
      %v5560 = vadd.f32 0.0, %v5559
      %v5561 = vpop.f32.mrb[0].mxu0
      %v5562 = vpop.f32.mrb[0].mxu0
      %v5563 = vadd.f32 0.0, %v5562
      %v5564 = vpop.f32.mrb[0].mxu0
      %5565 = vmatprep.mubr.bf16.mxu0 0
      %5566 = vmatmul.mubr.bf16.gmra.mrb[0].mxu0 %v5459
      %v5567 = vpop.f32.mrb[0].mxu0
      %v5568 = vadd.f32 0.0, %v5567
      %v5569 = vpop.f32.mrb[0].mxu0
      %v5570 = vpop.f32.mrb[0].mxu0
      %v5571 = vpop.f32.mrb[0].mxu0
      %5572 = vdwg.mxu0
      %v5573 = vadd.f32 %v5452, %v5560
      %v5574 = vadd.f32 %v5453, %v5563
      %v5575 = vadd.f32 %v5454, %v5568
      %v5576 = vld [vmem:[%s5212 + $0x3] sm:$0xff]
      %v5577 = vld [vmem:[%s5212 + $0x13] sm:$0xff]
      %v5578 = vld [vmem:[%s5212 + $0x23] sm:$0xff]
      %v5579 = vpack.c.bf16 %v5577, %v5576
      %v5580 = vpack.c.bf16 %v5578, %v5578
      %s5581 = scalar_lea.vmem %s5, 704
      %v5582 = vld [vmem:[%s5581] sm:$0xf]
      %v5583 = vld [vmem:[%s5581 + $0x4] sm:$0xf]
      %v5584 = vld [vmem:[%s5581 + $0x8] sm:$0xf]
      %v5585 = vld [vmem:[%s5581 + $0xc] sm:$0xf]
      %v5586 = vld [vmem:[%s5581 + $0x10] sm:$0xf]
      %v5587 = vld [vmem:[%s5581 + $0x14] sm:$0xf]
      %v5588 = vld [vmem:[%s5581 + $0x18] sm:$0xf]
      %v5589 = vld [vmem:[%s5581 + $0x1c] sm:$0xf]
      %v5590 = vld [vmem:[%s5581 + $0x20] sm:$0xf]
      %v5591 = vld [vmem:[%s5581 + $0x24] sm:$0xf]
      %v5592 = vld [vmem:[%s5581 + $0x28] sm:$0xf]
      %v5593 = vld [vmem:[%s5581 + $0x2c] sm:$0xf]
      %v5594 = vld [vmem:[%s5581 + $0x30] sm:$0xf]
      %v5595 = vld [vmem:[%s5581 + $0x34] sm:$0xf]
      %v5596 = vld [vmem:[%s5581 + $0x38] sm:$0xf]
      %v5597 = vld [vmem:[%s5581 + $0x3c] sm:$0xf]
      %v5614 = vunpack.c.l.b16 %v5582
      %v5615 = vunpack.c.l.b16 %v5583
      %v5616 = vunpack.c.l.b16 %v5584
      %v5617 = vunpack.c.l.b16 %v5585
      %v5618 = vunpack.c.l.b16 %v5586
      %v5619 = vunpack.c.l.b16 %v5587
      %v5620 = vunpack.c.l.b16 %v5588
      %v5621 = vunpack.c.l.b16 %v5589
      %v5622 = vunpack.c.l.b16 %v5590
      %v5623 = vunpack.c.l.b16 %v5591
      %v5624 = vunpack.c.l.b16 %v5592
      %v5625 = vunpack.c.l.b16 %v5593
      %v5626 = vunpack.c.l.b16 %v5594
      %v5627 = vunpack.c.l.b16 %v5595
      %v5628 = vunpack.c.l.b16 %v5596
      %v5629 = vunpack.c.l.b16 %v5597
      %v5630 = vpack.c.b16 %v5615, %v5614
      %v5631 = vpack.c.b16 %v5617, %v5616
      %v5632 = vpack.c.b16 %v5619, %v5618
      %v5633 = vpack.c.b16 %v5621, %v5620
      %v5634 = vpack.c.b16 %v5623, %v5622
      %v5635 = vpack.c.b16 %v5625, %v5624
      %v5636 = vpack.c.b16 %v5627, %v5626
      %v5637 = vpack.c.b16 %v5629, %v5628
      %5646 = vmatprep.subr.bf16.mxu0 0
      %5647 = vmatpush1.bf16.msra.mxu0 %v5630
      %5648 = vmatprep.subr.bf16.mxu0 0
      %5649 = vmatpush1.bf16.msra.mxu0 %v5631
      %5650 = vmatprep.subr.bf16.mxu0 0
      %5651 = vmatpush1.bf16.msra.mxu0 %v5632
      %5652 = vmatprep.subr.bf16.mxu0 0
      %5653 = vmatpush1.bf16.msra.mxu0 %v5633
      %5654 = vmatprep.subr.bf16.mxu0 0
      %5655 = vmatpush1.bf16.msra.mxu0 %v5634
      %5656 = vmatprep.subr.bf16.mxu0 0
      %5657 = vmatpush1.bf16.msra.mxu0 %v5635
      %5658 = vmatprep.subr.bf16.mxu0 0
      %5659 = vmatpush1.bf16.msra.mxu0 %v5636
      %5660 = vmatprep.subr.bf16.mxu0 0
      %5661 = vmatpush1.bf16.msra.mxu0 %v5637
      %5662 = vmatprep.subr.bf16.mxu0 0
      %5663 = vmatpush1.bf16.msra.mxu0 0
      %5664 = vmatprep.subr.bf16.mxu0 0
      %5665 = vmatpush1.bf16.msra.mxu0 0
      %5666 = vmatprep.subr.bf16.mxu0 0
      %5667 = vmatpush1.bf16.msra.mxu0 0
      %5668 = vmatprep.subr.bf16.mxu0 0
      %5669 = vmatpush1.bf16.msra.mxu0 0
      %5670 = vmatprep.subr.bf16.mxu0 0
      %5671 = vmatpush1.bf16.msra.mxu0 0
      %5672 = vmatprep.subr.bf16.mxu0 0
      %5673 = vmatpush1.bf16.msra.mxu0 0
      %5674 = vmatprep.subr.bf16.mxu0 0
      %5675 = vmatpush1.bf16.msra.mxu0 0
      %5676 = vmatprep.subr.bf16.mxu0 0
      %5677 = vmatpush1.bf16.msra.mxu0 0
      %5678 = vmatprep.mubr.bf16.mxu0 0
      %5679 = vmatmul.mubr.bf16.gmra.mrb[0].mxu0 %v5579
      %v5680 = vpop.f32.mrb[0].mxu0
      %v5681 = vadd.f32 0.0, %v5680
      %v5682 = vpop.f32.mrb[0].mxu0
      %v5683 = vpop.f32.mrb[0].mxu0
      %v5684 = vadd.f32 0.0, %v5683
      %v5685 = vpop.f32.mrb[0].mxu0
      %5686 = vmatprep.mubr.bf16.mxu0 0
      %5687 = vmatmul.mubr.bf16.gmra.mrb[0].mxu0 %v5580
      %v5688 = vpop.f32.mrb[0].mxu0
      %v5689 = vadd.f32 0.0, %v5688
      %v5690 = vpop.f32.mrb[0].mxu0
      %v5691 = vpop.f32.mrb[0].mxu0
      %v5692 = vpop.f32.mrb[0].mxu0
      %5693 = vdwg.mxu0
      %v5694 = vadd.f32 %v5573, %v5681
      %v5695 = vadd.f32 %v5574, %v5684
      %v5696 = vadd.f32 %v5575, %v5689
      %s5697 = scalar_lea.vmem [#allocation3], 48
      %v5698 = vld [vmem:[%s5697] sm:$0xff]
      %v5699 = vld [vmem:[%s5697 + $0x10] sm:$0xff]
      %v5700 = vld [vmem:[%s5697 + $0x20] sm:$0xff]
      %v5701 = vpack.c.bf16 %v5699, %v5698
      %v5702 = vpack.c.bf16 %v5700, %v5700
      %s5703 = scalar_lea.vmem %s5, 768
      %v5704 = vld [vmem:[%s5703] sm:$0xf]
      %v5705 = vld [vmem:[%s5703 + $0x4] sm:$0xf]
      %v5706 = vld [vmem:[%s5703 + $0x8] sm:$0xf]
      %v5707 = vld [vmem:[%s5703 + $0xc] sm:$0xf]
      %v5708 = vld [vmem:[%s5703 + $0x10] sm:$0xf]
      %v5709 = vld [vmem:[%s5703 + $0x14] sm:$0xf]
      %v5710 = vld [vmem:[%s5703 + $0x18] sm:$0xf]
      %v5711 = vld [vmem:[%s5703 + $0x1c] sm:$0xf]
      %v5712 = vld [vmem:[%s5703 + $0x20] sm:$0xf]
      %v5713 = vld [vmem:[%s5703 + $0x24] sm:$0xf]
      %v5714 = vld [vmem:[%s5703 + $0x28] sm:$0xf]
      %v5715 = vld [vmem:[%s5703 + $0x2c] sm:$0xf]
      %v5716 = vld [vmem:[%s5703 + $0x30] sm:$0xf]
      %v5717 = vld [vmem:[%s5703 + $0x34] sm:$0xf]
      %v5718 = vld [vmem:[%s5703 + $0x38] sm:$0xf]
      %v5719 = vld [vmem:[%s5703 + $0x3c] sm:$0xf]
      %v5736 = vunpack.c.l.b16 %v5704
      %v5737 = vunpack.c.l.b16 %v5705
      %v5738 = vunpack.c.l.b16 %v5706
      %v5739 = vunpack.c.l.b16 %v5707
      %v5740 = vunpack.c.l.b16 %v5708
      %v5741 = vunpack.c.l.b16 %v5709
      %v5742 = vunpack.c.l.b16 %v5710
      %v5743 = vunpack.c.l.b16 %v5711
      %v5744 = vunpack.c.l.b16 %v5712
      %v5745 = vunpack.c.l.b16 %v5713
      %v5746 = vunpack.c.l.b16 %v5714
      %v5747 = vunpack.c.l.b16 %v5715
      %v5748 = vunpack.c.l.b16 %v5716
      %v5749 = vunpack.c.l.b16 %v5717
      %v5750 = vunpack.c.l.b16 %v5718
      %v5751 = vunpack.c.l.b16 %v5719
      %v5752 = vpack.c.b16 %v5737, %v5736
      %v5753 = vpack.c.b16 %v5739, %v5738
      %v5754 = vpack.c.b16 %v5741, %v5740
      %v5755 = vpack.c.b16 %v5743, %v5742
      %v5756 = vpack.c.b16 %v5745, %v5744
      %v5757 = vpack.c.b16 %v5747, %v5746
      %v5758 = vpack.c.b16 %v5749, %v5748
      %v5759 = vpack.c.b16 %v5751, %v5750
      %5768 = vmatprep.subr.bf16.mxu0 0
      %5769 = vmatpush1.bf16.msra.mxu0 %v5752
      %5770 = vmatprep.subr.bf16.mxu0 0
      %5771 = vmatpush1.bf16.msra.mxu0 %v5753
      %5772 = vmatprep.subr.bf16.mxu0 0
      %5773 = vmatpush1.bf16.msra.mxu0 %v5754
      %5774 = vmatprep.subr.bf16.mxu0 0
      %5775 = vmatpush1.bf16.msra.mxu0 %v5755
      %5776 = vmatprep.subr.bf16.mxu0 0
      %5777 = vmatpush1.bf16.msra.mxu0 %v5756
      %5778 = vmatprep.subr.bf16.mxu0 0
      %5779 = vmatpush1.bf16.msra.mxu0 %v5757
      %5780 = vmatprep.subr.bf16.mxu0 0
      %5781 = vmatpush1.bf16.msra.mxu0 %v5758
      %5782 = vmatprep.subr.bf16.mxu0 0
      %5783 = vmatpush1.bf16.msra.mxu0 %v5759
      %5784 = vmatprep.subr.bf16.mxu0 0
      %5785 = vmatpush1.bf16.msra.mxu0 0
      %5786 = vmatprep.subr.bf16.mxu0 0
      %5787 = vmatpush1.bf16.msra.mxu0 0
      %5788 = vmatprep.subr.bf16.mxu0 0
      %5789 = vmatpush1.bf16.msra.mxu0 0
      %5790 = vmatprep.subr.bf16.mxu0 0
      %5791 = vmatpush1.bf16.msra.mxu0 0
      %5792 = vmatprep.subr.bf16.mxu0 0
      %5793 = vmatpush1.bf16.msra.mxu0 0
      %5794 = vmatprep.subr.bf16.mxu0 0
      %5795 = vmatpush1.bf16.msra.mxu0 0
      %5796 = vmatprep.subr.bf16.mxu0 0
      %5797 = vmatpush1.bf16.msra.mxu0 0
      %5798 = vmatprep.subr.bf16.mxu0 0
      %5799 = vmatpush1.bf16.msra.mxu0 0
      %5800 = vmatprep.mubr.bf16.mxu0 0
      %5801 = vmatmul.mubr.bf16.gmra.mrb[0].mxu0 %v5701
      %v5802 = vpop.f32.mrb[0].mxu0
      %v5803 = vadd.f32 0.0, %v5802
      %v5804 = vpop.f32.mrb[0].mxu0
      %v5805 = vpop.f32.mrb[0].mxu0
      %v5806 = vadd.f32 0.0, %v5805
      %v5807 = vpop.f32.mrb[0].mxu0
      %5808 = vmatprep.mubr.bf16.mxu0 0
      %5809 = vmatmul.mubr.bf16.gmra.mrb[0].mxu0 %v5702
      %v5810 = vpop.f32.mrb[0].mxu0
      %v5811 = vadd.f32 0.0, %v5810
      %v5812 = vpop.f32.mrb[0].mxu0
      %v5813 = vpop.f32.mrb[0].mxu0
      %v5814 = vpop.f32.mrb[0].mxu0
      %5815 = vdwg.mxu0
      %v5816 = vadd.f32 %v5694, %v5803
      %v5817 = vadd.f32 %v5695, %v5806
      %v5818 = vadd.f32 %v5696, %v5811
      %v5819 = vld [vmem:[%s5697 + $0x1] sm:$0xff]
      %v5820 = vld [vmem:[%s5697 + $0x11] sm:$0xff]
      %v5821 = vld [vmem:[%s5697 + $0x21] sm:$0xff]
      %v5822 = vpack.c.bf16 %v5820, %v5819
      %v5823 = vpack.c.bf16 %v5821, %v5821
      %s5824 = scalar_lea.vmem %s5, 832
      %v5825 = vld [vmem:[%s5824] sm:$0xf]
      %v5826 = vld [vmem:[%s5824 + $0x4] sm:$0xf]
      %v5827 = vld [vmem:[%s5824 + $0x8] sm:$0xf]
      %v5828 = vld [vmem:[%s5824 + $0xc] sm:$0xf]
      %v5829 = vld [vmem:[%s5824 + $0x10] sm:$0xf]
      %v5830 = vld [vmem:[%s5824 + $0x14] sm:$0xf]
      %v5831 = vld [vmem:[%s5824 + $0x18] sm:$0xf]
      %v5832 = vld [vmem:[%s5824 + $0x1c] sm:$0xf]
      %v5833 = vld [vmem:[%s5824 + $0x20] sm:$0xf]
      %v5834 = vld [vmem:[%s5824 + $0x24] sm:$0xf]
      %v5835 = vld [vmem:[%s5824 + $0x28] sm:$0xf]
      %v5836 = vld [vmem:[%s5824 + $0x2c] sm:$0xf]
      %v5837 = vld [vmem:[%s5824 + $0x30] sm:$0xf]
      %v5838 = vld [vmem:[%s5824 + $0x34] sm:$0xf]
      %v5839 = vld [vmem:[%s5824 + $0x38] sm:$0xf]
      %v5840 = vld [vmem:[%s5824 + $0x3c] sm:$0xf]
      %v5857 = vunpack.c.l.b16 %v5825
      %v5858 = vunpack.c.l.b16 %v5826
      %v5859 = vunpack.c.l.b16 %v5827
      %v5860 = vunpack.c.l.b16 %v5828
      %v5861 = vunpack.c.l.b16 %v5829
      %v5862 = vunpack.c.l.b16 %v5830
      %v5863 = vunpack.c.l.b16 %v5831
      %v5864 = vunpack.c.l.b16 %v5832
      %v5865 = vunpack.c.l.b16 %v5833
      %v5866 = vunpack.c.l.b16 %v5834
      %v5867 = vunpack.c.l.b16 %v5835
      %v5868 = vunpack.c.l.b16 %v5836
      %v5869 = vunpack.c.l.b16 %v5837
      %v5870 = vunpack.c.l.b16 %v5838
      %v5871 = vunpack.c.l.b16 %v5839
      %v5872 = vunpack.c.l.b16 %v5840
      %v5873 = vpack.c.b16 %v5858, %v5857
      %v5874 = vpack.c.b16 %v5860, %v5859
      %v5875 = vpack.c.b16 %v5862, %v5861
      %v5876 = vpack.c.b16 %v5864, %v5863
      %v5877 = vpack.c.b16 %v5866, %v5865
      %v5878 = vpack.c.b16 %v5868, %v5867
      %v5879 = vpack.c.b16 %v5870, %v5869
      %v5880 = vpack.c.b16 %v5872, %v5871
      %5889 = vmatprep.subr.bf16.mxu0 0
      %5890 = vmatpush1.bf16.msra.mxu0 %v5873
      %5891 = vmatprep.subr.bf16.mxu0 0
      %5892 = vmatpush1.bf16.msra.mxu0 %v5874
      %5893 = vmatprep.subr.bf16.mxu0 0
      %5894 = vmatpush1.bf16.msra.mxu0 %v5875
      %5895 = vmatprep.subr.bf16.mxu0 0
      %5896 = vmatpush1.bf16.msra.mxu0 %v5876
      %5897 = vmatprep.subr.bf16.mxu0 0
      %5898 = vmatpush1.bf16.msra.mxu0 %v5877
      %5899 = vmatprep.subr.bf16.mxu0 0
      %5900 = vmatpush1.bf16.msra.mxu0 %v5878
      %5901 = vmatprep.subr.bf16.mxu0 0
      %5902 = vmatpush1.bf16.msra.mxu0 %v5879
      %5903 = vmatprep.subr.bf16.mxu0 0
      %5904 = vmatpush1.bf16.msra.mxu0 %v5880
      %5905 = vmatprep.subr.bf16.mxu0 0
      %5906 = vmatpush1.bf16.msra.mxu0 0
      %5907 = vmatprep.subr.bf16.mxu0 0
      %5908 = vmatpush1.bf16.msra.mxu0 0
      %5909 = vmatprep.subr.bf16.mxu0 0
      %5910 = vmatpush1.bf16.msra.mxu0 0
      %5911 = vmatprep.subr.bf16.mxu0 0
      %5912 = vmatpush1.bf16.msra.mxu0 0
      %5913 = vmatprep.subr.bf16.mxu0 0
      %5914 = vmatpush1.bf16.msra.mxu0 0
      %5915 = vmatprep.subr.bf16.mxu0 0
      %5916 = vmatpush1.bf16.msra.mxu0 0
      %5917 = vmatprep.subr.bf16.mxu0 0
      %5918 = vmatpush1.bf16.msra.mxu0 0
      %5919 = vmatprep.subr.bf16.mxu0 0
      %5920 = vmatpush1.bf16.msra.mxu0 0
      %5921 = vmatprep.mubr.bf16.mxu0 0
      %5922 = vmatmul.mubr.bf16.gmra.mrb[0].mxu0 %v5822
      %v5923 = vpop.f32.mrb[0].mxu0
      %v5924 = vadd.f32 0.0, %v5923
      %v5925 = vpop.f32.mrb[0].mxu0
      %v5926 = vpop.f32.mrb[0].mxu0
      %v5927 = vadd.f32 0.0, %v5926
      %v5928 = vpop.f32.mrb[0].mxu0
      %5929 = vmatprep.mubr.bf16.mxu0 0
      %5930 = vmatmul.mubr.bf16.gmra.mrb[0].mxu0 %v5823
      %v5931 = vpop.f32.mrb[0].mxu0
      %v5932 = vadd.f32 0.0, %v5931
      %v5933 = vpop.f32.mrb[0].mxu0
      %v5934 = vpop.f32.mrb[0].mxu0
      %v5935 = vpop.f32.mrb[0].mxu0
      %5936 = vdwg.mxu0
      %v5937 = vadd.f32 %v5816, %v5924
      %v5938 = vadd.f32 %v5817, %v5927
      %v5939 = vadd.f32 %v5818, %v5932
      %v5940 = vld [vmem:[%s5697 + $0x2] sm:$0xff]
      %v5941 = vld [vmem:[%s5697 + $0x12] sm:$0xff]
      %v5942 = vld [vmem:[%s5697 + $0x22] sm:$0xff]
      %v5943 = vpack.c.bf16 %v5941, %v5940
      %v5944 = vpack.c.bf16 %v5942, %v5942
      %s5945 = scalar_lea.vmem %s5, 896
      %v5946 = vld [vmem:[%s5945] sm:$0xf]
      %v5947 = vld [vmem:[%s5945 + $0x4] sm:$0xf]
      %v5948 = vld [vmem:[%s5945 + $0x8] sm:$0xf]
      %v5949 = vld [vmem:[%s5945 + $0xc] sm:$0xf]
      %v5950 = vld [vmem:[%s5945 + $0x10] sm:$0xf]
      %v5951 = vld [vmem:[%s5945 + $0x14] sm:$0xf]
      %v5952 = vld [vmem:[%s5945 + $0x18] sm:$0xf]
      %v5953 = vld [vmem:[%s5945 + $0x1c] sm:$0xf]
      %v5954 = vld [vmem:[%s5945 + $0x20] sm:$0xf]
      %v5955 = vld [vmem:[%s5945 + $0x24] sm:$0xf]
      %v5956 = vld [vmem:[%s5945 + $0x28] sm:$0xf]
      %v5957 = vld [vmem:[%s5945 + $0x2c] sm:$0xf]
      %v5958 = vld [vmem:[%s5945 + $0x30] sm:$0xf]
      %v5959 = vld [vmem:[%s5945 + $0x34] sm:$0xf]
      %v5960 = vld [vmem:[%s5945 + $0x38] sm:$0xf]
      %v5961 = vld [vmem:[%s5945 + $0x3c] sm:$0xf]
      %v5978 = vunpack.c.l.b16 %v5946
      %v5979 = vunpack.c.l.b16 %v5947
      %v5980 = vunpack.c.l.b16 %v5948
      %v5981 = vunpack.c.l.b16 %v5949
      %v5982 = vunpack.c.l.b16 %v5950
      %v5983 = vunpack.c.l.b16 %v5951
      %v5984 = vunpack.c.l.b16 %v5952
      %v5985 = vunpack.c.l.b16 %v5953
      %v5986 = vunpack.c.l.b16 %v5954
      %v5987 = vunpack.c.l.b16 %v5955
      %v5988 = vunpack.c.l.b16 %v5956
      %v5989 = vunpack.c.l.b16 %v5957
      %v5990 = vunpack.c.l.b16 %v5958
      %v5991 = vunpack.c.l.b16 %v5959
      %v5992 = vunpack.c.l.b16 %v5960
      %v5993 = vunpack.c.l.b16 %v5961
      %v5994 = vpack.c.b16 %v5979, %v5978
      %v5995 = vpack.c.b16 %v5981, %v5980
      %v5996 = vpack.c.b16 %v5983, %v5982
      %v5997 = vpack.c.b16 %v5985, %v5984
      %v5998 = vpack.c.b16 %v5987, %v5986
      %v5999 = vpack.c.b16 %v5989, %v5988
      %v6000 = vpack.c.b16 %v5991, %v5990
      %v6001 = vpack.c.b16 %v5993, %v5992
      %6010 = vmatprep.subr.bf16.mxu0 0
      %6011 = vmatpush1.bf16.msra.mxu0 %v5994
      %6012 = vmatprep.subr.bf16.mxu0 0
      %6013 = vmatpush1.bf16.msra.mxu0 %v5995
      %6014 = vmatprep.subr.bf16.mxu0 0
      %6015 = vmatpush1.bf16.msra.mxu0 %v5996
      %6016 = vmatprep.subr.bf16.mxu0 0
      %6017 = vmatpush1.bf16.msra.mxu0 %v5997
      %6018 = vmatprep.subr.bf16.mxu0 0
      %6019 = vmatpush1.bf16.msra.mxu0 %v5998
      %6020 = vmatprep.subr.bf16.mxu0 0
      %6021 = vmatpush1.bf16.msra.mxu0 %v5999
      %6022 = vmatprep.subr.bf16.mxu0 0
      %6023 = vmatpush1.bf16.msra.mxu0 %v6000
      %6024 = vmatprep.subr.bf16.mxu0 0
      %6025 = vmatpush1.bf16.msra.mxu0 %v6001
      %6026 = vmatprep.subr.bf16.mxu0 0
      %6027 = vmatpush1.bf16.msra.mxu0 0
      %6028 = vmatprep.subr.bf16.mxu0 0
      %6029 = vmatpush1.bf16.msra.mxu0 0
      %6030 = vmatprep.subr.bf16.mxu0 0
      %6031 = vmatpush1.bf16.msra.mxu0 0
      %6032 = vmatprep.subr.bf16.mxu0 0
      %6033 = vmatpush1.bf16.msra.mxu0 0
      %6034 = vmatprep.subr.bf16.mxu0 0
      %6035 = vmatpush1.bf16.msra.mxu0 0
      %6036 = vmatprep.subr.bf16.mxu0 0
      %6037 = vmatpush1.bf16.msra.mxu0 0
      %6038 = vmatprep.subr.bf16.mxu0 0
      %6039 = vmatpush1.bf16.msra.mxu0 0
      %6040 = vmatprep.subr.bf16.mxu0 0
      %6041 = vmatpush1.bf16.msra.mxu0 0
      %6042 = vmatprep.mubr.bf16.mxu0 0
      %6043 = vmatmul.mubr.bf16.gmra.mrb[0].mxu0 %v5943
      %v6044 = vpop.f32.mrb[0].mxu0
      %v6045 = vadd.f32 0.0, %v6044
      %v6046 = vpop.f32.mrb[0].mxu0
      %v6047 = vpop.f32.mrb[0].mxu0
      %v6048 = vadd.f32 0.0, %v6047
      %v6049 = vpop.f32.mrb[0].mxu0
      %6050 = vmatprep.mubr.bf16.mxu0 0
      %6051 = vmatmul.mubr.bf16.gmra.mrb[0].mxu0 %v5944
      %v6052 = vpop.f32.mrb[0].mxu0
      %v6053 = vadd.f32 0.0, %v6052
      %v6054 = vpop.f32.mrb[0].mxu0
      %v6055 = vpop.f32.mrb[0].mxu0
      %v6056 = vpop.f32.mrb[0].mxu0
      %6057 = vdwg.mxu0
      %v6058 = vadd.f32 %v5937, %v6045
      %v6059 = vadd.f32 %v5938, %v6048
      %v6060 = vadd.f32 %v5939, %v6053
      %v6061 = vld [vmem:[%s5697 + $0x3] sm:$0xff]
      %v6062 = vld [vmem:[%s5697 + $0x13] sm:$0xff]
      %v6063 = vld [vmem:[%s5697 + $0x23] sm:$0xff]
      %v6064 = vpack.c.bf16 %v6062, %v6061
      %v6065 = vpack.c.bf16 %v6063, %v6063
      %s6066 = scalar_lea.vmem %s5, 960
      %v6067 = vld [vmem:[%s6066] sm:$0xf]
      %v6068 = vld [vmem:[%s6066 + $0x4] sm:$0xf]
      %v6069 = vld [vmem:[%s6066 + $0x8] sm:$0xf]
      %v6070 = vld [vmem:[%s6066 + $0xc] sm:$0xf]
      %v6071 = vld [vmem:[%s6066 + $0x10] sm:$0xf]
      %v6072 = vld [vmem:[%s6066 + $0x14] sm:$0xf]
      %v6073 = vld [vmem:[%s6066 + $0x18] sm:$0xf]
      %v6074 = vld [vmem:[%s6066 + $0x1c] sm:$0xf]
      %v6075 = vld [vmem:[%s6066 + $0x20] sm:$0xf]
      %v6076 = vld [vmem:[%s6066 + $0x24] sm:$0xf]
      %v6077 = vld [vmem:[%s6066 + $0x28] sm:$0xf]
      %v6078 = vld [vmem:[%s6066 + $0x2c] sm:$0xf]
      %v6079 = vld [vmem:[%s6066 + $0x30] sm:$0xf]
      %v6080 = vld [vmem:[%s6066 + $0x34] sm:$0xf]
      %v6081 = vld [vmem:[%s6066 + $0x38] sm:$0xf]
      %v6082 = vld [vmem:[%s6066 + $0x3c] sm:$0xf]
      %v6099 = vunpack.c.l.b16 %v6067
      %v6100 = vunpack.c.l.b16 %v6068
      %v6101 = vunpack.c.l.b16 %v6069
      %v6102 = vunpack.c.l.b16 %v6070
      %v6103 = vunpack.c.l.b16 %v6071
      %v6104 = vunpack.c.l.b16 %v6072
      %v6105 = vunpack.c.l.b16 %v6073
      %v6106 = vunpack.c.l.b16 %v6074
      %v6107 = vunpack.c.l.b16 %v6075
      %v6108 = vunpack.c.l.b16 %v6076
      %v6109 = vunpack.c.l.b16 %v6077
      %v6110 = vunpack.c.l.b16 %v6078
      %v6111 = vunpack.c.l.b16 %v6079
      %v6112 = vunpack.c.l.b16 %v6080
      %v6113 = vunpack.c.l.b16 %v6081
      %v6114 = vunpack.c.l.b16 %v6082
      %v6115 = vpack.c.b16 %v6100, %v6099
      %v6116 = vpack.c.b16 %v6102, %v6101
      %v6117 = vpack.c.b16 %v6104, %v6103
      %v6118 = vpack.c.b16 %v6106, %v6105
      %v6119 = vpack.c.b16 %v6108, %v6107
      %v6120 = vpack.c.b16 %v6110, %v6109
      %v6121 = vpack.c.b16 %v6112, %v6111
      %v6122 = vpack.c.b16 %v6114, %v6113
      %6131 = vmatprep.subr.bf16.mxu0 0
      %6132 = vmatpush1.bf16.msra.mxu0 %v6115
      %6133 = vmatprep.subr.bf16.mxu0 0
      %6134 = vmatpush1.bf16.msra.mxu0 %v6116
      %6135 = vmatprep.subr.bf16.mxu0 0
      %6136 = vmatpush1.bf16.msra.mxu0 %v6117
      %6137 = vmatprep.subr.bf16.mxu0 0
      %6138 = vmatpush1.bf16.msra.mxu0 %v6118
      %6139 = vmatprep.subr.bf16.mxu0 0
      %6140 = vmatpush1.bf16.msra.mxu0 %v6119
      %6141 = vmatprep.subr.bf16.mxu0 0
      %6142 = vmatpush1.bf16.msra.mxu0 %v6120
      %6143 = vmatprep.subr.bf16.mxu0 0
      %6144 = vmatpush1.bf16.msra.mxu0 %v6121
      %6145 = vmatprep.subr.bf16.mxu0 0
      %6146 = vmatpush1.bf16.msra.mxu0 %v6122
      %6147 = vmatprep.subr.bf16.mxu0 0
      %6148 = vmatpush1.bf16.msra.mxu0 0
      %6149 = vmatprep.subr.bf16.mxu0 0
      %6150 = vmatpush1.bf16.msra.mxu0 0
      %6151 = vmatprep.subr.bf16.mxu0 0
      %6152 = vmatpush1.bf16.msra.mxu0 0
      %6153 = vmatprep.subr.bf16.mxu0 0
      %6154 = vmatpush1.bf16.msra.mxu0 0
      %6155 = vmatprep.subr.bf16.mxu0 0
      %6156 = vmatpush1.bf16.msra.mxu0 0
      %6157 = vmatprep.subr.bf16.mxu0 0
      %6158 = vmatpush1.bf16.msra.mxu0 0
      %6159 = vmatprep.subr.bf16.mxu0 0
      %6160 = vmatpush1.bf16.msra.mxu0 0
      %6161 = vmatprep.subr.bf16.mxu0 0
      %6162 = vmatpush1.bf16.msra.mxu0 0
      %6163 = vmatprep.mubr.bf16.mxu0 0
      %6164 = vmatmul.mubr.bf16.gmra.mrb[0].mxu0 %v6064
      %v6165 = vpop.f32.mrb[0].mxu0
      %v6166 = vadd.f32 0.0, %v6165
      %v6167 = vpop.f32.mrb[0].mxu0
      %v6168 = vpop.f32.mrb[0].mxu0
      %v6169 = vadd.f32 0.0, %v6168
      %v6170 = vpop.f32.mrb[0].mxu0
      %6171 = vmatprep.mubr.bf16.mxu0 0
      %6172 = vmatmul.mubr.bf16.gmra.mrb[0].mxu0 %v6065
      %v6173 = vpop.f32.mrb[0].mxu0
      %v6174 = vadd.f32 0.0, %v6173
      %v6175 = vpop.f32.mrb[0].mxu0
      %v6176 = vpop.f32.mrb[0].mxu0
      %v6177 = vpop.f32.mrb[0].mxu0
      %6178 = vdwg.mxu0
      %v6179 = vadd.f32 %v6058, %v6166
      %v6180 = vadd.f32 %v6059, %v6169
      %v6181 = vadd.f32 %v6060, %v6174
      %v6182 = vld [vmem:[%s6] sm:$0x1]
      %v6184 = vlaneseq
      %v6185 = vshrl.u32 %v6184, 7
      %v6186 = vsub.s32 0, %v6185
      %v6187 = vrot.slane %v6182, %v6186
      %v6189 = vadd.f32 %v6179, %v6187
      %v6190 = vadd.f32 %v6180, %v6187
      %v6191 = vadd.f32 %v6181, %v6187
      %v6192 = vmax.f32 %v6189, 0.0
      %v6193 = vmax.f32 %v6190, 0.0
      %v6194 = vmax.f32 %v6191, 0.0
      %v6195 = vpack.c.bf16 %v6193, %v6192
      %v6196 = vpack.c.bf16 %v6194, %v6194
      %v6199 = vunpack.c.l.b16 %v6195
      %v6200 = vunpack.c.h.b16 %v6195
      %v6201 = vunpack.c.l.b16 %v6196
      %v6202 = vpack.c.b16 %v6199, %v6199
      %v6203 = vpack.c.b16 %v6200, %v6200
      %v6204 = vpack.c.b16 %v6201, %v6201
      %6208 = vst [vmem:[%s278] sm:$0xf] %v6202
      %6209 = vst [vmem:[%s278 + $0x4] sm:$0xf] %v6203
      %6210 = vst [vmem:[%s278 + $0x8] sm:$0xf] %v6204
      %p6211 = scmp.lt.s32.totalorder %s18, 1
      %s6212 = scalar_select %p6211, %s18, 1
      %s6213 = smul.addr %s6212, 3
      %s6214 = smul.addr %s6213, 4
      %s6215 = scalar_lea.vmem %s7, %s6214
      // Predicated region
      $region49: #{cnn_forward.2} parent=47 // pred_check
        %p6216 = pneg %p188
      $region50: #{cnn_forward.2} parent=47 // pred_check_branch
        %6218 = sbr.rel (%p6216) target = $region52
      $region51: #{cnn_forward.2} parent=47 // pred_region
        _
      $region52: #{cnn_forward.2} parent=47 // pred_fallthru
        _
    $region48: #{cnn_forward.2} parent=5 // pred_fallthru
      _
    %p6219 = scmp.le.s32.totalorder 2, %s13
    // Predicated region
    $region53: #{cnn_forward.2} parent=5 // pred_check
      %p6220 = pneg %p6219
    $region54: #{cnn_forward.2} parent=5 // pred_check_branch
      %6222 = sbr.rel (%p6220) target = $region56
    $region55: #{cnn_forward.2} parent=5 // pred_region
      %s6223 = ssub.s32 %s13, 2
      // Predicated region
      $region57: #{cnn_forward.2} parent=55 // pred_check
        %p6224 = pneg %p194
      $region58: #{cnn_forward.2} parent=55 // pred_check_branch
        %6226 = sbr.rel (%p6224) target = $region60
      $region59: #{cnn_forward.2} parent=55 // pred_region
        %p6227 = scmp.lt.s32.totalorder %s19, 1
        %s6228 = scalar_select %p6227, %s19, 1
        %s6229 = smul.addr %s6228, 3
        %s6230 = smul.addr %s6229, 4
        %s6231 = scalar_lea.vmem %s7, %s6230
      $region60: #{cnn_forward.2} parent=55 // pred_fallthru
        _
    $region56: #{cnn_forward.2} parent=5 // pred_fallthru
      _
  $region6: #{cnn_forward.2} parent=0 // loop_footer
    %s17 = sadd.s32 1, %s13
  $region7: #{cnn_forward.2} parent=0 // loop_footer_branch
    %12 = sbr.rel target = $region3
  $region8: #{cnn_forward.2} parent=0 // loop_exit
    _

</llo_original>
